<compile_context>
chip_gen: v7x
topology: tpu7x:2x2x1
jax: 0.10.0
libtpu: 0.0.40
codegen_flags: <defaults>
</compile_context>

<pallas_src>
import jax
import jax.numpy as jnp
from jax import lax
from jax.experimental import pallas as pl
from jax.experimental.pallas import tpu as pltpu


def _make_kernel(H, W, CP, M, OC, Bblk):
    HW = H * W
    R = Bblk * HW
    TAPS3 = [(kh, kw) for kh in range(3) for kw in range(3)]

    def kernel(corr_ref, fpat_ref,
               wc1_ref, bc1_ref, wc2_ref, bc2_ref,
               wf1_ref, bf1_ref, wf2_ref, bf2_ref,
               wcv_ref, bcv_ref,
               out_ref,
               padbuf, imcol9, imcol18):

        f32 = jnp.float32
        bf16 = jnp.bfloat16

        # Shared zero-padded activation buffer (borders must be 0; the interior
        # is fully overwritten below).  Scratch is per-core and uninitialised,
        # so this zeroing cannot be hoisted to program_id==0 without breaking
        # correctness on multi-TensorCore (v7x) grids.
        padbuf[...] = jnp.zeros_like(padbuf)

        def conv3x3(src_cin, w_ref, b_ref, imcol_ref):
            # im2col of padbuf[..., :src_cin] -> single MXU matmul, K = 9*src_cin.
            for k, (kh, kw) in enumerate(TAPS3):
                imcol_ref[:, :, k * src_cin:(k + 1) * src_cin] = (
                    padbuf[:, kh:kh + H, kw:kw + W, :src_cin]
                    .reshape(Bblk, HW, src_cin).astype(bf16))
            acc = jnp.dot(imcol_ref[...].reshape(R, 9 * src_cin), w_ref[...],
                          preferred_element_type=f32)
            return jnp.maximum(acc + b_ref[...], 0.0)

        # ---------------- corr branch ----------------
        corr = corr_ref[...].reshape(R, CP).astype(bf16)
        cor1 = jnp.maximum(
            jnp.dot(corr, wc1_ref[...], preferred_element_type=f32)
            + bc1_ref[...], 0.0)                                  # convc1 (1x1) + relu

        padbuf[:, 1:H + 1, 1:W + 1, :M] = cor1.reshape(Bblk, H, W, M)
        cor2 = conv3x3(M, wc2_ref, bc2_ref, imcol9)               # convc2 (3x3) + relu

        # ---------------- flow branch ----------------
        fpat = fpat_ref[...].reshape(R, 49)                       # 7x7 im2col (built in wrapper)
        flo1 = jnp.maximum(
            jnp.dot(fpat.astype(bf16), wf1_ref[...], preferred_element_type=f32)
            + bf1_ref[...], 0.0)                                  # convf1 (7x7) + relu -> 1 matmul

        padbuf[:, 1:H + 1, 1:W + 1, :M] = flo1.reshape(Bblk, H, W, M)
        flo2 = conv3x3(M, wf2_ref, bf2_ref, imcol9)               # convf2 (3x3) + relu

        # ---------------- fuse ----------------
        padbuf[:, 1:H + 1, 1:W + 1, :M] = cor2.reshape(Bblk, H, W, M)
        padbuf[:, 1:H + 1, 1:W + 1, M:2 * M] = flo2.reshape(Bblk, H, W, M)
        out = conv3x3(2 * M, wcv_ref, bcv_ref, imcol18)           # conv (3x3) + relu, 64 wide

        # cat([out, flow], C): wcv/bcv channel OC-1 is zero-padded so the conv
        # result is exactly 0 there; add raw flow (centre tap of the 7x7 im2col)
        # into that lane instead of a lane-level concat of a 63-wide tensor.
        onehot_last = (lax.broadcasted_iota(jnp.int32, (1, OC), 1)
                       == OC - 1).astype(f32)
        out = out + fpat[:, 24:25] * onehot_last

        out_ref[...] = out.reshape(Bblk, HW, OC).astype(out_ref.dtype)

    return kernel


def basic_motion_encoder(flow, corr, params):
    """flow: (B,H,W,1)  corr: (B,H,W,cor_planes)  ->  (B,H,W,out_channel)."""
    B, H, W, _ = flow.shape
    CP = corr.shape[-1]
    M = params["wc2"].shape[-1]
    OC = params["wcv"].shape[-1] + 1
    HW = H * W

    # Batch blocking: keep >= 2 parallel grid steps (v7x has 2 TensorCores).
    Bblk = B // 2 if (B >= 2 and B % 2 == 0) else 1
    num_blocks = B // Bblk
    assert num_blocks * Bblk == B

    # ---- cheap wrapper-side glue (layout only, no conv math) ----
    corr2d = corr.reshape(B, HW, CP).astype(jnp.float32)
    fp = jnp.pad(flow[..., 0], ((0, 0), (3, 3), (3, 3)))          # (B, H+6, W+6)
    fpat = jnp.stack([fp[:, kh:kh + H, kw:kw + W]
                      for kh in range(7) for kw in range(7)],
                     axis=-1).reshape(B, HW, 49).astype(jnp.float32)

    bf16 = jnp.bfloat16
    wc1 = params["wc1"].astype(bf16)                              # (CP, M)
    wc2 = params["wc2"].reshape(9 * M, M).astype(bf16)            # (288, M)
    wf1 = params["wf1"].reshape(49, M).astype(bf16)               # (49, M)
    wf2 = params["wf2"].reshape(9 * M, M).astype(bf16)            # (288, M)
    wcv = jnp.pad(params["wcv"], ((0, 0), (0, 0), (0, 0), (0, 1))
                  ).reshape(18 * M, OC).astype(bf16)              # (576, 64), col 63 = 0
    bc1 = params["bc1"].astype(jnp.float32)
    bc2 = params["bc2"].astype(jnp.float32)
    bf1 = params["bf1"].astype(jnp.float32)
    bf2 = params["bf2"].astype(jnp.float32)
    bcv = jnp.pad(params["bcv"], ((0, 0), (0, 1))).astype(jnp.float32)

    kernel = _make_kernel(H, W, CP, M, OC, Bblk)

    def wspec(a):
        return pl.BlockSpec(a.shape, lambda g: (0, 0))            # all weights are 2-D

    grid_spec = pltpu.PrefetchScalarGridSpec(
        num_scalar_prefetch=0,
        grid=(num_blocks,),
        in_specs=[
            pl.BlockSpec((Bblk, HW, CP), lambda g: (g, 0, 0)),
            pl.BlockSpec((Bblk, HW, 49), lambda g: (g, 0, 0)),
            wspec(wc1), wspec(bc1), wspec(wc2), wspec(bc2),
            wspec(wf1), wspec(bf1), wspec(wf2), wspec(bf2),
            wspec(wcv), wspec(bcv),
        ],
        out_specs=pl.BlockSpec((Bblk, HW, OC), lambda g: (g, 0, 0)),
        scratch_shapes=[
            pltpu.VMEM((Bblk, H + 2, W + 2, 2 * M), jnp.float32),   # shared padded act
            pltpu.VMEM((Bblk, HW, 9 * M), jnp.bfloat16),            # im2col K=288
            pltpu.VMEM((Bblk, HW, 18 * M), jnp.bfloat16),           # im2col K=576
        ],
    )

    out = pl.pallas_call(
        kernel,
        out_shape=jax.ShapeDtypeStruct((B, HW, OC), flow.dtype),
        grid_spec=grid_spec,
        compiler_params=pltpu.CompilerParams(
            dimension_semantics=("parallel",)),
    )(corr2d, fpat, wc1, bc1, wc2, bc2, wf1, bf1, wf2, bf2, wcv, bcv)

    return out.reshape(B, H, W, OC)


def init_params(key, cor_planes, mid, out_channel):
    keys = jax.random.split(key, 10)
    w = lambda k, s: jax.random.normal(k, s, jnp.float32) * 0.05
    return dict(
        wc1=w(keys[0], (cor_planes, mid)),            bc1=w(keys[1], (1, mid)),
        wc2=w(keys[2], (3, 3, mid, mid)),             bc2=w(keys[3], (1, mid)),
        wf1=w(keys[4], (7, 7, 1, mid)),               bf1=w(keys[5], (1, mid)),
        wf2=w(keys[6], (3, 3, mid, mid)),             bf2=w(keys[7], (1, mid)),
        wcv=w(keys[8], (3, 3, 2 * mid, out_channel - 1)),
        bcv=w(keys[9], (1, out_channel - 1)),
    )


def reference(flow, corr, params):
    """Pure-JAX (XLA conv) reference of the PyTorch forward, in NHWC/HWIO."""
    dn = ("NHWC", "HWIO", "NHWC")

    def conv(x, w, b, pad):
        y = lax.conv_general_dilated(x, w, (1, 1), [(pad, pad), (pad, pad)],
                                     dimension_numbers=dn)
        return jax.nn.relu(y + b.reshape(1, 1, 1, -1))

    cor = conv(corr, params["wc1"].reshape(1, 1, *params["wc1"].shape),
               params["bc1"][0], 0)
    cor = conv(cor, params["wc2"], params["bc2"][0], 1)
    flo = conv(flow, params["wf1"], params["bf1"][0], 3)
    flo = conv(flo, params["wf2"], params["bf2"][0], 1)
    out = conv(jnp.concatenate([cor, flo], -1), params["wcv"], params["bcv"][0], 1)
    return jnp.concatenate([out, flow], -1)


if __name__ == "__main__":
    corr_levels, corr_radius, out_channel = 2, 2, 64
    cor_planes = corr_levels * (2 * corr_radius + 1)   # 10
    mid = out_channel // 2                             # 32
    B, H, W = 2, 16, 16

    key = jax.random.PRNGKey(0)
    kf, kc, kp = jax.random.split(key, 3)
    flow = jax.random.normal(kf, (B, H, W, 1), jnp.float32)
    corr = jax.random.normal(kc, (B, H, W, cor_planes), jnp.float32)
    params = init_params(kp, cor_planes, mid, out_channel)

    out = jax.block_until_ready(basic_motion_encoder(flow, corr, params))
    ref = reference(flow, corr, params)

    assert out.shape == (B, H, W, out_channel), out.shape
    assert jnp.allclose(out, ref, atol=1e-2, rtol=1e-2), float(
        jnp.max(jnp.abs(out - ref)))
    print("KERNEL_OK")
</pallas_src>

<mosaic_0001>
module attributes {stable_mosaic.version = 11 : i64} {
  func.func @kernel(%arg0: i32, %arg1: memref<1x256x10xf32, #tpu.memory_space<vmem>>, %arg2: memref<1x256x49xf32, #tpu.memory_space<vmem>>, %arg3: memref<10x32xbf16, #tpu.memory_space<vmem>>, %arg4: memref<1x32xf32, #tpu.memory_space<vmem>>, %arg5: memref<288x32xbf16, #tpu.memory_space<vmem>>, %arg6: memref<1x32xf32, #tpu.memory_space<vmem>>, %arg7: memref<49x32xbf16, #tpu.memory_space<vmem>>, %arg8: memref<1x32xf32, #tpu.memory_space<vmem>>, %arg9: memref<288x32xbf16, #tpu.memory_space<vmem>>, %arg10: memref<1x32xf32, #tpu.memory_space<vmem>>, %arg11: memref<576x64xbf16, #tpu.memory_space<vmem>>, %arg12: memref<1x64xf32, #tpu.memory_space<vmem>>, %arg13: memref<1x256x64xf32, #tpu.memory_space<vmem>>, %arg14: memref<1x18x18x64xf32, #tpu.memory_space<vmem>>, %arg15: memref<1x256x288xbf16, #tpu.memory_space<vmem>>, %arg16: memref<1x256x576xbf16, #tpu.memory_space<vmem>>) attributes {dimension_semantics = [#tpu.dimension_semantics<parallel>], iteration_bounds = array<i64: 2>, scalar_prefetch = 0 : i64, scratch_operands = 3 : i64, tpu.core_type = #tpu.core_type<tc>, window_params = [{transform_indices = @transform_0, window_bounds = array<i64: 1, 256, 10>}, {transform_indices = @transform_1, window_bounds = array<i64: 1, 256, 49>}, {pipeline_mode = #tpu.pipeline_mode<synchronous>, transform_indices = @transform_2, window_bounds = array<i64: 10, 32>}, {pipeline_mode = #tpu.pipeline_mode<synchronous>, transform_indices = @transform_3, window_bounds = array<i64: 1, 32>}, {pipeline_mode = #tpu.pipeline_mode<synchronous>, transform_indices = @transform_4, window_bounds = array<i64: 288, 32>}, {pipeline_mode = #tpu.pipeline_mode<synchronous>, transform_indices = @transform_5, window_bounds = array<i64: 1, 32>}, {pipeline_mode = #tpu.pipeline_mode<synchronous>, transform_indices = @transform_6, window_bounds = array<i64: 49, 32>}, {pipeline_mode = #tpu.pipeline_mode<synchronous>, transform_indices = @transform_7, window_bounds = array<i64: 1, 32>}, {pipeline_mode = #tpu.pipeline_mode<synchronous>, transform_indices = @transform_8, window_bounds = array<i64: 288, 32>}, {pipeline_mode = #tpu.pipeline_mode<synchronous>, transform_indices = @transform_9, window_bounds = array<i64: 1, 32>}, {pipeline_mode = #tpu.pipeline_mode<synchronous>, transform_indices = @transform_10, window_bounds = array<i64: 576, 64>}, {pipeline_mode = #tpu.pipeline_mode<synchronous>, transform_indices = @transform_11, window_bounds = array<i64: 1, 64>}, {transform_indices = @transform_12, window_bounds = array<i64: 1, 256, 64>}]} {
    %cst = arith.constant 0.000000e+00 : f32
    %0 = vector.broadcast %cst : f32 to vector<1x18x18x64xf32>
    %c0 = arith.constant 0 : index
    %c0_0 = arith.constant 0 : index
    %c0_1 = arith.constant 0 : index
    %c0_2 = arith.constant 0 : index
    %1 = vector.load %arg14[%c0, %c0_0, %c0_1, %c0_2] : memref<1x18x18x64xf32, #tpu.memory_space<vmem>>, vector<1x18x18x64xf32>
    tpu.vector_store %arg14[%c0, %c0_0, %c0_1, %c0_2], %0 {strides = array<i32>} : memref<1x18x18x64xf32, #tpu.memory_space<vmem>>, vector<1x18x18x64xf32>,
    %c0_3 = arith.constant 0 : index
    %c0_4 = arith.constant 0 : index
    %c0_5 = arith.constant 0 : index
    %2 = vector.load %arg1[%c0_3, %c0_4, %c0_5] : memref<1x256x10xf32, #tpu.memory_space<vmem>>, vector<1x256x10xf32>
    %3 = vector.shape_cast %2 : vector<1x256x10xf32> to vector<256x10xf32>
    %4 = arith.truncf %3 : vector<256x10xf32> to vector<256x10xbf16>
    %c0_6 = arith.constant 0 : index
    %c0_7 = arith.constant 0 : index
    %5 = vector.load %arg3[%c0_6, %c0_7] : memref<10x32xbf16, #tpu.memory_space<vmem>>, vector<10x32xbf16>
    %cst_8 = arith.constant dense<0.000000e+00> : vector<256x32xf32>
    %6 = tpu.matmul %4, %5, %cst_8 {dimension_numbers = #tpu.dot_dimension_numbers<[1], [0], [0], [1], [0, 0, 1, 1], [], []>} : vector<256x10xbf16>, vector<10x32xbf16>, vector<256x32xf32> -> vector<256x32xf32>
    %c0_9 = arith.constant 0 : index
    %c0_10 = arith.constant 0 : index
    %7 = vector.load %arg4[%c0_9, %c0_10] : memref<1x32xf32, #tpu.memory_space<vmem>>, vector<1x32xf32>
    %8 = vector.broadcast %7 : vector<1x32xf32> to vector<256x32xf32>
    %9 = arith.addf %6, %8 : vector<256x32xf32>
    %cst_11 = arith.constant 0.000000e+00 : f32
    %10 = vector.broadcast %cst_11 : f32 to vector<256x32xf32>
    %11 = arith.maximumf %9, %10 : vector<256x32xf32>
    %12 = vector.shape_cast %11 : vector<256x32xf32> to vector<1x16x16x32xf32>
    %c0_12 = arith.constant 0 : index
    %c1 = arith.constant 1 : index
    %c1_13 = arith.constant 1 : index
    %c0_14 = arith.constant 0 : index
    %13 = vector.load %arg14[%c0_12, %c1, %c1_13, %c0_14] : memref<1x18x18x64xf32, #tpu.memory_space<vmem>>, vector<1x16x16x32xf32>
    tpu.vector_store %arg14[%c0_12, %c1, %c1_13, %c0_14], %12 {strides = array<i32>} : memref<1x18x18x64xf32, #tpu.memory_space<vmem>>, vector<1x16x16x32xf32>,
    %c0_15 = arith.constant 0 : index
    %c0_16 = arith.constant 0 : index
    %c0_17 = arith.constant 0 : index
    %c0_18 = arith.constant 0 : index
    %14 = vector.load %arg14[%c0_15, %c0_16, %c0_17, %c0_18] : memref<1x18x18x64xf32, #tpu.memory_space<vmem>>, vector<1x16x16x32xf32>
    %15 = vector.shape_cast %14 : vector<1x16x16x32xf32> to vector<1x256x32xf32>
    %16 = arith.truncf %15 : vector<1x256x32xf32> to vector<1x256x32xbf16>
    %c0_19 = arith.constant 0 : index
    %c0_20 = arith.constant 0 : index
    %c0_21 = arith.constant 0 : index
    %17 = vector.load %arg15[%c0_19, %c0_20, %c0_21] : memref<1x256x288xbf16, #tpu.memory_space<vmem>>, vector<1x256x32xbf16>
    tpu.vector_store %arg15[%c0_19, %c0_20, %c0_21], %16 {strides = array<i32>} : memref<1x256x288xbf16, #tpu.memory_space<vmem>>, vector<1x256x32xbf16>,
    %c0_22 = arith.constant 0 : index
    %c0_23 = arith.constant 0 : index
    %c1_24 = arith.constant 1 : index
    %c0_25 = arith.constant 0 : index
    %18 = vector.load %arg14[%c0_22, %c0_23, %c1_24, %c0_25] : memref<1x18x18x64xf32, #tpu.memory_space<vmem>>, vector<1x16x16x32xf32>
    %19 = vector.shape_cast %18 : vector<1x16x16x32xf32> to vector<1x256x32xf32>
    %20 = arith.truncf %19 : vector<1x256x32xf32> to vector<1x256x32xbf16>
    %c0_26 = arith.constant 0 : index
    %c0_27 = arith.constant 0 : index
    %c32 = arith.constant 32 : index
    %21 = vector.load %arg15[%c0_26, %c0_27, %c32] : memref<1x256x288xbf16, #tpu.memory_space<vmem>>, vector<1x256x32xbf16>
    tpu.vector_store %arg15[%c0_26, %c0_27, %c32], %20 {strides = array<i32>} : memref<1x256x288xbf16, #tpu.memory_space<vmem>>, vector<1x256x32xbf16>,
    %c0_28 = arith.constant 0 : index
    %c0_29 = arith.constant 0 : index
    %c2 = arith.constant 2 : index
    %c0_30 = arith.constant 0 : index
    %22 = vector.load %arg14[%c0_28, %c0_29, %c2, %c0_30] : memref<1x18x18x64xf32, #tpu.memory_space<vmem>>, vector<1x16x16x32xf32>
    %23 = vector.shape_cast %22 : vector<1x16x16x32xf32> to vector<1x256x32xf32>
    %24 = arith.truncf %23 : vector<1x256x32xf32> to vector<1x256x32xbf16>
    %c0_31 = arith.constant 0 : index
    %c0_32 = arith.constant 0 : index
    %c64 = arith.constant 64 : index
    %25 = vector.load %arg15[%c0_31, %c0_32, %c64] : memref<1x256x288xbf16, #tpu.memory_space<vmem>>, vector<1x256x32xbf16>
    tpu.vector_store %arg15[%c0_31, %c0_32, %c64], %24 {strides = array<i32>} : memref<1x256x288xbf16, #tpu.memory_space<vmem>>, vector<1x256x32xbf16>,
    %c0_33 = arith.constant 0 : index
    %c1_34 = arith.constant 1 : index
    %c0_35 = arith.constant 0 : index
    %c0_36 = arith.constant 0 : index
    %26 = vector.load %arg14[%c0_33, %c1_34, %c0_35, %c0_36] : memref<1x18x18x64xf32, #tpu.memory_space<vmem>>, vector<1x16x16x32xf32>
    %27 = vector.shape_cast %26 : vector<1x16x16x32xf32> to vector<1x256x32xf32>
    %28 = arith.truncf %27 : vector<1x256x32xf32> to vector<1x256x32xbf16>
    %c0_37 = arith.constant 0 : index
    %c0_38 = arith.constant 0 : index
    %c96 = arith.constant 96 : index
    %29 = vector.load %arg15[%c0_37, %c0_38, %c96] : memref<1x256x288xbf16, #tpu.memory_space<vmem>>, vector<1x256x32xbf16>
    tpu.vector_store %arg15[%c0_37, %c0_38, %c96], %28 {strides = array<i32>} : memref<1x256x288xbf16, #tpu.memory_space<vmem>>, vector<1x256x32xbf16>,
    %c0_39 = arith.constant 0 : index
    %c1_40 = arith.constant 1 : index
    %c1_41 = arith.constant 1 : index
    %c0_42 = arith.constant 0 : index
    %30 = vector.load %arg14[%c0_39, %c1_40, %c1_41, %c0_42] : memref<1x18x18x64xf32, #tpu.memory_space<vmem>>, vector<1x16x16x32xf32>
    %31 = vector.shape_cast %30 : vector<1x16x16x32xf32> to vector<1x256x32xf32>
    %32 = arith.truncf %31 : vector<1x256x32xf32> to vector<1x256x32xbf16>
    %c0_43 = arith.constant 0 : index
    %c0_44 = arith.constant 0 : index
    %c128 = arith.constant 128 : index
    %33 = vector.load %arg15[%c0_43, %c0_44, %c128] : memref<1x256x288xbf16, #tpu.memory_space<vmem>>, vector<1x256x32xbf16>
    tpu.vector_store %arg15[%c0_43, %c0_44, %c128], %32 {strides = array<i32>} : memref<1x256x288xbf16, #tpu.memory_space<vmem>>, vector<1x256x32xbf16>,
    %c0_45 = arith.constant 0 : index
    %c1_46 = arith.constant 1 : index
    %c2_47 = arith.constant 2 : index
    %c0_48 = arith.constant 0 : index
    %34 = vector.load %arg14[%c0_45, %c1_46, %c2_47, %c0_48] : memref<1x18x18x64xf32, #tpu.memory_space<vmem>>, vector<1x16x16x32xf32>
    %35 = vector.shape_cast %34 : vector<1x16x16x32xf32> to vector<1x256x32xf32>
    %36 = arith.truncf %35 : vector<1x256x32xf32> to vector<1x256x32xbf16>
    %c0_49 = arith.constant 0 : index
    %c0_50 = arith.constant 0 : index
    %c160 = arith.constant 160 : index
    %37 = vector.load %arg15[%c0_49, %c0_50, %c160] : memref<1x256x288xbf16, #tpu.memory_space<vmem>>, vector<1x256x32xbf16>
    tpu.vector_store %arg15[%c0_49, %c0_50, %c160], %36 {strides = array<i32>} : memref<1x256x288xbf16, #tpu.memory_space<vmem>>, vector<1x256x32xbf16>,
    %c0_51 = arith.constant 0 : index
    %c2_52 = arith.constant 2 : index
    %c0_53 = arith.constant 0 : index
    %c0_54 = arith.constant 0 : index
    %38 = vector.load %arg14[%c0_51, %c2_52, %c0_53, %c0_54] : memref<1x18x18x64xf32, #tpu.memory_space<vmem>>, vector<1x16x16x32xf32>
    %39 = vector.shape_cast %38 : vector<1x16x16x32xf32> to vector<1x256x32xf32>
    %40 = arith.truncf %39 : vector<1x256x32xf32> to vector<1x256x32xbf16>
    %c0_55 = arith.constant 0 : index
    %c0_56 = arith.constant 0 : index
    %c192 = arith.constant 192 : index
    %41 = vector.load %arg15[%c0_55, %c0_56, %c192] : memref<1x256x288xbf16, #tpu.memory_space<vmem>>, vector<1x256x32xbf16>
    tpu.vector_store %arg15[%c0_55, %c0_56, %c192], %40 {strides = array<i32>} : memref<1x256x288xbf16, #tpu.memory_space<vmem>>, vector<1x256x32xbf16>,
    %c0_57 = arith.constant 0 : index
    %c2_58 = arith.constant 2 : index
    %c1_59 = arith.constant 1 : index
    %c0_60 = arith.constant 0 : index
    %42 = vector.load %arg14[%c0_57, %c2_58, %c1_59, %c0_60] : memref<1x18x18x64xf32, #tpu.memory_space<vmem>>, vector<1x16x16x32xf32>
    %43 = vector.shape_cast %42 : vector<1x16x16x32xf32> to vector<1x256x32xf32>
    %44 = arith.truncf %43 : vector<1x256x32xf32> to vector<1x256x32xbf16>
    %c0_61 = arith.constant 0 : index
    %c0_62 = arith.constant 0 : index
    %c224 = arith.constant 224 : index
    %45 = vector.load %arg15[%c0_61, %c0_62, %c224] : memref<1x256x288xbf16, #tpu.memory_space<vmem>>, vector<1x256x32xbf16>
    tpu.vector_store %arg15[%c0_61, %c0_62, %c224], %44 {strides = array<i32>} : memref<1x256x288xbf16, #tpu.memory_space<vmem>>, vector<1x256x32xbf16>,
    %c0_63 = arith.constant 0 : index
    %c2_64 = arith.constant 2 : index
    %c2_65 = arith.constant 2 : index
    %c0_66 = arith.constant 0 : index
    %46 = vector.load %arg14[%c0_63, %c2_64, %c2_65, %c0_66] : memref<1x18x18x64xf32, #tpu.memory_space<vmem>>, vector<1x16x16x32xf32>
    %47 = vector.shape_cast %46 : vector<1x16x16x32xf32> to vector<1x256x32xf32>
    %48 = arith.truncf %47 : vector<1x256x32xf32> to vector<1x256x32xbf16>
    %c0_67 = arith.constant 0 : index
    %c0_68 = arith.constant 0 : index
    %c256 = arith.constant 256 : index
    %49 = vector.load %arg15[%c0_67, %c0_68, %c256] : memref<1x256x288xbf16, #tpu.memory_space<vmem>>, vector<1x256x32xbf16>
    tpu.vector_store %arg15[%c0_67, %c0_68, %c256], %48 {strides = array<i32>} : memref<1x256x288xbf16, #tpu.memory_space<vmem>>, vector<1x256x32xbf16>,
    %c0_69 = arith.constant 0 : index
    %c0_70 = arith.constant 0 : index
    %c0_71 = arith.constant 0 : index
    %50 = vector.load %arg15[%c0_69, %c0_70, %c0_71] : memref<1x256x288xbf16, #tpu.memory_space<vmem>>, vector<1x256x288xbf16>
    %51 = vector.shape_cast %50 : vector<1x256x288xbf16> to vector<256x288xbf16>
    %c0_72 = arith.constant 0 : index
    %c0_73 = arith.constant 0 : index
    %52 = vector.load %arg5[%c0_72, %c0_73] : memref<288x32xbf16, #tpu.memory_space<vmem>>, vector<288x32xbf16>
    %cst_74 = arith.constant dense<0.000000e+00> : vector<256x32xf32>
    %53 = tpu.matmul %51, %52, %cst_74 {dimension_numbers = #tpu.dot_dimension_numbers<[1], [0], [0], [1], [0, 0, 1, 1], [], []>} : vector<256x288xbf16>, vector<288x32xbf16>, vector<256x32xf32> -> vector<256x32xf32>
    %c0_75 = arith.constant 0 : index
    %c0_76 = arith.constant 0 : index
    %54 = vector.load %arg6[%c0_75, %c0_76] : memref<1x32xf32, #tpu.memory_space<vmem>>, vector<1x32xf32>
    %55 = vector.broadcast %54 : vector<1x32xf32> to vector<256x32xf32>
    %56 = arith.addf %53, %55 : vector<256x32xf32>
    %cst_77 = arith.constant 0.000000e+00 : f32
    %57 = vector.broadcast %cst_77 : f32 to vector<256x32xf32>
    %58 = arith.maximumf %56, %57 : vector<256x32xf32>
    %c0_78 = arith.constant 0 : index
    %c0_79 = arith.constant 0 : index
    %c0_80 = arith.constant 0 : index
    %59 = vector.load %arg2[%c0_78, %c0_79, %c0_80] : memref<1x256x49xf32, #tpu.memory_space<vmem>>, vector<1x256x49xf32>
    %60 = vector.shape_cast %59 : vector<1x256x49xf32> to vector<256x49xf32>
    %61 = arith.truncf %60 : vector<256x49xf32> to vector<256x49xbf16>
    %c0_81 = arith.constant 0 : index
    %c0_82 = arith.constant 0 : index
    %62 = vector.load %arg7[%c0_81, %c0_82] : memref<49x32xbf16, #tpu.memory_space<vmem>>, vector<49x32xbf16>
    %cst_83 = arith.constant dense<0.000000e+00> : vector<256x32xf32>
    %63 = tpu.matmul %61, %62, %cst_83 {dimension_numbers = #tpu.dot_dimension_numbers<[1], [0], [0], [1], [0, 0, 1, 1], [], []>} : vector<256x49xbf16>, vector<49x32xbf16>, vector<256x32xf32> -> vector<256x32xf32>
    %c0_84 = arith.constant 0 : index
    %c0_85 = arith.constant 0 : index
    %64 = vector.load %arg8[%c0_84, %c0_85] : memref<1x32xf32, #tpu.memory_space<vmem>>, vector<1x32xf32>
    %65 = vector.broadcast %64 : vector<1x32xf32> to vector<256x32xf32>
    %66 = arith.addf %63, %65 : vector<256x32xf32>
    %cst_86 = arith.constant 0.000000e+00 : f32
    %67 = vector.broadcast %cst_86 : f32 to vector<256x32xf32>
    %68 = arith.maximumf %66, %67 : vector<256x32xf32>
    %69 = vector.shape_cast %68 : vector<256x32xf32> to vector<1x16x16x32xf32>
    %c0_87 = arith.constant 0 : index
    %c1_88 = arith.constant 1 : index
    %c1_89 = arith.constant 1 : index
    %c0_90 = arith.constant 0 : index
    %70 = vector.load %arg14[%c0_87, %c1_88, %c1_89, %c0_90] : memref<1x18x18x64xf32, #tpu.memory_space<vmem>>, vector<1x16x16x32xf32>
    tpu.vector_store %arg14[%c0_87, %c1_88, %c1_89, %c0_90], %69 {strides = array<i32>} : memref<1x18x18x64xf32, #tpu.memory_space<vmem>>, vector<1x16x16x32xf32>,
    %c0_91 = arith.constant 0 : index
    %c0_92 = arith.constant 0 : index
    %c0_93 = arith.constant 0 : index
    %c0_94 = arith.constant 0 : index
    %71 = vector.load %arg14[%c0_91, %c0_92, %c0_93, %c0_94] : memref<1x18x18x64xf32, #tpu.memory_space<vmem>>, vector<1x16x16x32xf32>
    %72 = vector.shape_cast %71 : vector<1x16x16x32xf32> to vector<1x256x32xf32>
    %73 = arith.truncf %72 : vector<1x256x32xf32> to vector<1x256x32xbf16>
    %c0_95 = arith.constant 0 : index
    %c0_96 = arith.constant 0 : index
    %c0_97 = arith.constant 0 : index
    %74 = vector.load %arg15[%c0_95, %c0_96, %c0_97] : memref<1x256x288xbf16, #tpu.memory_space<vmem>>, vector<1x256x32xbf16>
    tpu.vector_store %arg15[%c0_95, %c0_96, %c0_97], %73 {strides = array<i32>} : memref<1x256x288xbf16, #tpu.memory_space<vmem>>, vector<1x256x32xbf16>,
    %c0_98 = arith.constant 0 : index
    %c0_99 = arith.constant 0 : index
    %c1_100 = arith.constant 1 : index
    %c0_101 = arith.constant 0 : index
    %75 = vector.load %arg14[%c0_98, %c0_99, %c1_100, %c0_101] : memref<1x18x18x64xf32, #tpu.memory_space<vmem>>, vector<1x16x16x32xf32>
    %76 = vector.shape_cast %75 : vector<1x16x16x32xf32> to vector<1x256x32xf32>
    %77 = arith.truncf %76 : vector<1x256x32xf32> to vector<1x256x32xbf16>
    %c0_102 = arith.constant 0 : index
    %c0_103 = arith.constant 0 : index
    %c32_104 = arith.constant 32 : index
    %78 = vector.load %arg15[%c0_102, %c0_103, %c32_104] : memref<1x256x288xbf16, #tpu.memory_space<vmem>>, vector<1x256x32xbf16>
    tpu.vector_store %arg15[%c0_102, %c0_103, %c32_104], %77 {strides = array<i32>} : memref<1x256x288xbf16, #tpu.memory_space<vmem>>, vector<1x256x32xbf16>,
    %c0_105 = arith.constant 0 : index
    %c0_106 = arith.constant 0 : index
    %c2_107 = arith.constant 2 : index
    %c0_108 = arith.constant 0 : index
    %79 = vector.load %arg14[%c0_105, %c0_106, %c2_107, %c0_108] : memref<1x18x18x64xf32, #tpu.memory_space<vmem>>, vector<1x16x16x32xf32>
    %80 = vector.shape_cast %79 : vector<1x16x16x32xf32> to vector<1x256x32xf32>
    %81 = arith.truncf %80 : vector<1x256x32xf32> to vector<1x256x32xbf16>
    %c0_109 = arith.constant 0 : index
    %c0_110 = arith.constant 0 : index
    %c64_111 = arith.constant 64 : index
    %82 = vector.load %arg15[%c0_109, %c0_110, %c64_111] : memref<1x256x288xbf16, #tpu.memory_space<vmem>>, vector<1x256x32xbf16>
    tpu.vector_store %arg15[%c0_109, %c0_110, %c64_111], %81 {strides = array<i32>} : memref<1x256x288xbf16, #tpu.memory_space<vmem>>, vector<1x256x32xbf16>,
    %c0_112 = arith.constant 0 : index
    %c1_113 = arith.constant 1 : index
    %c0_114 = arith.constant 0 : index
    %c0_115 = arith.constant 0 : index
    %83 = vector.load %arg14[%c0_112, %c1_113, %c0_114, %c0_115] : memref<1x18x18x64xf32, #tpu.memory_space<vmem>>, vector<1x16x16x32xf32>
    %84 = vector.shape_cast %83 : vector<1x16x16x32xf32> to vector<1x256x32xf32>
    %85 = arith.truncf %84 : vector<1x256x32xf32> to vector<1x256x32xbf16>
    %c0_116 = arith.constant 0 : index
    %c0_117 = arith.constant 0 : index
    %c96_118 = arith.constant 96 : index
    %86 = vector.load %arg15[%c0_116, %c0_117, %c96_118] : memref<1x256x288xbf16, #tpu.memory_space<vmem>>, vector<1x256x32xbf16>
    tpu.vector_store %arg15[%c0_116, %c0_117, %c96_118], %85 {strides = array<i32>} : memref<1x256x288xbf16, #tpu.memory_space<vmem>>, vector<1x256x32xbf16>,
    %c0_119 = arith.constant 0 : index
    %c1_120 = arith.constant 1 : index
    %c1_121 = arith.constant 1 : index
    %c0_122 = arith.constant 0 : index
    %87 = vector.load %arg14[%c0_119, %c1_120, %c1_121, %c0_122] : memref<1x18x18x64xf32, #tpu.memory_space<vmem>>, vector<1x16x16x32xf32>
    %88 = vector.shape_cast %87 : vector<1x16x16x32xf32> to vector<1x256x32xf32>
    %89 = arith.truncf %88 : vector<1x256x32xf32> to vector<1x256x32xbf16>
    %c0_123 = arith.constant 0 : index
    %c0_124 = arith.constant 0 : index
    %c128_125 = arith.constant 128 : index
    %90 = vector.load %arg15[%c0_123, %c0_124, %c128_125] : memref<1x256x288xbf16, #tpu.memory_space<vmem>>, vector<1x256x32xbf16>
    tpu.vector_store %arg15[%c0_123, %c0_124, %c128_125], %89 {strides = array<i32>} : memref<1x256x288xbf16, #tpu.memory_space<vmem>>, vector<1x256x32xbf16>,
    %c0_126 = arith.constant 0 : index
    %c1_127 = arith.constant 1 : index
    %c2_128 = arith.constant 2 : index
    %c0_129 = arith.constant 0 : index
    %91 = vector.load %arg14[%c0_126, %c1_127, %c2_128, %c0_129] : memref<1x18x18x64xf32, #tpu.memory_space<vmem>>, vector<1x16x16x32xf32>
    %92 = vector.shape_cast %91 : vector<1x16x16x32xf32> to vector<1x256x32xf32>
    %93 = arith.truncf %92 : vector<1x256x32xf32> to vector<1x256x32xbf16>
    %c0_130 = arith.constant 0 : index
    %c0_131 = arith.constant 0 : index
    %c160_132 = arith.constant 160 : index
    %94 = vector.load %arg15[%c0_130, %c0_131, %c160_132] : memref<1x256x288xbf16, #tpu.memory_space<vmem>>, vector<1x256x32xbf16>
    tpu.vector_store %arg15[%c0_130, %c0_131, %c160_132], %93 {strides = array<i32>} : memref<1x256x288xbf16, #tpu.memory_space<vmem>>, vector<1x256x32xbf16>,
    %c0_133 = arith.constant 0 : index
    %c2_134 = arith.constant 2 : index
    %c0_135 = arith.constant 0 : index
    %c0_136 = arith.constant 0 : index
    %95 = vector.load %arg14[%c0_133, %c2_134, %c0_135, %c0_136] : memref<1x18x18x64xf32, #tpu.memory_space<vmem>>, vector<1x16x16x32xf32>
    %96 = vector.shape_cast %95 : vector<1x16x16x32xf32> to vector<1x256x32xf32>
    %97 = arith.truncf %96 : vector<1x256x32xf32> to vector<1x256x32xbf16>
    %c0_137 = arith.constant 0 : index
    %c0_138 = arith.constant 0 : index
    %c192_139 = arith.constant 192 : index
    %98 = vector.load %arg15[%c0_137, %c0_138, %c192_139] : memref<1x256x288xbf16, #tpu.memory_space<vmem>>, vector<1x256x32xbf16>
    tpu.vector_store %arg15[%c0_137, %c0_138, %c192_139], %97 {strides = array<i32>} : memref<1x256x288xbf16, #tpu.memory_space<vmem>>, vector<1x256x32xbf16>,
    %c0_140 = arith.constant 0 : index
    %c2_141 = arith.constant 2 : index
    %c1_142 = arith.constant 1 : index
    %c0_143 = arith.constant 0 : index
    %99 = vector.load %arg14[%c0_140, %c2_141, %c1_142, %c0_143] : memref<1x18x18x64xf32, #tpu.memory_space<vmem>>, vector<1x16x16x32xf32>
    %100 = vector.shape_cast %99 : vector<1x16x16x32xf32> to vector<1x256x32xf32>
    %101 = arith.truncf %100 : vector<1x256x32xf32> to vector<1x256x32xbf16>
    %c0_144 = arith.constant 0 : index
    %c0_145 = arith.constant 0 : index
    %c224_146 = arith.constant 224 : index
    %102 = vector.load %arg15[%c0_144, %c0_145, %c224_146] : memref<1x256x288xbf16, #tpu.memory_space<vmem>>, vector<1x256x32xbf16>
    tpu.vector_store %arg15[%c0_144, %c0_145, %c224_146], %101 {strides = array<i32>} : memref<1x256x288xbf16, #tpu.memory_space<vmem>>, vector<1x256x32xbf16>,
    %c0_147 = arith.constant 0 : index
    %c2_148 = arith.constant 2 : index
    %c2_149 = arith.constant 2 : index
    %c0_150 = arith.constant 0 : index
    %103 = vector.load %arg14[%c0_147, %c2_148, %c2_149, %c0_150] : memref<1x18x18x64xf32, #tpu.memory_space<vmem>>, vector<1x16x16x32xf32>
    %104 = vector.shape_cast %103 : vector<1x16x16x32xf32> to vector<1x256x32xf32>
    %105 = arith.truncf %104 : vector<1x256x32xf32> to vector<1x256x32xbf16>
    %c0_151 = arith.constant 0 : index
    %c0_152 = arith.constant 0 : index
    %c256_153 = arith.constant 256 : index
    %106 = vector.load %arg15[%c0_151, %c0_152, %c256_153] : memref<1x256x288xbf16, #tpu.memory_space<vmem>>, vector<1x256x32xbf16>
    tpu.vector_store %arg15[%c0_151, %c0_152, %c256_153], %105 {strides = array<i32>} : memref<1x256x288xbf16, #tpu.memory_space<vmem>>, vector<1x256x32xbf16>,
    %c0_154 = arith.constant 0 : index
    %c0_155 = arith.constant 0 : index
    %c0_156 = arith.constant 0 : index
    %107 = vector.load %arg15[%c0_154, %c0_155, %c0_156] : memref<1x256x288xbf16, #tpu.memory_space<vmem>>, vector<1x256x288xbf16>
    %108 = vector.shape_cast %107 : vector<1x256x288xbf16> to vector<256x288xbf16>
    %c0_157 = arith.constant 0 : index
    %c0_158 = arith.constant 0 : index
    %109 = vector.load %arg9[%c0_157, %c0_158] : memref<288x32xbf16, #tpu.memory_space<vmem>>, vector<288x32xbf16>
    %cst_159 = arith.constant dense<0.000000e+00> : vector<256x32xf32>
    %110 = tpu.matmul %108, %109, %cst_159 {dimension_numbers = #tpu.dot_dimension_numbers<[1], [0], [0], [1], [0, 0, 1, 1], [], []>} : vector<256x288xbf16>, vector<288x32xbf16>, vector<256x32xf32> -> vector<256x32xf32>
    %c0_160 = arith.constant 0 : index
    %c0_161 = arith.constant 0 : index
    %111 = vector.load %arg10[%c0_160, %c0_161] : memref<1x32xf32, #tpu.memory_space<vmem>>, vector<1x32xf32>
    %112 = vector.broadcast %111 : vector<1x32xf32> to vector<256x32xf32>
    %113 = arith.addf %110, %112 : vector<256x32xf32>
    %cst_162 = arith.constant 0.000000e+00 : f32
    %114 = vector.broadcast %cst_162 : f32 to vector<256x32xf32>
    %115 = arith.maximumf %113, %114 : vector<256x32xf32>
    %116 = vector.shape_cast %58 : vector<256x32xf32> to vector<1x16x16x32xf32>
    %c0_163 = arith.constant 0 : index
    %c1_164 = arith.constant 1 : index
    %c1_165 = arith.constant 1 : index
    %c0_166 = arith.constant 0 : index
    %117 = vector.load %arg14[%c0_163, %c1_164, %c1_165, %c0_166] : memref<1x18x18x64xf32, #tpu.memory_space<vmem>>, vector<1x16x16x32xf32>
    tpu.vector_store %arg14[%c0_163, %c1_164, %c1_165, %c0_166], %116 {strides = array<i32>} : memref<1x18x18x64xf32, #tpu.memory_space<vmem>>, vector<1x16x16x32xf32>,
    %118 = vector.shape_cast %115 : vector<256x32xf32> to vector<1x16x16x32xf32>
    %c0_167 = arith.constant 0 : index
    %c1_168 = arith.constant 1 : index
    %c1_169 = arith.constant 1 : index
    %c32_170 = arith.constant 32 : index
    %119 = vector.load %arg14[%c0_167, %c1_168, %c1_169, %c32_170] : memref<1x18x18x64xf32, #tpu.memory_space<vmem>>, vector<1x16x16x32xf32>
    tpu.vector_store %arg14[%c0_167, %c1_168, %c1_169, %c32_170], %118 {strides = array<i32>} : memref<1x18x18x64xf32, #tpu.memory_space<vmem>>, vector<1x16x16x32xf32>,
    %c0_171 = arith.constant 0 : index
    %c0_172 = arith.constant 0 : index
    %c0_173 = arith.constant 0 : index
    %c0_174 = arith.constant 0 : index
    %120 = vector.load %arg14[%c0_171, %c0_172, %c0_173, %c0_174] : memref<1x18x18x64xf32, #tpu.memory_space<vmem>>, vector<1x16x16x64xf32>
    %121 = vector.shape_cast %120 : vector<1x16x16x64xf32> to vector<1x256x64xf32>
    %122 = arith.truncf %121 : vector<1x256x64xf32> to vector<1x256x64xbf16>
    %c0_175 = arith.constant 0 : index
    %c0_176 = arith.constant 0 : index
    %c0_177 = arith.constant 0 : index
    %123 = vector.load %arg16[%c0_175, %c0_176, %c0_177] : memref<1x256x576xbf16, #tpu.memory_space<vmem>>, vector<1x256x64xbf16>
    tpu.vector_store %arg16[%c0_175, %c0_176, %c0_177], %122 {strides = array<i32>} : memref<1x256x576xbf16, #tpu.memory_space<vmem>>, vector<1x256x64xbf16>,
    %c0_178 = arith.constant 0 : index
    %c0_179 = arith.constant 0 : index
    %c1_180 = arith.constant 1 : index
    %c0_181 = arith.constant 0 : index
    %124 = vector.load %arg14[%c0_178, %c0_179, %c1_180, %c0_181] : memref<1x18x18x64xf32, #tpu.memory_space<vmem>>, vector<1x16x16x64xf32>
    %125 = vector.shape_cast %124 : vector<1x16x16x64xf32> to vector<1x256x64xf32>
    %126 = arith.truncf %125 : vector<1x256x64xf32> to vector<1x256x64xbf16>
    %c0_182 = arith.constant 0 : index
    %c0_183 = arith.constant 0 : index
    %c64_184 = arith.constant 64 : index
    %127 = vector.load %arg16[%c0_182, %c0_183, %c64_184] : memref<1x256x576xbf16, #tpu.memory_space<vmem>>, vector<1x256x64xbf16>
    tpu.vector_store %arg16[%c0_182, %c0_183, %c64_184], %126 {strides = array<i32>} : memref<1x256x576xbf16, #tpu.memory_space<vmem>>, vector<1x256x64xbf16>,
    %c0_185 = arith.constant 0 : index
    %c0_186 = arith.constant 0 : index
    %c2_187 = arith.constant 2 : index
    %c0_188 = arith.constant 0 : index
    %128 = vector.load %arg14[%c0_185, %c0_186, %c2_187, %c0_188] : memref<1x18x18x64xf32, #tpu.memory_space<vmem>>, vector<1x16x16x64xf32>
    %129 = vector.shape_cast %128 : vector<1x16x16x64xf32> to vector<1x256x64xf32>
    %130 = arith.truncf %129 : vector<1x256x64xf32> to vector<1x256x64xbf16>
    %c0_189 = arith.constant 0 : index
    %c0_190 = arith.constant 0 : index
    %c128_191 = arith.constant 128 : index
    %131 = vector.load %arg16[%c0_189, %c0_190, %c128_191] : memref<1x256x576xbf16, #tpu.memory_space<vmem>>, vector<1x256x64xbf16>
    tpu.vector_store %arg16[%c0_189, %c0_190, %c128_191], %130 {strides = array<i32>} : memref<1x256x576xbf16, #tpu.memory_space<vmem>>, vector<1x256x64xbf16>,
    %c0_192 = arith.constant 0 : index
    %c1_193 = arith.constant 1 : index
    %c0_194 = arith.constant 0 : index
    %c0_195 = arith.constant 0 : index
    %132 = vector.load %arg14[%c0_192, %c1_193, %c0_194, %c0_195] : memref<1x18x18x64xf32, #tpu.memory_space<vmem>>, vector<1x16x16x64xf32>
    %133 = vector.shape_cast %132 : vector<1x16x16x64xf32> to vector<1x256x64xf32>
    %134 = arith.truncf %133 : vector<1x256x64xf32> to vector<1x256x64xbf16>
    %c0_196 = arith.constant 0 : index
    %c0_197 = arith.constant 0 : index
    %c192_198 = arith.constant 192 : index
    %135 = vector.load %arg16[%c0_196, %c0_197, %c192_198] : memref<1x256x576xbf16, #tpu.memory_space<vmem>>, vector<1x256x64xbf16>
    tpu.vector_store %arg16[%c0_196, %c0_197, %c192_198], %134 {strides = array<i32>} : memref<1x256x576xbf16, #tpu.memory_space<vmem>>, vector<1x256x64xbf16>,
    %c0_199 = arith.constant 0 : index
    %c1_200 = arith.constant 1 : index
    %c1_201 = arith.constant 1 : index
    %c0_202 = arith.constant 0 : index
    %136 = vector.load %arg14[%c0_199, %c1_200, %c1_201, %c0_202] : memref<1x18x18x64xf32, #tpu.memory_space<vmem>>, vector<1x16x16x64xf32>
    %137 = vector.shape_cast %136 : vector<1x16x16x64xf32> to vector<1x256x64xf32>
    %138 = arith.truncf %137 : vector<1x256x64xf32> to vector<1x256x64xbf16>
    %c0_203 = arith.constant 0 : index
    %c0_204 = arith.constant 0 : index
    %c256_205 = arith.constant 256 : index
    %139 = vector.load %arg16[%c0_203, %c0_204, %c256_205] : memref<1x256x576xbf16, #tpu.memory_space<vmem>>, vector<1x256x64xbf16>
    tpu.vector_store %arg16[%c0_203, %c0_204, %c256_205], %138 {strides = array<i32>} : memref<1x256x576xbf16, #tpu.memory_space<vmem>>, vector<1x256x64xbf16>,
    %c0_206 = arith.constant 0 : index
    %c1_207 = arith.constant 1 : index
    %c2_208 = arith.constant 2 : index
    %c0_209 = arith.constant 0 : index
    %140 = vector.load %arg14[%c0_206, %c1_207, %c2_208, %c0_209] : memref<1x18x18x64xf32, #tpu.memory_space<vmem>>, vector<1x16x16x64xf32>
    %141 = vector.shape_cast %140 : vector<1x16x16x64xf32> to vector<1x256x64xf32>
    %142 = arith.truncf %141 : vector<1x256x64xf32> to vector<1x256x64xbf16>
    %c0_210 = arith.constant 0 : index
    %c0_211 = arith.constant 0 : index
    %c320 = arith.constant 320 : index
    %143 = vector.load %arg16[%c0_210, %c0_211, %c320] : memref<1x256x576xbf16, #tpu.memory_space<vmem>>, vector<1x256x64xbf16>
    tpu.vector_store %arg16[%c0_210, %c0_211, %c320], %142 {strides = array<i32>} : memref<1x256x576xbf16, #tpu.memory_space<vmem>>, vector<1x256x64xbf16>,
    %c0_212 = arith.constant 0 : index
    %c2_213 = arith.constant 2 : index
    %c0_214 = arith.constant 0 : index
    %c0_215 = arith.constant 0 : index
    %144 = vector.load %arg14[%c0_212, %c2_213, %c0_214, %c0_215] : memref<1x18x18x64xf32, #tpu.memory_space<vmem>>, vector<1x16x16x64xf32>
    %145 = vector.shape_cast %144 : vector<1x16x16x64xf32> to vector<1x256x64xf32>
    %146 = arith.truncf %145 : vector<1x256x64xf32> to vector<1x256x64xbf16>
    %c0_216 = arith.constant 0 : index
    %c0_217 = arith.constant 0 : index
    %c384 = arith.constant 384 : index
    %147 = vector.load %arg16[%c0_216, %c0_217, %c384] : memref<1x256x576xbf16, #tpu.memory_space<vmem>>, vector<1x256x64xbf16>
    tpu.vector_store %arg16[%c0_216, %c0_217, %c384], %146 {strides = array<i32>} : memref<1x256x576xbf16, #tpu.memory_space<vmem>>, vector<1x256x64xbf16>,
    %c0_218 = arith.constant 0 : index
    %c2_219 = arith.constant 2 : index
    %c1_220 = arith.constant 1 : index
    %c0_221 = arith.constant 0 : index
    %148 = vector.load %arg14[%c0_218, %c2_219, %c1_220, %c0_221] : memref<1x18x18x64xf32, #tpu.memory_space<vmem>>, vector<1x16x16x64xf32>
    %149 = vector.shape_cast %148 : vector<1x16x16x64xf32> to vector<1x256x64xf32>
    %150 = arith.truncf %149 : vector<1x256x64xf32> to vector<1x256x64xbf16>
    %c0_222 = arith.constant 0 : index
    %c0_223 = arith.constant 0 : index
    %c448 = arith.constant 448 : index
    %151 = vector.load %arg16[%c0_222, %c0_223, %c448] : memref<1x256x576xbf16, #tpu.memory_space<vmem>>, vector<1x256x64xbf16>
    tpu.vector_store %arg16[%c0_222, %c0_223, %c448], %150 {strides = array<i32>} : memref<1x256x576xbf16, #tpu.memory_space<vmem>>, vector<1x256x64xbf16>,
    %c0_224 = arith.constant 0 : index
    %c2_225 = arith.constant 2 : index
    %c2_226 = arith.constant 2 : index
    %c0_227 = arith.constant 0 : index
    %152 = vector.load %arg14[%c0_224, %c2_225, %c2_226, %c0_227] : memref<1x18x18x64xf32, #tpu.memory_space<vmem>>, vector<1x16x16x64xf32>
    %153 = vector.shape_cast %152 : vector<1x16x16x64xf32> to vector<1x256x64xf32>
    %154 = arith.truncf %153 : vector<1x256x64xf32> to vector<1x256x64xbf16>
    %c0_228 = arith.constant 0 : index
    %c0_229 = arith.constant 0 : index
    %c512 = arith.constant 512 : index
    %155 = vector.load %arg16[%c0_228, %c0_229, %c512] : memref<1x256x576xbf16, #tpu.memory_space<vmem>>, vector<1x256x64xbf16>
    tpu.vector_store %arg16[%c0_228, %c0_229, %c512], %154 {strides = array<i32>} : memref<1x256x576xbf16, #tpu.memory_space<vmem>>, vector<1x256x64xbf16>,
    %c0_230 = arith.constant 0 : index
    %c0_231 = arith.constant 0 : index
    %c0_232 = arith.constant 0 : index
    %156 = vector.load %arg16[%c0_230, %c0_231, %c0_232] : memref<1x256x576xbf16, #tpu.memory_space<vmem>>, vector<1x256x576xbf16>
    %157 = vector.shape_cast %156 : vector<1x256x576xbf16> to vector<256x576xbf16>
    %c0_233 = arith.constant 0 : index
    %c0_234 = arith.constant 0 : index
    %158 = vector.load %arg11[%c0_233, %c0_234] : memref<576x64xbf16, #tpu.memory_space<vmem>>, vector<576x64xbf16>
    %cst_235 = arith.constant dense<0.000000e+00> : vector<256x64xf32>
    %159 = tpu.matmul %157, %158, %cst_235 {dimension_numbers = #tpu.dot_dimension_numbers<[1], [0], [0], [1], [0, 0, 1, 1], [], []>} : vector<256x576xbf16>, vector<576x64xbf16>, vector<256x64xf32> -> vector<256x64xf32>
    %c0_236 = arith.constant 0 : index
    %c0_237 = arith.constant 0 : index
    %160 = vector.load %arg12[%c0_236, %c0_237] : memref<1x64xf32, #tpu.memory_space<vmem>>, vector<1x64xf32>
    %161 = vector.broadcast %160 : vector<1x64xf32> to vector<256x64xf32>
    %162 = arith.addf %159, %161 : vector<256x64xf32>
    %cst_238 = arith.constant 0.000000e+00 : f32
    %163 = vector.broadcast %cst_238 : f32 to vector<256x64xf32>
    %164 = arith.maximumf %162, %163 : vector<256x64xf32>
    %165 = tpu.iota {dimensions = array<i32: 1>} : vector<1x64xi32>
    %c63_i32 = arith.constant 63 : i32
    %166 = vector.broadcast %c63_i32 : i32 to vector<1x64xi32>
    %167 = arith.cmpi eq, %165, %166 : vector<1x64xi32>
    %168 = arith.extui %167 : vector<1x64xi1> to vector<1x64xi32>
    %169 = arith.sitofp %168 : vector<1x64xi32> to vector<1x64xf32>
    %170 = vector.extract_strided_slice %60 {offsets = [0, 24], sizes = [256, 1], strides = [1, 1]} : vector<256x49xf32> to vector<256x1xf32>
    %171 = vector.broadcast %170 : vector<256x1xf32> to vector<256x64xf32>
    %172 = vector.broadcast %169 : vector<1x64xf32> to vector<256x64xf32>
    %173 = arith.mulf %171, %172 : vector<256x64xf32>
    %174 = arith.addf %164, %173 : vector<256x64xf32>
    %175 = vector.shape_cast %174 : vector<256x64xf32> to vector<1x256x64xf32>
    %c0_239 = arith.constant 0 : index
    %c0_240 = arith.constant 0 : index
    %c0_241 = arith.constant 0 : index
    %176 = vector.load %arg13[%c0_239, %c0_240, %c0_241] : memref<1x256x64xf32, #tpu.memory_space<vmem>>, vector<1x256x64xf32>
    tpu.vector_store %arg13[%c0_239, %c0_240, %c0_241], %175 {strides = array<i32>} : memref<1x256x64xf32, #tpu.memory_space<vmem>>, vector<1x256x64xf32>,
    return
  }
  func.func @transform_0(%arg0: i32) -> (i32, i32, i32) {
    %c0_i32 = arith.constant 0 : i32
    %c0_i32_0 = arith.constant 0 : i32
    %c0_i32_1 = arith.constant 0 : i32
    return %arg0, %c0_i32, %c0_i32_0 : i32, i32, i32
  }
  func.func @transform_1(%arg0: i32) -> (i32, i32, i32) {
    %c0_i32 = arith.constant 0 : i32
    %c0_i32_0 = arith.constant 0 : i32
    %c0_i32_1 = arith.constant 0 : i32
    return %arg0, %c0_i32, %c0_i32_0 : i32, i32, i32
  }
  func.func @transform_2(%arg0: i32) -> (i32, i32) {
    %c0_i32 = arith.constant 0 : i32
    %c0_i32_0 = arith.constant 0 : i32
    %c0_i32_1 = arith.constant 0 : i32
    return %c0_i32, %c0_i32_0 : i32, i32
  }
  func.func @transform_3(%arg0: i32) -> (i32, i32) {
    %c0_i32 = arith.constant 0 : i32
    %c0_i32_0 = arith.constant 0 : i32
    %c0_i32_1 = arith.constant 0 : i32
    return %c0_i32, %c0_i32_0 : i32, i32
  }
  func.func @transform_4(%arg0: i32) -> (i32, i32) {
    %c0_i32 = arith.constant 0 : i32
    %c0_i32_0 = arith.constant 0 : i32
    %c0_i32_1 = arith.constant 0 : i32
    return %c0_i32, %c0_i32_0 : i32, i32
  }
  func.func @transform_5(%arg0: i32) -> (i32, i32) {
    %c0_i32 = arith.constant 0 : i32
    %c0_i32_0 = arith.constant 0 : i32
    %c0_i32_1 = arith.constant 0 : i32
    return %c0_i32, %c0_i32_0 : i32, i32
  }
  func.func @transform_6(%arg0: i32) -> (i32, i32) {
    %c0_i32 = arith.constant 0 : i32
    %c0_i32_0 = arith.constant 0 : i32
    %c0_i32_1 = arith.constant 0 : i32
    return %c0_i32, %c0_i32_0 : i32, i32
  }
  func.func @transform_7(%arg0: i32) -> (i32, i32) {
    %c0_i32 = arith.constant 0 : i32
    %c0_i32_0 = arith.constant 0 : i32
    %c0_i32_1 = arith.constant 0 : i32
    return %c0_i32, %c0_i32_0 : i32, i32
  }
  func.func @transform_8(%arg0: i32) -> (i32, i32) {
    %c0_i32 = arith.constant 0 : i32
    %c0_i32_0 = arith.constant 0 : i32
    %c0_i32_1 = arith.constant 0 : i32
    return %c0_i32, %c0_i32_0 : i32, i32
  }
  func.func @transform_9(%arg0: i32) -> (i32, i32) {
    %c0_i32 = arith.constant 0 : i32
    %c0_i32_0 = arith.constant 0 : i32
    %c0_i32_1 = arith.constant 0 : i32
    return %c0_i32, %c0_i32_0 : i32, i32
  }
  func.func @transform_10(%arg0: i32) -> (i32, i32) {
    %c0_i32 = arith.constant 0 : i32
    %c0_i32_0 = arith.constant 0 : i32
    %c0_i32_1 = arith.constant 0 : i32
    return %c0_i32, %c0_i32_0 : i32, i32
  }
  func.func @transform_11(%arg0: i32) -> (i32, i32) {
    %c0_i32 = arith.constant 0 : i32
    %c0_i32_0 = arith.constant 0 : i32
    %c0_i32_1 = arith.constant 0 : i32
    return %c0_i32, %c0_i32_0 : i32, i32
  }
  func.func @transform_12(%arg0: i32) -> (i32, i32, i32) {
    %c0_i32 = arith.constant 0 : i32
    %c0_i32_0 = arith.constant 0 : i32
    %c0_i32_1 = arith.constant 0 : i32
    return %arg0, %c0_i32, %c0_i32_0 : i32, i32, i32
  }
}

</mosaic_0001>

<llo_original>
// kernel: tpu_custom_call.1
$region0: #{tpu_custom_call.1}
  #allocation0 [shape = 'u32[]', space=smem, size = 0x4, offset = 0x4, fixed_abs, tag = 'smem constant byte address 0x4 - core index']
  #allocation1 [shape = 'u32[144,128]{1,0:T(1,128)}', space=vmem, size = 0x12000, scoped, tag = 'internal scratch']
  #allocation2 [shape = 'f32[1,18,18,64]{3,2,1,0:T(8,128)}', space=vmem, size = 0x36000, scoped, tag = 'scratch operand']
  #allocation3 [shape = 'bf16[1,256,288]{2,1,0:T(16,128)(2,1)}', space=vmem, size = 0x30000, scoped, tag = 'scratch operand']
  #allocation4 [shape = 'bf16[1,256,576]{2,1,0:T(16,128)(2,1)}', space=vmem, size = 0x50000, scoped, tag = 'scratch operand']
  %s0 = inlined_call_operand.vmem [shape: f32[2,256,10], index: 0, kind: input, shape index: {}]
  %s1 = inlined_call_operand.vmem [shape: f32[2,256,49], index: 1, kind: input, shape index: {}]
  %s2 = inlined_call_operand.vmem [shape: bf16[10,32], index: 2, kind: input, shape index: {}]
  %s3 = inlined_call_operand.vmem [shape: f32[1,32], index: 3, kind: input, shape index: {}]
  %s4 = inlined_call_operand.vmem [shape: bf16[288,32], index: 4, kind: input, shape index: {}]
  %s5 = inlined_call_operand.vmem [shape: f32[1,32], index: 5, kind: input, shape index: {}]
  %s6 = inlined_call_operand.vmem [shape: bf16[49,32], index: 6, kind: input, shape index: {}]
  %s7 = inlined_call_operand.vmem [shape: f32[1,32], index: 7, kind: input, shape index: {}]
  %s8 = inlined_call_operand.vmem [shape: bf16[288,32], index: 8, kind: input, shape index: {}]
  %s9 = inlined_call_operand.vmem [shape: f32[1,32], index: 9, kind: input, shape index: {}]
  %s10 = inlined_call_operand.vmem [shape: bf16[576,64], index: 10, kind: input, shape index: {}]
  %s11 = inlined_call_operand.vmem [shape: f32[1,64], index: 11, kind: input, shape index: {}]
  %s12 = inlined_call_operand.vmem [shape: f32[2,256,64], index: 12, kind: output, shape index: {}]
  %s13 = sld [smem:[#allocation0]]
  $region81: #{tpu_custom_call.1} parent=0
    _
  %s15 = ssub.s32 1, %s13
  %s16 = scalar_select 0, %s15, %s13
  loop: start=0, step=1, limit=4
  $region2: #{tpu_custom_call.1} parent=0 // loop_pre_header
    _
  $region3: #{tpu_custom_call.1} parent=0 // loop_header
    %s18 = sphi 0, %s22
    %p19 = scmp.ge.s32.totalorder %s18, 4
    %s28 = sphi 0, %s30
    %s31 = sphi 0, %s28
    %s32 = sphi 0, %s31
    %s48 = sphi 0, %s32
    %s54 = sphi 0, %s56
    %s57 = sphi 0, %s54
    %s58 = sphi 0, %s57
    %s74 = sphi 0, %s58
    %s78 = sphi 0, %s78
    %s80 = sphi 0, %s78
    %s81 = sphi 0, %s80
    %s95 = sphi 0, %s81
    %s99 = sphi 0, %s99
    %s101 = sphi 0, %s99
    %s102 = sphi 0, %s101
    %s116 = sphi 0, %s102
    %s120 = sphi 0, %s120
    %s122 = sphi 0, %s120
    %s123 = sphi 0, %s122
    %s137 = sphi 0, %s123
    %s141 = sphi 0, %s141
    %s143 = sphi 0, %s141
    %s144 = sphi 0, %s143
    %s158 = sphi 0, %s144
    %s162 = sphi 0, %s162
    %s164 = sphi 0, %s162
    %s165 = sphi 0, %s164
    %s179 = sphi 0, %s165
    %s183 = sphi 0, %s183
    %s185 = sphi 0, %s183
    %s186 = sphi 0, %s185
    %s200 = sphi 0, %s186
    %s204 = sphi 0, %s204
    %s206 = sphi 0, %s204
    %s207 = sphi 0, %s206
    %s221 = sphi 0, %s207
    %s225 = sphi 0, %s225
    %s227 = sphi 0, %s225
    %s228 = sphi 0, %s227
    %s242 = sphi 0, %s228
    %s246 = sphi 0, %s246
    %s248 = sphi 0, %s246
    %s249 = sphi 0, %s248
    %s263 = sphi 0, %s249
    %s267 = sphi 0, %s267
    %s269 = sphi 0, %s267
    %s270 = sphi 0, %s269
    %s284 = sphi 0, %s270
    %s290 = sphi 0, %s292
    %s293 = sphi 0, %s290
    %s294 = sphi 0, %s293
    %s310 = sphi 0, %s294
  $region4: #{tpu_custom_call.1} parent=0 // loop_header_branch
    %21 = sbr.rel (%p19) target = $region8
  $region5: #{tpu_custom_call.1} parent=0 // loop_body
    %s23 = ssub.s32 %s18, 1
    %s24 = ssub.s32 %s18, 2
    %s25 = sadd.s32 %s18, 1
    %s26 = ssub.s32 %s18, %s25
    %p27 = scmp.eq.s32.totalorder %s26, 0
    %s29 = sadd.s32 %s28, 1
    %s30 = scalar_select %p27, %s28, %s29
    %p33 = pneg %p27
    %p34 = scmp.eq.s32.totalorder %s18, 1
    %p35 = por %p33, %p34
    %p36 = scmp.ne.s32.totalorder %s28, %s31
    %p37 = scmp.eq.s32.totalorder %s18, 0
    %p38 = por %p36, %p37
    %p39 = scmp.ne.s32.totalorder %s28, %s31
    %p40 = scmp.eq.s32.totalorder %s23, 1
    %p41 = por %p39, %p40
    %p42 = scmp.ne.s32.totalorder %s31, %s32
    %p43 = scmp.eq.s32.totalorder %s23, 0
    %p44 = por %p42, %p43
    %p45 = scmp.ne.s32.totalorder %s31, %s32
    %p46 = scmp.eq.s32.totalorder %s24, 1
    %p47 = por %p45, %p46
    %p49 = scmp.ne.s32.totalorder %s32, %s48
    %p50 = scmp.eq.s32.totalorder %s24, 0
    %p51 = por %p49, %p50
    %s52 = ssub.s32 %s18, %s25
    %p53 = scmp.eq.s32.totalorder %s52, 0
    %s55 = sadd.s32 %s54, 1
    %s56 = scalar_select %p53, %s54, %s55
    %p59 = pneg %p53
    %p60 = scmp.eq.s32.totalorder %s18, 1
    %p61 = por %p59, %p60
    %p62 = scmp.ne.s32.totalorder %s54, %s57
    %p63 = scmp.eq.s32.totalorder %s18, 0
    %p64 = por %p62, %p63
    %p65 = scmp.ne.s32.totalorder %s54, %s57
    %p66 = scmp.eq.s32.totalorder %s23, 1
    %p67 = por %p65, %p66
    %p68 = scmp.ne.s32.totalorder %s57, %s58
    %p69 = scmp.eq.s32.totalorder %s23, 0
    %p70 = por %p68, %p69
    %p71 = scmp.ne.s32.totalorder %s57, %s58
    %p72 = scmp.eq.s32.totalorder %s24, 1
    %p73 = por %p71, %p72
    %p75 = scmp.ne.s32.totalorder %s58, %s74
    %p76 = scmp.eq.s32.totalorder %s24, 0
    %p77 = por %p75, %p76
    %s79 = sadd.s32 %s78, 1
    %p82 = scmp.eq.s32.totalorder %s18, 1
    %p83 = scmp.ne.s32.totalorder %s78, %s80
    %p84 = scmp.eq.s32.totalorder %s18, 0
    %p85 = por %p83, %p84
    %p86 = scmp.ne.s32.totalorder %s78, %s80
    %p87 = scmp.eq.s32.totalorder %s23, 1
    %p88 = por %p86, %p87
    %p89 = scmp.ne.s32.totalorder %s80, %s81
    %p90 = scmp.eq.s32.totalorder %s23, 0
    %p91 = por %p89, %p90
    %p92 = scmp.ne.s32.totalorder %s80, %s81
    %p93 = scmp.eq.s32.totalorder %s24, 1
    %p94 = por %p92, %p93
    %p96 = scmp.ne.s32.totalorder %s81, %s95
    %p97 = scmp.eq.s32.totalorder %s24, 0
    %p98 = por %p96, %p97
    %s100 = sadd.s32 %s99, 1
    %p103 = scmp.eq.s32.totalorder %s18, 1
    %p104 = scmp.ne.s32.totalorder %s99, %s101
    %p105 = scmp.eq.s32.totalorder %s18, 0
    %p106 = por %p104, %p105
    %p107 = scmp.ne.s32.totalorder %s99, %s101
    %p108 = scmp.eq.s32.totalorder %s23, 1
    %p109 = por %p107, %p108
    %p110 = scmp.ne.s32.totalorder %s101, %s102
    %p111 = scmp.eq.s32.totalorder %s23, 0
    %p112 = por %p110, %p111
    %p113 = scmp.ne.s32.totalorder %s101, %s102
    %p114 = scmp.eq.s32.totalorder %s24, 1
    %p115 = por %p113, %p114
    %p117 = scmp.ne.s32.totalorder %s102, %s116
    %p118 = scmp.eq.s32.totalorder %s24, 0
    %p119 = por %p117, %p118
    %s121 = sadd.s32 %s120, 1
    %p124 = scmp.eq.s32.totalorder %s18, 1
    %p125 = scmp.ne.s32.totalorder %s120, %s122
    %p126 = scmp.eq.s32.totalorder %s18, 0
    %p127 = por %p125, %p126
    %p128 = scmp.ne.s32.totalorder %s120, %s122
    %p129 = scmp.eq.s32.totalorder %s23, 1
    %p130 = por %p128, %p129
    %p131 = scmp.ne.s32.totalorder %s122, %s123
    %p132 = scmp.eq.s32.totalorder %s23, 0
    %p133 = por %p131, %p132
    %p134 = scmp.ne.s32.totalorder %s122, %s123
    %p135 = scmp.eq.s32.totalorder %s24, 1
    %p136 = por %p134, %p135
    %p138 = scmp.ne.s32.totalorder %s123, %s137
    %p139 = scmp.eq.s32.totalorder %s24, 0
    %p140 = por %p138, %p139
    %s142 = sadd.s32 %s141, 1
    %p145 = scmp.eq.s32.totalorder %s18, 1
    %p146 = scmp.ne.s32.totalorder %s141, %s143
    %p147 = scmp.eq.s32.totalorder %s18, 0
    %p148 = por %p146, %p147
    %p149 = scmp.ne.s32.totalorder %s141, %s143
    %p150 = scmp.eq.s32.totalorder %s23, 1
    %p151 = por %p149, %p150
    %p152 = scmp.ne.s32.totalorder %s143, %s144
    %p153 = scmp.eq.s32.totalorder %s23, 0
    %p154 = por %p152, %p153
    %p155 = scmp.ne.s32.totalorder %s143, %s144
    %p156 = scmp.eq.s32.totalorder %s24, 1
    %p157 = por %p155, %p156
    %p159 = scmp.ne.s32.totalorder %s144, %s158
    %p160 = scmp.eq.s32.totalorder %s24, 0
    %p161 = por %p159, %p160
    %s163 = sadd.s32 %s162, 1
    %p166 = scmp.eq.s32.totalorder %s18, 1
    %p167 = scmp.ne.s32.totalorder %s162, %s164
    %p168 = scmp.eq.s32.totalorder %s18, 0
    %p169 = por %p167, %p168
    %p170 = scmp.ne.s32.totalorder %s162, %s164
    %p171 = scmp.eq.s32.totalorder %s23, 1
    %p172 = por %p170, %p171
    %p173 = scmp.ne.s32.totalorder %s164, %s165
    %p174 = scmp.eq.s32.totalorder %s23, 0
    %p175 = por %p173, %p174
    %p176 = scmp.ne.s32.totalorder %s164, %s165
    %p177 = scmp.eq.s32.totalorder %s24, 1
    %p178 = por %p176, %p177
    %p180 = scmp.ne.s32.totalorder %s165, %s179
    %p181 = scmp.eq.s32.totalorder %s24, 0
    %p182 = por %p180, %p181
    %s184 = sadd.s32 %s183, 1
    %p187 = scmp.eq.s32.totalorder %s18, 1
    %p188 = scmp.ne.s32.totalorder %s183, %s185
    %p189 = scmp.eq.s32.totalorder %s18, 0
    %p190 = por %p188, %p189
    %p191 = scmp.ne.s32.totalorder %s183, %s185
    %p192 = scmp.eq.s32.totalorder %s23, 1
    %p193 = por %p191, %p192
    %p194 = scmp.ne.s32.totalorder %s185, %s186
    %p195 = scmp.eq.s32.totalorder %s23, 0
    %p196 = por %p194, %p195
    %p197 = scmp.ne.s32.totalorder %s185, %s186
    %p198 = scmp.eq.s32.totalorder %s24, 1
    %p199 = por %p197, %p198
    %p201 = scmp.ne.s32.totalorder %s186, %s200
    %p202 = scmp.eq.s32.totalorder %s24, 0
    %p203 = por %p201, %p202
    %s205 = sadd.s32 %s204, 1
    %p208 = scmp.eq.s32.totalorder %s18, 1
    %p209 = scmp.ne.s32.totalorder %s204, %s206
    %p210 = scmp.eq.s32.totalorder %s18, 0
    %p211 = por %p209, %p210
    %p212 = scmp.ne.s32.totalorder %s204, %s206
    %p213 = scmp.eq.s32.totalorder %s23, 1
    %p214 = por %p212, %p213
    %p215 = scmp.ne.s32.totalorder %s206, %s207
    %p216 = scmp.eq.s32.totalorder %s23, 0
    %p217 = por %p215, %p216
    %p218 = scmp.ne.s32.totalorder %s206, %s207
    %p219 = scmp.eq.s32.totalorder %s24, 1
    %p220 = por %p218, %p219
    %p222 = scmp.ne.s32.totalorder %s207, %s221
    %p223 = scmp.eq.s32.totalorder %s24, 0
    %p224 = por %p222, %p223
    %s226 = sadd.s32 %s225, 1
    %p229 = scmp.eq.s32.totalorder %s18, 1
    %p230 = scmp.ne.s32.totalorder %s225, %s227
    %p231 = scmp.eq.s32.totalorder %s18, 0
    %p232 = por %p230, %p231
    %p233 = scmp.ne.s32.totalorder %s225, %s227
    %p234 = scmp.eq.s32.totalorder %s23, 1
    %p235 = por %p233, %p234
    %p236 = scmp.ne.s32.totalorder %s227, %s228
    %p237 = scmp.eq.s32.totalorder %s23, 0
    %p238 = por %p236, %p237
    %p239 = scmp.ne.s32.totalorder %s227, %s228
    %p240 = scmp.eq.s32.totalorder %s24, 1
    %p241 = por %p239, %p240
    %p243 = scmp.ne.s32.totalorder %s228, %s242
    %p244 = scmp.eq.s32.totalorder %s24, 0
    %p245 = por %p243, %p244
    %s247 = sadd.s32 %s246, 1
    %p250 = scmp.eq.s32.totalorder %s18, 1
    %p251 = scmp.ne.s32.totalorder %s246, %s248
    %p252 = scmp.eq.s32.totalorder %s18, 0
    %p253 = por %p251, %p252
    %p254 = scmp.ne.s32.totalorder %s246, %s248
    %p255 = scmp.eq.s32.totalorder %s23, 1
    %p256 = por %p254, %p255
    %p257 = scmp.ne.s32.totalorder %s248, %s249
    %p258 = scmp.eq.s32.totalorder %s23, 0
    %p259 = por %p257, %p258
    %p260 = scmp.ne.s32.totalorder %s248, %s249
    %p261 = scmp.eq.s32.totalorder %s24, 1
    %p262 = por %p260, %p261
    %p264 = scmp.ne.s32.totalorder %s249, %s263
    %p265 = scmp.eq.s32.totalorder %s24, 0
    %p266 = por %p264, %p265
    %s268 = sadd.s32 %s267, 1
    %p271 = scmp.eq.s32.totalorder %s18, 1
    %p272 = scmp.ne.s32.totalorder %s267, %s269
    %p273 = scmp.eq.s32.totalorder %s18, 0
    %p274 = por %p272, %p273
    %p275 = scmp.ne.s32.totalorder %s267, %s269
    %p276 = scmp.eq.s32.totalorder %s23, 1
    %p277 = por %p275, %p276
    %p278 = scmp.ne.s32.totalorder %s269, %s270
    %p279 = scmp.eq.s32.totalorder %s23, 0
    %p280 = por %p278, %p279
    %p281 = scmp.ne.s32.totalorder %s269, %s270
    %p282 = scmp.eq.s32.totalorder %s24, 1
    %p283 = por %p281, %p282
    %p285 = scmp.ne.s32.totalorder %s270, %s284
    %p286 = scmp.eq.s32.totalorder %s24, 0
    %p287 = por %p285, %p286
    %s288 = ssub.s32 %s18, %s25
    %p289 = scmp.eq.s32.totalorder %s288, 0
    %s291 = sadd.s32 %s290, 1
    %s292 = scalar_select %p289, %s290, %s291
    %p295 = pneg %p289
    %p296 = scmp.eq.s32.totalorder %s18, 1
    %p297 = por %p295, %p296
    %p298 = scmp.ne.s32.totalorder %s290, %s293
    %p299 = scmp.eq.s32.totalorder %s18, 0
    %p300 = por %p298, %p299
    %p301 = scmp.ne.s32.totalorder %s290, %s293
    %p302 = scmp.eq.s32.totalorder %s23, 1
    %p303 = por %p301, %p302
    %p304 = scmp.ne.s32.totalorder %s293, %s294
    %p305 = scmp.eq.s32.totalorder %s23, 0
    %p306 = por %p304, %p305
    %p307 = scmp.ne.s32.totalorder %s293, %s294
    %p308 = scmp.eq.s32.totalorder %s24, 1
    %p309 = por %p307, %p308
    %p311 = scmp.ne.s32.totalorder %s294, %s310
    %p312 = scmp.eq.s32.totalorder %s24, 0
    %p313 = por %p311, %p312
    %p314 = scmp.le.s32.totalorder 1, %s18
    %p315 = scmp.lt.s32.totalorder %s18, 3
    %p316 = pnand %p314, %p315
    %p317 = pneg %p316
    // Predicated region
    $region9: #{tpu_custom_call.1} parent=5 // pred_check
      _
    $region10: #{tpu_custom_call.1} parent=5 // pred_check_branch
      %319 = sbr.rel (%p316) target = $region12
    $region11: #{tpu_custom_call.1} parent=5 // pred_region
      %s320 = ssub.s32 %s18, 1
      // Predicated region
      $region13: #{tpu_custom_call.1} parent=11 // pred_check
        %p321 = pneg %p91
      $region14: #{tpu_custom_call.1} parent=11 // pred_check_branch
        %323 = sbr.rel (%p321) target = $region16
      $region15: #{tpu_custom_call.1} parent=11 // pred_region
        _
      $region16: #{tpu_custom_call.1} parent=11 // pred_fallthru
        _
      // Predicated region
      $region17: #{tpu_custom_call.1} parent=11 // pred_check
        %p324 = pneg %p112
      $region18: #{tpu_custom_call.1} parent=11 // pred_check_branch
        %326 = sbr.rel (%p324) target = $region20
      $region19: #{tpu_custom_call.1} parent=11 // pred_region
        _
      $region20: #{tpu_custom_call.1} parent=11 // pred_fallthru
        _
      // Predicated region
      $region21: #{tpu_custom_call.1} parent=11 // pred_check
        %p327 = pneg %p133
      $region22: #{tpu_custom_call.1} parent=11 // pred_check_branch
        %329 = sbr.rel (%p327) target = $region24
      $region23: #{tpu_custom_call.1} parent=11 // pred_region
        _
      $region24: #{tpu_custom_call.1} parent=11 // pred_fallthru
        _
      // Predicated region
      $region25: #{tpu_custom_call.1} parent=11 // pred_check
        %p330 = pneg %p154
      $region26: #{tpu_custom_call.1} parent=11 // pred_check_branch
        %332 = sbr.rel (%p330) target = $region28
      $region27: #{tpu_custom_call.1} parent=11 // pred_region
        _
      $region28: #{tpu_custom_call.1} parent=11 // pred_fallthru
        _
      // Predicated region
      $region29: #{tpu_custom_call.1} parent=11 // pred_check
        %p333 = pneg %p175
      $region30: #{tpu_custom_call.1} parent=11 // pred_check_branch
        %335 = sbr.rel (%p333) target = $region32
      $region31: #{tpu_custom_call.1} parent=11 // pred_region
        _
      $region32: #{tpu_custom_call.1} parent=11 // pred_fallthru
        _
      // Predicated region
      $region33: #{tpu_custom_call.1} parent=11 // pred_check
        %p336 = pneg %p196
      $region34: #{tpu_custom_call.1} parent=11 // pred_check_branch
        %338 = sbr.rel (%p336) target = $region36
      $region35: #{tpu_custom_call.1} parent=11 // pred_region
        _
      $region36: #{tpu_custom_call.1} parent=11 // pred_fallthru
        _
      // Predicated region
      $region37: #{tpu_custom_call.1} parent=11 // pred_check
        %p339 = pneg %p217
      $region38: #{tpu_custom_call.1} parent=11 // pred_check_branch
        %341 = sbr.rel (%p339) target = $region40
      $region39: #{tpu_custom_call.1} parent=11 // pred_region
        _
      $region40: #{tpu_custom_call.1} parent=11 // pred_fallthru
        _
      // Predicated region
      $region41: #{tpu_custom_call.1} parent=11 // pred_check
        %p342 = pneg %p238
      $region42: #{tpu_custom_call.1} parent=11 // pred_check_branch
        %344 = sbr.rel (%p342) target = $region44
      $region43: #{tpu_custom_call.1} parent=11 // pred_region
        _
      $region44: #{tpu_custom_call.1} parent=11 // pred_fallthru
        _
      // Predicated region
      $region45: #{tpu_custom_call.1} parent=11 // pred_check
        %p345 = pneg %p259
      $region46: #{tpu_custom_call.1} parent=11 // pred_check_branch
        %347 = sbr.rel (%p345) target = $region48
      $region47: #{tpu_custom_call.1} parent=11 // pred_region
        _
      $region48: #{tpu_custom_call.1} parent=11 // pred_fallthru
        _
      // Predicated region
      $region49: #{tpu_custom_call.1} parent=11 // pred_check
        %p348 = pneg %p280
      $region50: #{tpu_custom_call.1} parent=11 // pred_check_branch
        %350 = sbr.rel (%p348) target = $region52
      $region51: #{tpu_custom_call.1} parent=11 // pred_region
        _
      $region52: #{tpu_custom_call.1} parent=11 // pred_fallthru
        _
    $region12: #{tpu_custom_call.1} parent=5 // pred_fallthru
      _
    %p351 = scmp.lt.s32.totalorder %s18, 2
    // Predicated region
    $region53: #{tpu_custom_call.1} parent=5 // pred_check
      %p352 = pneg %p351
    $region54: #{tpu_custom_call.1} parent=5 // pred_check_branch
      %354 = sbr.rel (%p352) target = $region56
    $region55: #{tpu_custom_call.1} parent=5 // pred_region
      // Predicated region
      $region57: #{tpu_custom_call.1} parent=55 // pred_check
        %p355 = pneg %p38
      $region58: #{tpu_custom_call.1} parent=55 // pred_check_branch
        %357 = sbr.rel (%p355) target = $region60
      $region59: #{tpu_custom_call.1} parent=55 // pred_region
        %p358 = scmp.lt.s32.totalorder %s18, 1
        %s359 = scalar_select %p358, %s18, 1
        %s360 = smul.addr %s359, 32
        %s361 = smul.addr %s360, 8
        %s362 = scalar_lea.vmem %s0, %s361
      $region60: #{tpu_custom_call.1} parent=55 // pred_fallthru
        _
      // Predicated region
      $region61: #{tpu_custom_call.1} parent=55 // pred_check
        %p363 = pneg %p64
      $region62: #{tpu_custom_call.1} parent=55 // pred_check_branch
        %365 = sbr.rel (%p363) target = $region64
      $region63: #{tpu_custom_call.1} parent=55 // pred_region
        %p366 = scmp.lt.s32.totalorder %s18, 1
        %s367 = scalar_select %p366, %s18, 1
        %s368 = smul.addr %s367, 32
        %s369 = smul.addr %s368, 8
        %s370 = scalar_lea.vmem %s1, %s369
      $region64: #{tpu_custom_call.1} parent=55 // pred_fallthru
        _
    $region56: #{tpu_custom_call.1} parent=5 // pred_fallthru
      _
    %p371 = scmp.le.s32.totalorder 1, %s18
    %p372 = scmp.lt.s32.totalorder %s18, 3
    %p373 = pnand %p371, %p372
    %p374 = pneg %p373
    // Predicated region
    $region65: #{tpu_custom_call.1} parent=5 // pred_check
      _
    $region66: #{tpu_custom_call.1} parent=5 // pred_check_branch
      %376 = sbr.rel (%p373) target = $region68
    $region67: #{tpu_custom_call.1} parent=5 // pred_region
      %s377 = ssub.s32 %s18, 1
      %p378 = scmp.lt.s32.totalorder %s23, 1
      %s379 = scalar_select %p378, %s23, 1
      %s380 = smul.addr %s379, 32
      %s381 = smul.addr %s380, 8
      %s382 = scalar_lea.vmem %s0, %s381
      %p383 = pneg %p44
      %p384 = pneg %p41
      %p385 = scmp.lt.s32.totalorder %s23, 1
      %s386 = scalar_select %p385, %s23, 1
      %s387 = smul.addr %s386, 32
      %s388 = smul.addr %s387, 8
      %s389 = scalar_lea.vmem %s1, %s388
      %p390 = pneg %p70
      %p391 = pneg %p67
      %p392 = pneg %p91
      %p393 = pneg %p88
      %p394 = pneg %p112
      %p395 = pneg %p109
      %p396 = pneg %p133
      %p397 = pneg %p130
      %p398 = pneg %p154
      %p399 = pneg %p151
      %p400 = pneg %p175
      %p401 = pneg %p172
      %p402 = pneg %p196
      %p403 = pneg %p193
      %p404 = pneg %p217
      %p405 = pneg %p214
      %p406 = pneg %p238
      %p407 = pneg %p235
      %p408 = pneg %p259
      %p409 = pneg %p256
      %p410 = pneg %p280
      %p411 = pneg %p277
      %p412 = pneg %p306
      %p413 = pneg %p303
      %p414 = scmp.lt.s32.totalorder %s23, 1
      %s415 = scalar_select %p414, %s23, 1
      %s416 = smul.addr %s415, 32
      %s417 = smul.addr %s416, 8
      %s418 = scalar_lea.vmem %s12, %s417
      %p419 = scmp.lt.s32.totalorder %s23, 1
      %s420 = scalar_select %p419, %s23, 1
      %s421 = smul.addr %s420, 32
      %s422 = smul.addr %s421, 8
      %s423 = scalar_lea.vmem %s0, %s422
      %p424 = scmp.lt.s32.totalorder %s23, 1
      %s425 = scalar_select %p424, %s23, 1
      %s426 = smul.addr %s425, 32
      %s427 = smul.addr %s426, 8
      %s428 = scalar_lea.vmem %s1, %s427
      %p429 = scmp.lt.s32.totalorder %s23, 1
      %s430 = scalar_select %p429, %s23, 1
      %s431 = smul.addr %s430, 32
      %s432 = smul.addr %s431, 8
      %s433 = scalar_lea.vmem %s12, %s432
      %vm435 = vcmask 523264
      %436 = vst.msk [vmem:[#allocation2] sm:$0xff] %vm435, 0.0
      %437 = vst.msk [vmem:[#allocation2 + $0x8] sm:$0xff] %vm435, 0.0
      %vm438 = vcmask 517120
      %439 = vst.msk [vmem:[#allocation2 + $0x10] sm:$0x3] %vm438, 0.0
      %440 = vst.msk [vmem:[#allocation2 + $0x18] sm:$0xff] %vm435, 0.0
      %441 = vst.msk [vmem:[#allocation2 + $0x20] sm:$0xff] %vm435, 0.0
      %442 = vst.msk [vmem:[#allocation2 + $0x28] sm:$0x3] %vm438, 0.0
      %443 = vst.msk [vmem:[#allocation2 + $0x30] sm:$0xff] %vm435, 0.0
      %444 = vst.msk [vmem:[#allocation2 + $0x38] sm:$0xff] %vm435, 0.0
      %445 = vst.msk [vmem:[#allocation2 + $0x40] sm:$0x3] %vm438, 0.0
      %446 = vst.msk [vmem:[#allocation2 + $0x48] sm:$0xff] %vm435, 0.0
      %447 = vst.msk [vmem:[#allocation2 + $0x50] sm:$0xff] %vm435, 0.0
      %448 = vst.msk [vmem:[#allocation2 + $0x58] sm:$0x3] %vm438, 0.0
      %449 = vst.msk [vmem:[#allocation2 + $0x60] sm:$0xff] %vm435, 0.0
      %450 = vst.msk [vmem:[#allocation2 + $0x68] sm:$0xff] %vm435, 0.0
      %451 = vst.msk [vmem:[#allocation2 + $0x70] sm:$0x3] %vm438, 0.0
      %452 = vst.msk [vmem:[#allocation2 + $0x78] sm:$0xff] %vm435, 0.0
      %453 = vst.msk [vmem:[#allocation2 + $0x80] sm:$0xff] %vm435, 0.0
      %454 = vst.msk [vmem:[#allocation2 + $0x88] sm:$0x3] %vm438, 0.0
      %455 = vst.msk [vmem:[#allocation2 + $0x90] sm:$0xff] %vm435, 0.0
      %456 = vst.msk [vmem:[#allocation2 + $0x98] sm:$0xff] %vm435, 0.0
      %457 = vst.msk [vmem:[#allocation2 + $0xa0] sm:$0x3] %vm438, 0.0
      %458 = vst.msk [vmem:[#allocation2 + $0xa8] sm:$0xff] %vm435, 0.0
      %459 = vst.msk [vmem:[#allocation2 + $0xb0] sm:$0xff] %vm435, 0.0
      %460 = vst.msk [vmem:[#allocation2 + $0xb8] sm:$0x3] %vm438, 0.0
      %461 = vst.msk [vmem:[#allocation2 + $0xc0] sm:$0xff] %vm435, 0.0
      %462 = vst.msk [vmem:[#allocation2 + $0xc8] sm:$0xff] %vm435, 0.0
      %463 = vst.msk [vmem:[#allocation2 + $0xd0] sm:$0x3] %vm438, 0.0
      %464 = vst.msk [vmem:[#allocation2 + $0xd8] sm:$0xff] %vm435, 0.0
      %465 = vst.msk [vmem:[#allocation2 + $0xe0] sm:$0xff] %vm435, 0.0
      %466 = vst.msk [vmem:[#allocation2 + $0xe8] sm:$0x3] %vm438, 0.0
      %467 = vst.msk [vmem:[#allocation2 + $0xf0] sm:$0xff] %vm435, 0.0
      %468 = vst.msk [vmem:[#allocation2 + $0xf8] sm:$0xff] %vm435, 0.0
      %469 = vst.msk [vmem:[#allocation2 + $0x100] sm:$0x3] %vm438, 0.0
      %470 = vst.msk [vmem:[#allocation2 + $0x108] sm:$0xff] %vm435, 0.0
      %471 = vst.msk [vmem:[#allocation2 + $0x110] sm:$0xff] %vm435, 0.0
      %472 = vst.msk [vmem:[#allocation2 + $0x118] sm:$0x3] %vm438, 0.0
      %473 = vst.msk [vmem:[#allocation2 + $0x120] sm:$0xff] %vm435, 0.0
      %474 = vst.msk [vmem:[#allocation2 + $0x128] sm:$0xff] %vm435, 0.0
      %475 = vst.msk [vmem:[#allocation2 + $0x130] sm:$0x3] %vm438, 0.0
      %476 = vst.msk [vmem:[#allocation2 + $0x138] sm:$0xff] %vm435, 0.0
      %477 = vst.msk [vmem:[#allocation2 + $0x140] sm:$0xff] %vm435, 0.0
      %478 = vst.msk [vmem:[#allocation2 + $0x148] sm:$0x3] %vm438, 0.0
      %479 = vst.msk [vmem:[#allocation2 + $0x150] sm:$0xff] %vm435, 0.0
      %480 = vst.msk [vmem:[#allocation2 + $0x158] sm:$0xff] %vm435, 0.0
      %481 = vst.msk [vmem:[#allocation2 + $0x160] sm:$0x3] %vm438, 0.0
      %482 = vst.msk [vmem:[#allocation2 + $0x168] sm:$0xff] %vm435, 0.0
      %483 = vst.msk [vmem:[#allocation2 + $0x170] sm:$0xff] %vm435, 0.0
      %484 = vst.msk [vmem:[#allocation2 + $0x178] sm:$0x3] %vm438, 0.0
      %485 = vst.msk [vmem:[#allocation2 + $0x180] sm:$0xff] %vm435, 0.0
      %486 = vst.msk [vmem:[#allocation2 + $0x188] sm:$0xff] %vm435, 0.0
      %487 = vst.msk [vmem:[#allocation2 + $0x190] sm:$0x3] %vm438, 0.0
      %488 = vst.msk [vmem:[#allocation2 + $0x198] sm:$0xff] %vm435, 0.0
      %489 = vst.msk [vmem:[#allocation2 + $0x1a0] sm:$0xff] %vm435, 0.0
      %490 = vst.msk [vmem:[#allocation2 + $0x1a8] sm:$0x3] %vm438, 0.0
      %v491 = vld [vmem:[%s423] sm:$0xff]
      %v492 = vld [vmem:[%s423 + $0x8] sm:$0xff]
      %v493 = vld [vmem:[%s423 + $0x10] sm:$0xff]
      %v494 = vld [vmem:[%s423 + $0x18] sm:$0xff]
      %v495 = vld [vmem:[%s423 + $0x20] sm:$0xff]
      %v496 = vld [vmem:[%s423 + $0x28] sm:$0xff]
      %v497 = vld [vmem:[%s423 + $0x30] sm:$0xff]
      %v498 = vld [vmem:[%s423 + $0x38] sm:$0xff]
      %v499 = vld [vmem:[%s423 + $0x40] sm:$0xff]
      %v500 = vld [vmem:[%s423 + $0x48] sm:$0xff]
      %v501 = vld [vmem:[%s423 + $0x50] sm:$0xff]
      %v502 = vld [vmem:[%s423 + $0x58] sm:$0xff]
      %v503 = vld [vmem:[%s423 + $0x60] sm:$0xff]
      %v504 = vld [vmem:[%s423 + $0x68] sm:$0xff]
      %v505 = vld [vmem:[%s423 + $0x70] sm:$0xff]
      %v506 = vld [vmem:[%s423 + $0x78] sm:$0xff]
      %v507 = vld [vmem:[%s423 + $0x80] sm:$0xff]
      %v508 = vld [vmem:[%s423 + $0x88] sm:$0xff]
      %v509 = vld [vmem:[%s423 + $0x90] sm:$0xff]
      %v510 = vld [vmem:[%s423 + $0x98] sm:$0xff]
      %v511 = vld [vmem:[%s423 + $0xa0] sm:$0xff]
      %v512 = vld [vmem:[%s423 + $0xa8] sm:$0xff]
      %v513 = vld [vmem:[%s423 + $0xb0] sm:$0xff]
      %v514 = vld [vmem:[%s423 + $0xb8] sm:$0xff]
      %v515 = vld [vmem:[%s423 + $0xc0] sm:$0xff]
      %v516 = vld [vmem:[%s423 + $0xc8] sm:$0xff]
      %v517 = vld [vmem:[%s423 + $0xd0] sm:$0xff]
      %v518 = vld [vmem:[%s423 + $0xd8] sm:$0xff]
      %v519 = vld [vmem:[%s423 + $0xe0] sm:$0xff]
      %v520 = vld [vmem:[%s423 + $0xe8] sm:$0xff]
      %v521 = vld [vmem:[%s423 + $0xf0] sm:$0xff]
      %v522 = vld [vmem:[%s423 + $0xf8] sm:$0xff]
      %v523 = vpack.c.bf16 %v492, %v491
      %v524 = vpack.c.bf16 %v494, %v493
      %v525 = vpack.c.bf16 %v496, %v495
      %v526 = vpack.c.bf16 %v498, %v497
      %v527 = vpack.c.bf16 %v500, %v499
      %v528 = vpack.c.bf16 %v502, %v501
      %v529 = vpack.c.bf16 %v504, %v503
      %v530 = vpack.c.bf16 %v506, %v505
      %v531 = vpack.c.bf16 %v508, %v507
      %v532 = vpack.c.bf16 %v510, %v509
      %v533 = vpack.c.bf16 %v512, %v511
      %v534 = vpack.c.bf16 %v514, %v513
      %v535 = vpack.c.bf16 %v516, %v515
      %v536 = vpack.c.bf16 %v518, %v517
      %v537 = vpack.c.bf16 %v520, %v519
      %v538 = vpack.c.bf16 %v522, %v521
      %v539 = vld [vmem:[%s2] sm:$0xf]
      %v540 = vld [vmem:[%s2 + $0x4] sm:$0x1]
      %v541 = vld [vmem:[%s3] sm:$0x1]
      %v543 = vlaneseq
      %v544 = vshrl.u32 %v543, 7
      %v545 = vsub.s32 0, %v544
      %v546 = vrot.slane %v541, %v545
      %v550 = vunpack.c.l.b16 %v539
      %v551 = vunpack.c.l.b16 %v540
      %v552 = vpack.c.b16 %v551, %v550
      %vm553 = vcmask 80896
      %v555 = vsel %vm553, %v523, 0
      %v558 = vsel %vm553, %v524, 0
      %v561 = vsel %vm553, %v525, 0
      %v564 = vsel %vm553, %v526, 0
      %v567 = vsel %vm553, %v527, 0
      %v570 = vsel %vm553, %v528, 0
      %v573 = vsel %vm553, %v529, 0
      %v576 = vsel %vm553, %v530, 0
      %v579 = vsel %vm553, %v531, 0
      %v582 = vsel %vm553, %v532, 0
      %v585 = vsel %vm553, %v533, 0
      %v588 = vsel %vm553, %v534, 0
      %v591 = vsel %vm553, %v535, 0
      %v594 = vsel %vm553, %v536, 0
      %v597 = vsel %vm553, %v537, 0
      %v600 = vsel %vm553, %v538, 0
      %vm602 = vcmask 1044480
      %v604 = vsel %vm602, %v552, 0
      %606 = vmatprep.subr.bf16.mxu0 0
      %607 = vmatpush1.bf16.msra.mxu0 %v604
      %608 = vmatprep.subr.bf16.mxu0 0
      %609 = vmatpush1.bf16.msra.mxu0 0
      %610 = vmatprep.subr.bf16.mxu0 0
      %611 = vmatpush1.bf16.msra.mxu0 0
      %612 = vmatprep.subr.bf16.mxu0 0
      %613 = vmatpush1.bf16.msra.mxu0 0
      %614 = vmatprep.subr.bf16.mxu0 0
      %615 = vmatpush1.bf16.msra.mxu0 0
      %616 = vmatprep.subr.bf16.mxu0 0
      %617 = vmatpush1.bf16.msra.mxu0 0
      %618 = vmatprep.subr.bf16.mxu0 0
      %619 = vmatpush1.bf16.msra.mxu0 0
      %620 = vmatprep.subr.bf16.mxu0 0
      %621 = vmatpush1.bf16.msra.mxu0 0
      %622 = vmatprep.subr.bf16.mxu0 0
      %623 = vmatpush1.bf16.msra.mxu0 0
      %624 = vmatprep.subr.bf16.mxu0 0
      %625 = vmatpush1.bf16.msra.mxu0 0
      %626 = vmatprep.subr.bf16.mxu0 0
      %627 = vmatpush1.bf16.msra.mxu0 0
      %628 = vmatprep.subr.bf16.mxu0 0
      %629 = vmatpush1.bf16.msra.mxu0 0
      %630 = vmatprep.subr.bf16.mxu0 0
      %631 = vmatpush1.bf16.msra.mxu0 0
      %632 = vmatprep.subr.bf16.mxu0 0
      %633 = vmatpush1.bf16.msra.mxu0 0
      %634 = vmatprep.subr.bf16.mxu0 0
      %635 = vmatpush1.bf16.msra.mxu0 0
      %636 = vmatprep.subr.bf16.mxu0 0
      %637 = vmatpush1.bf16.msra.mxu0 0
      %638 = vmatprep.mubr.bf16.mxu0 0
      %639 = vmatmul.mubr.bf16.gmra.mrb[0].mxu0 %v555
      %v640 = vpop.f32.mrb[0].mxu0
      %v641 = vadd.f32 %v546, %v640
      %v642 = vpop.f32.mrb[0].mxu0
      %v643 = vpop.f32.mrb[0].mxu0
      %v644 = vadd.f32 %v546, %v643
      %v645 = vpop.f32.mrb[0].mxu0
      %646 = vmatprep.mubr.bf16.mxu0 0
      %647 = vmatmul.mubr.bf16.gmra.mrb[0].mxu0 %v558
      %v648 = vpop.f32.mrb[0].mxu0
      %v649 = vadd.f32 %v546, %v648
      %v650 = vpop.f32.mrb[0].mxu0
      %v651 = vpop.f32.mrb[0].mxu0
      %v652 = vadd.f32 %v546, %v651
      %v653 = vpop.f32.mrb[0].mxu0
      %654 = vmatprep.mubr.bf16.mxu0 0
      %655 = vmatmul.mubr.bf16.gmra.mrb[0].mxu0 %v561
      %v656 = vpop.f32.mrb[0].mxu0
      %v657 = vadd.f32 %v546, %v656
      %v658 = vpop.f32.mrb[0].mxu0
      %v659 = vpop.f32.mrb[0].mxu0
      %v660 = vadd.f32 %v546, %v659
      %v661 = vpop.f32.mrb[0].mxu0
      %662 = vmatprep.mubr.bf16.mxu0 0
      %663 = vmatmul.mubr.bf16.gmra.mrb[0].mxu0 %v564
      %v664 = vpop.f32.mrb[0].mxu0
      %v665 = vadd.f32 %v546, %v664
      %v666 = vpop.f32.mrb[0].mxu0
      %v667 = vpop.f32.mrb[0].mxu0
      %v668 = vadd.f32 %v546, %v667
      %v669 = vpop.f32.mrb[0].mxu0
      %670 = vmatprep.mubr.bf16.mxu0 0
      %671 = vmatmul.mubr.bf16.gmra.mrb[0].mxu0 %v567
      %v672 = vpop.f32.mrb[0].mxu0
      %v673 = vadd.f32 %v546, %v672
      %v674 = vpop.f32.mrb[0].mxu0
      %v675 = vpop.f32.mrb[0].mxu0
      %v676 = vadd.f32 %v546, %v675
      %v677 = vpop.f32.mrb[0].mxu0
      %678 = vmatprep.mubr.bf16.mxu0 0
      %679 = vmatmul.mubr.bf16.gmra.mrb[0].mxu0 %v570
      %v680 = vpop.f32.mrb[0].mxu0
      %v681 = vadd.f32 %v546, %v680
      %v682 = vpop.f32.mrb[0].mxu0
      %v683 = vpop.f32.mrb[0].mxu0
      %v684 = vadd.f32 %v546, %v683
      %v685 = vpop.f32.mrb[0].mxu0
      %686 = vmatprep.mubr.bf16.mxu0 0
      %687 = vmatmul.mubr.bf16.gmra.mrb[0].mxu0 %v573
      %v688 = vpop.f32.mrb[0].mxu0
      %v689 = vadd.f32 %v546, %v688
      %v690 = vpop.f32.mrb[0].mxu0
      %v691 = vpop.f32.mrb[0].mxu0
      %v692 = vadd.f32 %v546, %v691
      %v693 = vpop.f32.mrb[0].mxu0
      %694 = vmatprep.mubr.bf16.mxu0 0
      %695 = vmatmul.mubr.bf16.gmra.mrb[0].mxu0 %v576
      %v696 = vpop.f32.mrb[0].mxu0
      %v697 = vadd.f32 %v546, %v696
      %v698 = vpop.f32.mrb[0].mxu0
      %v699 = vpop.f32.mrb[0].mxu0
      %v700 = vadd.f32 %v546, %v699
      %v701 = vpop.f32.mrb[0].mxu0
      %702 = vmatprep.mubr.bf16.mxu0 0
      %703 = vmatmul.mubr.bf16.gmra.mrb[0].mxu0 %v579
      %v704 = vpop.f32.mrb[0].mxu0
      %v705 = vadd.f32 %v546, %v704
      %v706 = vpop.f32.mrb[0].mxu0
      %v707 = vpop.f32.mrb[0].mxu0
      %v708 = vadd.f32 %v546, %v707
      %v709 = vpop.f32.mrb[0].mxu0
      %710 = vmatprep.mubr.bf16.mxu0 0
      %711 = vmatmul.mubr.bf16.gmra.mrb[0].mxu0 %v582
      %v712 = vpop.f32.mrb[0].mxu0
      %v713 = vadd.f32 %v546, %v712
      %v714 = vpop.f32.mrb[0].mxu0
      %v715 = vpop.f32.mrb[0].mxu0
      %v716 = vadd.f32 %v546, %v715
      %v717 = vpop.f32.mrb[0].mxu0
      %718 = vmatprep.mubr.bf16.mxu0 0
      %719 = vmatmul.mubr.bf16.gmra.mrb[0].mxu0 %v585
      %v720 = vpop.f32.mrb[0].mxu0
      %v721 = vadd.f32 %v546, %v720
      %v722 = vpop.f32.mrb[0].mxu0
      %v723 = vpop.f32.mrb[0].mxu0
      %v724 = vadd.f32 %v546, %v723
      %v725 = vpop.f32.mrb[0].mxu0
      %726 = vmatprep.mubr.bf16.mxu0 0
      %727 = vmatmul.mubr.bf16.gmra.mrb[0].mxu0 %v588
      %v728 = vpop.f32.mrb[0].mxu0
      %v729 = vadd.f32 %v546, %v728
      %v730 = vpop.f32.mrb[0].mxu0
      %v731 = vpop.f32.mrb[0].mxu0
      %v732 = vadd.f32 %v546, %v731
      %v733 = vpop.f32.mrb[0].mxu0
      %734 = vmatprep.mubr.bf16.mxu0 0
      %735 = vmatmul.mubr.bf16.gmra.mrb[0].mxu0 %v591
      %v736 = vpop.f32.mrb[0].mxu0
      %v737 = vadd.f32 %v546, %v736
      %v738 = vpop.f32.mrb[0].mxu0
      %v739 = vpop.f32.mrb[0].mxu0
      %v740 = vadd.f32 %v546, %v739
      %v741 = vpop.f32.mrb[0].mxu0
      %742 = vmatprep.mubr.bf16.mxu0 0
      %743 = vmatmul.mubr.bf16.gmra.mrb[0].mxu0 %v594
      %v744 = vpop.f32.mrb[0].mxu0
      %v745 = vadd.f32 %v546, %v744
      %v746 = vpop.f32.mrb[0].mxu0
      %v747 = vpop.f32.mrb[0].mxu0
      %v748 = vadd.f32 %v546, %v747
      %v749 = vpop.f32.mrb[0].mxu0
      %750 = vmatprep.mubr.bf16.mxu0 0
      %751 = vmatmul.mubr.bf16.gmra.mrb[0].mxu0 %v597
      %v752 = vpop.f32.mrb[0].mxu0
      %v753 = vadd.f32 %v546, %v752
      %v754 = vpop.f32.mrb[0].mxu0
      %v755 = vpop.f32.mrb[0].mxu0
      %v756 = vadd.f32 %v546, %v755
      %v757 = vpop.f32.mrb[0].mxu0
      %758 = vmatprep.mubr.bf16.mxu0 0
      %759 = vmatmul.mubr.bf16.gmra.mrb[0].mxu0 %v600
      %v760 = vpop.f32.mrb[0].mxu0
      %v761 = vadd.f32 %v546, %v760
      %v762 = vpop.f32.mrb[0].mxu0
      %v763 = vpop.f32.mrb[0].mxu0
      %v764 = vadd.f32 %v546, %v763
      %v765 = vpop.f32.mrb[0].mxu0
      %766 = vdwg.mxu0
      %v767 = vmax.f32 %v641, 0.0
      %v768 = vmax.f32 %v644, 0.0
      %v769 = vmax.f32 %v649, 0.0
      %v770 = vmax.f32 %v652, 0.0
      %v771 = vmax.f32 %v657, 0.0
      %v772 = vmax.f32 %v660, 0.0
      %v773 = vmax.f32 %v665, 0.0
      %v774 = vmax.f32 %v668, 0.0
      %v775 = vmax.f32 %v673, 0.0
      %v776 = vmax.f32 %v676, 0.0
      %v777 = vmax.f32 %v681, 0.0
      %v778 = vmax.f32 %v684, 0.0
      %v779 = vmax.f32 %v689, 0.0
      %v780 = vmax.f32 %v692, 0.0
      %v781 = vmax.f32 %v697, 0.0
      %v782 = vmax.f32 %v700, 0.0
      %v783 = vmax.f32 %v705, 0.0
      %v784 = vmax.f32 %v708, 0.0
      %v785 = vmax.f32 %v713, 0.0
      %v786 = vmax.f32 %v716, 0.0
      %v787 = vmax.f32 %v721, 0.0
      %v788 = vmax.f32 %v724, 0.0
      %v789 = vmax.f32 %v729, 0.0
      %v790 = vmax.f32 %v732, 0.0
      %v791 = vmax.f32 %v737, 0.0
      %v792 = vmax.f32 %v740, 0.0
      %v793 = vmax.f32 %v745, 0.0
      %v794 = vmax.f32 %v748, 0.0
      %v795 = vmax.f32 %v753, 0.0
      %v796 = vmax.f32 %v756, 0.0
      %v797 = vmax.f32 %v761, 0.0
      %v798 = vmax.f32 %v764, 0.0
      %s799 = scalar_lea.vmem [#allocation2], 24
      %vm800 = vcmask 261120
      %801 = vst.msk [vmem:[%s799 + $0x1] sm:$0xff] %vm800, %v767
      %802 = vst.msk [vmem:[%s799 + $0x9] sm:$0xff] %vm800, %v768
      %803 = vst.msk [vmem:[%s799 + $0x19] sm:$0xff] %vm800, %v769
      %804 = vst.msk [vmem:[%s799 + $0x21] sm:$0xff] %vm800, %v770
      %805 = vst.msk [vmem:[%s799 + $0x31] sm:$0xff] %vm800, %v771
      %806 = vst.msk [vmem:[%s799 + $0x39] sm:$0xff] %vm800, %v772
      %807 = vst.msk [vmem:[%s799 + $0x49] sm:$0xff] %vm800, %v773
      %808 = vst.msk [vmem:[%s799 + $0x51] sm:$0xff] %vm800, %v774
      %809 = vst.msk [vmem:[%s799 + $0x61] sm:$0xff] %vm800, %v775
      %810 = vst.msk [vmem:[%s799 + $0x69] sm:$0xff] %vm800, %v776
      %811 = vst.msk [vmem:[%s799 + $0x79] sm:$0xff] %vm800, %v777
      %812 = vst.msk [vmem:[%s799 + $0x81] sm:$0xff] %vm800, %v778
      %813 = vst.msk [vmem:[%s799 + $0x91] sm:$0xff] %vm800, %v779
      %814 = vst.msk [vmem:[%s799 + $0x99] sm:$0xff] %vm800, %v780
      %815 = vst.msk [vmem:[%s799 + $0xa9] sm:$0xff] %vm800, %v781
      %816 = vst.msk [vmem:[%s799 + $0xb1] sm:$0xff] %vm800, %v782
      %817 = vst.msk [vmem:[%s799 + $0xc1] sm:$0xff] %vm800, %v783
      %818 = vst.msk [vmem:[%s799 + $0xc9] sm:$0xff] %vm800, %v784
      %819 = vst.msk [vmem:[%s799 + $0xd9] sm:$0xff] %vm800, %v785
      %820 = vst.msk [vmem:[%s799 + $0xe1] sm:$0xff] %vm800, %v786
      %821 = vst.msk [vmem:[%s799 + $0xf1] sm:$0xff] %vm800, %v787
      %822 = vst.msk [vmem:[%s799 + $0xf9] sm:$0xff] %vm800, %v788
      %823 = vst.msk [vmem:[%s799 + $0x109] sm:$0xff] %vm800, %v789
      %824 = vst.msk [vmem:[%s799 + $0x111] sm:$0xff] %vm800, %v790
      %825 = vst.msk [vmem:[%s799 + $0x121] sm:$0xff] %vm800, %v791
      %826 = vst.msk [vmem:[%s799 + $0x129] sm:$0xff] %vm800, %v792
      %827 = vst.msk [vmem:[%s799 + $0x139] sm:$0xff] %vm800, %v793
      %828 = vst.msk [vmem:[%s799 + $0x141] sm:$0xff] %vm800, %v794
      %829 = vst.msk [vmem:[%s799 + $0x151] sm:$0xff] %vm800, %v795
      %830 = vst.msk [vmem:[%s799 + $0x159] sm:$0xff] %vm800, %v796
      %831 = vst.msk [vmem:[%s799 + $0x169] sm:$0xff] %vm800, %v797
      %832 = vst.msk [vmem:[%s799 + $0x171] sm:$0xff] %vm800, %v798
      %v833 = vld [vmem:[#allocation2] sm:$0xff]
      %v834 = vld [vmem:[#allocation2 + $0x8] sm:$0xff]
      %v835 = vld [vmem:[#allocation2 + $0x18] sm:$0xff]
      %v836 = vld [vmem:[#allocation2 + $0x20] sm:$0xff]
      %v837 = vld [vmem:[#allocation2 + $0x30] sm:$0xff]
      %v838 = vld [vmem:[#allocation2 + $0x38] sm:$0xff]
      %v839 = vld [vmem:[#allocation2 + $0x48] sm:$0xff]
      %v840 = vld [vmem:[#allocation2 + $0x50] sm:$0xff]
      %v841 = vld [vmem:[#allocation2 + $0x60] sm:$0xff]
      %v842 = vld [vmem:[#allocation2 + $0x68] sm:$0xff]
      %v843 = vld [vmem:[#allocation2 + $0x78] sm:$0xff]
      %v844 = vld [vmem:[#allocation2 + $0x80] sm:$0xff]
      %v845 = vld [vmem:[#allocation2 + $0x90] sm:$0xff]
      %v846 = vld [vmem:[#allocation2 + $0x98] sm:$0xff]
      %v847 = vld [vmem:[#allocation2 + $0xa8] sm:$0xff]
      %v848 = vld [vmem:[#allocation2 + $0xb0] sm:$0xff]
      %v849 = vld [vmem:[#allocation2 + $0xc0] sm:$0xff]
      %v850 = vld [vmem:[#allocation2 + $0xc8] sm:$0xff]
      %v851 = vld [vmem:[#allocation2 + $0xd8] sm:$0xff]
      %v852 = vld [vmem:[#allocation2 + $0xe0] sm:$0xff]
      %v853 = vld [vmem:[#allocation2 + $0xf0] sm:$0xff]
      %v854 = vld [vmem:[#allocation2 + $0xf8] sm:$0xff]
      %v855 = vld [vmem:[#allocation2 + $0x108] sm:$0xff]
      %v856 = vld [vmem:[#allocation2 + $0x110] sm:$0xff]
      %v857 = vld [vmem:[#allocation2 + $0x120] sm:$0xff]
      %v858 = vld [vmem:[#allocation2 + $0x128] sm:$0xff]
      %v859 = vld [vmem:[#allocation2 + $0x138] sm:$0xff]
      %v860 = vld [vmem:[#allocation2 + $0x140] sm:$0xff]
      %v861 = vld [vmem:[#allocation2 + $0x150] sm:$0xff]
      %v862 = vld [vmem:[#allocation2 + $0x158] sm:$0xff]
      %v863 = vld [vmem:[#allocation2 + $0x168] sm:$0xff]
      %v864 = vld [vmem:[#allocation2 + $0x170] sm:$0xff]
      %v865 = vpack.c.bf16 %v834, %v833
      %v866 = vpack.c.bf16 %v836, %v835
      %v867 = vpack.c.bf16 %v838, %v837
      %v868 = vpack.c.bf16 %v840, %v839
      %v869 = vpack.c.bf16 %v842, %v841
      %v870 = vpack.c.bf16 %v844, %v843
      %v871 = vpack.c.bf16 %v846, %v845
      %v872 = vpack.c.bf16 %v848, %v847
      %v873 = vpack.c.bf16 %v850, %v849
      %v874 = vpack.c.bf16 %v852, %v851
      %v875 = vpack.c.bf16 %v854, %v853
      %v876 = vpack.c.bf16 %v856, %v855
      %v877 = vpack.c.bf16 %v858, %v857
      %v878 = vpack.c.bf16 %v860, %v859
      %v879 = vpack.c.bf16 %v862, %v861
      %v880 = vpack.c.bf16 %v864, %v863
      %881 = vst.msk [vmem:[#allocation3] sm:$0xff] %vm800, %v865
      %882 = vst.msk [vmem:[#allocation3 + $0x18] sm:$0xff] %vm800, %v866
      %883 = vst.msk [vmem:[#allocation3 + $0x30] sm:$0xff] %vm800, %v867
      %884 = vst.msk [vmem:[#allocation3 + $0x48] sm:$0xff] %vm800, %v868
      %885 = vst.msk [vmem:[#allocation3 + $0x60] sm:$0xff] %vm800, %v869
      %886 = vst.msk [vmem:[#allocation3 + $0x78] sm:$0xff] %vm800, %v870
      %887 = vst.msk [vmem:[#allocation3 + $0x90] sm:$0xff] %vm800, %v871
      %888 = vst.msk [vmem:[#allocation3 + $0xa8] sm:$0xff] %vm800, %v872
      %889 = vst.msk [vmem:[#allocation3 + $0xc0] sm:$0xff] %vm800, %v873
      %890 = vst.msk [vmem:[#allocation3 + $0xd8] sm:$0xff] %vm800, %v874
      %891 = vst.msk [vmem:[#allocation3 + $0xf0] sm:$0xff] %vm800, %v875
      %892 = vst.msk [vmem:[#allocation3 + $0x108] sm:$0xff] %vm800, %v876
      %893 = vst.msk [vmem:[#allocation3 + $0x120] sm:$0xff] %vm800, %v877
      %894 = vst.msk [vmem:[#allocation3 + $0x138] sm:$0xff] %vm800, %v878
      %895 = vst.msk [vmem:[#allocation3 + $0x150] sm:$0xff] %vm800, %v879
      %896 = vst.msk [vmem:[#allocation3 + $0x168] sm:$0xff] %vm800, %v880
      %v897 = vld [vmem:[#allocation2 + $0x1] sm:$0xff]
      %v898 = vld [vmem:[#allocation2 + $0x9] sm:$0xff]
      %v899 = vld [vmem:[#allocation2 + $0x19] sm:$0xff]
      %v900 = vld [vmem:[#allocation2 + $0x21] sm:$0xff]
      %v901 = vld [vmem:[#allocation2 + $0x31] sm:$0xff]
      %v902 = vld [vmem:[#allocation2 + $0x39] sm:$0xff]
      %v903 = vld [vmem:[#allocation2 + $0x49] sm:$0xff]
      %v904 = vld [vmem:[#allocation2 + $0x51] sm:$0xff]
      %v905 = vld [vmem:[#allocation2 + $0x61] sm:$0xff]
      %v906 = vld [vmem:[#allocation2 + $0x69] sm:$0xff]
      %v907 = vld [vmem:[#allocation2 + $0x79] sm:$0xff]
      %v908 = vld [vmem:[#allocation2 + $0x81] sm:$0xff]
      %v909 = vld [vmem:[#allocation2 + $0x91] sm:$0xff]
      %v910 = vld [vmem:[#allocation2 + $0x99] sm:$0xff]
      %v911 = vld [vmem:[#allocation2 + $0xa9] sm:$0xff]
      %v912 = vld [vmem:[#allocation2 + $0xb1] sm:$0xff]
      %v913 = vld [vmem:[#allocation2 + $0xc1] sm:$0xff]
      %v914 = vld [vmem:[#allocation2 + $0xc9] sm:$0xff]
      %v915 = vld [vmem:[#allocation2 + $0xd9] sm:$0xff]
      %v916 = vld [vmem:[#allocation2 + $0xe1] sm:$0xff]
      %v917 = vld [vmem:[#allocation2 + $0xf1] sm:$0xff]
      %v918 = vld [vmem:[#allocation2 + $0xf9] sm:$0xff]
      %v919 = vld [vmem:[#allocation2 + $0x109] sm:$0xff]
      %v920 = vld [vmem:[#allocation2 + $0x111] sm:$0xff]
      %v921 = vld [vmem:[#allocation2 + $0x121] sm:$0xff]
      %v922 = vld [vmem:[#allocation2 + $0x129] sm:$0xff]
      %v923 = vld [vmem:[#allocation2 + $0x139] sm:$0xff]
      %v924 = vld [vmem:[#allocation2 + $0x141] sm:$0xff]
      %v925 = vld [vmem:[#allocation2 + $0x151] sm:$0xff]
      %v926 = vld [vmem:[#allocation2 + $0x159] sm:$0xff]
      %v927 = vld [vmem:[#allocation2 + $0x169] sm:$0xff]
      %v928 = vld [vmem:[#allocation2 + $0x171] sm:$0xff]
      %v929 = vpack.c.bf16 %v898, %v897
      %v930 = vpack.c.bf16 %v900, %v899
      %v931 = vpack.c.bf16 %v902, %v901
      %v932 = vpack.c.bf16 %v904, %v903
      %v933 = vpack.c.bf16 %v906, %v905
      %v934 = vpack.c.bf16 %v908, %v907
      %v935 = vpack.c.bf16 %v910, %v909
      %v936 = vpack.c.bf16 %v912, %v911
      %v937 = vpack.c.bf16 %v914, %v913
      %v938 = vpack.c.bf16 %v916, %v915
      %v939 = vpack.c.bf16 %v918, %v917
      %v940 = vpack.c.bf16 %v920, %v919
      %v941 = vpack.c.bf16 %v922, %v921
      %v942 = vpack.c.bf16 %v924, %v923
      %v943 = vpack.c.bf16 %v926, %v925
      %v944 = vpack.c.bf16 %v928, %v927
      %961 = vrot.lane.b32.xlu0 %v929, 32
      %v962 = vpop.permute.xlu0 %961
      %963 = vrot.lane.b32.xlu0 %v930, 32
      %v964 = vpop.permute.xlu0 %963
      %965 = vrot.lane.b32.xlu0 %v931, 32
      %v966 = vpop.permute.xlu0 %965
      %967 = vrot.lane.b32.xlu0 %v932, 32
      %v968 = vpop.permute.xlu0 %967
      %969 = vrot.lane.b32.xlu0 %v933, 32
      %v970 = vpop.permute.xlu0 %969
      %971 = vrot.lane.b32.xlu0 %v934, 32
      %v972 = vpop.permute.xlu0 %971
      %973 = vrot.lane.b32.xlu0 %v935, 32
      %v974 = vpop.permute.xlu0 %973
      %975 = vrot.lane.b32.xlu0 %v936, 32
      %v976 = vpop.permute.xlu0 %975
      %977 = vrot.lane.b32.xlu0 %v937, 32
      %v978 = vpop.permute.xlu0 %977
      %979 = vrot.lane.b32.xlu0 %v938, 32
      %v980 = vpop.permute.xlu0 %979
      %981 = vrot.lane.b32.xlu0 %v939, 32
      %v982 = vpop.permute.xlu0 %981
      %983 = vrot.lane.b32.xlu0 %v940, 32
      %v984 = vpop.permute.xlu0 %983
      %985 = vrot.lane.b32.xlu0 %v941, 32
      %v986 = vpop.permute.xlu0 %985
      %987 = vrot.lane.b32.xlu0 %v942, 32
      %v988 = vpop.permute.xlu0 %987
      %989 = vrot.lane.b32.xlu0 %v943, 32
      %v990 = vpop.permute.xlu0 %989
      %991 = vrot.lane.b32.xlu0 %v944, 32
      %v992 = vpop.permute.xlu0 %991
      %vm1009 = vcmask 523520
      %1010 = vst.msk [vmem:[#allocation3] sm:$0xff] %vm1009, %v962
      %1011 = vst.msk [vmem:[#allocation3 + $0x18] sm:$0xff] %vm1009, %v964
      %1012 = vst.msk [vmem:[#allocation3 + $0x30] sm:$0xff] %vm1009, %v966
      %1013 = vst.msk [vmem:[#allocation3 + $0x48] sm:$0xff] %vm1009, %v968
      %1014 = vst.msk [vmem:[#allocation3 + $0x60] sm:$0xff] %vm1009, %v970
      %1015 = vst.msk [vmem:[#allocation3 + $0x78] sm:$0xff] %vm1009, %v972
      %1016 = vst.msk [vmem:[#allocation3 + $0x90] sm:$0xff] %vm1009, %v974
      %1017 = vst.msk [vmem:[#allocation3 + $0xa8] sm:$0xff] %vm1009, %v976
      %1018 = vst.msk [vmem:[#allocation3 + $0xc0] sm:$0xff] %vm1009, %v978
      %1019 = vst.msk [vmem:[#allocation3 + $0xd8] sm:$0xff] %vm1009, %v980
      %1020 = vst.msk [vmem:[#allocation3 + $0xf0] sm:$0xff] %vm1009, %v982
      %1021 = vst.msk [vmem:[#allocation3 + $0x108] sm:$0xff] %vm1009, %v984
      %1022 = vst.msk [vmem:[#allocation3 + $0x120] sm:$0xff] %vm1009, %v986
      %1023 = vst.msk [vmem:[#allocation3 + $0x138] sm:$0xff] %vm1009, %v988
      %1024 = vst.msk [vmem:[#allocation3 + $0x150] sm:$0xff] %vm1009, %v990
      %1025 = vst.msk [vmem:[#allocation3 + $0x168] sm:$0xff] %vm1009, %v992
      %v1026 = vld [vmem:[#allocation2 + $0x2] sm:$0xff]
      %v1027 = vld [vmem:[#allocation2 + $0xa] sm:$0xff]
      %v1028 = vld [vmem:[#allocation2 + $0x1a] sm:$0xff]
      %v1029 = vld [vmem:[#allocation2 + $0x22] sm:$0xff]
      %v1030 = vld [vmem:[#allocation2 + $0x32] sm:$0xff]
      %v1031 = vld [vmem:[#allocation2 + $0x3a] sm:$0xff]
      %v1032 = vld [vmem:[#allocation2 + $0x4a] sm:$0xff]
      %v1033 = vld [vmem:[#allocation2 + $0x52] sm:$0xff]
      %v1034 = vld [vmem:[#allocation2 + $0x62] sm:$0xff]
      %v1035 = vld [vmem:[#allocation2 + $0x6a] sm:$0xff]
      %v1036 = vld [vmem:[#allocation2 + $0x7a] sm:$0xff]
      %v1037 = vld [vmem:[#allocation2 + $0x82] sm:$0xff]
      %v1038 = vld [vmem:[#allocation2 + $0x92] sm:$0xff]
      %v1039 = vld [vmem:[#allocation2 + $0x9a] sm:$0xff]
      %v1040 = vld [vmem:[#allocation2 + $0xaa] sm:$0xff]
      %v1041 = vld [vmem:[#allocation2 + $0xb2] sm:$0xff]
      %v1042 = vld [vmem:[#allocation2 + $0xc2] sm:$0xff]
      %v1043 = vld [vmem:[#allocation2 + $0xca] sm:$0xff]
      %v1044 = vld [vmem:[#allocation2 + $0xda] sm:$0xff]
      %v1045 = vld [vmem:[#allocation2 + $0xe2] sm:$0xff]
      %v1046 = vld [vmem:[#allocation2 + $0xf2] sm:$0xff]
      %v1047 = vld [vmem:[#allocation2 + $0xfa] sm:$0xff]
      %v1048 = vld [vmem:[#allocation2 + $0x10a] sm:$0xff]
      %v1049 = vld [vmem:[#allocation2 + $0x112] sm:$0xff]
      %v1050 = vld [vmem:[#allocation2 + $0x122] sm:$0xff]
      %v1051 = vld [vmem:[#allocation2 + $0x12a] sm:$0xff]
      %v1052 = vld [vmem:[#allocation2 + $0x13a] sm:$0xff]
      %v1053 = vld [vmem:[#allocation2 + $0x142] sm:$0xff]
      %v1054 = vld [vmem:[#allocation2 + $0x152] sm:$0xff]
      %v1055 = vld [vmem:[#allocation2 + $0x15a] sm:$0xff]
      %v1056 = vld [vmem:[#allocation2 + $0x16a] sm:$0xff]
      %v1057 = vld [vmem:[#allocation2 + $0x172] sm:$0xff]
      %v1058 = vpack.c.bf16 %v1027, %v1026
      %v1059 = vpack.c.bf16 %v1029, %v1028
      %v1060 = vpack.c.bf16 %v1031, %v1030
      %v1061 = vpack.c.bf16 %v1033, %v1032
      %v1062 = vpack.c.bf16 %v1035, %v1034
      %v1063 = vpack.c.bf16 %v1037, %v1036
      %v1064 = vpack.c.bf16 %v1039, %v1038
      %v1065 = vpack.c.bf16 %v1041, %v1040
      %v1066 = vpack.c.bf16 %v1043, %v1042
      %v1067 = vpack.c.bf16 %v1045, %v1044
      %v1068 = vpack.c.bf16 %v1047, %v1046
      %v1069 = vpack.c.bf16 %v1049, %v1048
      %v1070 = vpack.c.bf16 %v1051, %v1050
      %v1071 = vpack.c.bf16 %v1053, %v1052
      %v1072 = vpack.c.bf16 %v1055, %v1054
      %v1073 = vpack.c.bf16 %v1057, %v1056
      %1090 = vrot.lane.b32.xlu0 %v1058, 64
      %v1091 = vpop.permute.xlu0 %1090
      %1092 = vrot.lane.b32.xlu0 %v1059, 64
      %v1093 = vpop.permute.xlu0 %1092
      %1094 = vrot.lane.b32.xlu0 %v1060, 64
      %v1095 = vpop.permute.xlu0 %1094
      %1096 = vrot.lane.b32.xlu0 %v1061, 64
      %v1097 = vpop.permute.xlu0 %1096
      %1098 = vrot.lane.b32.xlu0 %v1062, 64
      %v1099 = vpop.permute.xlu0 %1098
      %1100 = vrot.lane.b32.xlu0 %v1063, 64
      %v1101 = vpop.permute.xlu0 %1100
      %1102 = vrot.lane.b32.xlu0 %v1064, 64
      %v1103 = vpop.permute.xlu0 %1102
      %1104 = vrot.lane.b32.xlu0 %v1065, 64
      %v1105 = vpop.permute.xlu0 %1104
      %1106 = vrot.lane.b32.xlu0 %v1066, 64
      %v1107 = vpop.permute.xlu0 %1106
      %1108 = vrot.lane.b32.xlu0 %v1067, 64
      %v1109 = vpop.permute.xlu0 %1108
      %1110 = vrot.lane.b32.xlu0 %v1068, 64
      %v1111 = vpop.permute.xlu0 %1110
      %1112 = vrot.lane.b32.xlu0 %v1069, 64
      %v1113 = vpop.permute.xlu0 %1112
      %1114 = vrot.lane.b32.xlu0 %v1070, 64
      %v1115 = vpop.permute.xlu0 %1114
      %1116 = vrot.lane.b32.xlu0 %v1071, 64
      %v1117 = vpop.permute.xlu0 %1116
      %1118 = vrot.lane.b32.xlu0 %v1072, 64
      %v1119 = vpop.permute.xlu0 %1118
      %1120 = vrot.lane.b32.xlu0 %v1073, 64
      %v1121 = vpop.permute.xlu0 %1120
      %vm1138 = vcmask 785920
      %1139 = vst.msk [vmem:[#allocation3] sm:$0xff] %vm1138, %v1091
      %1140 = vst.msk [vmem:[#allocation3 + $0x18] sm:$0xff] %vm1138, %v1093
      %1141 = vst.msk [vmem:[#allocation3 + $0x30] sm:$0xff] %vm1138, %v1095
      %1142 = vst.msk [vmem:[#allocation3 + $0x48] sm:$0xff] %vm1138, %v1097
      %1143 = vst.msk [vmem:[#allocation3 + $0x60] sm:$0xff] %vm1138, %v1099
      %1144 = vst.msk [vmem:[#allocation3 + $0x78] sm:$0xff] %vm1138, %v1101
      %1145 = vst.msk [vmem:[#allocation3 + $0x90] sm:$0xff] %vm1138, %v1103
      %1146 = vst.msk [vmem:[#allocation3 + $0xa8] sm:$0xff] %vm1138, %v1105
      %1147 = vst.msk [vmem:[#allocation3 + $0xc0] sm:$0xff] %vm1138, %v1107
      %1148 = vst.msk [vmem:[#allocation3 + $0xd8] sm:$0xff] %vm1138, %v1109
      %1149 = vst.msk [vmem:[#allocation3 + $0xf0] sm:$0xff] %vm1138, %v1111
      %1150 = vst.msk [vmem:[#allocation3 + $0x108] sm:$0xff] %vm1138, %v1113
      %1151 = vst.msk [vmem:[#allocation3 + $0x120] sm:$0xff] %vm1138, %v1115
      %1152 = vst.msk [vmem:[#allocation3 + $0x138] sm:$0xff] %vm1138, %v1117
      %1153 = vst.msk [vmem:[#allocation3 + $0x150] sm:$0xff] %vm1138, %v1119
      %1154 = vst.msk [vmem:[#allocation3 + $0x168] sm:$0xff] %vm1138, %v1121
      %v1155 = vld [vmem:[%s799] sm:$0xff]
      %v1156 = vld [vmem:[%s799 + $0x8] sm:$0xff]
      %v1157 = vld [vmem:[%s799 + $0x18] sm:$0xff]
      %v1158 = vld [vmem:[%s799 + $0x20] sm:$0xff]
      %v1159 = vld [vmem:[%s799 + $0x30] sm:$0xff]
      %v1160 = vld [vmem:[%s799 + $0x38] sm:$0xff]
      %v1161 = vld [vmem:[%s799 + $0x48] sm:$0xff]
      %v1162 = vld [vmem:[%s799 + $0x50] sm:$0xff]
      %v1163 = vld [vmem:[%s799 + $0x60] sm:$0xff]
      %v1164 = vld [vmem:[%s799 + $0x68] sm:$0xff]
      %v1165 = vld [vmem:[%s799 + $0x78] sm:$0xff]
      %v1166 = vld [vmem:[%s799 + $0x80] sm:$0xff]
      %v1167 = vld [vmem:[%s799 + $0x90] sm:$0xff]
      %v1168 = vld [vmem:[%s799 + $0x98] sm:$0xff]
      %v1169 = vld [vmem:[%s799 + $0xa8] sm:$0xff]
      %v1170 = vld [vmem:[%s799 + $0xb0] sm:$0xff]
      %v1171 = vld [vmem:[%s799 + $0xc0] sm:$0xff]
      %v1172 = vld [vmem:[%s799 + $0xc8] sm:$0xff]
      %v1173 = vld [vmem:[%s799 + $0xd8] sm:$0xff]
      %v1174 = vld [vmem:[%s799 + $0xe0] sm:$0xff]
      %v1175 = vld [vmem:[%s799 + $0xf0] sm:$0xff]
      %v1176 = vld [vmem:[%s799 + $0xf8] sm:$0xff]
      %v1177 = vld [vmem:[%s799 + $0x108] sm:$0xff]
      %v1178 = vld [vmem:[%s799 + $0x110] sm:$0xff]
      %v1179 = vld [vmem:[%s799 + $0x120] sm:$0xff]
      %v1180 = vld [vmem:[%s799 + $0x128] sm:$0xff]
      %v1181 = vld [vmem:[%s799 + $0x138] sm:$0xff]
      %v1182 = vld [vmem:[%s799 + $0x140] sm:$0xff]
      %v1183 = vld [vmem:[%s799 + $0x150] sm:$0xff]
      %v1184 = vld [vmem:[%s799 + $0x158] sm:$0xff]
      %v1185 = vld [vmem:[%s799 + $0x168] sm:$0xff]
      %v1186 = vld [vmem:[%s799 + $0x170] sm:$0xff]
      %v1187 = vpack.c.bf16 %v1156, %v1155
      %v1188 = vpack.c.bf16 %v1158, %v1157
      %v1189 = vpack.c.bf16 %v1160, %v1159
      %v1190 = vpack.c.bf16 %v1162, %v1161
      %v1191 = vpack.c.bf16 %v1164, %v1163
      %v1192 = vpack.c.bf16 %v1166, %v1165
      %v1193 = vpack.c.bf16 %v1168, %v1167
      %v1194 = vpack.c.bf16 %v1170, %v1169
      %v1195 = vpack.c.bf16 %v1172, %v1171
      %v1196 = vpack.c.bf16 %v1174, %v1173
      %v1197 = vpack.c.bf16 %v1176, %v1175
      %v1198 = vpack.c.bf16 %v1178, %v1177
      %v1199 = vpack.c.bf16 %v1180, %v1179
      %v1200 = vpack.c.bf16 %v1182, %v1181
      %v1201 = vpack.c.bf16 %v1184, %v1183
      %v1202 = vpack.c.bf16 %v1186, %v1185
      %1219 = vrot.lane.b32.xlu0 %v1187, 96
      %v1220 = vpop.permute.xlu0 %1219
      %1221 = vrot.lane.b32.xlu0 %v1188, 96
      %v1222 = vpop.permute.xlu0 %1221
      %1223 = vrot.lane.b32.xlu0 %v1189, 96
      %v1224 = vpop.permute.xlu0 %1223
      %1225 = vrot.lane.b32.xlu0 %v1190, 96
      %v1226 = vpop.permute.xlu0 %1225
      %1227 = vrot.lane.b32.xlu0 %v1191, 96
      %v1228 = vpop.permute.xlu0 %1227
      %1229 = vrot.lane.b32.xlu0 %v1192, 96
      %v1230 = vpop.permute.xlu0 %1229
      %1231 = vrot.lane.b32.xlu0 %v1193, 96
      %v1232 = vpop.permute.xlu0 %1231
      %1233 = vrot.lane.b32.xlu0 %v1194, 96
      %v1234 = vpop.permute.xlu0 %1233
      %1235 = vrot.lane.b32.xlu0 %v1195, 96
      %v1236 = vpop.permute.xlu0 %1235
      %1237 = vrot.lane.b32.xlu0 %v1196, 96
      %v1238 = vpop.permute.xlu0 %1237
      %1239 = vrot.lane.b32.xlu0 %v1197, 96
      %v1240 = vpop.permute.xlu0 %1239
      %1241 = vrot.lane.b32.xlu0 %v1198, 96
      %v1242 = vpop.permute.xlu0 %1241
      %1243 = vrot.lane.b32.xlu0 %v1199, 96
      %v1244 = vpop.permute.xlu0 %1243
      %1245 = vrot.lane.b32.xlu0 %v1200, 96
      %v1246 = vpop.permute.xlu0 %1245
      %1247 = vrot.lane.b32.xlu0 %v1201, 96
      %v1248 = vpop.permute.xlu0 %1247
      %1249 = vrot.lane.b32.xlu0 %v1202, 96
      %v1250 = vpop.permute.xlu0 %1249
      %vm1267 = vcmask 1048320
      %1268 = vst.msk [vmem:[#allocation3] sm:$0xff] %vm1267, %v1220
      %1269 = vst.msk [vmem:[#allocation3 + $0x18] sm:$0xff] %vm1267, %v1222
      %1270 = vst.msk [vmem:[#allocation3 + $0x30] sm:$0xff] %vm1267, %v1224
      %1271 = vst.msk [vmem:[#allocation3 + $0x48] sm:$0xff] %vm1267, %v1226
      %1272 = vst.msk [vmem:[#allocation3 + $0x60] sm:$0xff] %vm1267, %v1228
      %1273 = vst.msk [vmem:[#allocation3 + $0x78] sm:$0xff] %vm1267, %v1230
      %1274 = vst.msk [vmem:[#allocation3 + $0x90] sm:$0xff] %vm1267, %v1232
      %1275 = vst.msk [vmem:[#allocation3 + $0xa8] sm:$0xff] %vm1267, %v1234
      %1276 = vst.msk [vmem:[#allocation3 + $0xc0] sm:$0xff] %vm1267, %v1236
      %1277 = vst.msk [vmem:[#allocation3 + $0xd8] sm:$0xff] %vm1267, %v1238
      %1278 = vst.msk [vmem:[#allocation3 + $0xf0] sm:$0xff] %vm1267, %v1240
      %1279 = vst.msk [vmem:[#allocation3 + $0x108] sm:$0xff] %vm1267, %v1242
      %1280 = vst.msk [vmem:[#allocation3 + $0x120] sm:$0xff] %vm1267, %v1244
      %1281 = vst.msk [vmem:[#allocation3 + $0x138] sm:$0xff] %vm1267, %v1246
      %1282 = vst.msk [vmem:[#allocation3 + $0x150] sm:$0xff] %vm1267, %v1248
      %1283 = vst.msk [vmem:[#allocation3 + $0x168] sm:$0xff] %vm1267, %v1250
      %v1284 = vld [vmem:[%s799 + $0x1] sm:$0xff]
      %v1285 = vld [vmem:[%s799 + $0x9] sm:$0xff]
      %v1286 = vld [vmem:[%s799 + $0x19] sm:$0xff]
      %v1287 = vld [vmem:[%s799 + $0x21] sm:$0xff]
      %v1288 = vld [vmem:[%s799 + $0x31] sm:$0xff]
      %v1289 = vld [vmem:[%s799 + $0x39] sm:$0xff]
      %v1290 = vld [vmem:[%s799 + $0x49] sm:$0xff]
      %v1291 = vld [vmem:[%s799 + $0x51] sm:$0xff]
      %v1292 = vld [vmem:[%s799 + $0x61] sm:$0xff]
      %v1293 = vld [vmem:[%s799 + $0x69] sm:$0xff]
      %v1294 = vld [vmem:[%s799 + $0x79] sm:$0xff]
      %v1295 = vld [vmem:[%s799 + $0x81] sm:$0xff]
      %v1296 = vld [vmem:[%s799 + $0x91] sm:$0xff]
      %v1297 = vld [vmem:[%s799 + $0x99] sm:$0xff]
      %v1298 = vld [vmem:[%s799 + $0xa9] sm:$0xff]
      %v1299 = vld [vmem:[%s799 + $0xb1] sm:$0xff]
      %v1300 = vld [vmem:[%s799 + $0xc1] sm:$0xff]
      %v1301 = vld [vmem:[%s799 + $0xc9] sm:$0xff]
      %v1302 = vld [vmem:[%s799 + $0xd9] sm:$0xff]
      %v1303 = vld [vmem:[%s799 + $0xe1] sm:$0xff]
      %v1304 = vld [vmem:[%s799 + $0xf1] sm:$0xff]
      %v1305 = vld [vmem:[%s799 + $0xf9] sm:$0xff]
      %v1306 = vld [vmem:[%s799 + $0x109] sm:$0xff]
      %v1307 = vld [vmem:[%s799 + $0x111] sm:$0xff]
      %v1308 = vld [vmem:[%s799 + $0x121] sm:$0xff]
      %v1309 = vld [vmem:[%s799 + $0x129] sm:$0xff]
      %v1310 = vld [vmem:[%s799 + $0x139] sm:$0xff]
      %v1311 = vld [vmem:[%s799 + $0x141] sm:$0xff]
      %v1312 = vld [vmem:[%s799 + $0x151] sm:$0xff]
      %v1313 = vld [vmem:[%s799 + $0x159] sm:$0xff]
      %v1314 = vld [vmem:[%s799 + $0x169] sm:$0xff]
      %v1315 = vld [vmem:[%s799 + $0x171] sm:$0xff]
      %v1316 = vpack.c.bf16 %v1285, %v1284
      %v1317 = vpack.c.bf16 %v1287, %v1286
      %v1318 = vpack.c.bf16 %v1289, %v1288
      %v1319 = vpack.c.bf16 %v1291, %v1290
      %v1320 = vpack.c.bf16 %v1293, %v1292
      %v1321 = vpack.c.bf16 %v1295, %v1294
      %v1322 = vpack.c.bf16 %v1297, %v1296
      %v1323 = vpack.c.bf16 %v1299, %v1298
      %v1324 = vpack.c.bf16 %v1301, %v1300
      %v1325 = vpack.c.bf16 %v1303, %v1302
      %v1326 = vpack.c.bf16 %v1305, %v1304
      %v1327 = vpack.c.bf16 %v1307, %v1306
      %v1328 = vpack.c.bf16 %v1309, %v1308
      %v1329 = vpack.c.bf16 %v1311, %v1310
      %v1330 = vpack.c.bf16 %v1313, %v1312
      %v1331 = vpack.c.bf16 %v1315, %v1314
      %1332 = vst.msk [vmem:[#allocation3 + $0x8] sm:$0xff] %vm800, %v1316
      %1333 = vst.msk [vmem:[#allocation3 + $0x20] sm:$0xff] %vm800, %v1317
      %1334 = vst.msk [vmem:[#allocation3 + $0x38] sm:$0xff] %vm800, %v1318
      %1335 = vst.msk [vmem:[#allocation3 + $0x50] sm:$0xff] %vm800, %v1319
      %1336 = vst.msk [vmem:[#allocation3 + $0x68] sm:$0xff] %vm800, %v1320
      %1337 = vst.msk [vmem:[#allocation3 + $0x80] sm:$0xff] %vm800, %v1321
      %1338 = vst.msk [vmem:[#allocation3 + $0x98] sm:$0xff] %vm800, %v1322
      %1339 = vst.msk [vmem:[#allocation3 + $0xb0] sm:$0xff] %vm800, %v1323
      %1340 = vst.msk [vmem:[#allocation3 + $0xc8] sm:$0xff] %vm800, %v1324
      %1341 = vst.msk [vmem:[#allocation3 + $0xe0] sm:$0xff] %vm800, %v1325
      %1342 = vst.msk [vmem:[#allocation3 + $0xf8] sm:$0xff] %vm800, %v1326
      %1343 = vst.msk [vmem:[#allocation3 + $0x110] sm:$0xff] %vm800, %v1327
      %1344 = vst.msk [vmem:[#allocation3 + $0x128] sm:$0xff] %vm800, %v1328
      %1345 = vst.msk [vmem:[#allocation3 + $0x140] sm:$0xff] %vm800, %v1329
      %1346 = vst.msk [vmem:[#allocation3 + $0x158] sm:$0xff] %vm800, %v1330
      %1347 = vst.msk [vmem:[#allocation3 + $0x170] sm:$0xff] %vm800, %v1331
      %v1348 = vld [vmem:[%s799 + $0x2] sm:$0xff]
      %v1349 = vld [vmem:[%s799 + $0xa] sm:$0xff]
      %v1350 = vld [vmem:[%s799 + $0x1a] sm:$0xff]
      %v1351 = vld [vmem:[%s799 + $0x22] sm:$0xff]
      %v1352 = vld [vmem:[%s799 + $0x32] sm:$0xff]
      %v1353 = vld [vmem:[%s799 + $0x3a] sm:$0xff]
      %v1354 = vld [vmem:[%s799 + $0x4a] sm:$0xff]
      %v1355 = vld [vmem:[%s799 + $0x52] sm:$0xff]
      %v1356 = vld [vmem:[%s799 + $0x62] sm:$0xff]
      %v1357 = vld [vmem:[%s799 + $0x6a] sm:$0xff]
      %v1358 = vld [vmem:[%s799 + $0x7a] sm:$0xff]
      %v1359 = vld [vmem:[%s799 + $0x82] sm:$0xff]
      %v1360 = vld [vmem:[%s799 + $0x92] sm:$0xff]
      %v1361 = vld [vmem:[%s799 + $0x9a] sm:$0xff]
      %v1362 = vld [vmem:[%s799 + $0xaa] sm:$0xff]
      %v1363 = vld [vmem:[%s799 + $0xb2] sm:$0xff]
      %v1364 = vld [vmem:[%s799 + $0xc2] sm:$0xff]
      %v1365 = vld [vmem:[%s799 + $0xca] sm:$0xff]
      %v1366 = vld [vmem:[%s799 + $0xda] sm:$0xff]
      %v1367 = vld [vmem:[%s799 + $0xe2] sm:$0xff]
      %v1368 = vld [vmem:[%s799 + $0xf2] sm:$0xff]
      %v1369 = vld [vmem:[%s799 + $0xfa] sm:$0xff]
      %v1370 = vld [vmem:[%s799 + $0x10a] sm:$0xff]
      %v1371 = vld [vmem:[%s799 + $0x112] sm:$0xff]
      %v1372 = vld [vmem:[%s799 + $0x122] sm:$0xff]
      %v1373 = vld [vmem:[%s799 + $0x12a] sm:$0xff]
      %v1374 = vld [vmem:[%s799 + $0x13a] sm:$0xff]
      %v1375 = vld [vmem:[%s799 + $0x142] sm:$0xff]
      %v1376 = vld [vmem:[%s799 + $0x152] sm:$0xff]
      %v1377 = vld [vmem:[%s799 + $0x15a] sm:$0xff]
      %v1378 = vld [vmem:[%s799 + $0x16a] sm:$0xff]
      %v1379 = vld [vmem:[%s799 + $0x172] sm:$0xff]
      %v1380 = vpack.c.bf16 %v1349, %v1348
      %v1381 = vpack.c.bf16 %v1351, %v1350
      %v1382 = vpack.c.bf16 %v1353, %v1352
      %v1383 = vpack.c.bf16 %v1355, %v1354
      %v1384 = vpack.c.bf16 %v1357, %v1356
      %v1385 = vpack.c.bf16 %v1359, %v1358
      %v1386 = vpack.c.bf16 %v1361, %v1360
      %v1387 = vpack.c.bf16 %v1363, %v1362
      %v1388 = vpack.c.bf16 %v1365, %v1364
      %v1389 = vpack.c.bf16 %v1367, %v1366
      %v1390 = vpack.c.bf16 %v1369, %v1368
      %v1391 = vpack.c.bf16 %v1371, %v1370
      %v1392 = vpack.c.bf16 %v1373, %v1372
      %v1393 = vpack.c.bf16 %v1375, %v1374
      %v1394 = vpack.c.bf16 %v1377, %v1376
      %v1395 = vpack.c.bf16 %v1379, %v1378
      %1412 = vrot.lane.b32.xlu0 %v1380, 32
      %v1413 = vpop.permute.xlu0 %1412
      %1414 = vrot.lane.b32.xlu0 %v1381, 32
      %v1415 = vpop.permute.xlu0 %1414
      %1416 = vrot.lane.b32.xlu0 %v1382, 32
      %v1417 = vpop.permute.xlu0 %1416
      %1418 = vrot.lane.b32.xlu0 %v1383, 32
      %v1419 = vpop.permute.xlu0 %1418
      %1420 = vrot.lane.b32.xlu0 %v1384, 32
      %v1421 = vpop.permute.xlu0 %1420
      %1422 = vrot.lane.b32.xlu0 %v1385, 32
      %v1423 = vpop.permute.xlu0 %1422
      %1424 = vrot.lane.b32.xlu0 %v1386, 32
      %v1425 = vpop.permute.xlu0 %1424
      %1426 = vrot.lane.b32.xlu0 %v1387, 32
      %v1427 = vpop.permute.xlu0 %1426
      %1428 = vrot.lane.b32.xlu0 %v1388, 32
      %v1429 = vpop.permute.xlu0 %1428
      %1430 = vrot.lane.b32.xlu0 %v1389, 32
      %v1431 = vpop.permute.xlu0 %1430
      %1432 = vrot.lane.b32.xlu0 %v1390, 32
      %v1433 = vpop.permute.xlu0 %1432
      %1434 = vrot.lane.b32.xlu0 %v1391, 32
      %v1435 = vpop.permute.xlu0 %1434
      %1436 = vrot.lane.b32.xlu0 %v1392, 32
      %v1437 = vpop.permute.xlu0 %1436
      %1438 = vrot.lane.b32.xlu0 %v1393, 32
      %v1439 = vpop.permute.xlu0 %1438
      %1440 = vrot.lane.b32.xlu0 %v1394, 32
      %v1441 = vpop.permute.xlu0 %1440
      %1442 = vrot.lane.b32.xlu0 %v1395, 32
      %v1443 = vpop.permute.xlu0 %1442
      %1460 = vst.msk [vmem:[#allocation3 + $0x8] sm:$0xff] %vm1009, %v1413
      %1461 = vst.msk [vmem:[#allocation3 + $0x20] sm:$0xff] %vm1009, %v1415
      %1462 = vst.msk [vmem:[#allocation3 + $0x38] sm:$0xff] %vm1009, %v1417
      %1463 = vst.msk [vmem:[#allocation3 + $0x50] sm:$0xff] %vm1009, %v1419
      %1464 = vst.msk [vmem:[#allocation3 + $0x68] sm:$0xff] %vm1009, %v1421
      %1465 = vst.msk [vmem:[#allocation3 + $0x80] sm:$0xff] %vm1009, %v1423
      %1466 = vst.msk [vmem:[#allocation3 + $0x98] sm:$0xff] %vm1009, %v1425
      %1467 = vst.msk [vmem:[#allocation3 + $0xb0] sm:$0xff] %vm1009, %v1427
      %1468 = vst.msk [vmem:[#allocation3 + $0xc8] sm:$0xff] %vm1009, %v1429
      %1469 = vst.msk [vmem:[#allocation3 + $0xe0] sm:$0xff] %vm1009, %v1431
      %1470 = vst.msk [vmem:[#allocation3 + $0xf8] sm:$0xff] %vm1009, %v1433
      %1471 = vst.msk [vmem:[#allocation3 + $0x110] sm:$0xff] %vm1009, %v1435
      %1472 = vst.msk [vmem:[#allocation3 + $0x128] sm:$0xff] %vm1009, %v1437
      %1473 = vst.msk [vmem:[#allocation3 + $0x140] sm:$0xff] %vm1009, %v1439
      %1474 = vst.msk [vmem:[#allocation3 + $0x158] sm:$0xff] %vm1009, %v1441
      %1475 = vst.msk [vmem:[#allocation3 + $0x170] sm:$0xff] %vm1009, %v1443
      %s1476 = scalar_lea.vmem [#allocation2], 48
      %v1477 = vld [vmem:[%s1476] sm:$0xff]
      %v1478 = vld [vmem:[%s1476 + $0x8] sm:$0xff]
      %v1479 = vld [vmem:[%s1476 + $0x18] sm:$0xff]
      %v1480 = vld [vmem:[%s1476 + $0x20] sm:$0xff]
      %v1481 = vld [vmem:[%s1476 + $0x30] sm:$0xff]
      %v1482 = vld [vmem:[%s1476 + $0x38] sm:$0xff]
      %v1483 = vld [vmem:[%s1476 + $0x48] sm:$0xff]
      %v1484 = vld [vmem:[%s1476 + $0x50] sm:$0xff]
      %v1485 = vld [vmem:[%s1476 + $0x60] sm:$0xff]
      %v1486 = vld [vmem:[%s1476 + $0x68] sm:$0xff]
      %v1487 = vld [vmem:[%s1476 + $0x78] sm:$0xff]
      %v1488 = vld [vmem:[%s1476 + $0x80] sm:$0xff]
      %v1489 = vld [vmem:[%s1476 + $0x90] sm:$0xff]
      %v1490 = vld [vmem:[%s1476 + $0x98] sm:$0xff]
      %v1491 = vld [vmem:[%s1476 + $0xa8] sm:$0xff]
      %v1492 = vld [vmem:[%s1476 + $0xb0] sm:$0xff]
      %v1493 = vld [vmem:[%s1476 + $0xc0] sm:$0xff]
      %v1494 = vld [vmem:[%s1476 + $0xc8] sm:$0xff]
      %v1495 = vld [vmem:[%s1476 + $0xd8] sm:$0xff]
      %v1496 = vld [vmem:[%s1476 + $0xe0] sm:$0xff]
      %v1497 = vld [vmem:[%s1476 + $0xf0] sm:$0xff]
      %v1498 = vld [vmem:[%s1476 + $0xf8] sm:$0xff]
      %v1499 = vld [vmem:[%s1476 + $0x108] sm:$0xff]
      %v1500 = vld [vmem:[%s1476 + $0x110] sm:$0xff]
      %v1501 = vld [vmem:[%s1476 + $0x120] sm:$0xff]
      %v1502 = vld [vmem:[%s1476 + $0x128] sm:$0xff]
      %v1503 = vld [vmem:[%s1476 + $0x138] sm:$0xff]
      %v1504 = vld [vmem:[%s1476 + $0x140] sm:$0xff]
      %v1505 = vld [vmem:[%s1476 + $0x150] sm:$0xff]
      %v1506 = vld [vmem:[%s1476 + $0x158] sm:$0xff]
      %v1507 = vld [vmem:[%s1476 + $0x168] sm:$0xff]
      %v1508 = vld [vmem:[%s1476 + $0x170] sm:$0xff]
      %v1509 = vpack.c.bf16 %v1478, %v1477
      %v1510 = vpack.c.bf16 %v1480, %v1479
      %v1511 = vpack.c.bf16 %v1482, %v1481
      %v1512 = vpack.c.bf16 %v1484, %v1483
      %v1513 = vpack.c.bf16 %v1486, %v1485
      %v1514 = vpack.c.bf16 %v1488, %v1487
      %v1515 = vpack.c.bf16 %v1490, %v1489
      %v1516 = vpack.c.bf16 %v1492, %v1491
      %v1517 = vpack.c.bf16 %v1494, %v1493
      %v1518 = vpack.c.bf16 %v1496, %v1495
      %v1519 = vpack.c.bf16 %v1498, %v1497
      %v1520 = vpack.c.bf16 %v1500, %v1499
      %v1521 = vpack.c.bf16 %v1502, %v1501
      %v1522 = vpack.c.bf16 %v1504, %v1503
      %v1523 = vpack.c.bf16 %v1506, %v1505
      %v1524 = vpack.c.bf16 %v1508, %v1507
      %1541 = vrot.lane.b32.xlu0 %v1509, 64
      %v1542 = vpop.permute.xlu0 %1541
      %1543 = vrot.lane.b32.xlu0 %v1510, 64
      %v1544 = vpop.permute.xlu0 %1543
      %1545 = vrot.lane.b32.xlu0 %v1511, 64
      %v1546 = vpop.permute.xlu0 %1545
      %1547 = vrot.lane.b32.xlu0 %v1512, 64
      %v1548 = vpop.permute.xlu0 %1547
      %1549 = vrot.lane.b32.xlu0 %v1513, 64
      %v1550 = vpop.permute.xlu0 %1549
      %1551 = vrot.lane.b32.xlu0 %v1514, 64
      %v1552 = vpop.permute.xlu0 %1551
      %1553 = vrot.lane.b32.xlu0 %v1515, 64
      %v1554 = vpop.permute.xlu0 %1553
      %1555 = vrot.lane.b32.xlu0 %v1516, 64
      %v1556 = vpop.permute.xlu0 %1555
      %1557 = vrot.lane.b32.xlu0 %v1517, 64
      %v1558 = vpop.permute.xlu0 %1557
      %1559 = vrot.lane.b32.xlu0 %v1518, 64
      %v1560 = vpop.permute.xlu0 %1559
      %1561 = vrot.lane.b32.xlu0 %v1519, 64
      %v1562 = vpop.permute.xlu0 %1561
      %1563 = vrot.lane.b32.xlu0 %v1520, 64
      %v1564 = vpop.permute.xlu0 %1563
      %1565 = vrot.lane.b32.xlu0 %v1521, 64
      %v1566 = vpop.permute.xlu0 %1565
      %1567 = vrot.lane.b32.xlu0 %v1522, 64
      %v1568 = vpop.permute.xlu0 %1567
      %1569 = vrot.lane.b32.xlu0 %v1523, 64
      %v1570 = vpop.permute.xlu0 %1569
      %1571 = vrot.lane.b32.xlu0 %v1524, 64
      %v1572 = vpop.permute.xlu0 %1571
      %1589 = vst.msk [vmem:[#allocation3 + $0x8] sm:$0xff] %vm1138, %v1542
      %1590 = vst.msk [vmem:[#allocation3 + $0x20] sm:$0xff] %vm1138, %v1544
      %1591 = vst.msk [vmem:[#allocation3 + $0x38] sm:$0xff] %vm1138, %v1546
      %1592 = vst.msk [vmem:[#allocation3 + $0x50] sm:$0xff] %vm1138, %v1548
      %1593 = vst.msk [vmem:[#allocation3 + $0x68] sm:$0xff] %vm1138, %v1550
      %1594 = vst.msk [vmem:[#allocation3 + $0x80] sm:$0xff] %vm1138, %v1552
      %1595 = vst.msk [vmem:[#allocation3 + $0x98] sm:$0xff] %vm1138, %v1554
      %1596 = vst.msk [vmem:[#allocation3 + $0xb0] sm:$0xff] %vm1138, %v1556
      %1597 = vst.msk [vmem:[#allocation3 + $0xc8] sm:$0xff] %vm1138, %v1558
      %1598 = vst.msk [vmem:[#allocation3 + $0xe0] sm:$0xff] %vm1138, %v1560
      %1599 = vst.msk [vmem:[#allocation3 + $0xf8] sm:$0xff] %vm1138, %v1562
      %1600 = vst.msk [vmem:[#allocation3 + $0x110] sm:$0xff] %vm1138, %v1564
      %1601 = vst.msk [vmem:[#allocation3 + $0x128] sm:$0xff] %vm1138, %v1566
      %1602 = vst.msk [vmem:[#allocation3 + $0x140] sm:$0xff] %vm1138, %v1568
      %1603 = vst.msk [vmem:[#allocation3 + $0x158] sm:$0xff] %vm1138, %v1570
      %1604 = vst.msk [vmem:[#allocation3 + $0x170] sm:$0xff] %vm1138, %v1572
      %v1605 = vld [vmem:[%s1476 + $0x1] sm:$0xff]
      %v1606 = vld [vmem:[%s1476 + $0x9] sm:$0xff]
      %v1607 = vld [vmem:[%s1476 + $0x19] sm:$0xff]
      %v1608 = vld [vmem:[%s1476 + $0x21] sm:$0xff]
      %v1609 = vld [vmem:[%s1476 + $0x31] sm:$0xff]
      %v1610 = vld [vmem:[%s1476 + $0x39] sm:$0xff]
      %v1611 = vld [vmem:[%s1476 + $0x49] sm:$0xff]
      %v1612 = vld [vmem:[%s1476 + $0x51] sm:$0xff]
      %v1613 = vld [vmem:[%s1476 + $0x61] sm:$0xff]
      %v1614 = vld [vmem:[%s1476 + $0x69] sm:$0xff]
      %v1615 = vld [vmem:[%s1476 + $0x79] sm:$0xff]
      %v1616 = vld [vmem:[%s1476 + $0x81] sm:$0xff]
      %v1617 = vld [vmem:[%s1476 + $0x91] sm:$0xff]
      %v1618 = vld [vmem:[%s1476 + $0x99] sm:$0xff]
      %v1619 = vld [vmem:[%s1476 + $0xa9] sm:$0xff]
      %v1620 = vld [vmem:[%s1476 + $0xb1] sm:$0xff]
      %v1621 = vld [vmem:[%s1476 + $0xc1] sm:$0xff]
      %v1622 = vld [vmem:[%s1476 + $0xc9] sm:$0xff]
      %v1623 = vld [vmem:[%s1476 + $0xd9] sm:$0xff]
      %v1624 = vld [vmem:[%s1476 + $0xe1] sm:$0xff]
      %v1625 = vld [vmem:[%s1476 + $0xf1] sm:$0xff]
      %v1626 = vld [vmem:[%s1476 + $0xf9] sm:$0xff]
      %v1627 = vld [vmem:[%s1476 + $0x109] sm:$0xff]
      %v1628 = vld [vmem:[%s1476 + $0x111] sm:$0xff]
      %v1629 = vld [vmem:[%s1476 + $0x121] sm:$0xff]
      %v1630 = vld [vmem:[%s1476 + $0x129] sm:$0xff]
      %v1631 = vld [vmem:[%s1476 + $0x139] sm:$0xff]
      %v1632 = vld [vmem:[%s1476 + $0x141] sm:$0xff]
      %v1633 = vld [vmem:[%s1476 + $0x151] sm:$0xff]
      %v1634 = vld [vmem:[%s1476 + $0x159] sm:$0xff]
      %v1635 = vld [vmem:[%s1476 + $0x169] sm:$0xff]
      %v1636 = vld [vmem:[%s1476 + $0x171] sm:$0xff]
      %v1637 = vpack.c.bf16 %v1606, %v1605
      %v1638 = vpack.c.bf16 %v1608, %v1607
      %v1639 = vpack.c.bf16 %v1610, %v1609
      %v1640 = vpack.c.bf16 %v1612, %v1611
      %v1641 = vpack.c.bf16 %v1614, %v1613
      %v1642 = vpack.c.bf16 %v1616, %v1615
      %v1643 = vpack.c.bf16 %v1618, %v1617
      %v1644 = vpack.c.bf16 %v1620, %v1619
      %v1645 = vpack.c.bf16 %v1622, %v1621
      %v1646 = vpack.c.bf16 %v1624, %v1623
      %v1647 = vpack.c.bf16 %v1626, %v1625
      %v1648 = vpack.c.bf16 %v1628, %v1627
      %v1649 = vpack.c.bf16 %v1630, %v1629
      %v1650 = vpack.c.bf16 %v1632, %v1631
      %v1651 = vpack.c.bf16 %v1634, %v1633
      %v1652 = vpack.c.bf16 %v1636, %v1635
      %1669 = vrot.lane.b32.xlu0 %v1637, 96
      %v1670 = vpop.permute.xlu0 %1669
      %1671 = vrot.lane.b32.xlu0 %v1638, 96
      %v1672 = vpop.permute.xlu0 %1671
      %1673 = vrot.lane.b32.xlu0 %v1639, 96
      %v1674 = vpop.permute.xlu0 %1673
      %1675 = vrot.lane.b32.xlu0 %v1640, 96
      %v1676 = vpop.permute.xlu0 %1675
      %1677 = vrot.lane.b32.xlu0 %v1641, 96
      %v1678 = vpop.permute.xlu0 %1677
      %1679 = vrot.lane.b32.xlu0 %v1642, 96
      %v1680 = vpop.permute.xlu0 %1679
      %1681 = vrot.lane.b32.xlu0 %v1643, 96
      %v1682 = vpop.permute.xlu0 %1681
      %1683 = vrot.lane.b32.xlu0 %v1644, 96
      %v1684 = vpop.permute.xlu0 %1683
      %1685 = vrot.lane.b32.xlu0 %v1645, 96
      %v1686 = vpop.permute.xlu0 %1685
      %1687 = vrot.lane.b32.xlu0 %v1646, 96
      %v1688 = vpop.permute.xlu0 %1687
      %1689 = vrot.lane.b32.xlu0 %v1647, 96
      %v1690 = vpop.permute.xlu0 %1689
      %1691 = vrot.lane.b32.xlu0 %v1648, 96
      %v1692 = vpop.permute.xlu0 %1691
      %1693 = vrot.lane.b32.xlu0 %v1649, 96
      %v1694 = vpop.permute.xlu0 %1693
      %1695 = vrot.lane.b32.xlu0 %v1650, 96
      %v1696 = vpop.permute.xlu0 %1695
      %1697 = vrot.lane.b32.xlu0 %v1651, 96
      %v1698 = vpop.permute.xlu0 %1697
      %1699 = vrot.lane.b32.xlu0 %v1652, 96
      %v1700 = vpop.permute.xlu0 %1699
      %1717 = vst.msk [vmem:[#allocation3 + $0x8] sm:$0xff] %vm1267, %v1670
      %1718 = vst.msk [vmem:[#allocation3 + $0x20] sm:$0xff] %vm1267, %v1672
      %1719 = vst.msk [vmem:[#allocation3 + $0x38] sm:$0xff] %vm1267, %v1674
      %1720 = vst.msk [vmem:[#allocation3 + $0x50] sm:$0xff] %vm1267, %v1676
      %1721 = vst.msk [vmem:[#allocation3 + $0x68] sm:$0xff] %vm1267, %v1678
      %1722 = vst.msk [vmem:[#allocation3 + $0x80] sm:$0xff] %vm1267, %v1680
      %1723 = vst.msk [vmem:[#allocation3 + $0x98] sm:$0xff] %vm1267, %v1682
      %1724 = vst.msk [vmem:[#allocation3 + $0xb0] sm:$0xff] %vm1267, %v1684
      %1725 = vst.msk [vmem:[#allocation3 + $0xc8] sm:$0xff] %vm1267, %v1686
      %1726 = vst.msk [vmem:[#allocation3 + $0xe0] sm:$0xff] %vm1267, %v1688
      %1727 = vst.msk [vmem:[#allocation3 + $0xf8] sm:$0xff] %vm1267, %v1690
      %1728 = vst.msk [vmem:[#allocation3 + $0x110] sm:$0xff] %vm1267, %v1692
      %1729 = vst.msk [vmem:[#allocation3 + $0x128] sm:$0xff] %vm1267, %v1694
      %1730 = vst.msk [vmem:[#allocation3 + $0x140] sm:$0xff] %vm1267, %v1696
      %1731 = vst.msk [vmem:[#allocation3 + $0x158] sm:$0xff] %vm1267, %v1698
      %1732 = vst.msk [vmem:[#allocation3 + $0x170] sm:$0xff] %vm1267, %v1700
      %v1733 = vld [vmem:[%s1476 + $0x2] sm:$0xff]
      %v1734 = vld [vmem:[%s1476 + $0xa] sm:$0xff]
      %v1735 = vld [vmem:[%s1476 + $0x1a] sm:$0xff]
      %v1736 = vld [vmem:[%s1476 + $0x22] sm:$0xff]
      %v1737 = vld [vmem:[%s1476 + $0x32] sm:$0xff]
      %v1738 = vld [vmem:[%s1476 + $0x3a] sm:$0xff]
      %v1739 = vld [vmem:[%s1476 + $0x4a] sm:$0xff]
      %v1740 = vld [vmem:[%s1476 + $0x52] sm:$0xff]
      %v1741 = vld [vmem:[%s1476 + $0x62] sm:$0xff]
      %v1742 = vld [vmem:[%s1476 + $0x6a] sm:$0xff]
      %v1743 = vld [vmem:[%s1476 + $0x7a] sm:$0xff]
      %v1744 = vld [vmem:[%s1476 + $0x82] sm:$0xff]
      %v1745 = vld [vmem:[%s1476 + $0x92] sm:$0xff]
      %v1746 = vld [vmem:[%s1476 + $0x9a] sm:$0xff]
      %v1747 = vld [vmem:[%s1476 + $0xaa] sm:$0xff]
      %v1748 = vld [vmem:[%s1476 + $0xb2] sm:$0xff]
      %v1749 = vld [vmem:[%s1476 + $0xc2] sm:$0xff]
      %v1750 = vld [vmem:[%s1476 + $0xca] sm:$0xff]
      %v1751 = vld [vmem:[%s1476 + $0xda] sm:$0xff]
      %v1752 = vld [vmem:[%s1476 + $0xe2] sm:$0xff]
      %v1753 = vld [vmem:[%s1476 + $0xf2] sm:$0xff]
      %v1754 = vld [vmem:[%s1476 + $0xfa] sm:$0xff]
      %v1755 = vld [vmem:[%s1476 + $0x10a] sm:$0xff]
      %v1756 = vld [vmem:[%s1476 + $0x112] sm:$0xff]
      %v1757 = vld [vmem:[%s1476 + $0x122] sm:$0xff]
      %v1758 = vld [vmem:[%s1476 + $0x12a] sm:$0xff]
      %v1759 = vld [vmem:[%s1476 + $0x13a] sm:$0xff]
      %v1760 = vld [vmem:[%s1476 + $0x142] sm:$0xff]
      %v1761 = vld [vmem:[%s1476 + $0x152] sm:$0xff]
      %v1762 = vld [vmem:[%s1476 + $0x15a] sm:$0xff]
      %v1763 = vld [vmem:[%s1476 + $0x16a] sm:$0xff]
      %v1764 = vld [vmem:[%s1476 + $0x172] sm:$0xff]
      %v1765 = vpack.c.bf16 %v1734, %v1733
      %v1766 = vpack.c.bf16 %v1736, %v1735
      %v1767 = vpack.c.bf16 %v1738, %v1737
      %v1768 = vpack.c.bf16 %v1740, %v1739
      %v1769 = vpack.c.bf16 %v1742, %v1741
      %v1770 = vpack.c.bf16 %v1744, %v1743
      %v1771 = vpack.c.bf16 %v1746, %v1745
      %v1772 = vpack.c.bf16 %v1748, %v1747
      %v1773 = vpack.c.bf16 %v1750, %v1749
      %v1774 = vpack.c.bf16 %v1752, %v1751
      %v1775 = vpack.c.bf16 %v1754, %v1753
      %v1776 = vpack.c.bf16 %v1756, %v1755
      %v1777 = vpack.c.bf16 %v1758, %v1757
      %v1778 = vpack.c.bf16 %v1760, %v1759
      %v1779 = vpack.c.bf16 %v1762, %v1761
      %v1780 = vpack.c.bf16 %v1764, %v1763
      %1781 = vst.msk [vmem:[#allocation3 + $0x10] sm:$0xff] %vm800, %v1765
      %1782 = vst.msk [vmem:[#allocation3 + $0x28] sm:$0xff] %vm800, %v1766
      %1783 = vst.msk [vmem:[#allocation3 + $0x40] sm:$0xff] %vm800, %v1767
      %1784 = vst.msk [vmem:[#allocation3 + $0x58] sm:$0xff] %vm800, %v1768
      %1785 = vst.msk [vmem:[#allocation3 + $0x70] sm:$0xff] %vm800, %v1769
      %1786 = vst.msk [vmem:[#allocation3 + $0x88] sm:$0xff] %vm800, %v1770
      %1787 = vst.msk [vmem:[#allocation3 + $0xa0] sm:$0xff] %vm800, %v1771
      %1788 = vst.msk [vmem:[#allocation3 + $0xb8] sm:$0xff] %vm800, %v1772
      %1789 = vst.msk [vmem:[#allocation3 + $0xd0] sm:$0xff] %vm800, %v1773
      %1790 = vst.msk [vmem:[#allocation3 + $0xe8] sm:$0xff] %vm800, %v1774
      %1791 = vst.msk [vmem:[#allocation3 + $0x100] sm:$0xff] %vm800, %v1775
      %1792 = vst.msk [vmem:[#allocation3 + $0x118] sm:$0xff] %vm800, %v1776
      %1793 = vst.msk [vmem:[#allocation3 + $0x130] sm:$0xff] %vm800, %v1777
      %1794 = vst.msk [vmem:[#allocation3 + $0x148] sm:$0xff] %vm800, %v1778
      %1795 = vst.msk [vmem:[#allocation3 + $0x160] sm:$0xff] %vm800, %v1779
      %1796 = vst.msk [vmem:[#allocation3 + $0x178] sm:$0xff] %vm800, %v1780
      %v1797 = vld [vmem:[#allocation3] sm:$0xff]
      %v1798 = vld [vmem:[#allocation3 + $0x8] sm:$0xff]
      %v1799 = vld [vmem:[#allocation3 + $0x10] sm:$0xff]
      %v1800 = vld [vmem:[#allocation3 + $0x18] sm:$0xff]
      %v1801 = vld [vmem:[#allocation3 + $0x20] sm:$0xff]
      %v1802 = vld [vmem:[#allocation3 + $0x28] sm:$0xff]
      %v1803 = vld [vmem:[#allocation3 + $0x30] sm:$0xff]
      %v1804 = vld [vmem:[#allocation3 + $0x38] sm:$0xff]
      %v1805 = vld [vmem:[#allocation3 + $0x40] sm:$0xff]
      %v1806 = vld [vmem:[#allocation3 + $0x48] sm:$0xff]
      %v1807 = vld [vmem:[#allocation3 + $0x50] sm:$0xff]
      %v1808 = vld [vmem:[#allocation3 + $0x58] sm:$0xff]
      %v1809 = vld [vmem:[#allocation3 + $0x60] sm:$0xff]
      %v1810 = vld [vmem:[#allocation3 + $0x68] sm:$0xff]
      %v1811 = vld [vmem:[#allocation3 + $0x70] sm:$0xff]
      %v1812 = vld [vmem:[#allocation3 + $0x78] sm:$0xff]
      %v1813 = vld [vmem:[#allocation3 + $0x80] sm:$0xff]
      %v1814 = vld [vmem:[#allocation3 + $0x88] sm:$0xff]
      %v1815 = vld [vmem:[#allocation3 + $0x90] sm:$0xff]
      %v1816 = vld [vmem:[#allocation3 + $0x98] sm:$0xff]
      %v1817 = vld [vmem:[#allocation3 + $0xa0] sm:$0xff]
      %v1818 = vld [vmem:[#allocation3 + $0xa8] sm:$0xff]
      %v1819 = vld [vmem:[#allocation3 + $0xb0] sm:$0xff]
      %v1820 = vld [vmem:[#allocation3 + $0xb8] sm:$0xff]
      %v1821 = vld [vmem:[#allocation3 + $0xc0] sm:$0xff]
      %v1822 = vld [vmem:[#allocation3 + $0xc8] sm:$0xff]
      %v1823 = vld [vmem:[#allocation3 + $0xd0] sm:$0xff]
      %v1824 = vld [vmem:[#allocation3 + $0xd8] sm:$0xff]
      %v1825 = vld [vmem:[#allocation3 + $0xe0] sm:$0xff]
      %v1826 = vld [vmem:[#allocation3 + $0xe8] sm:$0xff]
      %v1827 = vld [vmem:[#allocation3 + $0xf0] sm:$0xff]
      %v1828 = vld [vmem:[#allocation3 + $0xf8] sm:$0xff]
      %v1829 = vld [vmem:[#allocation3 + $0x100] sm:$0xff]
      %v1830 = vld [vmem:[#allocation3 + $0x108] sm:$0xff]
      %v1831 = vld [vmem:[#allocation3 + $0x110] sm:$0xff]
      %v1832 = vld [vmem:[#allocation3 + $0x118] sm:$0xff]
      %v1833 = vld [vmem:[#allocation3 + $0x120] sm:$0xff]
      %v1834 = vld [vmem:[#allocation3 + $0x128] sm:$0xff]
      %v1835 = vld [vmem:[#allocation3 + $0x130] sm:$0xff]
      %v1836 = vld [vmem:[#allocation3 + $0x138] sm:$0xff]
      %v1837 = vld [vmem:[#allocation3 + $0x140] sm:$0xff]
      %v1838 = vld [vmem:[#allocation3 + $0x148] sm:$0xff]
      %v1839 = vld [vmem:[#allocation3 + $0x150] sm:$0xff]
      %v1840 = vld [vmem:[#allocation3 + $0x158] sm:$0xff]
      %v1841 = vld [vmem:[#allocation3 + $0x160] sm:$0xff]
      %v1842 = vld [vmem:[#allocation3 + $0x168] sm:$0xff]
      %v1843 = vld [vmem:[#allocation3 + $0x170] sm:$0xff]
      %v1844 = vld [vmem:[#allocation3 + $0x178] sm:$0xff]
      %v1845 = vld [vmem:[%s4] sm:$0xf]
      %v1846 = vld [vmem:[%s4 + $0x4] sm:$0xf]
      %v1847 = vld [vmem:[%s4 + $0x8] sm:$0xf]
      %v1848 = vld [vmem:[%s4 + $0xc] sm:$0xf]
      %v1849 = vld [vmem:[%s4 + $0x10] sm:$0xf]
      %v1850 = vld [vmem:[%s4 + $0x14] sm:$0xf]
      %v1851 = vld [vmem:[%s4 + $0x18] sm:$0xf]
      %v1852 = vld [vmem:[%s4 + $0x1c] sm:$0xf]
      %v1853 = vld [vmem:[%s4 + $0x20] sm:$0xf]
      %v1854 = vld [vmem:[%s4 + $0x24] sm:$0xf]
      %v1855 = vld [vmem:[%s4 + $0x28] sm:$0xf]
      %v1856 = vld [vmem:[%s4 + $0x2c] sm:$0xf]
      %v1857 = vld [vmem:[%s4 + $0x30] sm:$0xf]
      %v1858 = vld [vmem:[%s4 + $0x34] sm:$0xf]
      %v1859 = vld [vmem:[%s4 + $0x38] sm:$0xf]
      %v1860 = vld [vmem:[%s4 + $0x3c] sm:$0xf]
      %v1861 = vld [vmem:[%s4 + $0x40] sm:$0xf]
      %v1862 = vld [vmem:[%s4 + $0x44] sm:$0xf]
      %v1863 = vld [vmem:[%s4 + $0x48] sm:$0xf]
      %v1864 = vld [vmem:[%s4 + $0x4c] sm:$0xf]
      %v1865 = vld [vmem:[%s4 + $0x50] sm:$0xf]
      %v1866 = vld [vmem:[%s4 + $0x54] sm:$0xf]
      %v1867 = vld [vmem:[%s4 + $0x58] sm:$0xf]
      %v1868 = vld [vmem:[%s4 + $0x5c] sm:$0xf]
      %v1869 = vld [vmem:[%s4 + $0x60] sm:$0xf]
      %v1870 = vld [vmem:[%s4 + $0x64] sm:$0xf]
      %v1871 = vld [vmem:[%s4 + $0x68] sm:$0xf]
      %v1872 = vld [vmem:[%s4 + $0x6c] sm:$0xf]
      %v1873 = vld [vmem:[%s4 + $0x70] sm:$0xf]
      %v1874 = vld [vmem:[%s4 + $0x74] sm:$0xf]
      %v1875 = vld [vmem:[%s4 + $0x78] sm:$0xf]
      %v1876 = vld [vmem:[%s4 + $0x7c] sm:$0xf]
      %v1877 = vld [vmem:[%s4 + $0x80] sm:$0xf]
      %v1878 = vld [vmem:[%s4 + $0x84] sm:$0xf]
      %v1879 = vld [vmem:[%s4 + $0x88] sm:$0xf]
      %v1880 = vld [vmem:[%s4 + $0x8c] sm:$0xf]
      %v1881 = vld [vmem:[%s5] sm:$0x1]
      %v1883 = vlaneseq
      %v1884 = vshrl.u32 %v1883, 7
      %v1885 = vsub.s32 0, %v1884
      %v1886 = vrot.slane %v1881, %v1885
      %v1924 = vunpack.c.l.b16 %v1845
      %v1925 = vunpack.c.l.b16 %v1846
      %v1926 = vunpack.c.l.b16 %v1847
      %v1927 = vunpack.c.l.b16 %v1848
      %v1928 = vunpack.c.l.b16 %v1849
      %v1929 = vunpack.c.l.b16 %v1850
      %v1930 = vunpack.c.l.b16 %v1851
      %v1931 = vunpack.c.l.b16 %v1852
      %v1932 = vunpack.c.l.b16 %v1853
      %v1933 = vunpack.c.l.b16 %v1854
      %v1934 = vunpack.c.l.b16 %v1855
      %v1935 = vunpack.c.l.b16 %v1856
      %v1936 = vunpack.c.l.b16 %v1857
      %v1937 = vunpack.c.l.b16 %v1858
      %v1938 = vunpack.c.l.b16 %v1859
      %v1939 = vunpack.c.l.b16 %v1860
      %v1940 = vunpack.c.l.b16 %v1861
      %v1941 = vunpack.c.l.b16 %v1862
      %v1942 = vunpack.c.l.b16 %v1863
      %v1943 = vunpack.c.l.b16 %v1864
      %v1944 = vunpack.c.l.b16 %v1865
      %v1945 = vunpack.c.l.b16 %v1866
      %v1946 = vunpack.c.l.b16 %v1867
      %v1947 = vunpack.c.l.b16 %v1868
      %v1948 = vunpack.c.l.b16 %v1869
      %v1949 = vunpack.c.l.b16 %v1870
      %v1950 = vunpack.c.l.b16 %v1871
      %v1951 = vunpack.c.l.b16 %v1872
      %v1952 = vunpack.c.l.b16 %v1873
      %v1953 = vunpack.c.l.b16 %v1874
      %v1954 = vunpack.c.l.b16 %v1875
      %v1955 = vunpack.c.l.b16 %v1876
      %v1956 = vunpack.c.l.b16 %v1877
      %v1957 = vunpack.c.l.b16 %v1878
      %v1958 = vunpack.c.l.b16 %v1879
      %v1959 = vunpack.c.l.b16 %v1880
      %v1960 = vpack.c.b16 %v1925, %v1924
      %v1961 = vpack.c.b16 %v1927, %v1926
      %v1962 = vpack.c.b16 %v1929, %v1928
      %v1963 = vpack.c.b16 %v1931, %v1930
      %v1964 = vpack.c.b16 %v1933, %v1932
      %v1965 = vpack.c.b16 %v1935, %v1934
      %v1966 = vpack.c.b16 %v1937, %v1936
      %v1967 = vpack.c.b16 %v1939, %v1938
      %v1968 = vpack.c.b16 %v1941, %v1940
      %v1969 = vpack.c.b16 %v1943, %v1942
      %v1970 = vpack.c.b16 %v1945, %v1944
      %v1971 = vpack.c.b16 %v1947, %v1946
      %v1972 = vpack.c.b16 %v1949, %v1948
      %v1973 = vpack.c.b16 %v1951, %v1950
      %v1974 = vpack.c.b16 %v1953, %v1952
      %v1975 = vpack.c.b16 %v1955, %v1954
      %v1976 = vpack.c.b16 %v1957, %v1956
      %v1977 = vpack.c.b16 %v1959, %v1958
      %v1997 = vsel %vm800, %v1799, 0
      %v2000 = vsel %vm800, %v1802, 0
      %v2003 = vsel %vm800, %v1805, 0
      %v2006 = vsel %vm800, %v1808, 0
      %v2009 = vsel %vm800, %v1811, 0
      %v2012 = vsel %vm800, %v1814, 0
      %v2015 = vsel %vm800, %v1817, 0
      %v2018 = vsel %vm800, %v1820, 0
      %v2021 = vsel %vm800, %v1823, 0
      %v2024 = vsel %vm800, %v1826, 0
      %v2027 = vsel %vm800, %v1829, 0
      %v2030 = vsel %vm800, %v1832, 0
      %v2033 = vsel %vm800, %v1835, 0
      %v2036 = vsel %vm800, %v1838, 0
      %v2039 = vsel %vm800, %v1841, 0
      %v2042 = vsel %vm800, %v1844, 0
      %2044 = vmatprep.subr.bf16.mxu0 0
      %2045 = vmatpush1.bf16.msra.mxu0 %v1960
      %2046 = vmatprep.subr.bf16.mxu0 0
      %2047 = vmatpush1.bf16.msra.mxu0 %v1961
      %2048 = vmatprep.subr.bf16.mxu0 0
      %2049 = vmatpush1.bf16.msra.mxu0 %v1962
      %2050 = vmatprep.subr.bf16.mxu0 0
      %2051 = vmatpush1.bf16.msra.mxu0 %v1963
      %2052 = vmatprep.subr.bf16.mxu0 0
      %2053 = vmatpush1.bf16.msra.mxu0 %v1964
      %2054 = vmatprep.subr.bf16.mxu0 0
      %2055 = vmatpush1.bf16.msra.mxu0 %v1965
      %2056 = vmatprep.subr.bf16.mxu0 0
      %2057 = vmatpush1.bf16.msra.mxu0 %v1966
      %2058 = vmatprep.subr.bf16.mxu0 0
      %2059 = vmatpush1.bf16.msra.mxu0 %v1967
      %2060 = vmatprep.subr.bf16.mxu0 0
      %2061 = vmatpush1.bf16.msra.mxu0 %v1968
      %2062 = vmatprep.subr.bf16.mxu0 0
      %2063 = vmatpush1.bf16.msra.mxu0 %v1969
      %2064 = vmatprep.subr.bf16.mxu0 0
      %2065 = vmatpush1.bf16.msra.mxu0 %v1970
      %2066 = vmatprep.subr.bf16.mxu0 0
      %2067 = vmatpush1.bf16.msra.mxu0 %v1971
      %2068 = vmatprep.subr.bf16.mxu0 0
      %2069 = vmatpush1.bf16.msra.mxu0 %v1972
      %2070 = vmatprep.subr.bf16.mxu0 0
      %2071 = vmatpush1.bf16.msra.mxu0 %v1973
      %2072 = vmatprep.subr.bf16.mxu0 0
      %2073 = vmatpush1.bf16.msra.mxu0 %v1974
      %2074 = vmatprep.subr.bf16.mxu0 0
      %2075 = vmatpush1.bf16.msra.mxu0 %v1975
      %2076 = vmatprep.mubr.bf16.mxu0 %v1798
      %2077 = vmatmul.mubr.bf16.gmra.mrb[0].mxu0 %v1797
      %v2078 = vpop.f32.mrb[0].mxu0
      %v2079 = vadd.f32 %v1886, %v2078
      %v2080 = vpop.f32.mrb[0].mxu0
      %v2081 = vpop.f32.mrb[0].mxu0
      %v2082 = vadd.f32 %v1886, %v2081
      %v2083 = vpop.f32.mrb[0].mxu0
      %2084 = vmatprep.mubr.bf16.mxu0 %v1801
      %2085 = vmatmul.mubr.bf16.gmra.mrb[0].mxu0 %v1800
      %v2086 = vpop.f32.mrb[0].mxu0
      %v2087 = vadd.f32 %v1886, %v2086
      %v2088 = vpop.f32.mrb[0].mxu0
      %v2089 = vpop.f32.mrb[0].mxu0
      %v2090 = vadd.f32 %v1886, %v2089
      %v2091 = vpop.f32.mrb[0].mxu0
      %2092 = vmatprep.mubr.bf16.mxu0 %v1804
      %2093 = vmatmul.mubr.bf16.gmra.mrb[0].mxu0 %v1803
      %v2094 = vpop.f32.mrb[0].mxu0
      %v2095 = vadd.f32 %v1886, %v2094
      %v2096 = vpop.f32.mrb[0].mxu0
      %v2097 = vpop.f32.mrb[0].mxu0
      %v2098 = vadd.f32 %v1886, %v2097
      %v2099 = vpop.f32.mrb[0].mxu0
      %2100 = vmatprep.mubr.bf16.mxu0 %v1807
      %2101 = vmatmul.mubr.bf16.gmra.mrb[0].mxu0 %v1806
      %v2102 = vpop.f32.mrb[0].mxu0
      %v2103 = vadd.f32 %v1886, %v2102
      %v2104 = vpop.f32.mrb[0].mxu0
      %v2105 = vpop.f32.mrb[0].mxu0
      %v2106 = vadd.f32 %v1886, %v2105
      %v2107 = vpop.f32.mrb[0].mxu0
      %2108 = vmatprep.mubr.bf16.mxu0 %v1810
      %2109 = vmatmul.mubr.bf16.gmra.mrb[0].mxu0 %v1809
      %v2110 = vpop.f32.mrb[0].mxu0
      %v2111 = vadd.f32 %v1886, %v2110
      %v2112 = vpop.f32.mrb[0].mxu0
      %v2113 = vpop.f32.mrb[0].mxu0
      %v2114 = vadd.f32 %v1886, %v2113
      %v2115 = vpop.f32.mrb[0].mxu0
      %2116 = vmatprep.mubr.bf16.mxu0 %v1813
      %2117 = vmatmul.mubr.bf16.gmra.mrb[0].mxu0 %v1812
      %v2118 = vpop.f32.mrb[0].mxu0
      %v2119 = vadd.f32 %v1886, %v2118
      %v2120 = vpop.f32.mrb[0].mxu0
      %v2121 = vpop.f32.mrb[0].mxu0
      %v2122 = vadd.f32 %v1886, %v2121
      %v2123 = vpop.f32.mrb[0].mxu0
      %2124 = vmatprep.mubr.bf16.mxu0 %v1816
      %2125 = vmatmul.mubr.bf16.gmra.mrb[0].mxu0 %v1815
      %v2126 = vpop.f32.mrb[0].mxu0
      %v2127 = vadd.f32 %v1886, %v2126
      %v2128 = vpop.f32.mrb[0].mxu0
      %v2129 = vpop.f32.mrb[0].mxu0
      %v2130 = vadd.f32 %v1886, %v2129
      %v2131 = vpop.f32.mrb[0].mxu0
      %2132 = vmatprep.mubr.bf16.mxu0 %v1819
      %2133 = vmatmul.mubr.bf16.gmra.mrb[0].mxu0 %v1818
      %v2134 = vpop.f32.mrb[0].mxu0
      %v2135 = vadd.f32 %v1886, %v2134
      %v2136 = vpop.f32.mrb[0].mxu0
      %v2137 = vpop.f32.mrb[0].mxu0
      %v2138 = vadd.f32 %v1886, %v2137
      %v2139 = vpop.f32.mrb[0].mxu0
      %2140 = vmatprep.mubr.bf16.mxu0 %v1822
      %2141 = vmatmul.mubr.bf16.gmra.mrb[0].mxu0 %v1821
      %v2142 = vpop.f32.mrb[0].mxu0
      %v2143 = vadd.f32 %v1886, %v2142
      %v2144 = vpop.f32.mrb[0].mxu0
      %v2145 = vpop.f32.mrb[0].mxu0
      %v2146 = vadd.f32 %v1886, %v2145
      %v2147 = vpop.f32.mrb[0].mxu0
      %2148 = vmatprep.mubr.bf16.mxu0 %v1825
      %2149 = vmatmul.mubr.bf16.gmra.mrb[0].mxu0 %v1824
      %v2150 = vpop.f32.mrb[0].mxu0
      %v2151 = vadd.f32 %v1886, %v2150
      %v2152 = vpop.f32.mrb[0].mxu0
      %v2153 = vpop.f32.mrb[0].mxu0
      %v2154 = vadd.f32 %v1886, %v2153
      %v2155 = vpop.f32.mrb[0].mxu0
      %2156 = vmatprep.mubr.bf16.mxu0 %v1828
      %2157 = vmatmul.mubr.bf16.gmra.mrb[0].mxu0 %v1827
      %v2158 = vpop.f32.mrb[0].mxu0
      %v2159 = vadd.f32 %v1886, %v2158
      %v2160 = vpop.f32.mrb[0].mxu0
      %v2161 = vpop.f32.mrb[0].mxu0
      %v2162 = vadd.f32 %v1886, %v2161
      %v2163 = vpop.f32.mrb[0].mxu0
      %2164 = vmatprep.mubr.bf16.mxu0 %v1831
      %2165 = vmatmul.mubr.bf16.gmra.mrb[0].mxu0 %v1830
      %v2166 = vpop.f32.mrb[0].mxu0
      %v2167 = vadd.f32 %v1886, %v2166
      %v2168 = vpop.f32.mrb[0].mxu0
      %v2169 = vpop.f32.mrb[0].mxu0
      %v2170 = vadd.f32 %v1886, %v2169
      %v2171 = vpop.f32.mrb[0].mxu0
      %2172 = vmatprep.mubr.bf16.mxu0 %v1834
      %2173 = vmatmul.mubr.bf16.gmra.mrb[0].mxu0 %v1833
      %v2174 = vpop.f32.mrb[0].mxu0
      %v2175 = vadd.f32 %v1886, %v2174
      %v2176 = vpop.f32.mrb[0].mxu0
      %v2177 = vpop.f32.mrb[0].mxu0
      %v2178 = vadd.f32 %v1886, %v2177
      %v2179 = vpop.f32.mrb[0].mxu0
      %2180 = vmatprep.mubr.bf16.mxu0 %v1837
      %2181 = vmatmul.mubr.bf16.gmra.mrb[0].mxu0 %v1836
      %v2182 = vpop.f32.mrb[0].mxu0
      %v2183 = vadd.f32 %v1886, %v2182
      %v2184 = vpop.f32.mrb[0].mxu0
      %v2185 = vpop.f32.mrb[0].mxu0
      %v2186 = vadd.f32 %v1886, %v2185
      %v2187 = vpop.f32.mrb[0].mxu0
      %2188 = vmatprep.mubr.bf16.mxu0 %v1840
      %2189 = vmatmul.mubr.bf16.gmra.mrb[0].mxu0 %v1839
      %v2190 = vpop.f32.mrb[0].mxu0
      %v2191 = vadd.f32 %v1886, %v2190
      %v2192 = vpop.f32.mrb[0].mxu0
      %v2193 = vpop.f32.mrb[0].mxu0
      %v2194 = vadd.f32 %v1886, %v2193
      %v2195 = vpop.f32.mrb[0].mxu0
      %2196 = vmatprep.mubr.bf16.mxu0 %v1843
      %2197 = vmatmul.mubr.bf16.gmra.mrb[0].mxu0 %v1842
      %v2198 = vpop.f32.mrb[0].mxu0
      %v2199 = vadd.f32 %v1886, %v2198
      %v2200 = vpop.f32.mrb[0].mxu0
      %v2201 = vpop.f32.mrb[0].mxu0
      %v2202 = vadd.f32 %v1886, %v2201
      %v2203 = vpop.f32.mrb[0].mxu0
      %2204 = vdwg.mxu0
      %2205 = vmatprep.subr.bf16.mxu0 0
      %2206 = vmatpush1.bf16.msra.mxu0 %v1976
      %2207 = vmatprep.subr.bf16.mxu0 0
      %2208 = vmatpush1.bf16.msra.mxu0 %v1977
      %2209 = vmatprep.subr.bf16.mxu0 0
      %2210 = vmatpush1.bf16.msra.mxu0 0
      %2211 = vmatprep.subr.bf16.mxu0 0
      %2212 = vmatpush1.bf16.msra.mxu0 0
      %2213 = vmatprep.subr.bf16.mxu0 0
      %2214 = vmatpush1.bf16.msra.mxu0 0
      %2215 = vmatprep.subr.bf16.mxu0 0
      %2216 = vmatpush1.bf16.msra.mxu0 0
      %2217 = vmatprep.subr.bf16.mxu0 0
      %2218 = vmatpush1.bf16.msra.mxu0 0
      %2219 = vmatprep.subr.bf16.mxu0 0
      %2220 = vmatpush1.bf16.msra.mxu0 0
      %2221 = vmatprep.subr.bf16.mxu0 0
      %2222 = vmatpush1.bf16.msra.mxu0 0
      %2223 = vmatprep.subr.bf16.mxu0 0
      %2224 = vmatpush1.bf16.msra.mxu0 0
      %2225 = vmatprep.subr.bf16.mxu0 0
      %2226 = vmatpush1.bf16.msra.mxu0 0
      %2227 = vmatprep.subr.bf16.mxu0 0
      %2228 = vmatpush1.bf16.msra.mxu0 0
      %2229 = vmatprep.subr.bf16.mxu0 0
      %2230 = vmatpush1.bf16.msra.mxu0 0
      %2231 = vmatprep.subr.bf16.mxu0 0
      %2232 = vmatpush1.bf16.msra.mxu0 0
      %2233 = vmatprep.subr.bf16.mxu0 0
      %2234 = vmatpush1.bf16.msra.mxu0 0
      %2235 = vmatprep.subr.bf16.mxu0 0
      %2236 = vmatpush1.bf16.msra.mxu0 0
      %2237 = vmatprep.mubr.bf16.mxu0 0
      %2238 = vmatmul.mubr.bf16.gmra.mrb[0].mxu0 %v1997
      %v2239 = vpop.f32.mrb[0].mxu0
      %v2240 = vadd.f32 %v2079, %v2239
      %v2241 = vpop.f32.mrb[0].mxu0
      %v2242 = vpop.f32.mrb[0].mxu0
      %v2243 = vadd.f32 %v2082, %v2242
      %v2244 = vpop.f32.mrb[0].mxu0
      %2245 = vmatprep.mubr.bf16.mxu0 0
      %2246 = vmatmul.mubr.bf16.gmra.mrb[0].mxu0 %v2000
      %v2247 = vpop.f32.mrb[0].mxu0
      %v2248 = vadd.f32 %v2087, %v2247
      %v2249 = vpop.f32.mrb[0].mxu0
      %v2250 = vpop.f32.mrb[0].mxu0
      %v2251 = vadd.f32 %v2090, %v2250
      %v2252 = vpop.f32.mrb[0].mxu0
      %2253 = vmatprep.mubr.bf16.mxu0 0
      %2254 = vmatmul.mubr.bf16.gmra.mrb[0].mxu0 %v2003
      %v2255 = vpop.f32.mrb[0].mxu0
      %v2256 = vadd.f32 %v2095, %v2255
      %v2257 = vpop.f32.mrb[0].mxu0
      %v2258 = vpop.f32.mrb[0].mxu0
      %v2259 = vadd.f32 %v2098, %v2258
      %v2260 = vpop.f32.mrb[0].mxu0
      %2261 = vmatprep.mubr.bf16.mxu0 0
      %2262 = vmatmul.mubr.bf16.gmra.mrb[0].mxu0 %v2006
      %v2263 = vpop.f32.mrb[0].mxu0
      %v2264 = vadd.f32 %v2103, %v2263
      %v2265 = vpop.f32.mrb[0].mxu0
      %v2266 = vpop.f32.mrb[0].mxu0
      %v2267 = vadd.f32 %v2106, %v2266
      %v2268 = vpop.f32.mrb[0].mxu0
      %2269 = vmatprep.mubr.bf16.mxu0 0
      %2270 = vmatmul.mubr.bf16.gmra.mrb[0].mxu0 %v2009
      %v2271 = vpop.f32.mrb[0].mxu0
      %v2272 = vadd.f32 %v2111, %v2271
      %v2273 = vpop.f32.mrb[0].mxu0
      %v2274 = vpop.f32.mrb[0].mxu0
      %v2275 = vadd.f32 %v2114, %v2274
      %v2276 = vpop.f32.mrb[0].mxu0
      %2277 = vmatprep.mubr.bf16.mxu0 0
      %2278 = vmatmul.mubr.bf16.gmra.mrb[0].mxu0 %v2012
      %v2279 = vpop.f32.mrb[0].mxu0
      %v2280 = vadd.f32 %v2119, %v2279
      %v2281 = vpop.f32.mrb[0].mxu0
      %v2282 = vpop.f32.mrb[0].mxu0
      %v2283 = vadd.f32 %v2122, %v2282
      %v2284 = vpop.f32.mrb[0].mxu0
      %2285 = vmatprep.mubr.bf16.mxu0 0
      %2286 = vmatmul.mubr.bf16.gmra.mrb[0].mxu0 %v2015
      %v2287 = vpop.f32.mrb[0].mxu0
      %v2288 = vadd.f32 %v2127, %v2287
      %v2289 = vpop.f32.mrb[0].mxu0
      %v2290 = vpop.f32.mrb[0].mxu0
      %v2291 = vadd.f32 %v2130, %v2290
      %v2292 = vpop.f32.mrb[0].mxu0
      %2293 = vmatprep.mubr.bf16.mxu0 0
      %2294 = vmatmul.mubr.bf16.gmra.mrb[0].mxu0 %v2018
      %v2295 = vpop.f32.mrb[0].mxu0
      %v2296 = vadd.f32 %v2135, %v2295
      %v2297 = vpop.f32.mrb[0].mxu0
      %v2298 = vpop.f32.mrb[0].mxu0
      %v2299 = vadd.f32 %v2138, %v2298
      %v2300 = vpop.f32.mrb[0].mxu0
      %2301 = vmatprep.mubr.bf16.mxu0 0
      %2302 = vmatmul.mubr.bf16.gmra.mrb[0].mxu0 %v2021
      %v2303 = vpop.f32.mrb[0].mxu0
      %v2304 = vadd.f32 %v2143, %v2303
      %v2305 = vpop.f32.mrb[0].mxu0
      %v2306 = vpop.f32.mrb[0].mxu0
      %v2307 = vadd.f32 %v2146, %v2306
      %v2308 = vpop.f32.mrb[0].mxu0
      %2309 = vmatprep.mubr.bf16.mxu0 0
      %2310 = vmatmul.mubr.bf16.gmra.mrb[0].mxu0 %v2024
      %v2311 = vpop.f32.mrb[0].mxu0
      %v2312 = vadd.f32 %v2151, %v2311
      %v2313 = vpop.f32.mrb[0].mxu0
      %v2314 = vpop.f32.mrb[0].mxu0
      %v2315 = vadd.f32 %v2154, %v2314
      %v2316 = vpop.f32.mrb[0].mxu0
      %2317 = vmatprep.mubr.bf16.mxu0 0
      %2318 = vmatmul.mubr.bf16.gmra.mrb[0].mxu0 %v2027
      %v2319 = vpop.f32.mrb[0].mxu0
      %v2320 = vadd.f32 %v2159, %v2319
      %v2321 = vpop.f32.mrb[0].mxu0
      %v2322 = vpop.f32.mrb[0].mxu0
      %v2323 = vadd.f32 %v2162, %v2322
      %v2324 = vpop.f32.mrb[0].mxu0
      %2325 = vmatprep.mubr.bf16.mxu0 0
      %2326 = vmatmul.mubr.bf16.gmra.mrb[0].mxu0 %v2030
      %v2327 = vpop.f32.mrb[0].mxu0
      %v2328 = vadd.f32 %v2167, %v2327
      %v2329 = vpop.f32.mrb[0].mxu0
      %v2330 = vpop.f32.mrb[0].mxu0
      %v2331 = vadd.f32 %v2170, %v2330
      %v2332 = vpop.f32.mrb[0].mxu0
      %2333 = vmatprep.mubr.bf16.mxu0 0
      %2334 = vmatmul.mubr.bf16.gmra.mrb[0].mxu0 %v2033
      %v2335 = vpop.f32.mrb[0].mxu0
      %v2336 = vadd.f32 %v2175, %v2335
      %v2337 = vpop.f32.mrb[0].mxu0
      %v2338 = vpop.f32.mrb[0].mxu0
      %v2339 = vadd.f32 %v2178, %v2338
      %v2340 = vpop.f32.mrb[0].mxu0
      %2341 = vmatprep.mubr.bf16.mxu0 0
      %2342 = vmatmul.mubr.bf16.gmra.mrb[0].mxu0 %v2036
      %v2343 = vpop.f32.mrb[0].mxu0
      %v2344 = vadd.f32 %v2183, %v2343
      %v2345 = vpop.f32.mrb[0].mxu0
      %v2346 = vpop.f32.mrb[0].mxu0
      %v2347 = vadd.f32 %v2186, %v2346
      %v2348 = vpop.f32.mrb[0].mxu0
      %2349 = vmatprep.mubr.bf16.mxu0 0
      %2350 = vmatmul.mubr.bf16.gmra.mrb[0].mxu0 %v2039
      %v2351 = vpop.f32.mrb[0].mxu0
      %v2352 = vadd.f32 %v2191, %v2351
      %v2353 = vpop.f32.mrb[0].mxu0
      %v2354 = vpop.f32.mrb[0].mxu0
      %v2355 = vadd.f32 %v2194, %v2354
      %v2356 = vpop.f32.mrb[0].mxu0
      %2357 = vmatprep.mubr.bf16.mxu0 0
      %2358 = vmatmul.mubr.bf16.gmra.mrb[0].mxu0 %v2042
      %v2359 = vpop.f32.mrb[0].mxu0
      %v2360 = vadd.f32 %v2199, %v2359
      %v2361 = vpop.f32.mrb[0].mxu0
      %v2362 = vpop.f32.mrb[0].mxu0
      %v2363 = vadd.f32 %v2202, %v2362
      %v2364 = vpop.f32.mrb[0].mxu0
      %2365 = vdwg.mxu0
      %v2366 = vmax.f32 %v2240, 0.0
      %v2367 = vmax.f32 %v2243, 0.0
      %v2368 = vmax.f32 %v2248, 0.0
      %v2369 = vmax.f32 %v2251, 0.0
      %v2370 = vmax.f32 %v2256, 0.0
      %v2371 = vmax.f32 %v2259, 0.0
      %v2372 = vmax.f32 %v2264, 0.0
      %v2373 = vmax.f32 %v2267, 0.0
      %v2374 = vmax.f32 %v2272, 0.0
      %v2375 = vmax.f32 %v2275, 0.0
      %v2376 = vmax.f32 %v2280, 0.0
      %v2377 = vmax.f32 %v2283, 0.0
      %v2378 = vmax.f32 %v2288, 0.0
      %v2379 = vmax.f32 %v2291, 0.0
      %v2380 = vmax.f32 %v2296, 0.0
      %v2381 = vmax.f32 %v2299, 0.0
      %v2382 = vmax.f32 %v2304, 0.0
      %v2383 = vmax.f32 %v2307, 0.0
      %v2384 = vmax.f32 %v2312, 0.0
      %v2385 = vmax.f32 %v2315, 0.0
      %v2386 = vmax.f32 %v2320, 0.0
      %v2387 = vmax.f32 %v2323, 0.0
      %v2388 = vmax.f32 %v2328, 0.0
      %v2389 = vmax.f32 %v2331, 0.0
      %v2390 = vmax.f32 %v2336, 0.0
      %v2391 = vmax.f32 %v2339, 0.0
      %v2392 = vmax.f32 %v2344, 0.0
      %v2393 = vmax.f32 %v2347, 0.0
      %v2394 = vmax.f32 %v2352, 0.0
      %v2395 = vmax.f32 %v2355, 0.0
      %v2396 = vmax.f32 %v2360, 0.0
      %v2397 = vmax.f32 %v2363, 0.0
      %v2398 = vld [vmem:[%s428] sm:$0xff]
      %v2399 = vld [vmem:[%s428 + $0x8] sm:$0xff]
      %v2400 = vld [vmem:[%s428 + $0x10] sm:$0xff]
      %v2401 = vld [vmem:[%s428 + $0x18] sm:$0xff]
      %v2402 = vld [vmem:[%s428 + $0x20] sm:$0xff]
      %v2403 = vld [vmem:[%s428 + $0x28] sm:$0xff]
      %v2404 = vld [vmem:[%s428 + $0x30] sm:$0xff]
      %v2405 = vld [vmem:[%s428 + $0x38] sm:$0xff]
      %v2406 = vld [vmem:[%s428 + $0x40] sm:$0xff]
      %v2407 = vld [vmem:[%s428 + $0x48] sm:$0xff]
      %v2408 = vld [vmem:[%s428 + $0x50] sm:$0xff]
      %v2409 = vld [vmem:[%s428 + $0x58] sm:$0xff]
      %v2410 = vld [vmem:[%s428 + $0x60] sm:$0xff]
      %v2411 = vld [vmem:[%s428 + $0x68] sm:$0xff]
      %v2412 = vld [vmem:[%s428 + $0x70] sm:$0xff]
      %v2413 = vld [vmem:[%s428 + $0x78] sm:$0xff]
      %v2414 = vld [vmem:[%s428 + $0x80] sm:$0xff]
      %v2415 = vld [vmem:[%s428 + $0x88] sm:$0xff]
      %v2416 = vld [vmem:[%s428 + $0x90] sm:$0xff]
      %v2417 = vld [vmem:[%s428 + $0x98] sm:$0xff]
      %v2418 = vld [vmem:[%s428 + $0xa0] sm:$0xff]
      %v2419 = vld [vmem:[%s428 + $0xa8] sm:$0xff]
      %v2420 = vld [vmem:[%s428 + $0xb0] sm:$0xff]
      %v2421 = vld [vmem:[%s428 + $0xb8] sm:$0xff]
      %v2422 = vld [vmem:[%s428 + $0xc0] sm:$0xff]
      %v2423 = vld [vmem:[%s428 + $0xc8] sm:$0xff]
      %v2424 = vld [vmem:[%s428 + $0xd0] sm:$0xff]
      %v2425 = vld [vmem:[%s428 + $0xd8] sm:$0xff]
      %v2426 = vld [vmem:[%s428 + $0xe0] sm:$0xff]
      %v2427 = vld [vmem:[%s428 + $0xe8] sm:$0xff]
      %v2428 = vld [vmem:[%s428 + $0xf0] sm:$0xff]
      %v2429 = vld [vmem:[%s428 + $0xf8] sm:$0xff]
      %v2430 = vpack.c.bf16 %v2399, %v2398
      %v2431 = vpack.c.bf16 %v2401, %v2400
      %v2432 = vpack.c.bf16 %v2403, %v2402
      %v2433 = vpack.c.bf16 %v2405, %v2404
      %v2434 = vpack.c.bf16 %v2407, %v2406
      %v2435 = vpack.c.bf16 %v2409, %v2408
      %v2436 = vpack.c.bf16 %v2411, %v2410
      %v2437 = vpack.c.bf16 %v2413, %v2412
      %v2438 = vpack.c.bf16 %v2415, %v2414
      %v2439 = vpack.c.bf16 %v2417, %v2416
      %v2440 = vpack.c.bf16 %v2419, %v2418
      %v2441 = vpack.c.bf16 %v2421, %v2420
      %v2442 = vpack.c.bf16 %v2423, %v2422
      %v2443 = vpack.c.bf16 %v2425, %v2424
      %v2444 = vpack.c.bf16 %v2427, %v2426
      %v2445 = vpack.c.bf16 %v2429, %v2428
      %v2446 = vld [vmem:[%s6] sm:$0xf]
      %v2447 = vld [vmem:[%s6 + $0x4] sm:$0xf]
      %v2448 = vld [vmem:[%s6 + $0x8] sm:$0xf]
      %v2449 = vld [vmem:[%s6 + $0xc] sm:$0xf]
      %v2450 = vld [vmem:[%s6 + $0x10] sm:$0xf]
      %v2451 = vld [vmem:[%s6 + $0x14] sm:$0xf]
      %v2452 = vld [vmem:[%s6 + $0x18] sm:$0x1]
      %v2453 = vld [vmem:[%s7] sm:$0x1]
      %v2455 = vlaneseq
      %v2456 = vshrl.u32 %v2455, 7
      %v2457 = vsub.s32 0, %v2456
      %v2458 = vrot.slane %v2453, %v2457
      %v2467 = vunpack.c.l.b16 %v2446
      %v2468 = vunpack.c.l.b16 %v2447
      %v2469 = vunpack.c.l.b16 %v2448
      %v2470 = vunpack.c.l.b16 %v2449
      %v2471 = vunpack.c.l.b16 %v2450
      %v2472 = vunpack.c.l.b16 %v2451
      %v2473 = vunpack.c.l.b16 %v2452
      %v2474 = vpack.c.b16 %v2468, %v2467
      %v2475 = vpack.c.b16 %v2470, %v2469
      %v2476 = vpack.c.b16 %v2472, %v2471
      %v2477 = vpack.c.b16 %v2473, %v2473
      %vm2481 = vcmask 400384
      %v2483 = vsel %vm2481, %v2430, 0
      %v2486 = vsel %vm2481, %v2431, 0
      %v2489 = vsel %vm2481, %v2432, 0
      %v2492 = vsel %vm2481, %v2433, 0
      %v2495 = vsel %vm2481, %v2434, 0
      %v2498 = vsel %vm2481, %v2435, 0
      %v2501 = vsel %vm2481, %v2436, 0
      %v2504 = vsel %vm2481, %v2437, 0
      %v2507 = vsel %vm2481, %v2438, 0
      %v2510 = vsel %vm2481, %v2439, 0
      %v2513 = vsel %vm2481, %v2440, 0
      %v2516 = vsel %vm2481, %v2441, 0
      %v2519 = vsel %vm2481, %v2442, 0
      %v2522 = vsel %vm2481, %v2443, 0
      %v2525 = vsel %vm2481, %v2444, 0
      %v2528 = vsel %vm2481, %v2445, 0
      %vm2530 = vcmask 1040384
      %v2531 = vsel 0, 4294967295, 65535
      %v2532 = vsel %vm2530, %v2531, 0
      %v2534 = vand.u32 %v2477, %v2532
      %2536 = vmatprep.subr.bf16.mxu0 0
      %2537 = vmatpush1.bf16.msra.mxu0 %v2474
      %2538 = vmatprep.subr.bf16.mxu0 0
      %2539 = vmatpush1.bf16.msra.mxu0 %v2475
      %2540 = vmatprep.subr.bf16.mxu0 0
      %2541 = vmatpush1.bf16.msra.mxu0 %v2476
      %2542 = vmatprep.subr.bf16.mxu0 0
      %2543 = vmatpush1.bf16.msra.mxu0 %v2534
      %2544 = vmatprep.subr.bf16.mxu0 0
      %2545 = vmatpush1.bf16.msra.mxu0 0
      %2546 = vmatprep.subr.bf16.mxu0 0
      %2547 = vmatpush1.bf16.msra.mxu0 0
      %2548 = vmatprep.subr.bf16.mxu0 0
      %2549 = vmatpush1.bf16.msra.mxu0 0
      %2550 = vmatprep.subr.bf16.mxu0 0
      %2551 = vmatpush1.bf16.msra.mxu0 0
      %2552 = vmatprep.subr.bf16.mxu0 0
      %2553 = vmatpush1.bf16.msra.mxu0 0
      %2554 = vmatprep.subr.bf16.mxu0 0
      %2555 = vmatpush1.bf16.msra.mxu0 0
      %2556 = vmatprep.subr.bf16.mxu0 0
      %2557 = vmatpush1.bf16.msra.mxu0 0
      %2558 = vmatprep.subr.bf16.mxu0 0
      %2559 = vmatpush1.bf16.msra.mxu0 0
      %2560 = vmatprep.subr.bf16.mxu0 0
      %2561 = vmatpush1.bf16.msra.mxu0 0
      %2562 = vmatprep.subr.bf16.mxu0 0
      %2563 = vmatpush1.bf16.msra.mxu0 0
      %2564 = vmatprep.subr.bf16.mxu0 0
      %2565 = vmatpush1.bf16.msra.mxu0 0
      %2566 = vmatprep.subr.bf16.mxu0 0
      %2567 = vmatpush1.bf16.msra.mxu0 0
      %2568 = vmatprep.mubr.bf16.mxu0 0
      %2569 = vmatmul.mubr.bf16.gmra.mrb[0].mxu0 %v2483
      %v2570 = vpop.f32.mrb[0].mxu0
      %v2571 = vadd.f32 %v2458, %v2570
      %v2572 = vpop.f32.mrb[0].mxu0
      %v2573 = vpop.f32.mrb[0].mxu0
      %v2574 = vadd.f32 %v2458, %v2573
      %v2575 = vpop.f32.mrb[0].mxu0
      %2576 = vmatprep.mubr.bf16.mxu0 0
      %2577 = vmatmul.mubr.bf16.gmra.mrb[0].mxu0 %v2486
      %v2578 = vpop.f32.mrb[0].mxu0
      %v2579 = vadd.f32 %v2458, %v2578
      %v2580 = vpop.f32.mrb[0].mxu0
      %v2581 = vpop.f32.mrb[0].mxu0
      %v2582 = vadd.f32 %v2458, %v2581
      %v2583 = vpop.f32.mrb[0].mxu0
      %2584 = vmatprep.mubr.bf16.mxu0 0
      %2585 = vmatmul.mubr.bf16.gmra.mrb[0].mxu0 %v2489
      %v2586 = vpop.f32.mrb[0].mxu0
      %v2587 = vadd.f32 %v2458, %v2586
      %v2588 = vpop.f32.mrb[0].mxu0
      %v2589 = vpop.f32.mrb[0].mxu0
      %v2590 = vadd.f32 %v2458, %v2589
      %v2591 = vpop.f32.mrb[0].mxu0
      %2592 = vmatprep.mubr.bf16.mxu0 0
      %2593 = vmatmul.mubr.bf16.gmra.mrb[0].mxu0 %v2492
      %v2594 = vpop.f32.mrb[0].mxu0
      %v2595 = vadd.f32 %v2458, %v2594
      %v2596 = vpop.f32.mrb[0].mxu0
      %v2597 = vpop.f32.mrb[0].mxu0
      %v2598 = vadd.f32 %v2458, %v2597
      %v2599 = vpop.f32.mrb[0].mxu0
      %2600 = vmatprep.mubr.bf16.mxu0 0
      %2601 = vmatmul.mubr.bf16.gmra.mrb[0].mxu0 %v2495
      %v2602 = vpop.f32.mrb[0].mxu0
      %v2603 = vadd.f32 %v2458, %v2602
      %v2604 = vpop.f32.mrb[0].mxu0
      %v2605 = vpop.f32.mrb[0].mxu0
      %v2606 = vadd.f32 %v2458, %v2605
      %v2607 = vpop.f32.mrb[0].mxu0
      %2608 = vmatprep.mubr.bf16.mxu0 0
      %2609 = vmatmul.mubr.bf16.gmra.mrb[0].mxu0 %v2498
      %v2610 = vpop.f32.mrb[0].mxu0
      %v2611 = vadd.f32 %v2458, %v2610
      %v2612 = vpop.f32.mrb[0].mxu0
      %v2613 = vpop.f32.mrb[0].mxu0
      %v2614 = vadd.f32 %v2458, %v2613
      %v2615 = vpop.f32.mrb[0].mxu0
      %2616 = vmatprep.mubr.bf16.mxu0 0
      %2617 = vmatmul.mubr.bf16.gmra.mrb[0].mxu0 %v2501
      %v2618 = vpop.f32.mrb[0].mxu0
      %v2619 = vadd.f32 %v2458, %v2618
      %v2620 = vpop.f32.mrb[0].mxu0
      %v2621 = vpop.f32.mrb[0].mxu0
      %v2622 = vadd.f32 %v2458, %v2621
      %v2623 = vpop.f32.mrb[0].mxu0
      %2624 = vmatprep.mubr.bf16.mxu0 0
      %2625 = vmatmul.mubr.bf16.gmra.mrb[0].mxu0 %v2504
      %v2626 = vpop.f32.mrb[0].mxu0
      %v2627 = vadd.f32 %v2458, %v2626
      %v2628 = vpop.f32.mrb[0].mxu0
      %v2629 = vpop.f32.mrb[0].mxu0
      %v2630 = vadd.f32 %v2458, %v2629
      %v2631 = vpop.f32.mrb[0].mxu0
      %2632 = vmatprep.mubr.bf16.mxu0 0
      %2633 = vmatmul.mubr.bf16.gmra.mrb[0].mxu0 %v2507
      %v2634 = vpop.f32.mrb[0].mxu0
      %v2635 = vadd.f32 %v2458, %v2634
      %v2636 = vpop.f32.mrb[0].mxu0
      %v2637 = vpop.f32.mrb[0].mxu0
      %v2638 = vadd.f32 %v2458, %v2637
      %v2639 = vpop.f32.mrb[0].mxu0
      %2640 = vmatprep.mubr.bf16.mxu0 0
      %2641 = vmatmul.mubr.bf16.gmra.mrb[0].mxu0 %v2510
      %v2642 = vpop.f32.mrb[0].mxu0
      %v2643 = vadd.f32 %v2458, %v2642
      %v2644 = vpop.f32.mrb[0].mxu0
      %v2645 = vpop.f32.mrb[0].mxu0
      %v2646 = vadd.f32 %v2458, %v2645
      %v2647 = vpop.f32.mrb[0].mxu0
      %2648 = vmatprep.mubr.bf16.mxu0 0
      %2649 = vmatmul.mubr.bf16.gmra.mrb[0].mxu0 %v2513
      %v2650 = vpop.f32.mrb[0].mxu0
      %v2651 = vadd.f32 %v2458, %v2650
      %v2652 = vpop.f32.mrb[0].mxu0
      %v2653 = vpop.f32.mrb[0].mxu0
      %v2654 = vadd.f32 %v2458, %v2653
      %v2655 = vpop.f32.mrb[0].mxu0
      %2656 = vmatprep.mubr.bf16.mxu0 0
      %2657 = vmatmul.mubr.bf16.gmra.mrb[0].mxu0 %v2516
      %v2658 = vpop.f32.mrb[0].mxu0
      %v2659 = vadd.f32 %v2458, %v2658
      %v2660 = vpop.f32.mrb[0].mxu0
      %v2661 = vpop.f32.mrb[0].mxu0
      %v2662 = vadd.f32 %v2458, %v2661
      %v2663 = vpop.f32.mrb[0].mxu0
      %2664 = vmatprep.mubr.bf16.mxu0 0
      %2665 = vmatmul.mubr.bf16.gmra.mrb[0].mxu0 %v2519
      %v2666 = vpop.f32.mrb[0].mxu0
      %v2667 = vadd.f32 %v2458, %v2666
      %v2668 = vpop.f32.mrb[0].mxu0
      %v2669 = vpop.f32.mrb[0].mxu0
      %v2670 = vadd.f32 %v2458, %v2669
      %v2671 = vpop.f32.mrb[0].mxu0
      %2672 = vmatprep.mubr.bf16.mxu0 0
      %2673 = vmatmul.mubr.bf16.gmra.mrb[0].mxu0 %v2522
      %v2674 = vpop.f32.mrb[0].mxu0
      %v2675 = vadd.f32 %v2458, %v2674
      %v2676 = vpop.f32.mrb[0].mxu0
      %v2677 = vpop.f32.mrb[0].mxu0
      %v2678 = vadd.f32 %v2458, %v2677
      %v2679 = vpop.f32.mrb[0].mxu0
      %2680 = vmatprep.mubr.bf16.mxu0 0
      %2681 = vmatmul.mubr.bf16.gmra.mrb[0].mxu0 %v2525
      %v2682 = vpop.f32.mrb[0].mxu0
      %v2683 = vadd.f32 %v2458, %v2682
      %v2684 = vpop.f32.mrb[0].mxu0
      %v2685 = vpop.f32.mrb[0].mxu0
      %v2686 = vadd.f32 %v2458, %v2685
      %v2687 = vpop.f32.mrb[0].mxu0
      %2688 = vmatprep.mubr.bf16.mxu0 0
      %2689 = vmatmul.mubr.bf16.gmra.mrb[0].mxu0 %v2528
      %v2690 = vpop.f32.mrb[0].mxu0
      %v2691 = vadd.f32 %v2458, %v2690
      %v2692 = vpop.f32.mrb[0].mxu0
      %v2693 = vpop.f32.mrb[0].mxu0
      %v2694 = vadd.f32 %v2458, %v2693
      %v2695 = vpop.f32.mrb[0].mxu0
      %2696 = vdwg.mxu0
      %v2697 = vmax.f32 %v2571, 0.0
      %v2698 = vmax.f32 %v2574, 0.0
      %v2699 = vmax.f32 %v2579, 0.0
      %v2700 = vmax.f32 %v2582, 0.0
      %v2701 = vmax.f32 %v2587, 0.0
      %v2702 = vmax.f32 %v2590, 0.0
      %v2703 = vmax.f32 %v2595, 0.0
      %v2704 = vmax.f32 %v2598, 0.0
      %v2705 = vmax.f32 %v2603, 0.0
      %v2706 = vmax.f32 %v2606, 0.0
      %v2707 = vmax.f32 %v2611, 0.0
      %v2708 = vmax.f32 %v2614, 0.0
      %v2709 = vmax.f32 %v2619, 0.0
      %v2710 = vmax.f32 %v2622, 0.0
      %v2711 = vmax.f32 %v2627, 0.0
      %v2712 = vmax.f32 %v2630, 0.0
      %v2713 = vmax.f32 %v2635, 0.0
      %v2714 = vmax.f32 %v2638, 0.0
      %v2715 = vmax.f32 %v2643, 0.0
      %v2716 = vmax.f32 %v2646, 0.0
      %v2717 = vmax.f32 %v2651, 0.0
      %v2718 = vmax.f32 %v2654, 0.0
      %v2719 = vmax.f32 %v2659, 0.0
      %v2720 = vmax.f32 %v2662, 0.0
      %v2721 = vmax.f32 %v2667, 0.0
      %v2722 = vmax.f32 %v2670, 0.0
      %v2723 = vmax.f32 %v2675, 0.0
      %v2724 = vmax.f32 %v2678, 0.0
      %v2725 = vmax.f32 %v2683, 0.0
      %v2726 = vmax.f32 %v2686, 0.0
      %v2727 = vmax.f32 %v2691, 0.0
      %v2728 = vmax.f32 %v2694, 0.0
      %2729 = vst.msk [vmem:[%s799 + $0x1] sm:$0xff] %vm800, %v2697
      %2730 = vst.msk [vmem:[%s799 + $0x9] sm:$0xff] %vm800, %v2698
      %2731 = vst.msk [vmem:[%s799 + $0x19] sm:$0xff] %vm800, %v2699
      %2732 = vst.msk [vmem:[%s799 + $0x21] sm:$0xff] %vm800, %v2700
      %2733 = vst.msk [vmem:[%s799 + $0x31] sm:$0xff] %vm800, %v2701
      %2734 = vst.msk [vmem:[%s799 + $0x39] sm:$0xff] %vm800, %v2702
      %2735 = vst.msk [vmem:[%s799 + $0x49] sm:$0xff] %vm800, %v2703
      %2736 = vst.msk [vmem:[%s799 + $0x51] sm:$0xff] %vm800, %v2704
      %2737 = vst.msk [vmem:[%s799 + $0x61] sm:$0xff] %vm800, %v2705
      %2738 = vst.msk [vmem:[%s799 + $0x69] sm:$0xff] %vm800, %v2706
      %2739 = vst.msk [vmem:[%s799 + $0x79] sm:$0xff] %vm800, %v2707
      %2740 = vst.msk [vmem:[%s799 + $0x81] sm:$0xff] %vm800, %v2708
      %2741 = vst.msk [vmem:[%s799 + $0x91] sm:$0xff] %vm800, %v2709
      %2742 = vst.msk [vmem:[%s799 + $0x99] sm:$0xff] %vm800, %v2710
      %2743 = vst.msk [vmem:[%s799 + $0xa9] sm:$0xff] %vm800, %v2711
      %2744 = vst.msk [vmem:[%s799 + $0xb1] sm:$0xff] %vm800, %v2712
      %2745 = vst.msk [vmem:[%s799 + $0xc1] sm:$0xff] %vm800, %v2713
      %2746 = vst.msk [vmem:[%s799 + $0xc9] sm:$0xff] %vm800, %v2714
      %2747 = vst.msk [vmem:[%s799 + $0xd9] sm:$0xff] %vm800, %v2715
      %2748 = vst.msk [vmem:[%s799 + $0xe1] sm:$0xff] %vm800, %v2716
      %2749 = vst.msk [vmem:[%s799 + $0xf1] sm:$0xff] %vm800, %v2717
      %2750 = vst.msk [vmem:[%s799 + $0xf9] sm:$0xff] %vm800, %v2718
      %2751 = vst.msk [vmem:[%s799 + $0x109] sm:$0xff] %vm800, %v2719
      %2752 = vst.msk [vmem:[%s799 + $0x111] sm:$0xff] %vm800, %v2720
      %2753 = vst.msk [vmem:[%s799 + $0x121] sm:$0xff] %vm800, %v2721
      %2754 = vst.msk [vmem:[%s799 + $0x129] sm:$0xff] %vm800, %v2722
      %2755 = vst.msk [vmem:[%s799 + $0x139] sm:$0xff] %vm800, %v2723
      %2756 = vst.msk [vmem:[%s799 + $0x141] sm:$0xff] %vm800, %v2724
      %2757 = vst.msk [vmem:[%s799 + $0x151] sm:$0xff] %vm800, %v2725
      %2758 = vst.msk [vmem:[%s799 + $0x159] sm:$0xff] %vm800, %v2726
      %2759 = vst.msk [vmem:[%s799 + $0x169] sm:$0xff] %vm800, %v2727
      %2760 = vst.msk [vmem:[%s799 + $0x171] sm:$0xff] %vm800, %v2728
      %v2761 = vld [vmem:[#allocation2] sm:$0xff]
      %v2762 = vld [vmem:[#allocation2 + $0x8] sm:$0xff]
      %v2763 = vld [vmem:[#allocation2 + $0x18] sm:$0xff]
      %v2764 = vld [vmem:[#allocation2 + $0x20] sm:$0xff]
      %v2765 = vld [vmem:[#allocation2 + $0x30] sm:$0xff]
      %v2766 = vld [vmem:[#allocation2 + $0x38] sm:$0xff]
      %v2767 = vld [vmem:[#allocation2 + $0x48] sm:$0xff]
      %v2768 = vld [vmem:[#allocation2 + $0x50] sm:$0xff]
      %v2769 = vld [vmem:[#allocation2 + $0x60] sm:$0xff]
      %v2770 = vld [vmem:[#allocation2 + $0x68] sm:$0xff]
      %v2771 = vld [vmem:[#allocation2 + $0x78] sm:$0xff]
      %v2772 = vld [vmem:[#allocation2 + $0x80] sm:$0xff]
      %v2773 = vld [vmem:[#allocation2 + $0x90] sm:$0xff]
      %v2774 = vld [vmem:[#allocation2 + $0x98] sm:$0xff]
      %v2775 = vld [vmem:[#allocation2 + $0xa8] sm:$0xff]
      %v2776 = vld [vmem:[#allocation2 + $0xb0] sm:$0xff]
      %v2777 = vld [vmem:[#allocation2 + $0xc0] sm:$0xff]
      %v2778 = vld [vmem:[#allocation2 + $0xc8] sm:$0xff]
      %v2779 = vld [vmem:[#allocation2 + $0xd8] sm:$0xff]
      %v2780 = vld [vmem:[#allocation2 + $0xe0] sm:$0xff]
      %v2781 = vld [vmem:[#allocation2 + $0xf0] sm:$0xff]
      %v2782 = vld [vmem:[#allocation2 + $0xf8] sm:$0xff]
      %v2783 = vld [vmem:[#allocation2 + $0x108] sm:$0xff]
      %v2784 = vld [vmem:[#allocation2 + $0x110] sm:$0xff]
      %v2785 = vld [vmem:[#allocation2 + $0x120] sm:$0xff]
      %v2786 = vld [vmem:[#allocation2 + $0x128] sm:$0xff]
      %v2787 = vld [vmem:[#allocation2 + $0x138] sm:$0xff]
      %v2788 = vld [vmem:[#allocation2 + $0x140] sm:$0xff]
      %v2789 = vld [vmem:[#allocation2 + $0x150] sm:$0xff]
      %v2790 = vld [vmem:[#allocation2 + $0x158] sm:$0xff]
      %v2791 = vld [vmem:[#allocation2 + $0x168] sm:$0xff]
      %v2792 = vld [vmem:[#allocation2 + $0x170] sm:$0xff]
      %v2793 = vpack.c.bf16 %v2762, %v2761
      %v2794 = vpack.c.bf16 %v2764, %v2763
      %v2795 = vpack.c.bf16 %v2766, %v2765
      %v2796 = vpack.c.bf16 %v2768, %v2767
      %v2797 = vpack.c.bf16 %v2770, %v2769
      %v2798 = vpack.c.bf16 %v2772, %v2771
      %v2799 = vpack.c.bf16 %v2774, %v2773
      %v2800 = vpack.c.bf16 %v2776, %v2775
      %v2801 = vpack.c.bf16 %v2778, %v2777
      %v2802 = vpack.c.bf16 %v2780, %v2779
      %v2803 = vpack.c.bf16 %v2782, %v2781
      %v2804 = vpack.c.bf16 %v2784, %v2783
      %v2805 = vpack.c.bf16 %v2786, %v2785
      %v2806 = vpack.c.bf16 %v2788, %v2787
      %v2807 = vpack.c.bf16 %v2790, %v2789
      %v2808 = vpack.c.bf16 %v2792, %v2791
      %2809 = vst.msk [vmem:[#allocation3] sm:$0xff] %vm800, %v2793
      %2810 = vst.msk [vmem:[#allocation3 + $0x18] sm:$0xff] %vm800, %v2794
      %2811 = vst.msk [vmem:[#allocation3 + $0x30] sm:$0xff] %vm800, %v2795
      %2812 = vst.msk [vmem:[#allocation3 + $0x48] sm:$0xff] %vm800, %v2796
      %2813 = vst.msk [vmem:[#allocation3 + $0x60] sm:$0xff] %vm800, %v2797
      %2814 = vst.msk [vmem:[#allocation3 + $0x78] sm:$0xff] %vm800, %v2798
      %2815 = vst.msk [vmem:[#allocation3 + $0x90] sm:$0xff] %vm800, %v2799
      %2816 = vst.msk [vmem:[#allocation3 + $0xa8] sm:$0xff] %vm800, %v2800
      %2817 = vst.msk [vmem:[#allocation3 + $0xc0] sm:$0xff] %vm800, %v2801
      %2818 = vst.msk [vmem:[#allocation3 + $0xd8] sm:$0xff] %vm800, %v2802
      %2819 = vst.msk [vmem:[#allocation3 + $0xf0] sm:$0xff] %vm800, %v2803
      %2820 = vst.msk [vmem:[#allocation3 + $0x108] sm:$0xff] %vm800, %v2804
      %2821 = vst.msk [vmem:[#allocation3 + $0x120] sm:$0xff] %vm800, %v2805
      %2822 = vst.msk [vmem:[#allocation3 + $0x138] sm:$0xff] %vm800, %v2806
      %2823 = vst.msk [vmem:[#allocation3 + $0x150] sm:$0xff] %vm800, %v2807
      %2824 = vst.msk [vmem:[#allocation3 + $0x168] sm:$0xff] %vm800, %v2808
      %v2825 = vld [vmem:[#allocation2 + $0x1] sm:$0xff]
      %v2826 = vld [vmem:[#allocation2 + $0x9] sm:$0xff]
      %v2827 = vld [vmem:[#allocation2 + $0x19] sm:$0xff]
      %v2828 = vld [vmem:[#allocation2 + $0x21] sm:$0xff]
      %v2829 = vld [vmem:[#allocation2 + $0x31] sm:$0xff]
      %v2830 = vld [vmem:[#allocation2 + $0x39] sm:$0xff]
      %v2831 = vld [vmem:[#allocation2 + $0x49] sm:$0xff]
      %v2832 = vld [vmem:[#allocation2 + $0x51] sm:$0xff]
      %v2833 = vld [vmem:[#allocation2 + $0x61] sm:$0xff]
      %v2834 = vld [vmem:[#allocation2 + $0x69] sm:$0xff]
      %v2835 = vld [vmem:[#allocation2 + $0x79] sm:$0xff]
      %v2836 = vld [vmem:[#allocation2 + $0x81] sm:$0xff]
      %v2837 = vld [vmem:[#allocation2 + $0x91] sm:$0xff]
      %v2838 = vld [vmem:[#allocation2 + $0x99] sm:$0xff]
      %v2839 = vld [vmem:[#allocation2 + $0xa9] sm:$0xff]
      %v2840 = vld [vmem:[#allocation2 + $0xb1] sm:$0xff]
      %v2841 = vld [vmem:[#allocation2 + $0xc1] sm:$0xff]
      %v2842 = vld [vmem:[#allocation2 + $0xc9] sm:$0xff]
      %v2843 = vld [vmem:[#allocation2 + $0xd9] sm:$0xff]
      %v2844 = vld [vmem:[#allocation2 + $0xe1] sm:$0xff]
      %v2845 = vld [vmem:[#allocation2 + $0xf1] sm:$0xff]
      %v2846 = vld [vmem:[#allocation2 + $0xf9] sm:$0xff]
      %v2847 = vld [vmem:[#allocation2 + $0x109] sm:$0xff]
      %v2848 = vld [vmem:[#allocation2 + $0x111] sm:$0xff]
      %v2849 = vld [vmem:[#allocation2 + $0x121] sm:$0xff]
      %v2850 = vld [vmem:[#allocation2 + $0x129] sm:$0xff]
      %v2851 = vld [vmem:[#allocation2 + $0x139] sm:$0xff]
      %v2852 = vld [vmem:[#allocation2 + $0x141] sm:$0xff]
      %v2853 = vld [vmem:[#allocation2 + $0x151] sm:$0xff]
      %v2854 = vld [vmem:[#allocation2 + $0x159] sm:$0xff]
      %v2855 = vld [vmem:[#allocation2 + $0x169] sm:$0xff]
      %v2856 = vld [vmem:[#allocation2 + $0x171] sm:$0xff]
      %v2857 = vpack.c.bf16 %v2826, %v2825
      %v2858 = vpack.c.bf16 %v2828, %v2827
      %v2859 = vpack.c.bf16 %v2830, %v2829
      %v2860 = vpack.c.bf16 %v2832, %v2831
      %v2861 = vpack.c.bf16 %v2834, %v2833
      %v2862 = vpack.c.bf16 %v2836, %v2835
      %v2863 = vpack.c.bf16 %v2838, %v2837
      %v2864 = vpack.c.bf16 %v2840, %v2839
      %v2865 = vpack.c.bf16 %v2842, %v2841
      %v2866 = vpack.c.bf16 %v2844, %v2843
      %v2867 = vpack.c.bf16 %v2846, %v2845
      %v2868 = vpack.c.bf16 %v2848, %v2847
      %v2869 = vpack.c.bf16 %v2850, %v2849
      %v2870 = vpack.c.bf16 %v2852, %v2851
      %v2871 = vpack.c.bf16 %v2854, %v2853
      %v2872 = vpack.c.bf16 %v2856, %v2855
      %2889 = vrot.lane.b32.xlu0 %v2857, 32
      %v2890 = vpop.permute.xlu0 %2889
      %2891 = vrot.lane.b32.xlu0 %v2858, 32
      %v2892 = vpop.permute.xlu0 %2891
      %2893 = vrot.lane.b32.xlu0 %v2859, 32
      %v2894 = vpop.permute.xlu0 %2893
      %2895 = vrot.lane.b32.xlu0 %v2860, 32
      %v2896 = vpop.permute.xlu0 %2895
      %2897 = vrot.lane.b32.xlu0 %v2861, 32
      %v2898 = vpop.permute.xlu0 %2897
      %2899 = vrot.lane.b32.xlu0 %v2862, 32
      %v2900 = vpop.permute.xlu0 %2899
      %2901 = vrot.lane.b32.xlu0 %v2863, 32
      %v2902 = vpop.permute.xlu0 %2901
      %2903 = vrot.lane.b32.xlu0 %v2864, 32
      %v2904 = vpop.permute.xlu0 %2903
      %2905 = vrot.lane.b32.xlu0 %v2865, 32
      %v2906 = vpop.permute.xlu0 %2905
      %2907 = vrot.lane.b32.xlu0 %v2866, 32
      %v2908 = vpop.permute.xlu0 %2907
      %2909 = vrot.lane.b32.xlu0 %v2867, 32
      %v2910 = vpop.permute.xlu0 %2909
      %2911 = vrot.lane.b32.xlu0 %v2868, 32
      %v2912 = vpop.permute.xlu0 %2911
      %2913 = vrot.lane.b32.xlu0 %v2869, 32
      %v2914 = vpop.permute.xlu0 %2913
      %2915 = vrot.lane.b32.xlu0 %v2870, 32
      %v2916 = vpop.permute.xlu0 %2915
      %2917 = vrot.lane.b32.xlu0 %v2871, 32
      %v2918 = vpop.permute.xlu0 %2917
      %2919 = vrot.lane.b32.xlu0 %v2872, 32
      %v2920 = vpop.permute.xlu0 %2919
      %2937 = vst.msk [vmem:[#allocation3] sm:$0xff] %vm1009, %v2890
      %2938 = vst.msk [vmem:[#allocation3 + $0x18] sm:$0xff] %vm1009, %v2892
      %2939 = vst.msk [vmem:[#allocation3 + $0x30] sm:$0xff] %vm1009, %v2894
      %2940 = vst.msk [vmem:[#allocation3 + $0x48] sm:$0xff] %vm1009, %v2896
      %2941 = vst.msk [vmem:[#allocation3 + $0x60] sm:$0xff] %vm1009, %v2898
      %2942 = vst.msk [vmem:[#allocation3 + $0x78] sm:$0xff] %vm1009, %v2900
      %2943 = vst.msk [vmem:[#allocation3 + $0x90] sm:$0xff] %vm1009, %v2902
      %2944 = vst.msk [vmem:[#allocation3 + $0xa8] sm:$0xff] %vm1009, %v2904
      %2945 = vst.msk [vmem:[#allocation3 + $0xc0] sm:$0xff] %vm1009, %v2906
      %2946 = vst.msk [vmem:[#allocation3 + $0xd8] sm:$0xff] %vm1009, %v2908
      %2947 = vst.msk [vmem:[#allocation3 + $0xf0] sm:$0xff] %vm1009, %v2910
      %2948 = vst.msk [vmem:[#allocation3 + $0x108] sm:$0xff] %vm1009, %v2912
      %2949 = vst.msk [vmem:[#allocation3 + $0x120] sm:$0xff] %vm1009, %v2914
      %2950 = vst.msk [vmem:[#allocation3 + $0x138] sm:$0xff] %vm1009, %v2916
      %2951 = vst.msk [vmem:[#allocation3 + $0x150] sm:$0xff] %vm1009, %v2918
      %2952 = vst.msk [vmem:[#allocation3 + $0x168] sm:$0xff] %vm1009, %v2920
      %v2953 = vld [vmem:[#allocation2 + $0x2] sm:$0xff]
      %v2954 = vld [vmem:[#allocation2 + $0xa] sm:$0xff]
      %v2955 = vld [vmem:[#allocation2 + $0x1a] sm:$0xff]
      %v2956 = vld [vmem:[#allocation2 + $0x22] sm:$0xff]
      %v2957 = vld [vmem:[#allocation2 + $0x32] sm:$0xff]
      %v2958 = vld [vmem:[#allocation2 + $0x3a] sm:$0xff]
      %v2959 = vld [vmem:[#allocation2 + $0x4a] sm:$0xff]
      %v2960 = vld [vmem:[#allocation2 + $0x52] sm:$0xff]
      %v2961 = vld [vmem:[#allocation2 + $0x62] sm:$0xff]
      %v2962 = vld [vmem:[#allocation2 + $0x6a] sm:$0xff]
      %v2963 = vld [vmem:[#allocation2 + $0x7a] sm:$0xff]
      %v2964 = vld [vmem:[#allocation2 + $0x82] sm:$0xff]
      %v2965 = vld [vmem:[#allocation2 + $0x92] sm:$0xff]
      %v2966 = vld [vmem:[#allocation2 + $0x9a] sm:$0xff]
      %v2967 = vld [vmem:[#allocation2 + $0xaa] sm:$0xff]
      %v2968 = vld [vmem:[#allocation2 + $0xb2] sm:$0xff]
      %v2969 = vld [vmem:[#allocation2 + $0xc2] sm:$0xff]
      %v2970 = vld [vmem:[#allocation2 + $0xca] sm:$0xff]
      %v2971 = vld [vmem:[#allocation2 + $0xda] sm:$0xff]
      %v2972 = vld [vmem:[#allocation2 + $0xe2] sm:$0xff]
      %v2973 = vld [vmem:[#allocation2 + $0xf2] sm:$0xff]
      %v2974 = vld [vmem:[#allocation2 + $0xfa] sm:$0xff]
      %v2975 = vld [vmem:[#allocation2 + $0x10a] sm:$0xff]
      %v2976 = vld [vmem:[#allocation2 + $0x112] sm:$0xff]
      %v2977 = vld [vmem:[#allocation2 + $0x122] sm:$0xff]
      %v2978 = vld [vmem:[#allocation2 + $0x12a] sm:$0xff]
      %v2979 = vld [vmem:[#allocation2 + $0x13a] sm:$0xff]
      %v2980 = vld [vmem:[#allocation2 + $0x142] sm:$0xff]
      %v2981 = vld [vmem:[#allocation2 + $0x152] sm:$0xff]
      %v2982 = vld [vmem:[#allocation2 + $0x15a] sm:$0xff]
      %v2983 = vld [vmem:[#allocation2 + $0x16a] sm:$0xff]
      %v2984 = vld [vmem:[#allocation2 + $0x172] sm:$0xff]
      %v2985 = vpack.c.bf16 %v2954, %v2953
      %v2986 = vpack.c.bf16 %v2956, %v2955
      %v2987 = vpack.c.bf16 %v2958, %v2957
      %v2988 = vpack.c.bf16 %v2960, %v2959
      %v2989 = vpack.c.bf16 %v2962, %v2961
      %v2990 = vpack.c.bf16 %v2964, %v2963
      %v2991 = vpack.c.bf16 %v2966, %v2965
      %v2992 = vpack.c.bf16 %v2968, %v2967
      %v2993 = vpack.c.bf16 %v2970, %v2969
      %v2994 = vpack.c.bf16 %v2972, %v2971
      %v2995 = vpack.c.bf16 %v2974, %v2973
      %v2996 = vpack.c.bf16 %v2976, %v2975
      %v2997 = vpack.c.bf16 %v2978, %v2977
      %v2998 = vpack.c.bf16 %v2980, %v2979
      %v2999 = vpack.c.bf16 %v2982, %v2981
      %v3000 = vpack.c.bf16 %v2984, %v2983
      %3017 = vrot.lane.b32.xlu0 %v2985, 64
      %v3018 = vpop.permute.xlu0 %3017
      %3019 = vrot.lane.b32.xlu0 %v2986, 64
      %v3020 = vpop.permute.xlu0 %3019
      %3021 = vrot.lane.b32.xlu0 %v2987, 64
      %v3022 = vpop.permute.xlu0 %3021
      %3023 = vrot.lane.b32.xlu0 %v2988, 64
      %v3024 = vpop.permute.xlu0 %3023
      %3025 = vrot.lane.b32.xlu0 %v2989, 64
      %v3026 = vpop.permute.xlu0 %3025
      %3027 = vrot.lane.b32.xlu0 %v2990, 64
      %v3028 = vpop.permute.xlu0 %3027
      %3029 = vrot.lane.b32.xlu0 %v2991, 64
      %v3030 = vpop.permute.xlu0 %3029
      %3031 = vrot.lane.b32.xlu0 %v2992, 64
      %v3032 = vpop.permute.xlu0 %3031
      %3033 = vrot.lane.b32.xlu0 %v2993, 64
      %v3034 = vpop.permute.xlu0 %3033
      %3035 = vrot.lane.b32.xlu0 %v2994, 64
      %v3036 = vpop.permute.xlu0 %3035
      %3037 = vrot.lane.b32.xlu0 %v2995, 64
      %v3038 = vpop.permute.xlu0 %3037
      %3039 = vrot.lane.b32.xlu0 %v2996, 64
      %v3040 = vpop.permute.xlu0 %3039
      %3041 = vrot.lane.b32.xlu0 %v2997, 64
      %v3042 = vpop.permute.xlu0 %3041
      %3043 = vrot.lane.b32.xlu0 %v2998, 64
      %v3044 = vpop.permute.xlu0 %3043
      %3045 = vrot.lane.b32.xlu0 %v2999, 64
      %v3046 = vpop.permute.xlu0 %3045
      %3047 = vrot.lane.b32.xlu0 %v3000, 64
      %v3048 = vpop.permute.xlu0 %3047
      %3065 = vst.msk [vmem:[#allocation3] sm:$0xff] %vm1138, %v3018
      %3066 = vst.msk [vmem:[#allocation3 + $0x18] sm:$0xff] %vm1138, %v3020
      %3067 = vst.msk [vmem:[#allocation3 + $0x30] sm:$0xff] %vm1138, %v3022
      %3068 = vst.msk [vmem:[#allocation3 + $0x48] sm:$0xff] %vm1138, %v3024
      %3069 = vst.msk [vmem:[#allocation3 + $0x60] sm:$0xff] %vm1138, %v3026
      %3070 = vst.msk [vmem:[#allocation3 + $0x78] sm:$0xff] %vm1138, %v3028
      %3071 = vst.msk [vmem:[#allocation3 + $0x90] sm:$0xff] %vm1138, %v3030
      %3072 = vst.msk [vmem:[#allocation3 + $0xa8] sm:$0xff] %vm1138, %v3032
      %3073 = vst.msk [vmem:[#allocation3 + $0xc0] sm:$0xff] %vm1138, %v3034
      %3074 = vst.msk [vmem:[#allocation3 + $0xd8] sm:$0xff] %vm1138, %v3036
      %3075 = vst.msk [vmem:[#allocation3 + $0xf0] sm:$0xff] %vm1138, %v3038
      %3076 = vst.msk [vmem:[#allocation3 + $0x108] sm:$0xff] %vm1138, %v3040
      %3077 = vst.msk [vmem:[#allocation3 + $0x120] sm:$0xff] %vm1138, %v3042
      %3078 = vst.msk [vmem:[#allocation3 + $0x138] sm:$0xff] %vm1138, %v3044
      %3079 = vst.msk [vmem:[#allocation3 + $0x150] sm:$0xff] %vm1138, %v3046
      %3080 = vst.msk [vmem:[#allocation3 + $0x168] sm:$0xff] %vm1138, %v3048
      %v3081 = vld [vmem:[%s799] sm:$0xff]
      %v3082 = vld [vmem:[%s799 + $0x8] sm:$0xff]
      %v3083 = vld [vmem:[%s799 + $0x18] sm:$0xff]
      %v3084 = vld [vmem:[%s799 + $0x20] sm:$0xff]
      %v3085 = vld [vmem:[%s799 + $0x30] sm:$0xff]
      %v3086 = vld [vmem:[%s799 + $0x38] sm:$0xff]
      %v3087 = vld [vmem:[%s799 + $0x48] sm:$0xff]
      %v3088 = vld [vmem:[%s799 + $0x50] sm:$0xff]
      %v3089 = vld [vmem:[%s799 + $0x60] sm:$0xff]
      %v3090 = vld [vmem:[%s799 + $0x68] sm:$0xff]
      %v3091 = vld [vmem:[%s799 + $0x78] sm:$0xff]
      %v3092 = vld [vmem:[%s799 + $0x80] sm:$0xff]
      %v3093 = vld [vmem:[%s799 + $0x90] sm:$0xff]
      %v3094 = vld [vmem:[%s799 + $0x98] sm:$0xff]
      %v3095 = vld [vmem:[%s799 + $0xa8] sm:$0xff]
      %v3096 = vld [vmem:[%s799 + $0xb0] sm:$0xff]
      %v3097 = vld [vmem:[%s799 + $0xc0] sm:$0xff]
      %v3098 = vld [vmem:[%s799 + $0xc8] sm:$0xff]
      %v3099 = vld [vmem:[%s799 + $0xd8] sm:$0xff]
      %v3100 = vld [vmem:[%s799 + $0xe0] sm:$0xff]
      %v3101 = vld [vmem:[%s799 + $0xf0] sm:$0xff]
      %v3102 = vld [vmem:[%s799 + $0xf8] sm:$0xff]
      %v3103 = vld [vmem:[%s799 + $0x108] sm:$0xff]
      %v3104 = vld [vmem:[%s799 + $0x110] sm:$0xff]
      %v3105 = vld [vmem:[%s799 + $0x120] sm:$0xff]
      %v3106 = vld [vmem:[%s799 + $0x128] sm:$0xff]
      %v3107 = vld [vmem:[%s799 + $0x138] sm:$0xff]
      %v3108 = vld [vmem:[%s799 + $0x140] sm:$0xff]
      %v3109 = vld [vmem:[%s799 + $0x150] sm:$0xff]
      %v3110 = vld [vmem:[%s799 + $0x158] sm:$0xff]
      %v3111 = vld [vmem:[%s799 + $0x168] sm:$0xff]
      %v3112 = vld [vmem:[%s799 + $0x170] sm:$0xff]
      %v3113 = vpack.c.bf16 %v3082, %v3081
      %v3114 = vpack.c.bf16 %v3084, %v3083
      %v3115 = vpack.c.bf16 %v3086, %v3085
      %v3116 = vpack.c.bf16 %v3088, %v3087
      %v3117 = vpack.c.bf16 %v3090, %v3089
      %v3118 = vpack.c.bf16 %v3092, %v3091
      %v3119 = vpack.c.bf16 %v3094, %v3093
      %v3120 = vpack.c.bf16 %v3096, %v3095
      %v3121 = vpack.c.bf16 %v3098, %v3097
      %v3122 = vpack.c.bf16 %v3100, %v3099
      %v3123 = vpack.c.bf16 %v3102, %v3101
      %v3124 = vpack.c.bf16 %v3104, %v3103
      %v3125 = vpack.c.bf16 %v3106, %v3105
      %v3126 = vpack.c.bf16 %v3108, %v3107
      %v3127 = vpack.c.bf16 %v3110, %v3109
      %v3128 = vpack.c.bf16 %v3112, %v3111
      %3145 = vrot.lane.b32.xlu0 %v3113, 96
      %v3146 = vpop.permute.xlu0 %3145
      %3147 = vrot.lane.b32.xlu0 %v3114, 96
      %v3148 = vpop.permute.xlu0 %3147
      %3149 = vrot.lane.b32.xlu0 %v3115, 96
      %v3150 = vpop.permute.xlu0 %3149
      %3151 = vrot.lane.b32.xlu0 %v3116, 96
      %v3152 = vpop.permute.xlu0 %3151
      %3153 = vrot.lane.b32.xlu0 %v3117, 96
      %v3154 = vpop.permute.xlu0 %3153
      %3155 = vrot.lane.b32.xlu0 %v3118, 96
      %v3156 = vpop.permute.xlu0 %3155
      %3157 = vrot.lane.b32.xlu0 %v3119, 96
      %v3158 = vpop.permute.xlu0 %3157
      %3159 = vrot.lane.b32.xlu0 %v3120, 96
      %v3160 = vpop.permute.xlu0 %3159
      %3161 = vrot.lane.b32.xlu0 %v3121, 96
      %v3162 = vpop.permute.xlu0 %3161
      %3163 = vrot.lane.b32.xlu0 %v3122, 96
      %v3164 = vpop.permute.xlu0 %3163
      %3165 = vrot.lane.b32.xlu0 %v3123, 96
      %v3166 = vpop.permute.xlu0 %3165
      %3167 = vrot.lane.b32.xlu0 %v3124, 96
      %v3168 = vpop.permute.xlu0 %3167
      %3169 = vrot.lane.b32.xlu0 %v3125, 96
      %v3170 = vpop.permute.xlu0 %3169
      %3171 = vrot.lane.b32.xlu0 %v3126, 96
      %v3172 = vpop.permute.xlu0 %3171
      %3173 = vrot.lane.b32.xlu0 %v3127, 96
      %v3174 = vpop.permute.xlu0 %3173
      %3175 = vrot.lane.b32.xlu0 %v3128, 96
      %v3176 = vpop.permute.xlu0 %3175
      %3193 = vst.msk [vmem:[#allocation3] sm:$0xff] %vm1267, %v3146
      %3194 = vst.msk [vmem:[#allocation3 + $0x18] sm:$0xff] %vm1267, %v3148
      %3195 = vst.msk [vmem:[#allocation3 + $0x30] sm:$0xff] %vm1267, %v3150
      %3196 = vst.msk [vmem:[#allocation3 + $0x48] sm:$0xff] %vm1267, %v3152
      %3197 = vst.msk [vmem:[#allocation3 + $0x60] sm:$0xff] %vm1267, %v3154
      %3198 = vst.msk [vmem:[#allocation3 + $0x78] sm:$0xff] %vm1267, %v3156
      %3199 = vst.msk [vmem:[#allocation3 + $0x90] sm:$0xff] %vm1267, %v3158
      %3200 = vst.msk [vmem:[#allocation3 + $0xa8] sm:$0xff] %vm1267, %v3160
      %3201 = vst.msk [vmem:[#allocation3 + $0xc0] sm:$0xff] %vm1267, %v3162
      %3202 = vst.msk [vmem:[#allocation3 + $0xd8] sm:$0xff] %vm1267, %v3164
      %3203 = vst.msk [vmem:[#allocation3 + $0xf0] sm:$0xff] %vm1267, %v3166
      %3204 = vst.msk [vmem:[#allocation3 + $0x108] sm:$0xff] %vm1267, %v3168
      %3205 = vst.msk [vmem:[#allocation3 + $0x120] sm:$0xff] %vm1267, %v3170
      %3206 = vst.msk [vmem:[#allocation3 + $0x138] sm:$0xff] %vm1267, %v3172
      %3207 = vst.msk [vmem:[#allocation3 + $0x150] sm:$0xff] %vm1267, %v3174
      %3208 = vst.msk [vmem:[#allocation3 + $0x168] sm:$0xff] %vm1267, %v3176
      %v3209 = vld [vmem:[%s799 + $0x1] sm:$0xff]
      %v3210 = vld [vmem:[%s799 + $0x9] sm:$0xff]
      %v3211 = vld [vmem:[%s799 + $0x19] sm:$0xff]
      %v3212 = vld [vmem:[%s799 + $0x21] sm:$0xff]
      %v3213 = vld [vmem:[%s799 + $0x31] sm:$0xff]
      %v3214 = vld [vmem:[%s799 + $0x39] sm:$0xff]
      %v3215 = vld [vmem:[%s799 + $0x49] sm:$0xff]
      %v3216 = vld [vmem:[%s799 + $0x51] sm:$0xff]
      %v3217 = vld [vmem:[%s799 + $0x61] sm:$0xff]
      %v3218 = vld [vmem:[%s799 + $0x69] sm:$0xff]
      %v3219 = vld [vmem:[%s799 + $0x79] sm:$0xff]
      %v3220 = vld [vmem:[%s799 + $0x81] sm:$0xff]
      %v3221 = vld [vmem:[%s799 + $0x91] sm:$0xff]
      %v3222 = vld [vmem:[%s799 + $0x99] sm:$0xff]
      %v3223 = vld [vmem:[%s799 + $0xa9] sm:$0xff]
      %v3224 = vld [vmem:[%s799 + $0xb1] sm:$0xff]
      %v3225 = vld [vmem:[%s799 + $0xc1] sm:$0xff]
      %v3226 = vld [vmem:[%s799 + $0xc9] sm:$0xff]
      %v3227 = vld [vmem:[%s799 + $0xd9] sm:$0xff]
      %v3228 = vld [vmem:[%s799 + $0xe1] sm:$0xff]
      %v3229 = vld [vmem:[%s799 + $0xf1] sm:$0xff]
      %v3230 = vld [vmem:[%s799 + $0xf9] sm:$0xff]
      %v3231 = vld [vmem:[%s799 + $0x109] sm:$0xff]
      %v3232 = vld [vmem:[%s799 + $0x111] sm:$0xff]
      %v3233 = vld [vmem:[%s799 + $0x121] sm:$0xff]
      %v3234 = vld [vmem:[%s799 + $0x129] sm:$0xff]
      %v3235 = vld [vmem:[%s799 + $0x139] sm:$0xff]
      %v3236 = vld [vmem:[%s799 + $0x141] sm:$0xff]
      %v3237 = vld [vmem:[%s799 + $0x151] sm:$0xff]
      %v3238 = vld [vmem:[%s799 + $0x159] sm:$0xff]
      %v3239 = vld [vmem:[%s799 + $0x169] sm:$0xff]
      %v3240 = vld [vmem:[%s799 + $0x171] sm:$0xff]
      %v3241 = vpack.c.bf16 %v3210, %v3209
      %v3242 = vpack.c.bf16 %v3212, %v3211
      %v3243 = vpack.c.bf16 %v3214, %v3213
      %v3244 = vpack.c.bf16 %v3216, %v3215
      %v3245 = vpack.c.bf16 %v3218, %v3217
      %v3246 = vpack.c.bf16 %v3220, %v3219
      %v3247 = vpack.c.bf16 %v3222, %v3221
      %v3248 = vpack.c.bf16 %v3224, %v3223
      %v3249 = vpack.c.bf16 %v3226, %v3225
      %v3250 = vpack.c.bf16 %v3228, %v3227
      %v3251 = vpack.c.bf16 %v3230, %v3229
      %v3252 = vpack.c.bf16 %v3232, %v3231
      %v3253 = vpack.c.bf16 %v3234, %v3233
      %v3254 = vpack.c.bf16 %v3236, %v3235
      %v3255 = vpack.c.bf16 %v3238, %v3237
      %v3256 = vpack.c.bf16 %v3240, %v3239
      %3257 = vst.msk [vmem:[#allocation3 + $0x8] sm:$0xff] %vm800, %v3241
      %3258 = vst.msk [vmem:[#allocation3 + $0x20] sm:$0xff] %vm800, %v3242
      %3259 = vst.msk [vmem:[#allocation3 + $0x38] sm:$0xff] %vm800, %v3243
      %3260 = vst.msk [vmem:[#allocation3 + $0x50] sm:$0xff] %vm800, %v3244
      %3261 = vst.msk [vmem:[#allocation3 + $0x68] sm:$0xff] %vm800, %v3245
      %3262 = vst.msk [vmem:[#allocation3 + $0x80] sm:$0xff] %vm800, %v3246
      %3263 = vst.msk [vmem:[#allocation3 + $0x98] sm:$0xff] %vm800, %v3247
      %3264 = vst.msk [vmem:[#allocation3 + $0xb0] sm:$0xff] %vm800, %v3248
      %3265 = vst.msk [vmem:[#allocation3 + $0xc8] sm:$0xff] %vm800, %v3249
      %3266 = vst.msk [vmem:[#allocation3 + $0xe0] sm:$0xff] %vm800, %v3250
      %3267 = vst.msk [vmem:[#allocation3 + $0xf8] sm:$0xff] %vm800, %v3251
      %3268 = vst.msk [vmem:[#allocation3 + $0x110] sm:$0xff] %vm800, %v3252
      %3269 = vst.msk [vmem:[#allocation3 + $0x128] sm:$0xff] %vm800, %v3253
      %3270 = vst.msk [vmem:[#allocation3 + $0x140] sm:$0xff] %vm800, %v3254
      %3271 = vst.msk [vmem:[#allocation3 + $0x158] sm:$0xff] %vm800, %v3255
      %3272 = vst.msk [vmem:[#allocation3 + $0x170] sm:$0xff] %vm800, %v3256
      %v3273 = vld [vmem:[%s799 + $0x2] sm:$0xff]
      %v3274 = vld [vmem:[%s799 + $0xa] sm:$0xff]
      %v3275 = vld [vmem:[%s799 + $0x1a] sm:$0xff]
      %v3276 = vld [vmem:[%s799 + $0x22] sm:$0xff]
      %v3277 = vld [vmem:[%s799 + $0x32] sm:$0xff]
      %v3278 = vld [vmem:[%s799 + $0x3a] sm:$0xff]
      %v3279 = vld [vmem:[%s799 + $0x4a] sm:$0xff]
      %v3280 = vld [vmem:[%s799 + $0x52] sm:$0xff]
      %v3281 = vld [vmem:[%s799 + $0x62] sm:$0xff]
      %v3282 = vld [vmem:[%s799 + $0x6a] sm:$0xff]
      %v3283 = vld [vmem:[%s799 + $0x7a] sm:$0xff]
      %v3284 = vld [vmem:[%s799 + $0x82] sm:$0xff]
      %v3285 = vld [vmem:[%s799 + $0x92] sm:$0xff]
      %v3286 = vld [vmem:[%s799 + $0x9a] sm:$0xff]
      %v3287 = vld [vmem:[%s799 + $0xaa] sm:$0xff]
      %v3288 = vld [vmem:[%s799 + $0xb2] sm:$0xff]
      %v3289 = vld [vmem:[%s799 + $0xc2] sm:$0xff]
      %v3290 = vld [vmem:[%s799 + $0xca] sm:$0xff]
      %v3291 = vld [vmem:[%s799 + $0xda] sm:$0xff]
      %v3292 = vld [vmem:[%s799 + $0xe2] sm:$0xff]
      %v3293 = vld [vmem:[%s799 + $0xf2] sm:$0xff]
      %v3294 = vld [vmem:[%s799 + $0xfa] sm:$0xff]
      %v3295 = vld [vmem:[%s799 + $0x10a] sm:$0xff]
      %v3296 = vld [vmem:[%s799 + $0x112] sm:$0xff]
      %v3297 = vld [vmem:[%s799 + $0x122] sm:$0xff]
      %v3298 = vld [vmem:[%s799 + $0x12a] sm:$0xff]
      %v3299 = vld [vmem:[%s799 + $0x13a] sm:$0xff]
      %v3300 = vld [vmem:[%s799 + $0x142] sm:$0xff]
      %v3301 = vld [vmem:[%s799 + $0x152] sm:$0xff]
      %v3302 = vld [vmem:[%s799 + $0x15a] sm:$0xff]
      %v3303 = vld [vmem:[%s799 + $0x16a] sm:$0xff]
      %v3304 = vld [vmem:[%s799 + $0x172] sm:$0xff]
      %v3305 = vpack.c.bf16 %v3274, %v3273
      %v3306 = vpack.c.bf16 %v3276, %v3275
      %v3307 = vpack.c.bf16 %v3278, %v3277
      %v3308 = vpack.c.bf16 %v3280, %v3279
      %v3309 = vpack.c.bf16 %v3282, %v3281
      %v3310 = vpack.c.bf16 %v3284, %v3283
      %v3311 = vpack.c.bf16 %v3286, %v3285
      %v3312 = vpack.c.bf16 %v3288, %v3287
      %v3313 = vpack.c.bf16 %v3290, %v3289
      %v3314 = vpack.c.bf16 %v3292, %v3291
      %v3315 = vpack.c.bf16 %v3294, %v3293
      %v3316 = vpack.c.bf16 %v3296, %v3295
      %v3317 = vpack.c.bf16 %v3298, %v3297
      %v3318 = vpack.c.bf16 %v3300, %v3299
      %v3319 = vpack.c.bf16 %v3302, %v3301
      %v3320 = vpack.c.bf16 %v3304, %v3303
      %3337 = vrot.lane.b32.xlu0 %v3305, 32
      %v3338 = vpop.permute.xlu0 %3337
      %3339 = vrot.lane.b32.xlu0 %v3306, 32
      %v3340 = vpop.permute.xlu0 %3339
      %3341 = vrot.lane.b32.xlu0 %v3307, 32
      %v3342 = vpop.permute.xlu0 %3341
      %3343 = vrot.lane.b32.xlu0 %v3308, 32
      %v3344 = vpop.permute.xlu0 %3343
      %3345 = vrot.lane.b32.xlu0 %v3309, 32
      %v3346 = vpop.permute.xlu0 %3345
      %3347 = vrot.lane.b32.xlu0 %v3310, 32
      %v3348 = vpop.permute.xlu0 %3347
      %3349 = vrot.lane.b32.xlu0 %v3311, 32
      %v3350 = vpop.permute.xlu0 %3349
      %3351 = vrot.lane.b32.xlu0 %v3312, 32
      %v3352 = vpop.permute.xlu0 %3351
      %3353 = vrot.lane.b32.xlu0 %v3313, 32
      %v3354 = vpop.permute.xlu0 %3353
      %3355 = vrot.lane.b32.xlu0 %v3314, 32
      %v3356 = vpop.permute.xlu0 %3355
      %3357 = vrot.lane.b32.xlu0 %v3315, 32
      %v3358 = vpop.permute.xlu0 %3357
      %3359 = vrot.lane.b32.xlu0 %v3316, 32
      %v3360 = vpop.permute.xlu0 %3359
      %3361 = vrot.lane.b32.xlu0 %v3317, 32
      %v3362 = vpop.permute.xlu0 %3361
      %3363 = vrot.lane.b32.xlu0 %v3318, 32
      %v3364 = vpop.permute.xlu0 %3363
      %3365 = vrot.lane.b32.xlu0 %v3319, 32
      %v3366 = vpop.permute.xlu0 %3365
      %3367 = vrot.lane.b32.xlu0 %v3320, 32
      %v3368 = vpop.permute.xlu0 %3367
      %3385 = vst.msk [vmem:[#allocation3 + $0x8] sm:$0xff] %vm1009, %v3338
      %3386 = vst.msk [vmem:[#allocation3 + $0x20] sm:$0xff] %vm1009, %v3340
      %3387 = vst.msk [vmem:[#allocation3 + $0x38] sm:$0xff] %vm1009, %v3342
      %3388 = vst.msk [vmem:[#allocation3 + $0x50] sm:$0xff] %vm1009, %v3344
      %3389 = vst.msk [vmem:[#allocation3 + $0x68] sm:$0xff] %vm1009, %v3346
      %3390 = vst.msk [vmem:[#allocation3 + $0x80] sm:$0xff] %vm1009, %v3348
      %3391 = vst.msk [vmem:[#allocation3 + $0x98] sm:$0xff] %vm1009, %v3350
      %3392 = vst.msk [vmem:[#allocation3 + $0xb0] sm:$0xff] %vm1009, %v3352
      %3393 = vst.msk [vmem:[#allocation3 + $0xc8] sm:$0xff] %vm1009, %v3354
      %3394 = vst.msk [vmem:[#allocation3 + $0xe0] sm:$0xff] %vm1009, %v3356
      %3395 = vst.msk [vmem:[#allocation3 + $0xf8] sm:$0xff] %vm1009, %v3358
      %3396 = vst.msk [vmem:[#allocation3 + $0x110] sm:$0xff] %vm1009, %v3360
      %3397 = vst.msk [vmem:[#allocation3 + $0x128] sm:$0xff] %vm1009, %v3362
      %3398 = vst.msk [vmem:[#allocation3 + $0x140] sm:$0xff] %vm1009, %v3364
      %3399 = vst.msk [vmem:[#allocation3 + $0x158] sm:$0xff] %vm1009, %v3366
      %3400 = vst.msk [vmem:[#allocation3 + $0x170] sm:$0xff] %vm1009, %v3368
      %v3401 = vld [vmem:[%s1476] sm:$0xff]
      %v3402 = vld [vmem:[%s1476 + $0x8] sm:$0xff]
      %v3403 = vld [vmem:[%s1476 + $0x18] sm:$0xff]
      %v3404 = vld [vmem:[%s1476 + $0x20] sm:$0xff]
      %v3405 = vld [vmem:[%s1476 + $0x30] sm:$0xff]
      %v3406 = vld [vmem:[%s1476 + $0x38] sm:$0xff]
      %v3407 = vld [vmem:[%s1476 + $0x48] sm:$0xff]
      %v3408 = vld [vmem:[%s1476 + $0x50] sm:$0xff]
      %v3409 = vld [vmem:[%s1476 + $0x60] sm:$0xff]
      %v3410 = vld [vmem:[%s1476 + $0x68] sm:$0xff]
      %v3411 = vld [vmem:[%s1476 + $0x78] sm:$0xff]
      %v3412 = vld [vmem:[%s1476 + $0x80] sm:$0xff]
      %v3413 = vld [vmem:[%s1476 + $0x90] sm:$0xff]
      %v3414 = vld [vmem:[%s1476 + $0x98] sm:$0xff]
      %v3415 = vld [vmem:[%s1476 + $0xa8] sm:$0xff]
      %v3416 = vld [vmem:[%s1476 + $0xb0] sm:$0xff]
      %v3417 = vld [vmem:[%s1476 + $0xc0] sm:$0xff]
      %v3418 = vld [vmem:[%s1476 + $0xc8] sm:$0xff]
      %v3419 = vld [vmem:[%s1476 + $0xd8] sm:$0xff]
      %v3420 = vld [vmem:[%s1476 + $0xe0] sm:$0xff]
      %v3421 = vld [vmem:[%s1476 + $0xf0] sm:$0xff]
      %v3422 = vld [vmem:[%s1476 + $0xf8] sm:$0xff]
      %v3423 = vld [vmem:[%s1476 + $0x108] sm:$0xff]
      %v3424 = vld [vmem:[%s1476 + $0x110] sm:$0xff]
      %v3425 = vld [vmem:[%s1476 + $0x120] sm:$0xff]
      %v3426 = vld [vmem:[%s1476 + $0x128] sm:$0xff]
      %v3427 = vld [vmem:[%s1476 + $0x138] sm:$0xff]
      %v3428 = vld [vmem:[%s1476 + $0x140] sm:$0xff]
      %v3429 = vld [vmem:[%s1476 + $0x150] sm:$0xff]
      %v3430 = vld [vmem:[%s1476 + $0x158] sm:$0xff]
      %v3431 = vld [vmem:[%s1476 + $0x168] sm:$0xff]
      %v3432 = vld [vmem:[%s1476 + $0x170] sm:$0xff]
      %v3433 = vpack.c.bf16 %v3402, %v3401
      %v3434 = vpack.c.bf16 %v3404, %v3403
      %v3435 = vpack.c.bf16 %v3406, %v3405
      %v3436 = vpack.c.bf16 %v3408, %v3407
      %v3437 = vpack.c.bf16 %v3410, %v3409
      %v3438 = vpack.c.bf16 %v3412, %v3411
      %v3439 = vpack.c.bf16 %v3414, %v3413
      %v3440 = vpack.c.bf16 %v3416, %v3415
      %v3441 = vpack.c.bf16 %v3418, %v3417
      %v3442 = vpack.c.bf16 %v3420, %v3419
      %v3443 = vpack.c.bf16 %v3422, %v3421
      %v3444 = vpack.c.bf16 %v3424, %v3423
      %v3445 = vpack.c.bf16 %v3426, %v3425
      %v3446 = vpack.c.bf16 %v3428, %v3427
      %v3447 = vpack.c.bf16 %v3430, %v3429
      %v3448 = vpack.c.bf16 %v3432, %v3431
      %3465 = vrot.lane.b32.xlu0 %v3433, 64
      %v3466 = vpop.permute.xlu0 %3465
      %3467 = vrot.lane.b32.xlu0 %v3434, 64
      %v3468 = vpop.permute.xlu0 %3467
      %3469 = vrot.lane.b32.xlu0 %v3435, 64
      %v3470 = vpop.permute.xlu0 %3469
      %3471 = vrot.lane.b32.xlu0 %v3436, 64
      %v3472 = vpop.permute.xlu0 %3471
      %3473 = vrot.lane.b32.xlu0 %v3437, 64
      %v3474 = vpop.permute.xlu0 %3473
      %3475 = vrot.lane.b32.xlu0 %v3438, 64
      %v3476 = vpop.permute.xlu0 %3475
      %3477 = vrot.lane.b32.xlu0 %v3439, 64
      %v3478 = vpop.permute.xlu0 %3477
      %3479 = vrot.lane.b32.xlu0 %v3440, 64
      %v3480 = vpop.permute.xlu0 %3479
      %3481 = vrot.lane.b32.xlu0 %v3441, 64
      %v3482 = vpop.permute.xlu0 %3481
      %3483 = vrot.lane.b32.xlu0 %v3442, 64
      %v3484 = vpop.permute.xlu0 %3483
      %3485 = vrot.lane.b32.xlu0 %v3443, 64
      %v3486 = vpop.permute.xlu0 %3485
      %3487 = vrot.lane.b32.xlu0 %v3444, 64
      %v3488 = vpop.permute.xlu0 %3487
      %3489 = vrot.lane.b32.xlu0 %v3445, 64
      %v3490 = vpop.permute.xlu0 %3489
      %3491 = vrot.lane.b32.xlu0 %v3446, 64
      %v3492 = vpop.permute.xlu0 %3491
      %3493 = vrot.lane.b32.xlu0 %v3447, 64
      %v3494 = vpop.permute.xlu0 %3493
      %3495 = vrot.lane.b32.xlu0 %v3448, 64
      %v3496 = vpop.permute.xlu0 %3495
      %3513 = vst.msk [vmem:[#allocation3 + $0x8] sm:$0xff] %vm1138, %v3466
      %3514 = vst.msk [vmem:[#allocation3 + $0x20] sm:$0xff] %vm1138, %v3468
      %3515 = vst.msk [vmem:[#allocation3 + $0x38] sm:$0xff] %vm1138, %v3470
      %3516 = vst.msk [vmem:[#allocation3 + $0x50] sm:$0xff] %vm1138, %v3472
      %3517 = vst.msk [vmem:[#allocation3 + $0x68] sm:$0xff] %vm1138, %v3474
      %3518 = vst.msk [vmem:[#allocation3 + $0x80] sm:$0xff] %vm1138, %v3476
      %3519 = vst.msk [vmem:[#allocation3 + $0x98] sm:$0xff] %vm1138, %v3478
      %3520 = vst.msk [vmem:[#allocation3 + $0xb0] sm:$0xff] %vm1138, %v3480
      %3521 = vst.msk [vmem:[#allocation3 + $0xc8] sm:$0xff] %vm1138, %v3482
      %3522 = vst.msk [vmem:[#allocation3 + $0xe0] sm:$0xff] %vm1138, %v3484
      %3523 = vst.msk [vmem:[#allocation3 + $0xf8] sm:$0xff] %vm1138, %v3486
      %3524 = vst.msk [vmem:[#allocation3 + $0x110] sm:$0xff] %vm1138, %v3488
      %3525 = vst.msk [vmem:[#allocation3 + $0x128] sm:$0xff] %vm1138, %v3490
      %3526 = vst.msk [vmem:[#allocation3 + $0x140] sm:$0xff] %vm1138, %v3492
      %3527 = vst.msk [vmem:[#allocation3 + $0x158] sm:$0xff] %vm1138, %v3494
      %3528 = vst.msk [vmem:[#allocation3 + $0x170] sm:$0xff] %vm1138, %v3496
      %v3529 = vld [vmem:[%s1476 + $0x1] sm:$0xff]
      %v3530 = vld [vmem:[%s1476 + $0x9] sm:$0xff]
      %v3531 = vld [vmem:[%s1476 + $0x19] sm:$0xff]
      %v3532 = vld [vmem:[%s1476 + $0x21] sm:$0xff]
      %v3533 = vld [vmem:[%s1476 + $0x31] sm:$0xff]
      %v3534 = vld [vmem:[%s1476 + $0x39] sm:$0xff]
      %v3535 = vld [vmem:[%s1476 + $0x49] sm:$0xff]
      %v3536 = vld [vmem:[%s1476 + $0x51] sm:$0xff]
      %v3537 = vld [vmem:[%s1476 + $0x61] sm:$0xff]
      %v3538 = vld [vmem:[%s1476 + $0x69] sm:$0xff]
      %v3539 = vld [vmem:[%s1476 + $0x79] sm:$0xff]
      %v3540 = vld [vmem:[%s1476 + $0x81] sm:$0xff]
      %v3541 = vld [vmem:[%s1476 + $0x91] sm:$0xff]
      %v3542 = vld [vmem:[%s1476 + $0x99] sm:$0xff]
      %v3543 = vld [vmem:[%s1476 + $0xa9] sm:$0xff]
      %v3544 = vld [vmem:[%s1476 + $0xb1] sm:$0xff]
      %v3545 = vld [vmem:[%s1476 + $0xc1] sm:$0xff]
      %v3546 = vld [vmem:[%s1476 + $0xc9] sm:$0xff]
      %v3547 = vld [vmem:[%s1476 + $0xd9] sm:$0xff]
      %v3548 = vld [vmem:[%s1476 + $0xe1] sm:$0xff]
      %v3549 = vld [vmem:[%s1476 + $0xf1] sm:$0xff]
      %v3550 = vld [vmem:[%s1476 + $0xf9] sm:$0xff]
      %v3551 = vld [vmem:[%s1476 + $0x109] sm:$0xff]
      %v3552 = vld [vmem:[%s1476 + $0x111] sm:$0xff]
      %v3553 = vld [vmem:[%s1476 + $0x121] sm:$0xff]
      %v3554 = vld [vmem:[%s1476 + $0x129] sm:$0xff]
      %v3555 = vld [vmem:[%s1476 + $0x139] sm:$0xff]
      %v3556 = vld [vmem:[%s1476 + $0x141] sm:$0xff]
      %v3557 = vld [vmem:[%s1476 + $0x151] sm:$0xff]
      %v3558 = vld [vmem:[%s1476 + $0x159] sm:$0xff]
      %v3559 = vld [vmem:[%s1476 + $0x169] sm:$0xff]
      %v3560 = vld [vmem:[%s1476 + $0x171] sm:$0xff]
      %v3561 = vpack.c.bf16 %v3530, %v3529
      %v3562 = vpack.c.bf16 %v3532, %v3531
      %v3563 = vpack.c.bf16 %v3534, %v3533
      %v3564 = vpack.c.bf16 %v3536, %v3535
      %v3565 = vpack.c.bf16 %v3538, %v3537
      %v3566 = vpack.c.bf16 %v3540, %v3539
      %v3567 = vpack.c.bf16 %v3542, %v3541
      %v3568 = vpack.c.bf16 %v3544, %v3543
      %v3569 = vpack.c.bf16 %v3546, %v3545
      %v3570 = vpack.c.bf16 %v3548, %v3547
      %v3571 = vpack.c.bf16 %v3550, %v3549
      %v3572 = vpack.c.bf16 %v3552, %v3551
      %v3573 = vpack.c.bf16 %v3554, %v3553
      %v3574 = vpack.c.bf16 %v3556, %v3555
      %v3575 = vpack.c.bf16 %v3558, %v3557
      %v3576 = vpack.c.bf16 %v3560, %v3559
      %3593 = vrot.lane.b32.xlu0 %v3561, 96
      %v3594 = vpop.permute.xlu0 %3593
      %3595 = vrot.lane.b32.xlu0 %v3562, 96
      %v3596 = vpop.permute.xlu0 %3595
      %3597 = vrot.lane.b32.xlu0 %v3563, 96
      %v3598 = vpop.permute.xlu0 %3597
      %3599 = vrot.lane.b32.xlu0 %v3564, 96
      %v3600 = vpop.permute.xlu0 %3599
      %3601 = vrot.lane.b32.xlu0 %v3565, 96
      %v3602 = vpop.permute.xlu0 %3601
      %3603 = vrot.lane.b32.xlu0 %v3566, 96
      %v3604 = vpop.permute.xlu0 %3603
      %3605 = vrot.lane.b32.xlu0 %v3567, 96
      %v3606 = vpop.permute.xlu0 %3605
      %3607 = vrot.lane.b32.xlu0 %v3568, 96
      %v3608 = vpop.permute.xlu0 %3607
      %3609 = vrot.lane.b32.xlu0 %v3569, 96
      %v3610 = vpop.permute.xlu0 %3609
      %3611 = vrot.lane.b32.xlu0 %v3570, 96
      %v3612 = vpop.permute.xlu0 %3611
      %3613 = vrot.lane.b32.xlu0 %v3571, 96
      %v3614 = vpop.permute.xlu0 %3613
      %3615 = vrot.lane.b32.xlu0 %v3572, 96
      %v3616 = vpop.permute.xlu0 %3615
      %3617 = vrot.lane.b32.xlu0 %v3573, 96
      %v3618 = vpop.permute.xlu0 %3617
      %3619 = vrot.lane.b32.xlu0 %v3574, 96
      %v3620 = vpop.permute.xlu0 %3619
      %3621 = vrot.lane.b32.xlu0 %v3575, 96
      %v3622 = vpop.permute.xlu0 %3621
      %3623 = vrot.lane.b32.xlu0 %v3576, 96
      %v3624 = vpop.permute.xlu0 %3623
      %3641 = vst.msk [vmem:[#allocation3 + $0x8] sm:$0xff] %vm1267, %v3594
      %3642 = vst.msk [vmem:[#allocation3 + $0x20] sm:$0xff] %vm1267, %v3596
      %3643 = vst.msk [vmem:[#allocation3 + $0x38] sm:$0xff] %vm1267, %v3598
      %3644 = vst.msk [vmem:[#allocation3 + $0x50] sm:$0xff] %vm1267, %v3600
      %3645 = vst.msk [vmem:[#allocation3 + $0x68] sm:$0xff] %vm1267, %v3602
      %3646 = vst.msk [vmem:[#allocation3 + $0x80] sm:$0xff] %vm1267, %v3604
      %3647 = vst.msk [vmem:[#allocation3 + $0x98] sm:$0xff] %vm1267, %v3606
      %3648 = vst.msk [vmem:[#allocation3 + $0xb0] sm:$0xff] %vm1267, %v3608
      %3649 = vst.msk [vmem:[#allocation3 + $0xc8] sm:$0xff] %vm1267, %v3610
      %3650 = vst.msk [vmem:[#allocation3 + $0xe0] sm:$0xff] %vm1267, %v3612
      %3651 = vst.msk [vmem:[#allocation3 + $0xf8] sm:$0xff] %vm1267, %v3614
      %3652 = vst.msk [vmem:[#allocation3 + $0x110] sm:$0xff] %vm1267, %v3616
      %3653 = vst.msk [vmem:[#allocation3 + $0x128] sm:$0xff] %vm1267, %v3618
      %3654 = vst.msk [vmem:[#allocation3 + $0x140] sm:$0xff] %vm1267, %v3620
      %3655 = vst.msk [vmem:[#allocation3 + $0x158] sm:$0xff] %vm1267, %v3622
      %3656 = vst.msk [vmem:[#allocation3 + $0x170] sm:$0xff] %vm1267, %v3624
      %v3657 = vld [vmem:[%s1476 + $0x2] sm:$0xff]
      %v3658 = vld [vmem:[%s1476 + $0xa] sm:$0xff]
      %v3659 = vld [vmem:[%s1476 + $0x1a] sm:$0xff]
      %v3660 = vld [vmem:[%s1476 + $0x22] sm:$0xff]
      %v3661 = vld [vmem:[%s1476 + $0x32] sm:$0xff]
      %v3662 = vld [vmem:[%s1476 + $0x3a] sm:$0xff]
      %v3663 = vld [vmem:[%s1476 + $0x4a] sm:$0xff]
      %v3664 = vld [vmem:[%s1476 + $0x52] sm:$0xff]
      %v3665 = vld [vmem:[%s1476 + $0x62] sm:$0xff]
      %v3666 = vld [vmem:[%s1476 + $0x6a] sm:$0xff]
      %v3667 = vld [vmem:[%s1476 + $0x7a] sm:$0xff]
      %v3668 = vld [vmem:[%s1476 + $0x82] sm:$0xff]
      %v3669 = vld [vmem:[%s1476 + $0x92] sm:$0xff]
      %v3670 = vld [vmem:[%s1476 + $0x9a] sm:$0xff]
      %v3671 = vld [vmem:[%s1476 + $0xaa] sm:$0xff]
      %v3672 = vld [vmem:[%s1476 + $0xb2] sm:$0xff]
      %v3673 = vld [vmem:[%s1476 + $0xc2] sm:$0xff]
      %v3674 = vld [vmem:[%s1476 + $0xca] sm:$0xff]
      %v3675 = vld [vmem:[%s1476 + $0xda] sm:$0xff]
      %v3676 = vld [vmem:[%s1476 + $0xe2] sm:$0xff]
      %v3677 = vld [vmem:[%s1476 + $0xf2] sm:$0xff]
      %v3678 = vld [vmem:[%s1476 + $0xfa] sm:$0xff]
      %v3679 = vld [vmem:[%s1476 + $0x10a] sm:$0xff]
      %v3680 = vld [vmem:[%s1476 + $0x112] sm:$0xff]
      %v3681 = vld [vmem:[%s1476 + $0x122] sm:$0xff]
      %v3682 = vld [vmem:[%s1476 + $0x12a] sm:$0xff]
      %v3683 = vld [vmem:[%s1476 + $0x13a] sm:$0xff]
      %v3684 = vld [vmem:[%s1476 + $0x142] sm:$0xff]
      %v3685 = vld [vmem:[%s1476 + $0x152] sm:$0xff]
      %v3686 = vld [vmem:[%s1476 + $0x15a] sm:$0xff]
      %v3687 = vld [vmem:[%s1476 + $0x16a] sm:$0xff]
      %v3688 = vld [vmem:[%s1476 + $0x172] sm:$0xff]
      %v3689 = vpack.c.bf16 %v3658, %v3657
      %v3690 = vpack.c.bf16 %v3660, %v3659
      %v3691 = vpack.c.bf16 %v3662, %v3661
      %v3692 = vpack.c.bf16 %v3664, %v3663
      %v3693 = vpack.c.bf16 %v3666, %v3665
      %v3694 = vpack.c.bf16 %v3668, %v3667
      %v3695 = vpack.c.bf16 %v3670, %v3669
      %v3696 = vpack.c.bf16 %v3672, %v3671
      %v3697 = vpack.c.bf16 %v3674, %v3673
      %v3698 = vpack.c.bf16 %v3676, %v3675
      %v3699 = vpack.c.bf16 %v3678, %v3677
      %v3700 = vpack.c.bf16 %v3680, %v3679
      %v3701 = vpack.c.bf16 %v3682, %v3681
      %v3702 = vpack.c.bf16 %v3684, %v3683
      %v3703 = vpack.c.bf16 %v3686, %v3685
      %v3704 = vpack.c.bf16 %v3688, %v3687
      %3705 = vst.msk [vmem:[#allocation3 + $0x10] sm:$0xff] %vm800, %v3689
      %3706 = vst.msk [vmem:[#allocation3 + $0x28] sm:$0xff] %vm800, %v3690
      %3707 = vst.msk [vmem:[#allocation3 + $0x40] sm:$0xff] %vm800, %v3691
      %3708 = vst.msk [vmem:[#allocation3 + $0x58] sm:$0xff] %vm800, %v3692
      %3709 = vst.msk [vmem:[#allocation3 + $0x70] sm:$0xff] %vm800, %v3693
      %3710 = vst.msk [vmem:[#allocation3 + $0x88] sm:$0xff] %vm800, %v3694
      %3711 = vst.msk [vmem:[#allocation3 + $0xa0] sm:$0xff] %vm800, %v3695
      %3712 = vst.msk [vmem:[#allocation3 + $0xb8] sm:$0xff] %vm800, %v3696
      %3713 = vst.msk [vmem:[#allocation3 + $0xd0] sm:$0xff] %vm800, %v3697
      %3714 = vst.msk [vmem:[#allocation3 + $0xe8] sm:$0xff] %vm800, %v3698
      %3715 = vst.msk [vmem:[#allocation3 + $0x100] sm:$0xff] %vm800, %v3699
      %3716 = vst.msk [vmem:[#allocation3 + $0x118] sm:$0xff] %vm800, %v3700
      %3717 = vst.msk [vmem:[#allocation3 + $0x130] sm:$0xff] %vm800, %v3701
      %3718 = vst.msk [vmem:[#allocation3 + $0x148] sm:$0xff] %vm800, %v3702
      %3719 = vst.msk [vmem:[#allocation3 + $0x160] sm:$0xff] %vm800, %v3703
      %3720 = vst.msk [vmem:[#allocation3 + $0x178] sm:$0xff] %vm800, %v3704
      %v3721 = vld [vmem:[#allocation3] sm:$0xff]
      %v3722 = vld [vmem:[#allocation3 + $0x8] sm:$0xff]
      %v3723 = vld [vmem:[#allocation3 + $0x10] sm:$0xff]
      %v3724 = vld [vmem:[#allocation3 + $0x18] sm:$0xff]
      %v3725 = vld [vmem:[#allocation3 + $0x20] sm:$0xff]
      %v3726 = vld [vmem:[#allocation3 + $0x28] sm:$0xff]
      %v3727 = vld [vmem:[#allocation3 + $0x30] sm:$0xff]
      %v3728 = vld [vmem:[#allocation3 + $0x38] sm:$0xff]
      %v3729 = vld [vmem:[#allocation3 + $0x40] sm:$0xff]
      %v3730 = vld [vmem:[#allocation3 + $0x48] sm:$0xff]
      %v3731 = vld [vmem:[#allocation3 + $0x50] sm:$0xff]
      %v3732 = vld [vmem:[#allocation3 + $0x58] sm:$0xff]
      %v3733 = vld [vmem:[#allocation3 + $0x60] sm:$0xff]
      %v3734 = vld [vmem:[#allocation3 + $0x68] sm:$0xff]
      %v3735 = vld [vmem:[#allocation3 + $0x70] sm:$0xff]
      %v3736 = vld [vmem:[#allocation3 + $0x78] sm:$0xff]
      %v3737 = vld [vmem:[#allocation3 + $0x80] sm:$0xff]
      %v3738 = vld [vmem:[#allocation3 + $0x88] sm:$0xff]
      %v3739 = vld [vmem:[#allocation3 + $0x90] sm:$0xff]
      %v3740 = vld [vmem:[#allocation3 + $0x98] sm:$0xff]
      %v3741 = vld [vmem:[#allocation3 + $0xa0] sm:$0xff]
      %v3742 = vld [vmem:[#allocation3 + $0xa8] sm:$0xff]
      %v3743 = vld [vmem:[#allocation3 + $0xb0] sm:$0xff]
      %v3744 = vld [vmem:[#allocation3 + $0xb8] sm:$0xff]
      %v3745 = vld [vmem:[#allocation3 + $0xc0] sm:$0xff]
      %v3746 = vld [vmem:[#allocation3 + $0xc8] sm:$0xff]
      %v3747 = vld [vmem:[#allocation3 + $0xd0] sm:$0xff]
      %v3748 = vld [vmem:[#allocation3 + $0xd8] sm:$0xff]
      %v3749 = vld [vmem:[#allocation3 + $0xe0] sm:$0xff]
      %v3750 = vld [vmem:[#allocation3 + $0xe8] sm:$0xff]
      %v3751 = vld [vmem:[#allocation3 + $0xf0] sm:$0xff]
      %v3752 = vld [vmem:[#allocation3 + $0xf8] sm:$0xff]
      %v3753 = vld [vmem:[#allocation3 + $0x100] sm:$0xff]
      %v3754 = vld [vmem:[#allocation3 + $0x108] sm:$0xff]
      %v3755 = vld [vmem:[#allocation3 + $0x110] sm:$0xff]
      %v3756 = vld [vmem:[#allocation3 + $0x118] sm:$0xff]
      %v3757 = vld [vmem:[#allocation3 + $0x120] sm:$0xff]
      %v3758 = vld [vmem:[#allocation3 + $0x128] sm:$0xff]
      %v3759 = vld [vmem:[#allocation3 + $0x130] sm:$0xff]
      %v3760 = vld [vmem:[#allocation3 + $0x138] sm:$0xff]
      %v3761 = vld [vmem:[#allocation3 + $0x140] sm:$0xff]
      %v3762 = vld [vmem:[#allocation3 + $0x148] sm:$0xff]
      %v3763 = vld [vmem:[#allocation3 + $0x150] sm:$0xff]
      %v3764 = vld [vmem:[#allocation3 + $0x158] sm:$0xff]
      %v3765 = vld [vmem:[#allocation3 + $0x160] sm:$0xff]
      %v3766 = vld [vmem:[#allocation3 + $0x168] sm:$0xff]
      %v3767 = vld [vmem:[#allocation3 + $0x170] sm:$0xff]
      %v3768 = vld [vmem:[#allocation3 + $0x178] sm:$0xff]
      %v3769 = vld [vmem:[%s8] sm:$0xf]
      %v3770 = vld [vmem:[%s8 + $0x4] sm:$0xf]
      %v3771 = vld [vmem:[%s8 + $0x8] sm:$0xf]
      %v3772 = vld [vmem:[%s8 + $0xc] sm:$0xf]
      %v3773 = vld [vmem:[%s8 + $0x10] sm:$0xf]
      %v3774 = vld [vmem:[%s8 + $0x14] sm:$0xf]
      %v3775 = vld [vmem:[%s8 + $0x18] sm:$0xf]
      %v3776 = vld [vmem:[%s8 + $0x1c] sm:$0xf]
      %v3777 = vld [vmem:[%s8 + $0x20] sm:$0xf]
      %v3778 = vld [vmem:[%s8 + $0x24] sm:$0xf]
      %v3779 = vld [vmem:[%s8 + $0x28] sm:$0xf]
      %v3780 = vld [vmem:[%s8 + $0x2c] sm:$0xf]
      %v3781 = vld [vmem:[%s8 + $0x30] sm:$0xf]
      %v3782 = vld [vmem:[%s8 + $0x34] sm:$0xf]
      %v3783 = vld [vmem:[%s8 + $0x38] sm:$0xf]
      %v3784 = vld [vmem:[%s8 + $0x3c] sm:$0xf]
      %v3785 = vld [vmem:[%s8 + $0x40] sm:$0xf]
      %v3786 = vld [vmem:[%s8 + $0x44] sm:$0xf]
      %v3787 = vld [vmem:[%s8 + $0x48] sm:$0xf]
      %v3788 = vld [vmem:[%s8 + $0x4c] sm:$0xf]
      %v3789 = vld [vmem:[%s8 + $0x50] sm:$0xf]
      %v3790 = vld [vmem:[%s8 + $0x54] sm:$0xf]
      %v3791 = vld [vmem:[%s8 + $0x58] sm:$0xf]
      %v3792 = vld [vmem:[%s8 + $0x5c] sm:$0xf]
      %v3793 = vld [vmem:[%s8 + $0x60] sm:$0xf]
      %v3794 = vld [vmem:[%s8 + $0x64] sm:$0xf]
      %v3795 = vld [vmem:[%s8 + $0x68] sm:$0xf]
      %v3796 = vld [vmem:[%s8 + $0x6c] sm:$0xf]
      %v3797 = vld [vmem:[%s8 + $0x70] sm:$0xf]
      %v3798 = vld [vmem:[%s8 + $0x74] sm:$0xf]
      %v3799 = vld [vmem:[%s8 + $0x78] sm:$0xf]
      %v3800 = vld [vmem:[%s8 + $0x7c] sm:$0xf]
      %v3801 = vld [vmem:[%s8 + $0x80] sm:$0xf]
      %v3802 = vld [vmem:[%s8 + $0x84] sm:$0xf]
      %v3803 = vld [vmem:[%s8 + $0x88] sm:$0xf]
      %v3804 = vld [vmem:[%s8 + $0x8c] sm:$0xf]
      %v3805 = vld [vmem:[%s9] sm:$0x1]
      %v3807 = vlaneseq
      %v3808 = vshrl.u32 %v3807, 7
      %v3809 = vsub.s32 0, %v3808
      %v3810 = vrot.slane %v3805, %v3809
      %v3848 = vunpack.c.l.b16 %v3769
      %v3849 = vunpack.c.l.b16 %v3770
      %v3850 = vunpack.c.l.b16 %v3771
      %v3851 = vunpack.c.l.b16 %v3772
      %v3852 = vunpack.c.l.b16 %v3773
      %v3853 = vunpack.c.l.b16 %v3774
      %v3854 = vunpack.c.l.b16 %v3775
      %v3855 = vunpack.c.l.b16 %v3776
      %v3856 = vunpack.c.l.b16 %v3777
      %v3857 = vunpack.c.l.b16 %v3778
      %v3858 = vunpack.c.l.b16 %v3779
      %v3859 = vunpack.c.l.b16 %v3780
      %v3860 = vunpack.c.l.b16 %v3781
      %v3861 = vunpack.c.l.b16 %v3782
      %v3862 = vunpack.c.l.b16 %v3783
      %v3863 = vunpack.c.l.b16 %v3784
      %v3864 = vunpack.c.l.b16 %v3785
      %v3865 = vunpack.c.l.b16 %v3786
      %v3866 = vunpack.c.l.b16 %v3787
      %v3867 = vunpack.c.l.b16 %v3788
      %v3868 = vunpack.c.l.b16 %v3789
      %v3869 = vunpack.c.l.b16 %v3790
      %v3870 = vunpack.c.l.b16 %v3791
      %v3871 = vunpack.c.l.b16 %v3792
      %v3872 = vunpack.c.l.b16 %v3793
      %v3873 = vunpack.c.l.b16 %v3794
      %v3874 = vunpack.c.l.b16 %v3795
      %v3875 = vunpack.c.l.b16 %v3796
      %v3876 = vunpack.c.l.b16 %v3797
      %v3877 = vunpack.c.l.b16 %v3798
      %v3878 = vunpack.c.l.b16 %v3799
      %v3879 = vunpack.c.l.b16 %v3800
      %v3880 = vunpack.c.l.b16 %v3801
      %v3881 = vunpack.c.l.b16 %v3802
      %v3882 = vunpack.c.l.b16 %v3803
      %v3883 = vunpack.c.l.b16 %v3804
      %v3884 = vpack.c.b16 %v3849, %v3848
      %v3885 = vpack.c.b16 %v3851, %v3850
      %v3886 = vpack.c.b16 %v3853, %v3852
      %v3887 = vpack.c.b16 %v3855, %v3854
      %v3888 = vpack.c.b16 %v3857, %v3856
      %v3889 = vpack.c.b16 %v3859, %v3858
      %v3890 = vpack.c.b16 %v3861, %v3860
      %v3891 = vpack.c.b16 %v3863, %v3862
      %v3892 = vpack.c.b16 %v3865, %v3864
      %v3893 = vpack.c.b16 %v3867, %v3866
      %v3894 = vpack.c.b16 %v3869, %v3868
      %v3895 = vpack.c.b16 %v3871, %v3870
      %v3896 = vpack.c.b16 %v3873, %v3872
      %v3897 = vpack.c.b16 %v3875, %v3874
      %v3898 = vpack.c.b16 %v3877, %v3876
      %v3899 = vpack.c.b16 %v3879, %v3878
      %v3900 = vpack.c.b16 %v3881, %v3880
      %v3901 = vpack.c.b16 %v3883, %v3882
      %v3921 = vsel %vm800, %v3723, 0
      %v3924 = vsel %vm800, %v3726, 0
      %v3927 = vsel %vm800, %v3729, 0
      %v3930 = vsel %vm800, %v3732, 0
      %v3933 = vsel %vm800, %v3735, 0
      %v3936 = vsel %vm800, %v3738, 0
      %v3939 = vsel %vm800, %v3741, 0
      %v3942 = vsel %vm800, %v3744, 0
      %v3945 = vsel %vm800, %v3747, 0
      %v3948 = vsel %vm800, %v3750, 0
      %v3951 = vsel %vm800, %v3753, 0
      %v3954 = vsel %vm800, %v3756, 0
      %v3957 = vsel %vm800, %v3759, 0
      %v3960 = vsel %vm800, %v3762, 0
      %v3963 = vsel %vm800, %v3765, 0
      %v3966 = vsel %vm800, %v3768, 0
      %3968 = vmatprep.subr.bf16.mxu0 0
      %3969 = vmatpush1.bf16.msra.mxu0 %v3884
      %3970 = vmatprep.subr.bf16.mxu0 0
      %3971 = vmatpush1.bf16.msra.mxu0 %v3885
      %3972 = vmatprep.subr.bf16.mxu0 0
      %3973 = vmatpush1.bf16.msra.mxu0 %v3886
      %3974 = vmatprep.subr.bf16.mxu0 0
      %3975 = vmatpush1.bf16.msra.mxu0 %v3887
      %3976 = vmatprep.subr.bf16.mxu0 0
      %3977 = vmatpush1.bf16.msra.mxu0 %v3888
      %3978 = vmatprep.subr.bf16.mxu0 0
      %3979 = vmatpush1.bf16.msra.mxu0 %v3889
      %3980 = vmatprep.subr.bf16.mxu0 0
      %3981 = vmatpush1.bf16.msra.mxu0 %v3890
      %3982 = vmatprep.subr.bf16.mxu0 0
      %3983 = vmatpush1.bf16.msra.mxu0 %v3891
      %3984 = vmatprep.subr.bf16.mxu0 0
      %3985 = vmatpush1.bf16.msra.mxu0 %v3892
      %3986 = vmatprep.subr.bf16.mxu0 0
      %3987 = vmatpush1.bf16.msra.mxu0 %v3893
      %3988 = vmatprep.subr.bf16.mxu0 0
      %3989 = vmatpush1.bf16.msra.mxu0 %v3894
      %3990 = vmatprep.subr.bf16.mxu0 0
      %3991 = vmatpush1.bf16.msra.mxu0 %v3895
      %3992 = vmatprep.subr.bf16.mxu0 0
      %3993 = vmatpush1.bf16.msra.mxu0 %v3896
      %3994 = vmatprep.subr.bf16.mxu0 0
      %3995 = vmatpush1.bf16.msra.mxu0 %v3897
      %3996 = vmatprep.subr.bf16.mxu0 0
      %3997 = vmatpush1.bf16.msra.mxu0 %v3898
      %3998 = vmatprep.subr.bf16.mxu0 0
      %3999 = vmatpush1.bf16.msra.mxu0 %v3899
      %4000 = vmatprep.mubr.bf16.mxu0 %v3722
      %4001 = vmatmul.mubr.bf16.gmra.mrb[0].mxu0 %v3721
      %v4002 = vpop.f32.mrb[0].mxu0
      %v4003 = vadd.f32 %v3810, %v4002
      %v4004 = vpop.f32.mrb[0].mxu0
      %v4005 = vpop.f32.mrb[0].mxu0
      %v4006 = vadd.f32 %v3810, %v4005
      %v4007 = vpop.f32.mrb[0].mxu0
      %4008 = vmatprep.mubr.bf16.mxu0 %v3725
      %4009 = vmatmul.mubr.bf16.gmra.mrb[0].mxu0 %v3724
      %v4010 = vpop.f32.mrb[0].mxu0
      %v4011 = vadd.f32 %v3810, %v4010
      %v4012 = vpop.f32.mrb[0].mxu0
      %v4013 = vpop.f32.mrb[0].mxu0
      %v4014 = vadd.f32 %v3810, %v4013
      %v4015 = vpop.f32.mrb[0].mxu0
      %4016 = vmatprep.mubr.bf16.mxu0 %v3728
      %4017 = vmatmul.mubr.bf16.gmra.mrb[0].mxu0 %v3727
      %v4018 = vpop.f32.mrb[0].mxu0
      %v4019 = vadd.f32 %v3810, %v4018
      %v4020 = vpop.f32.mrb[0].mxu0
      %v4021 = vpop.f32.mrb[0].mxu0
      %v4022 = vadd.f32 %v3810, %v4021
      %v4023 = vpop.f32.mrb[0].mxu0
      %4024 = vmatprep.mubr.bf16.mxu0 %v3731
      %4025 = vmatmul.mubr.bf16.gmra.mrb[0].mxu0 %v3730
      %v4026 = vpop.f32.mrb[0].mxu0
      %v4027 = vadd.f32 %v3810, %v4026
      %v4028 = vpop.f32.mrb[0].mxu0
      %v4029 = vpop.f32.mrb[0].mxu0
      %v4030 = vadd.f32 %v3810, %v4029
      %v4031 = vpop.f32.mrb[0].mxu0
      %4032 = vmatprep.mubr.bf16.mxu0 %v3734
      %4033 = vmatmul.mubr.bf16.gmra.mrb[0].mxu0 %v3733
      %v4034 = vpop.f32.mrb[0].mxu0
      %v4035 = vadd.f32 %v3810, %v4034
      %v4036 = vpop.f32.mrb[0].mxu0
      %v4037 = vpop.f32.mrb[0].mxu0
      %v4038 = vadd.f32 %v3810, %v4037
      %v4039 = vpop.f32.mrb[0].mxu0
      %4040 = vmatprep.mubr.bf16.mxu0 %v3737
      %4041 = vmatmul.mubr.bf16.gmra.mrb[0].mxu0 %v3736
      %v4042 = vpop.f32.mrb[0].mxu0
      %v4043 = vadd.f32 %v3810, %v4042
      %v4044 = vpop.f32.mrb[0].mxu0
      %v4045 = vpop.f32.mrb[0].mxu0
      %v4046 = vadd.f32 %v3810, %v4045
      %v4047 = vpop.f32.mrb[0].mxu0
      %4048 = vmatprep.mubr.bf16.mxu0 %v3740
      %4049 = vmatmul.mubr.bf16.gmra.mrb[0].mxu0 %v3739
      %v4050 = vpop.f32.mrb[0].mxu0
      %v4051 = vadd.f32 %v3810, %v4050
      %v4052 = vpop.f32.mrb[0].mxu0
      %v4053 = vpop.f32.mrb[0].mxu0
      %v4054 = vadd.f32 %v3810, %v4053
      %v4055 = vpop.f32.mrb[0].mxu0
      %4056 = vmatprep.mubr.bf16.mxu0 %v3743
      %4057 = vmatmul.mubr.bf16.gmra.mrb[0].mxu0 %v3742
      %v4058 = vpop.f32.mrb[0].mxu0
      %v4059 = vadd.f32 %v3810, %v4058
      %v4060 = vpop.f32.mrb[0].mxu0
      %v4061 = vpop.f32.mrb[0].mxu0
      %v4062 = vadd.f32 %v3810, %v4061
      %v4063 = vpop.f32.mrb[0].mxu0
      %4064 = vmatprep.mubr.bf16.mxu0 %v3746
      %4065 = vmatmul.mubr.bf16.gmra.mrb[0].mxu0 %v3745
      %v4066 = vpop.f32.mrb[0].mxu0
      %v4067 = vadd.f32 %v3810, %v4066
      %v4068 = vpop.f32.mrb[0].mxu0
      %v4069 = vpop.f32.mrb[0].mxu0
      %v4070 = vadd.f32 %v3810, %v4069
      %v4071 = vpop.f32.mrb[0].mxu0
      %4072 = vmatprep.mubr.bf16.mxu0 %v3749
      %4073 = vmatmul.mubr.bf16.gmra.mrb[0].mxu0 %v3748
      %v4074 = vpop.f32.mrb[0].mxu0
      %v4075 = vadd.f32 %v3810, %v4074
      %v4076 = vpop.f32.mrb[0].mxu0
      %v4077 = vpop.f32.mrb[0].mxu0
      %v4078 = vadd.f32 %v3810, %v4077
      %v4079 = vpop.f32.mrb[0].mxu0
      %4080 = vmatprep.mubr.bf16.mxu0 %v3752
      %4081 = vmatmul.mubr.bf16.gmra.mrb[0].mxu0 %v3751
      %v4082 = vpop.f32.mrb[0].mxu0
      %v4083 = vadd.f32 %v3810, %v4082
      %v4084 = vpop.f32.mrb[0].mxu0
      %v4085 = vpop.f32.mrb[0].mxu0
      %v4086 = vadd.f32 %v3810, %v4085
      %v4087 = vpop.f32.mrb[0].mxu0
      %4088 = vmatprep.mubr.bf16.mxu0 %v3755
      %4089 = vmatmul.mubr.bf16.gmra.mrb[0].mxu0 %v3754
      %v4090 = vpop.f32.mrb[0].mxu0
      %v4091 = vadd.f32 %v3810, %v4090
      %v4092 = vpop.f32.mrb[0].mxu0
      %v4093 = vpop.f32.mrb[0].mxu0
      %v4094 = vadd.f32 %v3810, %v4093
      %v4095 = vpop.f32.mrb[0].mxu0
      %4096 = vmatprep.mubr.bf16.mxu0 %v3758
      %4097 = vmatmul.mubr.bf16.gmra.mrb[0].mxu0 %v3757
      %v4098 = vpop.f32.mrb[0].mxu0
      %v4099 = vadd.f32 %v3810, %v4098
      %v4100 = vpop.f32.mrb[0].mxu0
      %v4101 = vpop.f32.mrb[0].mxu0
      %v4102 = vadd.f32 %v3810, %v4101
      %v4103 = vpop.f32.mrb[0].mxu0
      %4104 = vmatprep.mubr.bf16.mxu0 %v3761
      %4105 = vmatmul.mubr.bf16.gmra.mrb[0].mxu0 %v3760
      %v4106 = vpop.f32.mrb[0].mxu0
      %v4107 = vadd.f32 %v3810, %v4106
      %v4108 = vpop.f32.mrb[0].mxu0
      %v4109 = vpop.f32.mrb[0].mxu0
      %v4110 = vadd.f32 %v3810, %v4109
      %v4111 = vpop.f32.mrb[0].mxu0
      %4112 = vmatprep.mubr.bf16.mxu0 %v3764
      %4113 = vmatmul.mubr.bf16.gmra.mrb[0].mxu0 %v3763
      %v4114 = vpop.f32.mrb[0].mxu0
      %v4115 = vadd.f32 %v3810, %v4114
      %v4116 = vpop.f32.mrb[0].mxu0
      %v4117 = vpop.f32.mrb[0].mxu0
      %v4118 = vadd.f32 %v3810, %v4117
      %v4119 = vpop.f32.mrb[0].mxu0
      %4120 = vmatprep.mubr.bf16.mxu0 %v3767
      %4121 = vmatmul.mubr.bf16.gmra.mrb[0].mxu0 %v3766
      %v4122 = vpop.f32.mrb[0].mxu0
      %v4123 = vadd.f32 %v3810, %v4122
      %v4124 = vpop.f32.mrb[0].mxu0
      %v4125 = vpop.f32.mrb[0].mxu0
      %v4126 = vadd.f32 %v3810, %v4125
      %v4127 = vpop.f32.mrb[0].mxu0
      %4128 = vdwg.mxu0
      %4129 = vmatprep.subr.bf16.mxu0 0
      %4130 = vmatpush1.bf16.msra.mxu0 %v3900
      %4131 = vmatprep.subr.bf16.mxu0 0
      %4132 = vmatpush1.bf16.msra.mxu0 %v3901
      %4133 = vmatprep.subr.bf16.mxu0 0
      %4134 = vmatpush1.bf16.msra.mxu0 0
      %4135 = vmatprep.subr.bf16.mxu0 0
      %4136 = vmatpush1.bf16.msra.mxu0 0
      %4137 = vmatprep.subr.bf16.mxu0 0
      %4138 = vmatpush1.bf16.msra.mxu0 0
      %4139 = vmatprep.subr.bf16.mxu0 0
      %4140 = vmatpush1.bf16.msra.mxu0 0
      %4141 = vmatprep.subr.bf16.mxu0 0
      %4142 = vmatpush1.bf16.msra.mxu0 0
      %4143 = vmatprep.subr.bf16.mxu0 0
      %4144 = vmatpush1.bf16.msra.mxu0 0
      %4145 = vmatprep.subr.bf16.mxu0 0
      %4146 = vmatpush1.bf16.msra.mxu0 0
      %4147 = vmatprep.subr.bf16.mxu0 0
      %4148 = vmatpush1.bf16.msra.mxu0 0
      %4149 = vmatprep.subr.bf16.mxu0 0
      %4150 = vmatpush1.bf16.msra.mxu0 0
      %4151 = vmatprep.subr.bf16.mxu0 0
      %4152 = vmatpush1.bf16.msra.mxu0 0
      %4153 = vmatprep.subr.bf16.mxu0 0
      %4154 = vmatpush1.bf16.msra.mxu0 0
      %4155 = vmatprep.subr.bf16.mxu0 0
      %4156 = vmatpush1.bf16.msra.mxu0 0
      %4157 = vmatprep.subr.bf16.mxu0 0
      %4158 = vmatpush1.bf16.msra.mxu0 0
      %4159 = vmatprep.subr.bf16.mxu0 0
      %4160 = vmatpush1.bf16.msra.mxu0 0
      %4161 = vmatprep.mubr.bf16.mxu0 0
      %4162 = vmatmul.mubr.bf16.gmra.mrb[0].mxu0 %v3921
      %v4163 = vpop.f32.mrb[0].mxu0
      %v4164 = vadd.f32 %v4003, %v4163
      %v4165 = vpop.f32.mrb[0].mxu0
      %v4166 = vpop.f32.mrb[0].mxu0
      %v4167 = vadd.f32 %v4006, %v4166
      %v4168 = vpop.f32.mrb[0].mxu0
      %4169 = vmatprep.mubr.bf16.mxu0 0
      %4170 = vmatmul.mubr.bf16.gmra.mrb[0].mxu0 %v3924
      %v4171 = vpop.f32.mrb[0].mxu0
      %v4172 = vadd.f32 %v4011, %v4171
      %v4173 = vpop.f32.mrb[0].mxu0
      %v4174 = vpop.f32.mrb[0].mxu0
      %v4175 = vadd.f32 %v4014, %v4174
      %v4176 = vpop.f32.mrb[0].mxu0
      %4177 = vmatprep.mubr.bf16.mxu0 0
      %4178 = vmatmul.mubr.bf16.gmra.mrb[0].mxu0 %v3927
      %v4179 = vpop.f32.mrb[0].mxu0
      %v4180 = vadd.f32 %v4019, %v4179
      %v4181 = vpop.f32.mrb[0].mxu0
      %v4182 = vpop.f32.mrb[0].mxu0
      %v4183 = vadd.f32 %v4022, %v4182
      %v4184 = vpop.f32.mrb[0].mxu0
      %4185 = vmatprep.mubr.bf16.mxu0 0
      %4186 = vmatmul.mubr.bf16.gmra.mrb[0].mxu0 %v3930
      %v4187 = vpop.f32.mrb[0].mxu0
      %v4188 = vadd.f32 %v4027, %v4187
      %v4189 = vpop.f32.mrb[0].mxu0
      %v4190 = vpop.f32.mrb[0].mxu0
      %v4191 = vadd.f32 %v4030, %v4190
      %v4192 = vpop.f32.mrb[0].mxu0
      %4193 = vmatprep.mubr.bf16.mxu0 0
      %4194 = vmatmul.mubr.bf16.gmra.mrb[0].mxu0 %v3933
      %v4195 = vpop.f32.mrb[0].mxu0
      %v4196 = vadd.f32 %v4035, %v4195
      %v4197 = vpop.f32.mrb[0].mxu0
      %v4198 = vpop.f32.mrb[0].mxu0
      %v4199 = vadd.f32 %v4038, %v4198
      %v4200 = vpop.f32.mrb[0].mxu0
      %4201 = vmatprep.mubr.bf16.mxu0 0
      %4202 = vmatmul.mubr.bf16.gmra.mrb[0].mxu0 %v3936
      %v4203 = vpop.f32.mrb[0].mxu0
      %v4204 = vadd.f32 %v4043, %v4203
      %v4205 = vpop.f32.mrb[0].mxu0
      %v4206 = vpop.f32.mrb[0].mxu0
      %v4207 = vadd.f32 %v4046, %v4206
      %v4208 = vpop.f32.mrb[0].mxu0
      %4209 = vmatprep.mubr.bf16.mxu0 0
      %4210 = vmatmul.mubr.bf16.gmra.mrb[0].mxu0 %v3939
      %v4211 = vpop.f32.mrb[0].mxu0
      %v4212 = vadd.f32 %v4051, %v4211
      %v4213 = vpop.f32.mrb[0].mxu0
      %v4214 = vpop.f32.mrb[0].mxu0
      %v4215 = vadd.f32 %v4054, %v4214
      %v4216 = vpop.f32.mrb[0].mxu0
      %4217 = vmatprep.mubr.bf16.mxu0 0
      %4218 = vmatmul.mubr.bf16.gmra.mrb[0].mxu0 %v3942
      %v4219 = vpop.f32.mrb[0].mxu0
      %v4220 = vadd.f32 %v4059, %v4219
      %v4221 = vpop.f32.mrb[0].mxu0
      %v4222 = vpop.f32.mrb[0].mxu0
      %v4223 = vadd.f32 %v4062, %v4222
      %v4224 = vpop.f32.mrb[0].mxu0
      %4225 = vmatprep.mubr.bf16.mxu0 0
      %4226 = vmatmul.mubr.bf16.gmra.mrb[0].mxu0 %v3945
      %v4227 = vpop.f32.mrb[0].mxu0
      %v4228 = vadd.f32 %v4067, %v4227
      %v4229 = vpop.f32.mrb[0].mxu0
      %v4230 = vpop.f32.mrb[0].mxu0
      %v4231 = vadd.f32 %v4070, %v4230
      %v4232 = vpop.f32.mrb[0].mxu0
      %4233 = vmatprep.mubr.bf16.mxu0 0
      %4234 = vmatmul.mubr.bf16.gmra.mrb[0].mxu0 %v3948
      %v4235 = vpop.f32.mrb[0].mxu0
      %v4236 = vadd.f32 %v4075, %v4235
      %v4237 = vpop.f32.mrb[0].mxu0
      %v4238 = vpop.f32.mrb[0].mxu0
      %v4239 = vadd.f32 %v4078, %v4238
      %v4240 = vpop.f32.mrb[0].mxu0
      %4241 = vmatprep.mubr.bf16.mxu0 0
      %4242 = vmatmul.mubr.bf16.gmra.mrb[0].mxu0 %v3951
      %v4243 = vpop.f32.mrb[0].mxu0
      %v4244 = vadd.f32 %v4083, %v4243
      %v4245 = vpop.f32.mrb[0].mxu0
      %v4246 = vpop.f32.mrb[0].mxu0
      %v4247 = vadd.f32 %v4086, %v4246
      %v4248 = vpop.f32.mrb[0].mxu0
      %4249 = vmatprep.mubr.bf16.mxu0 0
      %4250 = vmatmul.mubr.bf16.gmra.mrb[0].mxu0 %v3954
      %v4251 = vpop.f32.mrb[0].mxu0
      %v4252 = vadd.f32 %v4091, %v4251
      %v4253 = vpop.f32.mrb[0].mxu0
      %v4254 = vpop.f32.mrb[0].mxu0
      %v4255 = vadd.f32 %v4094, %v4254
      %v4256 = vpop.f32.mrb[0].mxu0
      %4257 = vmatprep.mubr.bf16.mxu0 0
      %4258 = vmatmul.mubr.bf16.gmra.mrb[0].mxu0 %v3957
      %v4259 = vpop.f32.mrb[0].mxu0
      %v4260 = vadd.f32 %v4099, %v4259
      %v4261 = vpop.f32.mrb[0].mxu0
      %v4262 = vpop.f32.mrb[0].mxu0
      %v4263 = vadd.f32 %v4102, %v4262
      %v4264 = vpop.f32.mrb[0].mxu0
      %4265 = vmatprep.mubr.bf16.mxu0 0
      %4266 = vmatmul.mubr.bf16.gmra.mrb[0].mxu0 %v3960
      %v4267 = vpop.f32.mrb[0].mxu0
      %v4268 = vadd.f32 %v4107, %v4267
      %v4269 = vpop.f32.mrb[0].mxu0
      %v4270 = vpop.f32.mrb[0].mxu0
      %v4271 = vadd.f32 %v4110, %v4270
      %v4272 = vpop.f32.mrb[0].mxu0
      %4273 = vmatprep.mubr.bf16.mxu0 0
      %4274 = vmatmul.mubr.bf16.gmra.mrb[0].mxu0 %v3963
      %v4275 = vpop.f32.mrb[0].mxu0
      %v4276 = vadd.f32 %v4115, %v4275
      %v4277 = vpop.f32.mrb[0].mxu0
      %v4278 = vpop.f32.mrb[0].mxu0
      %v4279 = vadd.f32 %v4118, %v4278
      %v4280 = vpop.f32.mrb[0].mxu0
      %4281 = vmatprep.mubr.bf16.mxu0 0
      %4282 = vmatmul.mubr.bf16.gmra.mrb[0].mxu0 %v3966
      %v4283 = vpop.f32.mrb[0].mxu0
      %v4284 = vadd.f32 %v4123, %v4283
      %v4285 = vpop.f32.mrb[0].mxu0
      %v4286 = vpop.f32.mrb[0].mxu0
      %v4287 = vadd.f32 %v4126, %v4286
      %v4288 = vpop.f32.mrb[0].mxu0
      %4289 = vdwg.mxu0
      %v4290 = vmax.f32 %v4164, 0.0
      %v4291 = vmax.f32 %v4167, 0.0
      %v4292 = vmax.f32 %v4172, 0.0
      %v4293 = vmax.f32 %v4175, 0.0
      %v4294 = vmax.f32 %v4180, 0.0
      %v4295 = vmax.f32 %v4183, 0.0
      %v4296 = vmax.f32 %v4188, 0.0
      %v4297 = vmax.f32 %v4191, 0.0
      %v4298 = vmax.f32 %v4196, 0.0
      %v4299 = vmax.f32 %v4199, 0.0
      %v4300 = vmax.f32 %v4204, 0.0
      %v4301 = vmax.f32 %v4207, 0.0
      %v4302 = vmax.f32 %v4212, 0.0
      %v4303 = vmax.f32 %v4215, 0.0
      %v4304 = vmax.f32 %v4220, 0.0
      %v4305 = vmax.f32 %v4223, 0.0
      %v4306 = vmax.f32 %v4228, 0.0
      %v4307 = vmax.f32 %v4231, 0.0
      %v4308 = vmax.f32 %v4236, 0.0
      %v4309 = vmax.f32 %v4239, 0.0
      %v4310 = vmax.f32 %v4244, 0.0
      %v4311 = vmax.f32 %v4247, 0.0
      %v4312 = vmax.f32 %v4252, 0.0
      %v4313 = vmax.f32 %v4255, 0.0
      %v4314 = vmax.f32 %v4260, 0.0
      %v4315 = vmax.f32 %v4263, 0.0
      %v4316 = vmax.f32 %v4268, 0.0
      %v4317 = vmax.f32 %v4271, 0.0
      %v4318 = vmax.f32 %v4276, 0.0
      %v4319 = vmax.f32 %v4279, 0.0
      %v4320 = vmax.f32 %v4284, 0.0
      %v4321 = vmax.f32 %v4287, 0.0
      %4322 = vst.msk [vmem:[%s799 + $0x1] sm:$0xff] %vm800, %v2366
      %4323 = vst.msk [vmem:[%s799 + $0x9] sm:$0xff] %vm800, %v2367
      %4324 = vst.msk [vmem:[%s799 + $0x19] sm:$0xff] %vm800, %v2368
      %4325 = vst.msk [vmem:[%s799 + $0x21] sm:$0xff] %vm800, %v2369
      %4326 = vst.msk [vmem:[%s799 + $0x31] sm:$0xff] %vm800, %v2370
      %4327 = vst.msk [vmem:[%s799 + $0x39] sm:$0xff] %vm800, %v2371
      %4328 = vst.msk [vmem:[%s799 + $0x49] sm:$0xff] %vm800, %v2372
      %4329 = vst.msk [vmem:[%s799 + $0x51] sm:$0xff] %vm800, %v2373
      %4330 = vst.msk [vmem:[%s799 + $0x61] sm:$0xff] %vm800, %v2374
      %4331 = vst.msk [vmem:[%s799 + $0x69] sm:$0xff] %vm800, %v2375
      %4332 = vst.msk [vmem:[%s799 + $0x79] sm:$0xff] %vm800, %v2376
      %4333 = vst.msk [vmem:[%s799 + $0x81] sm:$0xff] %vm800, %v2377
      %4334 = vst.msk [vmem:[%s799 + $0x91] sm:$0xff] %vm800, %v2378
      %4335 = vst.msk [vmem:[%s799 + $0x99] sm:$0xff] %vm800, %v2379
      %4336 = vst.msk [vmem:[%s799 + $0xa9] sm:$0xff] %vm800, %v2380
      %4337 = vst.msk [vmem:[%s799 + $0xb1] sm:$0xff] %vm800, %v2381
      %4338 = vst.msk [vmem:[%s799 + $0xc1] sm:$0xff] %vm800, %v2382
      %4339 = vst.msk [vmem:[%s799 + $0xc9] sm:$0xff] %vm800, %v2383
      %4340 = vst.msk [vmem:[%s799 + $0xd9] sm:$0xff] %vm800, %v2384
      %4341 = vst.msk [vmem:[%s799 + $0xe1] sm:$0xff] %vm800, %v2385
      %4342 = vst.msk [vmem:[%s799 + $0xf1] sm:$0xff] %vm800, %v2386
      %4343 = vst.msk [vmem:[%s799 + $0xf9] sm:$0xff] %vm800, %v2387
      %4344 = vst.msk [vmem:[%s799 + $0x109] sm:$0xff] %vm800, %v2388
      %4345 = vst.msk [vmem:[%s799 + $0x111] sm:$0xff] %vm800, %v2389
      %4346 = vst.msk [vmem:[%s799 + $0x121] sm:$0xff] %vm800, %v2390
      %4347 = vst.msk [vmem:[%s799 + $0x129] sm:$0xff] %vm800, %v2391
      %4348 = vst.msk [vmem:[%s799 + $0x139] sm:$0xff] %vm800, %v2392
      %4349 = vst.msk [vmem:[%s799 + $0x141] sm:$0xff] %vm800, %v2393
      %4350 = vst.msk [vmem:[%s799 + $0x151] sm:$0xff] %vm800, %v2394
      %4351 = vst.msk [vmem:[%s799 + $0x159] sm:$0xff] %vm800, %v2395
      %4352 = vst.msk [vmem:[%s799 + $0x169] sm:$0xff] %vm800, %v2396
      %4353 = vst.msk [vmem:[%s799 + $0x171] sm:$0xff] %vm800, %v2397
      %4386 = vrot.lane.b32.xlu0 %v4290, 32
      %v4387 = vpop.permute.xlu0 %4386
      %4388 = vrot.lane.b32.xlu0 %v4291, 32
      %v4389 = vpop.permute.xlu0 %4388
      %4390 = vrot.lane.b32.xlu0 %v4292, 32
      %v4391 = vpop.permute.xlu0 %4390
      %4392 = vrot.lane.b32.xlu0 %v4293, 32
      %v4393 = vpop.permute.xlu0 %4392
      %4394 = vrot.lane.b32.xlu0 %v4294, 32
      %v4395 = vpop.permute.xlu0 %4394
      %4396 = vrot.lane.b32.xlu0 %v4295, 32
      %v4397 = vpop.permute.xlu0 %4396
      %4398 = vrot.lane.b32.xlu0 %v4296, 32
      %v4399 = vpop.permute.xlu0 %4398
      %4400 = vrot.lane.b32.xlu0 %v4297, 32
      %v4401 = vpop.permute.xlu0 %4400
      %4402 = vrot.lane.b32.xlu0 %v4298, 32
      %v4403 = vpop.permute.xlu0 %4402
      %4404 = vrot.lane.b32.xlu0 %v4299, 32
      %v4405 = vpop.permute.xlu0 %4404
      %4406 = vrot.lane.b32.xlu0 %v4300, 32
      %v4407 = vpop.permute.xlu0 %4406
      %4408 = vrot.lane.b32.xlu0 %v4301, 32
      %v4409 = vpop.permute.xlu0 %4408
      %4410 = vrot.lane.b32.xlu0 %v4302, 32
      %v4411 = vpop.permute.xlu0 %4410
      %4412 = vrot.lane.b32.xlu0 %v4303, 32
      %v4413 = vpop.permute.xlu0 %4412
      %4414 = vrot.lane.b32.xlu0 %v4304, 32
      %v4415 = vpop.permute.xlu0 %4414
      %4416 = vrot.lane.b32.xlu0 %v4305, 32
      %v4417 = vpop.permute.xlu0 %4416
      %4418 = vrot.lane.b32.xlu0 %v4306, 32
      %v4419 = vpop.permute.xlu0 %4418
      %4420 = vrot.lane.b32.xlu0 %v4307, 32
      %v4421 = vpop.permute.xlu0 %4420
      %4422 = vrot.lane.b32.xlu0 %v4308, 32
      %v4423 = vpop.permute.xlu0 %4422
      %4424 = vrot.lane.b32.xlu0 %v4309, 32
      %v4425 = vpop.permute.xlu0 %4424
      %4426 = vrot.lane.b32.xlu0 %v4310, 32
      %v4427 = vpop.permute.xlu0 %4426
      %4428 = vrot.lane.b32.xlu0 %v4311, 32
      %v4429 = vpop.permute.xlu0 %4428
      %4430 = vrot.lane.b32.xlu0 %v4312, 32
      %v4431 = vpop.permute.xlu0 %4430
      %4432 = vrot.lane.b32.xlu0 %v4313, 32
      %v4433 = vpop.permute.xlu0 %4432
      %4434 = vrot.lane.b32.xlu0 %v4314, 32
      %v4435 = vpop.permute.xlu0 %4434
      %4436 = vrot.lane.b32.xlu0 %v4315, 32
      %v4437 = vpop.permute.xlu0 %4436
      %4438 = vrot.lane.b32.xlu0 %v4316, 32
      %v4439 = vpop.permute.xlu0 %4438
      %4440 = vrot.lane.b32.xlu0 %v4317, 32
      %v4441 = vpop.permute.xlu0 %4440
      %4442 = vrot.lane.b32.xlu0 %v4318, 32
      %v4443 = vpop.permute.xlu0 %4442
      %4444 = vrot.lane.b32.xlu0 %v4319, 32
      %v4445 = vpop.permute.xlu0 %4444
      %4446 = vrot.lane.b32.xlu0 %v4320, 32
      %v4447 = vpop.permute.xlu0 %4446
      %4448 = vrot.lane.b32.xlu0 %v4321, 32
      %v4449 = vpop.permute.xlu0 %4448
      %4482 = vst.msk [vmem:[%s799 + $0x1] sm:$0xff] %vm1009, %v4387
      %4483 = vst.msk [vmem:[%s799 + $0x9] sm:$0xff] %vm1009, %v4389
      %4484 = vst.msk [vmem:[%s799 + $0x19] sm:$0xff] %vm1009, %v4391
      %4485 = vst.msk [vmem:[%s799 + $0x21] sm:$0xff] %vm1009, %v4393
      %4486 = vst.msk [vmem:[%s799 + $0x31] sm:$0xff] %vm1009, %v4395
      %4487 = vst.msk [vmem:[%s799 + $0x39] sm:$0xff] %vm1009, %v4397
      %4488 = vst.msk [vmem:[%s799 + $0x49] sm:$0xff] %vm1009, %v4399
      %4489 = vst.msk [vmem:[%s799 + $0x51] sm:$0xff] %vm1009, %v4401
      %4490 = vst.msk [vmem:[%s799 + $0x61] sm:$0xff] %vm1009, %v4403
      %4491 = vst.msk [vmem:[%s799 + $0x69] sm:$0xff] %vm1009, %v4405
      %4492 = vst.msk [vmem:[%s799 + $0x79] sm:$0xff] %vm1009, %v4407
      %4493 = vst.msk [vmem:[%s799 + $0x81] sm:$0xff] %vm1009, %v4409
      %4494 = vst.msk [vmem:[%s799 + $0x91] sm:$0xff] %vm1009, %v4411
      %4495 = vst.msk [vmem:[%s799 + $0x99] sm:$0xff] %vm1009, %v4413
      %4496 = vst.msk [vmem:[%s799 + $0xa9] sm:$0xff] %vm1009, %v4415
      %4497 = vst.msk [vmem:[%s799 + $0xb1] sm:$0xff] %vm1009, %v4417
      %4498 = vst.msk [vmem:[%s799 + $0xc1] sm:$0xff] %vm1009, %v4419
      %4499 = vst.msk [vmem:[%s799 + $0xc9] sm:$0xff] %vm1009, %v4421
      %4500 = vst.msk [vmem:[%s799 + $0xd9] sm:$0xff] %vm1009, %v4423
      %4501 = vst.msk [vmem:[%s799 + $0xe1] sm:$0xff] %vm1009, %v4425
      %4502 = vst.msk [vmem:[%s799 + $0xf1] sm:$0xff] %vm1009, %v4427
      %4503 = vst.msk [vmem:[%s799 + $0xf9] sm:$0xff] %vm1009, %v4429
      %4504 = vst.msk [vmem:[%s799 + $0x109] sm:$0xff] %vm1009, %v4431
      %4505 = vst.msk [vmem:[%s799 + $0x111] sm:$0xff] %vm1009, %v4433
      %4506 = vst.msk [vmem:[%s799 + $0x121] sm:$0xff] %vm1009, %v4435
      %4507 = vst.msk [vmem:[%s799 + $0x129] sm:$0xff] %vm1009, %v4437
      %4508 = vst.msk [vmem:[%s799 + $0x139] sm:$0xff] %vm1009, %v4439
      %4509 = vst.msk [vmem:[%s799 + $0x141] sm:$0xff] %vm1009, %v4441
      %4510 = vst.msk [vmem:[%s799 + $0x151] sm:$0xff] %vm1009, %v4443
      %4511 = vst.msk [vmem:[%s799 + $0x159] sm:$0xff] %vm1009, %v4445
      %4512 = vst.msk [vmem:[%s799 + $0x169] sm:$0xff] %vm1009, %v4447
      %4513 = vst.msk [vmem:[%s799 + $0x171] sm:$0xff] %vm1009, %v4449
      %v4514 = vld [vmem:[#allocation2] sm:$0xff]
      %v4515 = vld [vmem:[#allocation2 + $0x8] sm:$0xff]
      %v4516 = vld [vmem:[#allocation2 + $0x18] sm:$0xff]
      %v4517 = vld [vmem:[#allocation2 + $0x20] sm:$0xff]
      %v4518 = vld [vmem:[#allocation2 + $0x30] sm:$0xff]
      %v4519 = vld [vmem:[#allocation2 + $0x38] sm:$0xff]
      %v4520 = vld [vmem:[#allocation2 + $0x48] sm:$0xff]
      %v4521 = vld [vmem:[#allocation2 + $0x50] sm:$0xff]
      %v4522 = vld [vmem:[#allocation2 + $0x60] sm:$0xff]
      %v4523 = vld [vmem:[#allocation2 + $0x68] sm:$0xff]
      %v4524 = vld [vmem:[#allocation2 + $0x78] sm:$0xff]
      %v4525 = vld [vmem:[#allocation2 + $0x80] sm:$0xff]
      %v4526 = vld [vmem:[#allocation2 + $0x90] sm:$0xff]
      %v4527 = vld [vmem:[#allocation2 + $0x98] sm:$0xff]
      %v4528 = vld [vmem:[#allocation2 + $0xa8] sm:$0xff]
      %v4529 = vld [vmem:[#allocation2 + $0xb0] sm:$0xff]
      %v4530 = vld [vmem:[#allocation2 + $0xc0] sm:$0xff]
      %v4531 = vld [vmem:[#allocation2 + $0xc8] sm:$0xff]
      %v4532 = vld [vmem:[#allocation2 + $0xd8] sm:$0xff]
      %v4533 = vld [vmem:[#allocation2 + $0xe0] sm:$0xff]
      %v4534 = vld [vmem:[#allocation2 + $0xf0] sm:$0xff]
      %v4535 = vld [vmem:[#allocation2 + $0xf8] sm:$0xff]
      %v4536 = vld [vmem:[#allocation2 + $0x108] sm:$0xff]
      %v4537 = vld [vmem:[#allocation2 + $0x110] sm:$0xff]
      %v4538 = vld [vmem:[#allocation2 + $0x120] sm:$0xff]
      %v4539 = vld [vmem:[#allocation2 + $0x128] sm:$0xff]
      %v4540 = vld [vmem:[#allocation2 + $0x138] sm:$0xff]
      %v4541 = vld [vmem:[#allocation2 + $0x140] sm:$0xff]
      %v4542 = vld [vmem:[#allocation2 + $0x150] sm:$0xff]
      %v4543 = vld [vmem:[#allocation2 + $0x158] sm:$0xff]
      %v4544 = vld [vmem:[#allocation2 + $0x168] sm:$0xff]
      %v4545 = vld [vmem:[#allocation2 + $0x170] sm:$0xff]
      %v4546 = vpack.c.bf16 %v4515, %v4514
      %v4547 = vpack.c.bf16 %v4517, %v4516
      %v4548 = vpack.c.bf16 %v4519, %v4518
      %v4549 = vpack.c.bf16 %v4521, %v4520
      %v4550 = vpack.c.bf16 %v4523, %v4522
      %v4551 = vpack.c.bf16 %v4525, %v4524
      %v4552 = vpack.c.bf16 %v4527, %v4526
      %v4553 = vpack.c.bf16 %v4529, %v4528
      %v4554 = vpack.c.bf16 %v4531, %v4530
      %v4555 = vpack.c.bf16 %v4533, %v4532
      %v4556 = vpack.c.bf16 %v4535, %v4534
      %v4557 = vpack.c.bf16 %v4537, %v4536
      %v4558 = vpack.c.bf16 %v4539, %v4538
      %v4559 = vpack.c.bf16 %v4541, %v4540
      %v4560 = vpack.c.bf16 %v4543, %v4542
      %v4561 = vpack.c.bf16 %v4545, %v4544
      %4562 = vst.msk [vmem:[#allocation4] sm:$0xff] %vm435, %v4546
      %4563 = vst.msk [vmem:[#allocation4 + $0x28] sm:$0xff] %vm435, %v4547
      %4564 = vst.msk [vmem:[#allocation4 + $0x50] sm:$0xff] %vm435, %v4548
      %4565 = vst.msk [vmem:[#allocation4 + $0x78] sm:$0xff] %vm435, %v4549
      %4566 = vst.msk [vmem:[#allocation4 + $0xa0] sm:$0xff] %vm435, %v4550
      %4567 = vst.msk [vmem:[#allocation4 + $0xc8] sm:$0xff] %vm435, %v4551
      %4568 = vst.msk [vmem:[#allocation4 + $0xf0] sm:$0xff] %vm435, %v4552
      %4569 = vst.msk [vmem:[#allocation4 + $0x118] sm:$0xff] %vm435, %v4553
      %4570 = vst.msk [vmem:[#allocation4 + $0x140] sm:$0xff] %vm435, %v4554
      %4571 = vst.msk [vmem:[#allocation4 + $0x168] sm:$0xff] %vm435, %v4555
      %4572 = vst.msk [vmem:[#allocation4 + $0x190] sm:$0xff] %vm435, %v4556
      %4573 = vst.msk [vmem:[#allocation4 + $0x1b8] sm:$0xff] %vm435, %v4557
      %4574 = vst.msk [vmem:[#allocation4 + $0x1e0] sm:$0xff] %vm435, %v4558
      %4575 = vst.msk [vmem:[#allocation4 + $0x208] sm:$0xff] %vm435, %v4559
      %4576 = vst.msk [vmem:[#allocation4 + $0x230] sm:$0xff] %vm435, %v4560
      %4577 = vst.msk [vmem:[#allocation4 + $0x258] sm:$0xff] %vm435, %v4561
      %v4578 = vld [vmem:[#allocation2 + $0x1] sm:$0xff]
      %v4579 = vld [vmem:[#allocation2 + $0x9] sm:$0xff]
      %v4580 = vld [vmem:[#allocation2 + $0x19] sm:$0xff]
      %v4581 = vld [vmem:[#allocation2 + $0x21] sm:$0xff]
      %v4582 = vld [vmem:[#allocation2 + $0x31] sm:$0xff]
      %v4583 = vld [vmem:[#allocation2 + $0x39] sm:$0xff]
      %v4584 = vld [vmem:[#allocation2 + $0x49] sm:$0xff]
      %v4585 = vld [vmem:[#allocation2 + $0x51] sm:$0xff]
      %v4586 = vld [vmem:[#allocation2 + $0x61] sm:$0xff]
      %v4587 = vld [vmem:[#allocation2 + $0x69] sm:$0xff]
      %v4588 = vld [vmem:[#allocation2 + $0x79] sm:$0xff]
      %v4589 = vld [vmem:[#allocation2 + $0x81] sm:$0xff]
      %v4590 = vld [vmem:[#allocation2 + $0x91] sm:$0xff]
      %v4591 = vld [vmem:[#allocation2 + $0x99] sm:$0xff]
      %v4592 = vld [vmem:[#allocation2 + $0xa9] sm:$0xff]
      %v4593 = vld [vmem:[#allocation2 + $0xb1] sm:$0xff]
      %v4594 = vld [vmem:[#allocation2 + $0xc1] sm:$0xff]
      %v4595 = vld [vmem:[#allocation2 + $0xc9] sm:$0xff]
      %v4596 = vld [vmem:[#allocation2 + $0xd9] sm:$0xff]
      %v4597 = vld [vmem:[#allocation2 + $0xe1] sm:$0xff]
      %v4598 = vld [vmem:[#allocation2 + $0xf1] sm:$0xff]
      %v4599 = vld [vmem:[#allocation2 + $0xf9] sm:$0xff]
      %v4600 = vld [vmem:[#allocation2 + $0x109] sm:$0xff]
      %v4601 = vld [vmem:[#allocation2 + $0x111] sm:$0xff]
      %v4602 = vld [vmem:[#allocation2 + $0x121] sm:$0xff]
      %v4603 = vld [vmem:[#allocation2 + $0x129] sm:$0xff]
      %v4604 = vld [vmem:[#allocation2 + $0x139] sm:$0xff]
      %v4605 = vld [vmem:[#allocation2 + $0x141] sm:$0xff]
      %v4606 = vld [vmem:[#allocation2 + $0x151] sm:$0xff]
      %v4607 = vld [vmem:[#allocation2 + $0x159] sm:$0xff]
      %v4608 = vld [vmem:[#allocation2 + $0x169] sm:$0xff]
      %v4609 = vld [vmem:[#allocation2 + $0x171] sm:$0xff]
      %v4610 = vpack.c.bf16 %v4579, %v4578
      %v4611 = vpack.c.bf16 %v4581, %v4580
      %v4612 = vpack.c.bf16 %v4583, %v4582
      %v4613 = vpack.c.bf16 %v4585, %v4584
      %v4614 = vpack.c.bf16 %v4587, %v4586
      %v4615 = vpack.c.bf16 %v4589, %v4588
      %v4616 = vpack.c.bf16 %v4591, %v4590
      %v4617 = vpack.c.bf16 %v4593, %v4592
      %v4618 = vpack.c.bf16 %v4595, %v4594
      %v4619 = vpack.c.bf16 %v4597, %v4596
      %v4620 = vpack.c.bf16 %v4599, %v4598
      %v4621 = vpack.c.bf16 %v4601, %v4600
      %v4622 = vpack.c.bf16 %v4603, %v4602
      %v4623 = vpack.c.bf16 %v4605, %v4604
      %v4624 = vpack.c.bf16 %v4607, %v4606
      %v4625 = vpack.c.bf16 %v4609, %v4608
      %4642 = vrot.lane.b32.xlu0 %v4610, 64
      %v4643 = vpop.permute.xlu0 %4642
      %4644 = vrot.lane.b32.xlu0 %v4611, 64
      %v4645 = vpop.permute.xlu0 %4644
      %4646 = vrot.lane.b32.xlu0 %v4612, 64
      %v4647 = vpop.permute.xlu0 %4646
      %4648 = vrot.lane.b32.xlu0 %v4613, 64
      %v4649 = vpop.permute.xlu0 %4648
      %4650 = vrot.lane.b32.xlu0 %v4614, 64
      %v4651 = vpop.permute.xlu0 %4650
      %4652 = vrot.lane.b32.xlu0 %v4615, 64
      %v4653 = vpop.permute.xlu0 %4652
      %4654 = vrot.lane.b32.xlu0 %v4616, 64
      %v4655 = vpop.permute.xlu0 %4654
      %4656 = vrot.lane.b32.xlu0 %v4617, 64
      %v4657 = vpop.permute.xlu0 %4656
      %4658 = vrot.lane.b32.xlu0 %v4618, 64
      %v4659 = vpop.permute.xlu0 %4658
      %4660 = vrot.lane.b32.xlu0 %v4619, 64
      %v4661 = vpop.permute.xlu0 %4660
      %4662 = vrot.lane.b32.xlu0 %v4620, 64
      %v4663 = vpop.permute.xlu0 %4662
      %4664 = vrot.lane.b32.xlu0 %v4621, 64
      %v4665 = vpop.permute.xlu0 %4664
      %4666 = vrot.lane.b32.xlu0 %v4622, 64
      %v4667 = vpop.permute.xlu0 %4666
      %4668 = vrot.lane.b32.xlu0 %v4623, 64
      %v4669 = vpop.permute.xlu0 %4668
      %4670 = vrot.lane.b32.xlu0 %v4624, 64
      %v4671 = vpop.permute.xlu0 %4670
      %4672 = vrot.lane.b32.xlu0 %v4625, 64
      %v4673 = vpop.permute.xlu0 %4672
      %vm4690 = vcmask 1048064
      %4691 = vst.msk [vmem:[#allocation4] sm:$0xff] %vm4690, %v4643
      %4692 = vst.msk [vmem:[#allocation4 + $0x28] sm:$0xff] %vm4690, %v4645
      %4693 = vst.msk [vmem:[#allocation4 + $0x50] sm:$0xff] %vm4690, %v4647
      %4694 = vst.msk [vmem:[#allocation4 + $0x78] sm:$0xff] %vm4690, %v4649
      %4695 = vst.msk [vmem:[#allocation4 + $0xa0] sm:$0xff] %vm4690, %v4651
      %4696 = vst.msk [vmem:[#allocation4 + $0xc8] sm:$0xff] %vm4690, %v4653
      %4697 = vst.msk [vmem:[#allocation4 + $0xf0] sm:$0xff] %vm4690, %v4655
      %4698 = vst.msk [vmem:[#allocation4 + $0x118] sm:$0xff] %vm4690, %v4657
      %4699 = vst.msk [vmem:[#allocation4 + $0x140] sm:$0xff] %vm4690, %v4659
      %4700 = vst.msk [vmem:[#allocation4 + $0x168] sm:$0xff] %vm4690, %v4661
      %4701 = vst.msk [vmem:[#allocation4 + $0x190] sm:$0xff] %vm4690, %v4663
      %4702 = vst.msk [vmem:[#allocation4 + $0x1b8] sm:$0xff] %vm4690, %v4665
      %4703 = vst.msk [vmem:[#allocation4 + $0x1e0] sm:$0xff] %vm4690, %v4667
      %4704 = vst.msk [vmem:[#allocation4 + $0x208] sm:$0xff] %vm4690, %v4669
      %4705 = vst.msk [vmem:[#allocation4 + $0x230] sm:$0xff] %vm4690, %v4671
      %4706 = vst.msk [vmem:[#allocation4 + $0x258] sm:$0xff] %vm4690, %v4673
      %v4707 = vld [vmem:[#allocation2 + $0x2] sm:$0xff]
      %v4708 = vld [vmem:[#allocation2 + $0xa] sm:$0xff]
      %v4709 = vld [vmem:[#allocation2 + $0x1a] sm:$0xff]
      %v4710 = vld [vmem:[#allocation2 + $0x22] sm:$0xff]
      %v4711 = vld [vmem:[#allocation2 + $0x32] sm:$0xff]
      %v4712 = vld [vmem:[#allocation2 + $0x3a] sm:$0xff]
      %v4713 = vld [vmem:[#allocation2 + $0x4a] sm:$0xff]
      %v4714 = vld [vmem:[#allocation2 + $0x52] sm:$0xff]
      %v4715 = vld [vmem:[#allocation2 + $0x62] sm:$0xff]
      %v4716 = vld [vmem:[#allocation2 + $0x6a] sm:$0xff]
      %v4717 = vld [vmem:[#allocation2 + $0x7a] sm:$0xff]
      %v4718 = vld [vmem:[#allocation2 + $0x82] sm:$0xff]
      %v4719 = vld [vmem:[#allocation2 + $0x92] sm:$0xff]
      %v4720 = vld [vmem:[#allocation2 + $0x9a] sm:$0xff]
      %v4721 = vld [vmem:[#allocation2 + $0xaa] sm:$0xff]
      %v4722 = vld [vmem:[#allocation2 + $0xb2] sm:$0xff]
      %v4723 = vld [vmem:[#allocation2 + $0xc2] sm:$0xff]
      %v4724 = vld [vmem:[#allocation2 + $0xca] sm:$0xff]
      %v4725 = vld [vmem:[#allocation2 + $0xda] sm:$0xff]
      %v4726 = vld [vmem:[#allocation2 + $0xe2] sm:$0xff]
      %v4727 = vld [vmem:[#allocation2 + $0xf2] sm:$0xff]
      %v4728 = vld [vmem:[#allocation2 + $0xfa] sm:$0xff]
      %v4729 = vld [vmem:[#allocation2 + $0x10a] sm:$0xff]
      %v4730 = vld [vmem:[#allocation2 + $0x112] sm:$0xff]
      %v4731 = vld [vmem:[#allocation2 + $0x122] sm:$0xff]
      %v4732 = vld [vmem:[#allocation2 + $0x12a] sm:$0xff]
      %v4733 = vld [vmem:[#allocation2 + $0x13a] sm:$0xff]
      %v4734 = vld [vmem:[#allocation2 + $0x142] sm:$0xff]
      %v4735 = vld [vmem:[#allocation2 + $0x152] sm:$0xff]
      %v4736 = vld [vmem:[#allocation2 + $0x15a] sm:$0xff]
      %v4737 = vld [vmem:[#allocation2 + $0x16a] sm:$0xff]
      %v4738 = vld [vmem:[#allocation2 + $0x172] sm:$0xff]
      %v4739 = vpack.c.bf16 %v4708, %v4707
      %v4740 = vpack.c.bf16 %v4710, %v4709
      %v4741 = vpack.c.bf16 %v4712, %v4711
      %v4742 = vpack.c.bf16 %v4714, %v4713
      %v4743 = vpack.c.bf16 %v4716, %v4715
      %v4744 = vpack.c.bf16 %v4718, %v4717
      %v4745 = vpack.c.bf16 %v4720, %v4719
      %v4746 = vpack.c.bf16 %v4722, %v4721
      %v4747 = vpack.c.bf16 %v4724, %v4723
      %v4748 = vpack.c.bf16 %v4726, %v4725
      %v4749 = vpack.c.bf16 %v4728, %v4727
      %v4750 = vpack.c.bf16 %v4730, %v4729
      %v4751 = vpack.c.bf16 %v4732, %v4731
      %v4752 = vpack.c.bf16 %v4734, %v4733
      %v4753 = vpack.c.bf16 %v4736, %v4735
      %v4754 = vpack.c.bf16 %v4738, %v4737
      %4755 = vst.msk [vmem:[#allocation4 + $0x8] sm:$0xff] %vm435, %v4739
      %4756 = vst.msk [vmem:[#allocation4 + $0x30] sm:$0xff] %vm435, %v4740
      %4757 = vst.msk [vmem:[#allocation4 + $0x58] sm:$0xff] %vm435, %v4741
      %4758 = vst.msk [vmem:[#allocation4 + $0x80] sm:$0xff] %vm435, %v4742
      %4759 = vst.msk [vmem:[#allocation4 + $0xa8] sm:$0xff] %vm435, %v4743
      %4760 = vst.msk [vmem:[#allocation4 + $0xd0] sm:$0xff] %vm435, %v4744
      %4761 = vst.msk [vmem:[#allocation4 + $0xf8] sm:$0xff] %vm435, %v4745
      %4762 = vst.msk [vmem:[#allocation4 + $0x120] sm:$0xff] %vm435, %v4746
      %4763 = vst.msk [vmem:[#allocation4 + $0x148] sm:$0xff] %vm435, %v4747
      %4764 = vst.msk [vmem:[#allocation4 + $0x170] sm:$0xff] %vm435, %v4748
      %4765 = vst.msk [vmem:[#allocation4 + $0x198] sm:$0xff] %vm435, %v4749
      %4766 = vst.msk [vmem:[#allocation4 + $0x1c0] sm:$0xff] %vm435, %v4750
      %4767 = vst.msk [vmem:[#allocation4 + $0x1e8] sm:$0xff] %vm435, %v4751
      %4768 = vst.msk [vmem:[#allocation4 + $0x210] sm:$0xff] %vm435, %v4752
      %4769 = vst.msk [vmem:[#allocation4 + $0x238] sm:$0xff] %vm435, %v4753
      %4770 = vst.msk [vmem:[#allocation4 + $0x260] sm:$0xff] %vm435, %v4754
      %v4771 = vld [vmem:[%s799] sm:$0xff]
      %v4772 = vld [vmem:[%s799 + $0x8] sm:$0xff]
      %v4773 = vld [vmem:[%s799 + $0x18] sm:$0xff]
      %v4774 = vld [vmem:[%s799 + $0x20] sm:$0xff]
      %v4775 = vld [vmem:[%s799 + $0x30] sm:$0xff]
      %v4776 = vld [vmem:[%s799 + $0x38] sm:$0xff]
      %v4777 = vld [vmem:[%s799 + $0x48] sm:$0xff]
      %v4778 = vld [vmem:[%s799 + $0x50] sm:$0xff]
      %v4779 = vld [vmem:[%s799 + $0x60] sm:$0xff]
      %v4780 = vld [vmem:[%s799 + $0x68] sm:$0xff]
      %v4781 = vld [vmem:[%s799 + $0x78] sm:$0xff]
      %v4782 = vld [vmem:[%s799 + $0x80] sm:$0xff]
      %v4783 = vld [vmem:[%s799 + $0x90] sm:$0xff]
      %v4784 = vld [vmem:[%s799 + $0x98] sm:$0xff]
      %v4785 = vld [vmem:[%s799 + $0xa8] sm:$0xff]
      %v4786 = vld [vmem:[%s799 + $0xb0] sm:$0xff]
      %v4787 = vld [vmem:[%s799 + $0xc0] sm:$0xff]
      %v4788 = vld [vmem:[%s799 + $0xc8] sm:$0xff]
      %v4789 = vld [vmem:[%s799 + $0xd8] sm:$0xff]
      %v4790 = vld [vmem:[%s799 + $0xe0] sm:$0xff]
      %v4791 = vld [vmem:[%s799 + $0xf0] sm:$0xff]
      %v4792 = vld [vmem:[%s799 + $0xf8] sm:$0xff]
      %v4793 = vld [vmem:[%s799 + $0x108] sm:$0xff]
      %v4794 = vld [vmem:[%s799 + $0x110] sm:$0xff]
      %v4795 = vld [vmem:[%s799 + $0x120] sm:$0xff]
      %v4796 = vld [vmem:[%s799 + $0x128] sm:$0xff]
      %v4797 = vld [vmem:[%s799 + $0x138] sm:$0xff]
      %v4798 = vld [vmem:[%s799 + $0x140] sm:$0xff]
      %v4799 = vld [vmem:[%s799 + $0x150] sm:$0xff]
      %v4800 = vld [vmem:[%s799 + $0x158] sm:$0xff]
      %v4801 = vld [vmem:[%s799 + $0x168] sm:$0xff]
      %v4802 = vld [vmem:[%s799 + $0x170] sm:$0xff]
      %v4803 = vpack.c.bf16 %v4772, %v4771
      %v4804 = vpack.c.bf16 %v4774, %v4773
      %v4805 = vpack.c.bf16 %v4776, %v4775
      %v4806 = vpack.c.bf16 %v4778, %v4777
      %v4807 = vpack.c.bf16 %v4780, %v4779
      %v4808 = vpack.c.bf16 %v4782, %v4781
      %v4809 = vpack.c.bf16 %v4784, %v4783
      %v4810 = vpack.c.bf16 %v4786, %v4785
      %v4811 = vpack.c.bf16 %v4788, %v4787
      %v4812 = vpack.c.bf16 %v4790, %v4789
      %v4813 = vpack.c.bf16 %v4792, %v4791
      %v4814 = vpack.c.bf16 %v4794, %v4793
      %v4815 = vpack.c.bf16 %v4796, %v4795
      %v4816 = vpack.c.bf16 %v4798, %v4797
      %v4817 = vpack.c.bf16 %v4800, %v4799
      %v4818 = vpack.c.bf16 %v4802, %v4801
      %4835 = vrot.lane.b32.xlu0 %v4803, 64
      %v4836 = vpop.permute.xlu0 %4835
      %4837 = vrot.lane.b32.xlu0 %v4804, 64
      %v4838 = vpop.permute.xlu0 %4837
      %4839 = vrot.lane.b32.xlu0 %v4805, 64
      %v4840 = vpop.permute.xlu0 %4839
      %4841 = vrot.lane.b32.xlu0 %v4806, 64
      %v4842 = vpop.permute.xlu0 %4841
      %4843 = vrot.lane.b32.xlu0 %v4807, 64
      %v4844 = vpop.permute.xlu0 %4843
      %4845 = vrot.lane.b32.xlu0 %v4808, 64
      %v4846 = vpop.permute.xlu0 %4845
      %4847 = vrot.lane.b32.xlu0 %v4809, 64
      %v4848 = vpop.permute.xlu0 %4847
      %4849 = vrot.lane.b32.xlu0 %v4810, 64
      %v4850 = vpop.permute.xlu0 %4849
      %4851 = vrot.lane.b32.xlu0 %v4811, 64
      %v4852 = vpop.permute.xlu0 %4851
      %4853 = vrot.lane.b32.xlu0 %v4812, 64
      %v4854 = vpop.permute.xlu0 %4853
      %4855 = vrot.lane.b32.xlu0 %v4813, 64
      %v4856 = vpop.permute.xlu0 %4855
      %4857 = vrot.lane.b32.xlu0 %v4814, 64
      %v4858 = vpop.permute.xlu0 %4857
      %4859 = vrot.lane.b32.xlu0 %v4815, 64
      %v4860 = vpop.permute.xlu0 %4859
      %4861 = vrot.lane.b32.xlu0 %v4816, 64
      %v4862 = vpop.permute.xlu0 %4861
      %4863 = vrot.lane.b32.xlu0 %v4817, 64
      %v4864 = vpop.permute.xlu0 %4863
      %4865 = vrot.lane.b32.xlu0 %v4818, 64
      %v4866 = vpop.permute.xlu0 %4865
      %4883 = vst.msk [vmem:[#allocation4 + $0x8] sm:$0xff] %vm4690, %v4836
      %4884 = vst.msk [vmem:[#allocation4 + $0x30] sm:$0xff] %vm4690, %v4838
      %4885 = vst.msk [vmem:[#allocation4 + $0x58] sm:$0xff] %vm4690, %v4840
      %4886 = vst.msk [vmem:[#allocation4 + $0x80] sm:$0xff] %vm4690, %v4842
      %4887 = vst.msk [vmem:[#allocation4 + $0xa8] sm:$0xff] %vm4690, %v4844
      %4888 = vst.msk [vmem:[#allocation4 + $0xd0] sm:$0xff] %vm4690, %v4846
      %4889 = vst.msk [vmem:[#allocation4 + $0xf8] sm:$0xff] %vm4690, %v4848
      %4890 = vst.msk [vmem:[#allocation4 + $0x120] sm:$0xff] %vm4690, %v4850
      %4891 = vst.msk [vmem:[#allocation4 + $0x148] sm:$0xff] %vm4690, %v4852
      %4892 = vst.msk [vmem:[#allocation4 + $0x170] sm:$0xff] %vm4690, %v4854
      %4893 = vst.msk [vmem:[#allocation4 + $0x198] sm:$0xff] %vm4690, %v4856
      %4894 = vst.msk [vmem:[#allocation4 + $0x1c0] sm:$0xff] %vm4690, %v4858
      %4895 = vst.msk [vmem:[#allocation4 + $0x1e8] sm:$0xff] %vm4690, %v4860
      %4896 = vst.msk [vmem:[#allocation4 + $0x210] sm:$0xff] %vm4690, %v4862
      %4897 = vst.msk [vmem:[#allocation4 + $0x238] sm:$0xff] %vm4690, %v4864
      %4898 = vst.msk [vmem:[#allocation4 + $0x260] sm:$0xff] %vm4690, %v4866
      %v4899 = vld [vmem:[%s799 + $0x1] sm:$0xff]
      %v4900 = vld [vmem:[%s799 + $0x9] sm:$0xff]
      %v4901 = vld [vmem:[%s799 + $0x19] sm:$0xff]
      %v4902 = vld [vmem:[%s799 + $0x21] sm:$0xff]
      %v4903 = vld [vmem:[%s799 + $0x31] sm:$0xff]
      %v4904 = vld [vmem:[%s799 + $0x39] sm:$0xff]
      %v4905 = vld [vmem:[%s799 + $0x49] sm:$0xff]
      %v4906 = vld [vmem:[%s799 + $0x51] sm:$0xff]
      %v4907 = vld [vmem:[%s799 + $0x61] sm:$0xff]
      %v4908 = vld [vmem:[%s799 + $0x69] sm:$0xff]
      %v4909 = vld [vmem:[%s799 + $0x79] sm:$0xff]
      %v4910 = vld [vmem:[%s799 + $0x81] sm:$0xff]
      %v4911 = vld [vmem:[%s799 + $0x91] sm:$0xff]
      %v4912 = vld [vmem:[%s799 + $0x99] sm:$0xff]
      %v4913 = vld [vmem:[%s799 + $0xa9] sm:$0xff]
      %v4914 = vld [vmem:[%s799 + $0xb1] sm:$0xff]
      %v4915 = vld [vmem:[%s799 + $0xc1] sm:$0xff]
      %v4916 = vld [vmem:[%s799 + $0xc9] sm:$0xff]
      %v4917 = vld [vmem:[%s799 + $0xd9] sm:$0xff]
      %v4918 = vld [vmem:[%s799 + $0xe1] sm:$0xff]
      %v4919 = vld [vmem:[%s799 + $0xf1] sm:$0xff]
      %v4920 = vld [vmem:[%s799 + $0xf9] sm:$0xff]
      %v4921 = vld [vmem:[%s799 + $0x109] sm:$0xff]
      %v4922 = vld [vmem:[%s799 + $0x111] sm:$0xff]
      %v4923 = vld [vmem:[%s799 + $0x121] sm:$0xff]
      %v4924 = vld [vmem:[%s799 + $0x129] sm:$0xff]
      %v4925 = vld [vmem:[%s799 + $0x139] sm:$0xff]
      %v4926 = vld [vmem:[%s799 + $0x141] sm:$0xff]
      %v4927 = vld [vmem:[%s799 + $0x151] sm:$0xff]
      %v4928 = vld [vmem:[%s799 + $0x159] sm:$0xff]
      %v4929 = vld [vmem:[%s799 + $0x169] sm:$0xff]
      %v4930 = vld [vmem:[%s799 + $0x171] sm:$0xff]
      %v4931 = vpack.c.bf16 %v4900, %v4899
      %v4932 = vpack.c.bf16 %v4902, %v4901
      %v4933 = vpack.c.bf16 %v4904, %v4903
      %v4934 = vpack.c.bf16 %v4906, %v4905
      %v4935 = vpack.c.bf16 %v4908, %v4907
      %v4936 = vpack.c.bf16 %v4910, %v4909
      %v4937 = vpack.c.bf16 %v4912, %v4911
      %v4938 = vpack.c.bf16 %v4914, %v4913
      %v4939 = vpack.c.bf16 %v4916, %v4915
      %v4940 = vpack.c.bf16 %v4918, %v4917
      %v4941 = vpack.c.bf16 %v4920, %v4919
      %v4942 = vpack.c.bf16 %v4922, %v4921
      %v4943 = vpack.c.bf16 %v4924, %v4923
      %v4944 = vpack.c.bf16 %v4926, %v4925
      %v4945 = vpack.c.bf16 %v4928, %v4927
      %v4946 = vpack.c.bf16 %v4930, %v4929
      %4947 = vst.msk [vmem:[#allocation4 + $0x10] sm:$0xff] %vm435, %v4931
      %4948 = vst.msk [vmem:[#allocation4 + $0x38] sm:$0xff] %vm435, %v4932
      %4949 = vst.msk [vmem:[#allocation4 + $0x60] sm:$0xff] %vm435, %v4933
      %4950 = vst.msk [vmem:[#allocation4 + $0x88] sm:$0xff] %vm435, %v4934
      %4951 = vst.msk [vmem:[#allocation4 + $0xb0] sm:$0xff] %vm435, %v4935
      %4952 = vst.msk [vmem:[#allocation4 + $0xd8] sm:$0xff] %vm435, %v4936
      %4953 = vst.msk [vmem:[#allocation4 + $0x100] sm:$0xff] %vm435, %v4937
      %4954 = vst.msk [vmem:[#allocation4 + $0x128] sm:$0xff] %vm435, %v4938
      %4955 = vst.msk [vmem:[#allocation4 + $0x150] sm:$0xff] %vm435, %v4939
      %4956 = vst.msk [vmem:[#allocation4 + $0x178] sm:$0xff] %vm435, %v4940
      %4957 = vst.msk [vmem:[#allocation4 + $0x1a0] sm:$0xff] %vm435, %v4941
      %4958 = vst.msk [vmem:[#allocation4 + $0x1c8] sm:$0xff] %vm435, %v4942
      %4959 = vst.msk [vmem:[#allocation4 + $0x1f0] sm:$0xff] %vm435, %v4943
      %4960 = vst.msk [vmem:[#allocation4 + $0x218] sm:$0xff] %vm435, %v4944
      %4961 = vst.msk [vmem:[#allocation4 + $0x240] sm:$0xff] %vm435, %v4945
      %4962 = vst.msk [vmem:[#allocation4 + $0x268] sm:$0xff] %vm435, %v4946
      %v4963 = vld [vmem:[%s799 + $0x2] sm:$0xff]
      %v4964 = vld [vmem:[%s799 + $0xa] sm:$0xff]
      %v4965 = vld [vmem:[%s799 + $0x1a] sm:$0xff]
      %v4966 = vld [vmem:[%s799 + $0x22] sm:$0xff]
      %v4967 = vld [vmem:[%s799 + $0x32] sm:$0xff]
      %v4968 = vld [vmem:[%s799 + $0x3a] sm:$0xff]
      %v4969 = vld [vmem:[%s799 + $0x4a] sm:$0xff]
      %v4970 = vld [vmem:[%s799 + $0x52] sm:$0xff]
      %v4971 = vld [vmem:[%s799 + $0x62] sm:$0xff]
      %v4972 = vld [vmem:[%s799 + $0x6a] sm:$0xff]
      %v4973 = vld [vmem:[%s799 + $0x7a] sm:$0xff]
      %v4974 = vld [vmem:[%s799 + $0x82] sm:$0xff]
      %v4975 = vld [vmem:[%s799 + $0x92] sm:$0xff]
      %v4976 = vld [vmem:[%s799 + $0x9a] sm:$0xff]
      %v4977 = vld [vmem:[%s799 + $0xaa] sm:$0xff]
      %v4978 = vld [vmem:[%s799 + $0xb2] sm:$0xff]
      %v4979 = vld [vmem:[%s799 + $0xc2] sm:$0xff]
      %v4980 = vld [vmem:[%s799 + $0xca] sm:$0xff]
      %v4981 = vld [vmem:[%s799 + $0xda] sm:$0xff]
      %v4982 = vld [vmem:[%s799 + $0xe2] sm:$0xff]
      %v4983 = vld [vmem:[%s799 + $0xf2] sm:$0xff]
      %v4984 = vld [vmem:[%s799 + $0xfa] sm:$0xff]
      %v4985 = vld [vmem:[%s799 + $0x10a] sm:$0xff]
      %v4986 = vld [vmem:[%s799 + $0x112] sm:$0xff]
      %v4987 = vld [vmem:[%s799 + $0x122] sm:$0xff]
      %v4988 = vld [vmem:[%s799 + $0x12a] sm:$0xff]
      %v4989 = vld [vmem:[%s799 + $0x13a] sm:$0xff]
      %v4990 = vld [vmem:[%s799 + $0x142] sm:$0xff]
      %v4991 = vld [vmem:[%s799 + $0x152] sm:$0xff]
      %v4992 = vld [vmem:[%s799 + $0x15a] sm:$0xff]
      %v4993 = vld [vmem:[%s799 + $0x16a] sm:$0xff]
      %v4994 = vld [vmem:[%s799 + $0x172] sm:$0xff]
      %v4995 = vpack.c.bf16 %v4964, %v4963
      %v4996 = vpack.c.bf16 %v4966, %v4965
      %v4997 = vpack.c.bf16 %v4968, %v4967
      %v4998 = vpack.c.bf16 %v4970, %v4969
      %v4999 = vpack.c.bf16 %v4972, %v4971
      %v5000 = vpack.c.bf16 %v4974, %v4973
      %v5001 = vpack.c.bf16 %v4976, %v4975
      %v5002 = vpack.c.bf16 %v4978, %v4977
      %v5003 = vpack.c.bf16 %v4980, %v4979
      %v5004 = vpack.c.bf16 %v4982, %v4981
      %v5005 = vpack.c.bf16 %v4984, %v4983
      %v5006 = vpack.c.bf16 %v4986, %v4985
      %v5007 = vpack.c.bf16 %v4988, %v4987
      %v5008 = vpack.c.bf16 %v4990, %v4989
      %v5009 = vpack.c.bf16 %v4992, %v4991
      %v5010 = vpack.c.bf16 %v4994, %v4993
      %5027 = vrot.lane.b32.xlu0 %v4995, 64
      %v5028 = vpop.permute.xlu0 %5027
      %5029 = vrot.lane.b32.xlu0 %v4996, 64
      %v5030 = vpop.permute.xlu0 %5029
      %5031 = vrot.lane.b32.xlu0 %v4997, 64
      %v5032 = vpop.permute.xlu0 %5031
      %5033 = vrot.lane.b32.xlu0 %v4998, 64
      %v5034 = vpop.permute.xlu0 %5033
      %5035 = vrot.lane.b32.xlu0 %v4999, 64
      %v5036 = vpop.permute.xlu0 %5035
      %5037 = vrot.lane.b32.xlu0 %v5000, 64
      %v5038 = vpop.permute.xlu0 %5037
      %5039 = vrot.lane.b32.xlu0 %v5001, 64
      %v5040 = vpop.permute.xlu0 %5039
      %5041 = vrot.lane.b32.xlu0 %v5002, 64
      %v5042 = vpop.permute.xlu0 %5041
      %5043 = vrot.lane.b32.xlu0 %v5003, 64
      %v5044 = vpop.permute.xlu0 %5043
      %5045 = vrot.lane.b32.xlu0 %v5004, 64
      %v5046 = vpop.permute.xlu0 %5045
      %5047 = vrot.lane.b32.xlu0 %v5005, 64
      %v5048 = vpop.permute.xlu0 %5047
      %5049 = vrot.lane.b32.xlu0 %v5006, 64
      %v5050 = vpop.permute.xlu0 %5049
      %5051 = vrot.lane.b32.xlu0 %v5007, 64
      %v5052 = vpop.permute.xlu0 %5051
      %5053 = vrot.lane.b32.xlu0 %v5008, 64
      %v5054 = vpop.permute.xlu0 %5053
      %5055 = vrot.lane.b32.xlu0 %v5009, 64
      %v5056 = vpop.permute.xlu0 %5055
      %5057 = vrot.lane.b32.xlu0 %v5010, 64
      %v5058 = vpop.permute.xlu0 %5057
      %5075 = vst.msk [vmem:[#allocation4 + $0x10] sm:$0xff] %vm4690, %v5028
      %5076 = vst.msk [vmem:[#allocation4 + $0x38] sm:$0xff] %vm4690, %v5030
      %5077 = vst.msk [vmem:[#allocation4 + $0x60] sm:$0xff] %vm4690, %v5032
      %5078 = vst.msk [vmem:[#allocation4 + $0x88] sm:$0xff] %vm4690, %v5034
      %5079 = vst.msk [vmem:[#allocation4 + $0xb0] sm:$0xff] %vm4690, %v5036
      %5080 = vst.msk [vmem:[#allocation4 + $0xd8] sm:$0xff] %vm4690, %v5038
      %5081 = vst.msk [vmem:[#allocation4 + $0x100] sm:$0xff] %vm4690, %v5040
      %5082 = vst.msk [vmem:[#allocation4 + $0x128] sm:$0xff] %vm4690, %v5042
      %5083 = vst.msk [vmem:[#allocation4 + $0x150] sm:$0xff] %vm4690, %v5044
      %5084 = vst.msk [vmem:[#allocation4 + $0x178] sm:$0xff] %vm4690, %v5046
      %5085 = vst.msk [vmem:[#allocation4 + $0x1a0] sm:$0xff] %vm4690, %v5048
      %5086 = vst.msk [vmem:[#allocation4 + $0x1c8] sm:$0xff] %vm4690, %v5050
      %5087 = vst.msk [vmem:[#allocation4 + $0x1f0] sm:$0xff] %vm4690, %v5052
      %5088 = vst.msk [vmem:[#allocation4 + $0x218] sm:$0xff] %vm4690, %v5054
      %5089 = vst.msk [vmem:[#allocation4 + $0x240] sm:$0xff] %vm4690, %v5056
      %5090 = vst.msk [vmem:[#allocation4 + $0x268] sm:$0xff] %vm4690, %v5058
      %v5091 = vld [vmem:[%s1476] sm:$0xff]
      %v5092 = vld [vmem:[%s1476 + $0x8] sm:$0xff]
      %v5093 = vld [vmem:[%s1476 + $0x18] sm:$0xff]
      %v5094 = vld [vmem:[%s1476 + $0x20] sm:$0xff]
      %v5095 = vld [vmem:[%s1476 + $0x30] sm:$0xff]
      %v5096 = vld [vmem:[%s1476 + $0x38] sm:$0xff]
      %v5097 = vld [vmem:[%s1476 + $0x48] sm:$0xff]
      %v5098 = vld [vmem:[%s1476 + $0x50] sm:$0xff]
      %v5099 = vld [vmem:[%s1476 + $0x60] sm:$0xff]
      %v5100 = vld [vmem:[%s1476 + $0x68] sm:$0xff]
      %v5101 = vld [vmem:[%s1476 + $0x78] sm:$0xff]
      %v5102 = vld [vmem:[%s1476 + $0x80] sm:$0xff]
      %v5103 = vld [vmem:[%s1476 + $0x90] sm:$0xff]
      %v5104 = vld [vmem:[%s1476 + $0x98] sm:$0xff]
      %v5105 = vld [vmem:[%s1476 + $0xa8] sm:$0xff]
      %v5106 = vld [vmem:[%s1476 + $0xb0] sm:$0xff]
      %v5107 = vld [vmem:[%s1476 + $0xc0] sm:$0xff]
      %v5108 = vld [vmem:[%s1476 + $0xc8] sm:$0xff]
      %v5109 = vld [vmem:[%s1476 + $0xd8] sm:$0xff]
      %v5110 = vld [vmem:[%s1476 + $0xe0] sm:$0xff]
      %v5111 = vld [vmem:[%s1476 + $0xf0] sm:$0xff]
      %v5112 = vld [vmem:[%s1476 + $0xf8] sm:$0xff]
      %v5113 = vld [vmem:[%s1476 + $0x108] sm:$0xff]
      %v5114 = vld [vmem:[%s1476 + $0x110] sm:$0xff]
      %v5115 = vld [vmem:[%s1476 + $0x120] sm:$0xff]
      %v5116 = vld [vmem:[%s1476 + $0x128] sm:$0xff]
      %v5117 = vld [vmem:[%s1476 + $0x138] sm:$0xff]
      %v5118 = vld [vmem:[%s1476 + $0x140] sm:$0xff]
      %v5119 = vld [vmem:[%s1476 + $0x150] sm:$0xff]
      %v5120 = vld [vmem:[%s1476 + $0x158] sm:$0xff]
      %v5121 = vld [vmem:[%s1476 + $0x168] sm:$0xff]
      %v5122 = vld [vmem:[%s1476 + $0x170] sm:$0xff]
      %v5123 = vpack.c.bf16 %v5092, %v5091
      %v5124 = vpack.c.bf16 %v5094, %v5093
      %v5125 = vpack.c.bf16 %v5096, %v5095
      %v5126 = vpack.c.bf16 %v5098, %v5097
      %v5127 = vpack.c.bf16 %v5100, %v5099
      %v5128 = vpack.c.bf16 %v5102, %v5101
      %v5129 = vpack.c.bf16 %v5104, %v5103
      %v5130 = vpack.c.bf16 %v5106, %v5105
      %v5131 = vpack.c.bf16 %v5108, %v5107
      %v5132 = vpack.c.bf16 %v5110, %v5109
      %v5133 = vpack.c.bf16 %v5112, %v5111
      %v5134 = vpack.c.bf16 %v5114, %v5113
      %v5135 = vpack.c.bf16 %v5116, %v5115
      %v5136 = vpack.c.bf16 %v5118, %v5117
      %v5137 = vpack.c.bf16 %v5120, %v5119
      %v5138 = vpack.c.bf16 %v5122, %v5121
      %5139 = vst.msk [vmem:[#allocation4 + $0x18] sm:$0xff] %vm435, %v5123
      %5140 = vst.msk [vmem:[#allocation4 + $0x40] sm:$0xff] %vm435, %v5124
      %5141 = vst.msk [vmem:[#allocation4 + $0x68] sm:$0xff] %vm435, %v5125
      %5142 = vst.msk [vmem:[#allocation4 + $0x90] sm:$0xff] %vm435, %v5126
      %5143 = vst.msk [vmem:[#allocation4 + $0xb8] sm:$0xff] %vm435, %v5127
      %5144 = vst.msk [vmem:[#allocation4 + $0xe0] sm:$0xff] %vm435, %v5128
      %5145 = vst.msk [vmem:[#allocation4 + $0x108] sm:$0xff] %vm435, %v5129
      %5146 = vst.msk [vmem:[#allocation4 + $0x130] sm:$0xff] %vm435, %v5130
      %5147 = vst.msk [vmem:[#allocation4 + $0x158] sm:$0xff] %vm435, %v5131
      %5148 = vst.msk [vmem:[#allocation4 + $0x180] sm:$0xff] %vm435, %v5132
      %5149 = vst.msk [vmem:[#allocation4 + $0x1a8] sm:$0xff] %vm435, %v5133
      %5150 = vst.msk [vmem:[#allocation4 + $0x1d0] sm:$0xff] %vm435, %v5134
      %5151 = vst.msk [vmem:[#allocation4 + $0x1f8] sm:$0xff] %vm435, %v5135
      %5152 = vst.msk [vmem:[#allocation4 + $0x220] sm:$0xff] %vm435, %v5136
      %5153 = vst.msk [vmem:[#allocation4 + $0x248] sm:$0xff] %vm435, %v5137
      %5154 = vst.msk [vmem:[#allocation4 + $0x270] sm:$0xff] %vm435, %v5138
      %v5155 = vld [vmem:[%s1476 + $0x1] sm:$0xff]
      %v5156 = vld [vmem:[%s1476 + $0x9] sm:$0xff]
      %v5157 = vld [vmem:[%s1476 + $0x19] sm:$0xff]
      %v5158 = vld [vmem:[%s1476 + $0x21] sm:$0xff]
      %v5159 = vld [vmem:[%s1476 + $0x31] sm:$0xff]
      %v5160 = vld [vmem:[%s1476 + $0x39] sm:$0xff]
      %v5161 = vld [vmem:[%s1476 + $0x49] sm:$0xff]
      %v5162 = vld [vmem:[%s1476 + $0x51] sm:$0xff]
      %v5163 = vld [vmem:[%s1476 + $0x61] sm:$0xff]
      %v5164 = vld [vmem:[%s1476 + $0x69] sm:$0xff]
      %v5165 = vld [vmem:[%s1476 + $0x79] sm:$0xff]
      %v5166 = vld [vmem:[%s1476 + $0x81] sm:$0xff]
      %v5167 = vld [vmem:[%s1476 + $0x91] sm:$0xff]
      %v5168 = vld [vmem:[%s1476 + $0x99] sm:$0xff]
      %v5169 = vld [vmem:[%s1476 + $0xa9] sm:$0xff]
      %v5170 = vld [vmem:[%s1476 + $0xb1] sm:$0xff]
      %v5171 = vld [vmem:[%s1476 + $0xc1] sm:$0xff]
      %v5172 = vld [vmem:[%s1476 + $0xc9] sm:$0xff]
      %v5173 = vld [vmem:[%s1476 + $0xd9] sm:$0xff]
      %v5174 = vld [vmem:[%s1476 + $0xe1] sm:$0xff]
      %v5175 = vld [vmem:[%s1476 + $0xf1] sm:$0xff]
      %v5176 = vld [vmem:[%s1476 + $0xf9] sm:$0xff]
      %v5177 = vld [vmem:[%s1476 + $0x109] sm:$0xff]
      %v5178 = vld [vmem:[%s1476 + $0x111] sm:$0xff]
      %v5179 = vld [vmem:[%s1476 + $0x121] sm:$0xff]
      %v5180 = vld [vmem:[%s1476 + $0x129] sm:$0xff]
      %v5181 = vld [vmem:[%s1476 + $0x139] sm:$0xff]
      %v5182 = vld [vmem:[%s1476 + $0x141] sm:$0xff]
      %v5183 = vld [vmem:[%s1476 + $0x151] sm:$0xff]
      %v5184 = vld [vmem:[%s1476 + $0x159] sm:$0xff]
      %v5185 = vld [vmem:[%s1476 + $0x169] sm:$0xff]
      %v5186 = vld [vmem:[%s1476 + $0x171] sm:$0xff]
      %v5187 = vpack.c.bf16 %v5156, %v5155
      %v5188 = vpack.c.bf16 %v5158, %v5157
      %v5189 = vpack.c.bf16 %v5160, %v5159
      %v5190 = vpack.c.bf16 %v5162, %v5161
      %v5191 = vpack.c.bf16 %v5164, %v5163
      %v5192 = vpack.c.bf16 %v5166, %v5165
      %v5193 = vpack.c.bf16 %v5168, %v5167
      %v5194 = vpack.c.bf16 %v5170, %v5169
      %v5195 = vpack.c.bf16 %v5172, %v5171
      %v5196 = vpack.c.bf16 %v5174, %v5173
      %v5197 = vpack.c.bf16 %v5176, %v5175
      %v5198 = vpack.c.bf16 %v5178, %v5177
      %v5199 = vpack.c.bf16 %v5180, %v5179
      %v5200 = vpack.c.bf16 %v5182, %v5181
      %v5201 = vpack.c.bf16 %v5184, %v5183
      %v5202 = vpack.c.bf16 %v5186, %v5185
      %5219 = vrot.lane.b32.xlu0 %v5187, 64
      %v5220 = vpop.permute.xlu0 %5219
      %5221 = vrot.lane.b32.xlu0 %v5188, 64
      %v5222 = vpop.permute.xlu0 %5221
      %5223 = vrot.lane.b32.xlu0 %v5189, 64
      %v5224 = vpop.permute.xlu0 %5223
      %5225 = vrot.lane.b32.xlu0 %v5190, 64
      %v5226 = vpop.permute.xlu0 %5225
      %5227 = vrot.lane.b32.xlu0 %v5191, 64
      %v5228 = vpop.permute.xlu0 %5227
      %5229 = vrot.lane.b32.xlu0 %v5192, 64
      %v5230 = vpop.permute.xlu0 %5229
      %5231 = vrot.lane.b32.xlu0 %v5193, 64
      %v5232 = vpop.permute.xlu0 %5231
      %5233 = vrot.lane.b32.xlu0 %v5194, 64
      %v5234 = vpop.permute.xlu0 %5233
      %5235 = vrot.lane.b32.xlu0 %v5195, 64
      %v5236 = vpop.permute.xlu0 %5235
      %5237 = vrot.lane.b32.xlu0 %v5196, 64
      %v5238 = vpop.permute.xlu0 %5237
      %5239 = vrot.lane.b32.xlu0 %v5197, 64
      %v5240 = vpop.permute.xlu0 %5239
      %5241 = vrot.lane.b32.xlu0 %v5198, 64
      %v5242 = vpop.permute.xlu0 %5241
      %5243 = vrot.lane.b32.xlu0 %v5199, 64
      %v5244 = vpop.permute.xlu0 %5243
      %5245 = vrot.lane.b32.xlu0 %v5200, 64
      %v5246 = vpop.permute.xlu0 %5245
      %5247 = vrot.lane.b32.xlu0 %v5201, 64
      %v5248 = vpop.permute.xlu0 %5247
      %5249 = vrot.lane.b32.xlu0 %v5202, 64
      %v5250 = vpop.permute.xlu0 %5249
      %5267 = vst.msk [vmem:[#allocation4 + $0x18] sm:$0xff] %vm4690, %v5220
      %5268 = vst.msk [vmem:[#allocation4 + $0x40] sm:$0xff] %vm4690, %v5222
      %5269 = vst.msk [vmem:[#allocation4 + $0x68] sm:$0xff] %vm4690, %v5224
      %5270 = vst.msk [vmem:[#allocation4 + $0x90] sm:$0xff] %vm4690, %v5226
      %5271 = vst.msk [vmem:[#allocation4 + $0xb8] sm:$0xff] %vm4690, %v5228
      %5272 = vst.msk [vmem:[#allocation4 + $0xe0] sm:$0xff] %vm4690, %v5230
      %5273 = vst.msk [vmem:[#allocation4 + $0x108] sm:$0xff] %vm4690, %v5232
      %5274 = vst.msk [vmem:[#allocation4 + $0x130] sm:$0xff] %vm4690, %v5234
      %5275 = vst.msk [vmem:[#allocation4 + $0x158] sm:$0xff] %vm4690, %v5236
      %5276 = vst.msk [vmem:[#allocation4 + $0x180] sm:$0xff] %vm4690, %v5238
      %5277 = vst.msk [vmem:[#allocation4 + $0x1a8] sm:$0xff] %vm4690, %v5240
      %5278 = vst.msk [vmem:[#allocation4 + $0x1d0] sm:$0xff] %vm4690, %v5242
      %5279 = vst.msk [vmem:[#allocation4 + $0x1f8] sm:$0xff] %vm4690, %v5244
      %5280 = vst.msk [vmem:[#allocation4 + $0x220] sm:$0xff] %vm4690, %v5246
      %5281 = vst.msk [vmem:[#allocation4 + $0x248] sm:$0xff] %vm4690, %v5248
      %5282 = vst.msk [vmem:[#allocation4 + $0x270] sm:$0xff] %vm4690, %v5250
      %v5283 = vld [vmem:[%s1476 + $0x2] sm:$0xff]
      %v5284 = vld [vmem:[%s1476 + $0xa] sm:$0xff]
      %v5285 = vld [vmem:[%s1476 + $0x1a] sm:$0xff]
      %v5286 = vld [vmem:[%s1476 + $0x22] sm:$0xff]
      %v5287 = vld [vmem:[%s1476 + $0x32] sm:$0xff]
      %v5288 = vld [vmem:[%s1476 + $0x3a] sm:$0xff]
      %v5289 = vld [vmem:[%s1476 + $0x4a] sm:$0xff]
      %v5290 = vld [vmem:[%s1476 + $0x52] sm:$0xff]
      %v5291 = vld [vmem:[%s1476 + $0x62] sm:$0xff]
      %v5292 = vld [vmem:[%s1476 + $0x6a] sm:$0xff]
      %v5293 = vld [vmem:[%s1476 + $0x7a] sm:$0xff]
      %v5294 = vld [vmem:[%s1476 + $0x82] sm:$0xff]
      %v5295 = vld [vmem:[%s1476 + $0x92] sm:$0xff]
      %v5296 = vld [vmem:[%s1476 + $0x9a] sm:$0xff]
      %v5297 = vld [vmem:[%s1476 + $0xaa] sm:$0xff]
      %v5298 = vld [vmem:[%s1476 + $0xb2] sm:$0xff]
      %v5299 = vld [vmem:[%s1476 + $0xc2] sm:$0xff]
      %v5300 = vld [vmem:[%s1476 + $0xca] sm:$0xff]
      %v5301 = vld [vmem:[%s1476 + $0xda] sm:$0xff]
      %v5302 = vld [vmem:[%s1476 + $0xe2] sm:$0xff]
      %v5303 = vld [vmem:[%s1476 + $0xf2] sm:$0xff]
      %v5304 = vld [vmem:[%s1476 + $0xfa] sm:$0xff]
      %v5305 = vld [vmem:[%s1476 + $0x10a] sm:$0xff]
      %v5306 = vld [vmem:[%s1476 + $0x112] sm:$0xff]
      %v5307 = vld [vmem:[%s1476 + $0x122] sm:$0xff]
      %v5308 = vld [vmem:[%s1476 + $0x12a] sm:$0xff]
      %v5309 = vld [vmem:[%s1476 + $0x13a] sm:$0xff]
      %v5310 = vld [vmem:[%s1476 + $0x142] sm:$0xff]
      %v5311 = vld [vmem:[%s1476 + $0x152] sm:$0xff]
      %v5312 = vld [vmem:[%s1476 + $0x15a] sm:$0xff]
      %v5313 = vld [vmem:[%s1476 + $0x16a] sm:$0xff]
      %v5314 = vld [vmem:[%s1476 + $0x172] sm:$0xff]
      %v5315 = vpack.c.bf16 %v5284, %v5283
      %v5316 = vpack.c.bf16 %v5286, %v5285
      %v5317 = vpack.c.bf16 %v5288, %v5287
      %v5318 = vpack.c.bf16 %v5290, %v5289
      %v5319 = vpack.c.bf16 %v5292, %v5291
      %v5320 = vpack.c.bf16 %v5294, %v5293
      %v5321 = vpack.c.bf16 %v5296, %v5295
      %v5322 = vpack.c.bf16 %v5298, %v5297
      %v5323 = vpack.c.bf16 %v5300, %v5299
      %v5324 = vpack.c.bf16 %v5302, %v5301
      %v5325 = vpack.c.bf16 %v5304, %v5303
      %v5326 = vpack.c.bf16 %v5306, %v5305
      %v5327 = vpack.c.bf16 %v5308, %v5307
      %v5328 = vpack.c.bf16 %v5310, %v5309
      %v5329 = vpack.c.bf16 %v5312, %v5311
      %v5330 = vpack.c.bf16 %v5314, %v5313
      %5331 = vst.msk [vmem:[#allocation4 + $0x20] sm:$0xff] %vm435, %v5315
      %5332 = vst.msk [vmem:[#allocation4 + $0x48] sm:$0xff] %vm435, %v5316
      %5333 = vst.msk [vmem:[#allocation4 + $0x70] sm:$0xff] %vm435, %v5317
      %5334 = vst.msk [vmem:[#allocation4 + $0x98] sm:$0xff] %vm435, %v5318
      %5335 = vst.msk [vmem:[#allocation4 + $0xc0] sm:$0xff] %vm435, %v5319
      %5336 = vst.msk [vmem:[#allocation4 + $0xe8] sm:$0xff] %vm435, %v5320
      %5337 = vst.msk [vmem:[#allocation4 + $0x110] sm:$0xff] %vm435, %v5321
      %5338 = vst.msk [vmem:[#allocation4 + $0x138] sm:$0xff] %vm435, %v5322
      %5339 = vst.msk [vmem:[#allocation4 + $0x160] sm:$0xff] %vm435, %v5323
      %5340 = vst.msk [vmem:[#allocation4 + $0x188] sm:$0xff] %vm435, %v5324
      %5341 = vst.msk [vmem:[#allocation4 + $0x1b0] sm:$0xff] %vm435, %v5325
      %5342 = vst.msk [vmem:[#allocation4 + $0x1d8] sm:$0xff] %vm435, %v5326
      %5343 = vst.msk [vmem:[#allocation4 + $0x200] sm:$0xff] %vm435, %v5327
      %5344 = vst.msk [vmem:[#allocation4 + $0x228] sm:$0xff] %vm435, %v5328
      %5345 = vst.msk [vmem:[#allocation4 + $0x250] sm:$0xff] %vm435, %v5329
      %5346 = vst.msk [vmem:[#allocation4 + $0x278] sm:$0xff] %vm435, %v5330
      %v5347 = vld [vmem:[#allocation4] sm:$0xff]
      %v5348 = vld [vmem:[#allocation4 + $0x8] sm:$0xff]
      %v5349 = vld [vmem:[#allocation4 + $0x10] sm:$0xff]
      %v5350 = vld [vmem:[#allocation4 + $0x18] sm:$0xff]
      %v5351 = vld [vmem:[#allocation4 + $0x20] sm:$0xff]
      %v5352 = vld [vmem:[#allocation4 + $0x28] sm:$0xff]
      %v5353 = vld [vmem:[#allocation4 + $0x30] sm:$0xff]
      %v5354 = vld [vmem:[#allocation4 + $0x38] sm:$0xff]
      %v5355 = vld [vmem:[#allocation4 + $0x40] sm:$0xff]
      %v5356 = vld [vmem:[#allocation4 + $0x48] sm:$0xff]
      %v5357 = vld [vmem:[#allocation4 + $0x50] sm:$0xff]
      %v5358 = vld [vmem:[#allocation4 + $0x58] sm:$0xff]
      %v5359 = vld [vmem:[#allocation4 + $0x60] sm:$0xff]
      %v5360 = vld [vmem:[#allocation4 + $0x68] sm:$0xff]
      %v5361 = vld [vmem:[#allocation4 + $0x70] sm:$0xff]
      %v5362 = vld [vmem:[#allocation4 + $0x78] sm:$0xff]
      %v5363 = vld [vmem:[#allocation4 + $0x80] sm:$0xff]
      %v5364 = vld [vmem:[#allocation4 + $0x88] sm:$0xff]
      %v5365 = vld [vmem:[#allocation4 + $0x90] sm:$0xff]
      %v5366 = vld [vmem:[#allocation4 + $0x98] sm:$0xff]
      %v5367 = vld [vmem:[#allocation4 + $0xa0] sm:$0xff]
      %v5368 = vld [vmem:[#allocation4 + $0xa8] sm:$0xff]
      %v5369 = vld [vmem:[#allocation4 + $0xb0] sm:$0xff]
      %v5370 = vld [vmem:[#allocation4 + $0xb8] sm:$0xff]
      %v5371 = vld [vmem:[#allocation4 + $0xc0] sm:$0xff]
      %v5372 = vld [vmem:[#allocation4 + $0xc8] sm:$0xff]
      %v5373 = vld [vmem:[#allocation4 + $0xd0] sm:$0xff]
      %v5374 = vld [vmem:[#allocation4 + $0xd8] sm:$0xff]
      %v5375 = vld [vmem:[#allocation4 + $0xe0] sm:$0xff]
      %v5376 = vld [vmem:[#allocation4 + $0xe8] sm:$0xff]
      %v5377 = vld [vmem:[#allocation4 + $0xf0] sm:$0xff]
      %v5378 = vld [vmem:[#allocation4 + $0xf8] sm:$0xff]
      %v5379 = vld [vmem:[#allocation4 + $0x100] sm:$0xff]
      %v5380 = vld [vmem:[#allocation4 + $0x108] sm:$0xff]
      %v5381 = vld [vmem:[#allocation4 + $0x110] sm:$0xff]
      %v5382 = vld [vmem:[#allocation4 + $0x118] sm:$0xff]
      %v5383 = vld [vmem:[#allocation4 + $0x120] sm:$0xff]
      %v5384 = vld [vmem:[#allocation4 + $0x128] sm:$0xff]
      %v5385 = vld [vmem:[#allocation4 + $0x130] sm:$0xff]
      %v5386 = vld [vmem:[#allocation4 + $0x138] sm:$0xff]
      %v5387 = vld [vmem:[#allocation4 + $0x140] sm:$0xff]
      %v5388 = vld [vmem:[#allocation4 + $0x148] sm:$0xff]
      %v5389 = vld [vmem:[#allocation4 + $0x150] sm:$0xff]
      %v5390 = vld [vmem:[#allocation4 + $0x158] sm:$0xff]
      %v5391 = vld [vmem:[#allocation4 + $0x160] sm:$0xff]
      %v5392 = vld [vmem:[#allocation4 + $0x168] sm:$0xff]
      %v5393 = vld [vmem:[#allocation4 + $0x170] sm:$0xff]
      %v5394 = vld [vmem:[#allocation4 + $0x178] sm:$0xff]
      %v5395 = vld [vmem:[#allocation4 + $0x180] sm:$0xff]
      %v5396 = vld [vmem:[#allocation4 + $0x188] sm:$0xff]
      %v5397 = vld [vmem:[#allocation4 + $0x190] sm:$0xff]
      %v5398 = vld [vmem:[#allocation4 + $0x198] sm:$0xff]
      %v5399 = vld [vmem:[#allocation4 + $0x1a0] sm:$0xff]
      %v5400 = vld [vmem:[#allocation4 + $0x1a8] sm:$0xff]
      %v5401 = vld [vmem:[#allocation4 + $0x1b0] sm:$0xff]
      %v5402 = vld [vmem:[#allocation4 + $0x1b8] sm:$0xff]
      %v5403 = vld [vmem:[#allocation4 + $0x1c0] sm:$0xff]
      %v5404 = vld [vmem:[#allocation4 + $0x1c8] sm:$0xff]
      %v5405 = vld [vmem:[#allocation4 + $0x1d0] sm:$0xff]
      %v5406 = vld [vmem:[#allocation4 + $0x1d8] sm:$0xff]
      %v5407 = vld [vmem:[#allocation4 + $0x1e0] sm:$0xff]
      %v5408 = vld [vmem:[#allocation4 + $0x1e8] sm:$0xff]
      %v5409 = vld [vmem:[#allocation4 + $0x1f0] sm:$0xff]
      %v5410 = vld [vmem:[#allocation4 + $0x1f8] sm:$0xff]
      %v5411 = vld [vmem:[#allocation4 + $0x200] sm:$0xff]
      %v5412 = vld [vmem:[#allocation4 + $0x208] sm:$0xff]
      %v5413 = vld [vmem:[#allocation4 + $0x210] sm:$0xff]
      %v5414 = vld [vmem:[#allocation4 + $0x218] sm:$0xff]
      %v5415 = vld [vmem:[#allocation4 + $0x220] sm:$0xff]
      %v5416 = vld [vmem:[#allocation4 + $0x228] sm:$0xff]
      %v5417 = vld [vmem:[#allocation4 + $0x230] sm:$0xff]
      %v5418 = vld [vmem:[#allocation4 + $0x238] sm:$0xff]
      %v5419 = vld [vmem:[#allocation4 + $0x240] sm:$0xff]
      %v5420 = vld [vmem:[#allocation4 + $0x248] sm:$0xff]
      %v5421 = vld [vmem:[#allocation4 + $0x250] sm:$0xff]
      %v5422 = vld [vmem:[#allocation4 + $0x258] sm:$0xff]
      %v5423 = vld [vmem:[#allocation4 + $0x260] sm:$0xff]
      %v5424 = vld [vmem:[#allocation4 + $0x268] sm:$0xff]
      %v5425 = vld [vmem:[#allocation4 + $0x270] sm:$0xff]
      %v5426 = vld [vmem:[#allocation4 + $0x278] sm:$0xff]
      %v5427 = vld [vmem:[%s10] sm:$0xf]
      %v5428 = vld [vmem:[%s10 + $0x4] sm:$0xf]
      %v5429 = vld [vmem:[%s10 + $0x8] sm:$0xf]
      %v5430 = vld [vmem:[%s10 + $0xc] sm:$0xf]
      %v5431 = vld [vmem:[%s10 + $0x10] sm:$0xf]
      %v5432 = vld [vmem:[%s10 + $0x14] sm:$0xf]
      %v5433 = vld [vmem:[%s10 + $0x18] sm:$0xf]
      %v5434 = vld [vmem:[%s10 + $0x1c] sm:$0xf]
      %v5435 = vld [vmem:[%s10 + $0x20] sm:$0xf]
      %v5436 = vld [vmem:[%s10 + $0x24] sm:$0xf]
      %v5437 = vld [vmem:[%s10 + $0x28] sm:$0xf]
      %v5438 = vld [vmem:[%s10 + $0x2c] sm:$0xf]
      %v5439 = vld [vmem:[%s10 + $0x30] sm:$0xf]
      %v5440 = vld [vmem:[%s10 + $0x34] sm:$0xf]
      %v5441 = vld [vmem:[%s10 + $0x38] sm:$0xf]
      %v5442 = vld [vmem:[%s10 + $0x3c] sm:$0xf]
      %v5443 = vld [vmem:[%s10 + $0x40] sm:$0xf]
      %v5444 = vld [vmem:[%s10 + $0x44] sm:$0xf]
      %v5445 = vld [vmem:[%s10 + $0x48] sm:$0xf]
      %v5446 = vld [vmem:[%s10 + $0x4c] sm:$0xf]
      %v5447 = vld [vmem:[%s10 + $0x50] sm:$0xf]
      %v5448 = vld [vmem:[%s10 + $0x54] sm:$0xf]
      %v5449 = vld [vmem:[%s10 + $0x58] sm:$0xf]
      %v5450 = vld [vmem:[%s10 + $0x5c] sm:$0xf]
      %v5451 = vld [vmem:[%s10 + $0x60] sm:$0xf]
      %v5452 = vld [vmem:[%s10 + $0x64] sm:$0xf]
      %v5453 = vld [vmem:[%s10 + $0x68] sm:$0xf]
      %v5454 = vld [vmem:[%s10 + $0x6c] sm:$0xf]
      %v5455 = vld [vmem:[%s10 + $0x70] sm:$0xf]
      %v5456 = vld [vmem:[%s10 + $0x74] sm:$0xf]
      %v5457 = vld [vmem:[%s10 + $0x78] sm:$0xf]
      %v5458 = vld [vmem:[%s10 + $0x7c] sm:$0xf]
      %v5459 = vld [vmem:[%s10 + $0x80] sm:$0xf]
      %v5460 = vld [vmem:[%s10 + $0x84] sm:$0xf]
      %v5461 = vld [vmem:[%s10 + $0x88] sm:$0xf]
      %v5462 = vld [vmem:[%s10 + $0x8c] sm:$0xf]
      %v5463 = vld [vmem:[%s10 + $0x90] sm:$0xf]
      %v5464 = vld [vmem:[%s10 + $0x94] sm:$0xf]
      %v5465 = vld [vmem:[%s10 + $0x98] sm:$0xf]
      %v5466 = vld [vmem:[%s10 + $0x9c] sm:$0xf]
      %v5467 = vld [vmem:[%s10 + $0xa0] sm:$0xf]
      %v5468 = vld [vmem:[%s10 + $0xa4] sm:$0xf]
      %v5469 = vld [vmem:[%s10 + $0xa8] sm:$0xf]
      %v5470 = vld [vmem:[%s10 + $0xac] sm:$0xf]
      %v5471 = vld [vmem:[%s10 + $0xb0] sm:$0xf]
      %v5472 = vld [vmem:[%s10 + $0xb4] sm:$0xf]
      %v5473 = vld [vmem:[%s10 + $0xb8] sm:$0xf]
      %v5474 = vld [vmem:[%s10 + $0xbc] sm:$0xf]
      %v5475 = vld [vmem:[%s10 + $0xc0] sm:$0xf]
      %v5476 = vld [vmem:[%s10 + $0xc4] sm:$0xf]
      %v5477 = vld [vmem:[%s10 + $0xc8] sm:$0xf]
      %v5478 = vld [vmem:[%s10 + $0xcc] sm:$0xf]
      %v5479 = vld [vmem:[%s10 + $0xd0] sm:$0xf]
      %v5480 = vld [vmem:[%s10 + $0xd4] sm:$0xf]
      %v5481 = vld [vmem:[%s10 + $0xd8] sm:$0xf]
      %v5482 = vld [vmem:[%s10 + $0xdc] sm:$0xf]
      %v5483 = vld [vmem:[%s10 + $0xe0] sm:$0xf]
      %v5484 = vld [vmem:[%s10 + $0xe4] sm:$0xf]
      %v5485 = vld [vmem:[%s10 + $0xe8] sm:$0xf]
      %v5486 = vld [vmem:[%s10 + $0xec] sm:$0xf]
      %v5487 = vld [vmem:[%s10 + $0xf0] sm:$0xf]
      %v5488 = vld [vmem:[%s10 + $0xf4] sm:$0xf]
      %v5489 = vld [vmem:[%s10 + $0xf8] sm:$0xf]
      %v5490 = vld [vmem:[%s10 + $0xfc] sm:$0xf]
      %v5491 = vld [vmem:[%s10 + $0x100] sm:$0xf]
      %v5492 = vld [vmem:[%s10 + $0x104] sm:$0xf]
      %v5493 = vld [vmem:[%s10 + $0x108] sm:$0xf]
      %v5494 = vld [vmem:[%s10 + $0x10c] sm:$0xf]
      %v5495 = vld [vmem:[%s10 + $0x110] sm:$0xf]
      %v5496 = vld [vmem:[%s10 + $0x114] sm:$0xf]
      %v5497 = vld [vmem:[%s10 + $0x118] sm:$0xf]
      %v5498 = vld [vmem:[%s10 + $0x11c] sm:$0xf]
      %v5499 = vld [vmem:[%s11] sm:$0x1]
      %v5501 = vlaneseq
      %v5502 = vshrl.u32 %v5501, 7
      %v5503 = vsub.s32 0, %v5502
      %v5504 = vrot.slane %v5499, %v5503
      %v5578 = vunpack.c.l.b16 %v5427
      %v5579 = vunpack.c.l.b16 %v5428
      %v5580 = vunpack.c.l.b16 %v5429
      %v5581 = vunpack.c.l.b16 %v5430
      %v5582 = vunpack.c.l.b16 %v5431
      %v5583 = vunpack.c.l.b16 %v5432
      %v5584 = vunpack.c.l.b16 %v5433
      %v5585 = vunpack.c.l.b16 %v5434
      %v5586 = vunpack.c.l.b16 %v5435
      %v5587 = vunpack.c.l.b16 %v5436
      %v5588 = vunpack.c.l.b16 %v5437
      %v5589 = vunpack.c.l.b16 %v5438
      %v5590 = vunpack.c.l.b16 %v5439
      %v5591 = vunpack.c.l.b16 %v5440
      %v5592 = vunpack.c.l.b16 %v5441
      %v5593 = vunpack.c.l.b16 %v5442
      %v5594 = vunpack.c.l.b16 %v5443
      %v5595 = vunpack.c.l.b16 %v5444
      %v5596 = vunpack.c.l.b16 %v5445
      %v5597 = vunpack.c.l.b16 %v5446
      %v5598 = vunpack.c.l.b16 %v5447
      %v5599 = vunpack.c.l.b16 %v5448
      %v5600 = vunpack.c.l.b16 %v5449
      %v5601 = vunpack.c.l.b16 %v5450
      %v5602 = vunpack.c.l.b16 %v5451
      %v5603 = vunpack.c.l.b16 %v5452
      %v5604 = vunpack.c.l.b16 %v5453
      %v5605 = vunpack.c.l.b16 %v5454
      %v5606 = vunpack.c.l.b16 %v5455
      %v5607 = vunpack.c.l.b16 %v5456
      %v5608 = vunpack.c.l.b16 %v5457
      %v5609 = vunpack.c.l.b16 %v5458
      %v5610 = vunpack.c.l.b16 %v5459
      %v5611 = vunpack.c.l.b16 %v5460
      %v5612 = vunpack.c.l.b16 %v5461
      %v5613 = vunpack.c.l.b16 %v5462
      %v5614 = vunpack.c.l.b16 %v5463
      %v5615 = vunpack.c.l.b16 %v5464
      %v5616 = vunpack.c.l.b16 %v5465
      %v5617 = vunpack.c.l.b16 %v5466
      %v5618 = vunpack.c.l.b16 %v5467
      %v5619 = vunpack.c.l.b16 %v5468
      %v5620 = vunpack.c.l.b16 %v5469
      %v5621 = vunpack.c.l.b16 %v5470
      %v5622 = vunpack.c.l.b16 %v5471
      %v5623 = vunpack.c.l.b16 %v5472
      %v5624 = vunpack.c.l.b16 %v5473
      %v5625 = vunpack.c.l.b16 %v5474
      %v5626 = vunpack.c.l.b16 %v5475
      %v5627 = vunpack.c.l.b16 %v5476
      %v5628 = vunpack.c.l.b16 %v5477
      %v5629 = vunpack.c.l.b16 %v5478
      %v5630 = vunpack.c.l.b16 %v5479
      %v5631 = vunpack.c.l.b16 %v5480
      %v5632 = vunpack.c.l.b16 %v5481
      %v5633 = vunpack.c.l.b16 %v5482
      %v5634 = vunpack.c.l.b16 %v5483
      %v5635 = vunpack.c.l.b16 %v5484
      %v5636 = vunpack.c.l.b16 %v5485
      %v5637 = vunpack.c.l.b16 %v5486
      %v5638 = vunpack.c.l.b16 %v5487
      %v5639 = vunpack.c.l.b16 %v5488
      %v5640 = vunpack.c.l.b16 %v5489
      %v5641 = vunpack.c.l.b16 %v5490
      %v5642 = vunpack.c.l.b16 %v5491
      %v5643 = vunpack.c.l.b16 %v5492
      %v5644 = vunpack.c.l.b16 %v5493
      %v5645 = vunpack.c.l.b16 %v5494
      %v5646 = vunpack.c.l.b16 %v5495
      %v5647 = vunpack.c.l.b16 %v5496
      %v5648 = vunpack.c.l.b16 %v5497
      %v5649 = vunpack.c.l.b16 %v5498
      %v5650 = vpack.c.b16 %v5579, %v5578
      %v5651 = vpack.c.b16 %v5581, %v5580
      %v5652 = vpack.c.b16 %v5583, %v5582
      %v5653 = vpack.c.b16 %v5585, %v5584
      %v5654 = vpack.c.b16 %v5587, %v5586
      %v5655 = vpack.c.b16 %v5589, %v5588
      %v5656 = vpack.c.b16 %v5591, %v5590
      %v5657 = vpack.c.b16 %v5593, %v5592
      %v5658 = vpack.c.b16 %v5595, %v5594
      %v5659 = vpack.c.b16 %v5597, %v5596
      %v5660 = vpack.c.b16 %v5599, %v5598
      %v5661 = vpack.c.b16 %v5601, %v5600
      %v5662 = vpack.c.b16 %v5603, %v5602
      %v5663 = vpack.c.b16 %v5605, %v5604
      %v5664 = vpack.c.b16 %v5607, %v5606
      %v5665 = vpack.c.b16 %v5609, %v5608
      %v5666 = vpack.c.b16 %v5611, %v5610
      %v5667 = vpack.c.b16 %v5613, %v5612
      %v5668 = vpack.c.b16 %v5615, %v5614
      %v5669 = vpack.c.b16 %v5617, %v5616
      %v5670 = vpack.c.b16 %v5619, %v5618
      %v5671 = vpack.c.b16 %v5621, %v5620
      %v5672 = vpack.c.b16 %v5623, %v5622
      %v5673 = vpack.c.b16 %v5625, %v5624
      %v5674 = vpack.c.b16 %v5627, %v5626
      %v5675 = vpack.c.b16 %v5629, %v5628
      %v5676 = vpack.c.b16 %v5631, %v5630
      %v5677 = vpack.c.b16 %v5633, %v5632
      %v5678 = vpack.c.b16 %v5635, %v5634
      %v5679 = vpack.c.b16 %v5637, %v5636
      %v5680 = vpack.c.b16 %v5639, %v5638
      %v5681 = vpack.c.b16 %v5641, %v5640
      %v5682 = vpack.c.b16 %v5643, %v5642
      %v5683 = vpack.c.b16 %v5645, %v5644
      %v5684 = vpack.c.b16 %v5647, %v5646
      %v5685 = vpack.c.b16 %v5649, %v5648
      %v5723 = vsel %vm435, %v5351, 0
      %v5726 = vsel %vm435, %v5356, 0
      %v5729 = vsel %vm435, %v5361, 0
      %v5732 = vsel %vm435, %v5366, 0
      %v5735 = vsel %vm435, %v5371, 0
      %v5738 = vsel %vm435, %v5376, 0
      %v5741 = vsel %vm435, %v5381, 0
      %v5744 = vsel %vm435, %v5386, 0
      %v5747 = vsel %vm435, %v5391, 0
      %v5750 = vsel %vm435, %v5396, 0
      %v5753 = vsel %vm435, %v5401, 0
      %v5756 = vsel %vm435, %v5406, 0
      %v5759 = vsel %vm435, %v5411, 0
      %v5762 = vsel %vm435, %v5416, 0
      %v5765 = vsel %vm435, %v5421, 0
      %v5768 = vsel %vm435, %v5426, 0
      %5770 = vmatprep.subr.bf16.mxu0 0
      %5771 = vmatpush1.bf16.msra.mxu0 %v5650
      %5772 = vmatprep.subr.bf16.mxu0 0
      %5773 = vmatpush1.bf16.msra.mxu0 %v5651
      %5774 = vmatprep.subr.bf16.mxu0 0
      %5775 = vmatpush1.bf16.msra.mxu0 %v5652
      %5776 = vmatprep.subr.bf16.mxu0 0
      %5777 = vmatpush1.bf16.msra.mxu0 %v5653
      %5778 = vmatprep.subr.bf16.mxu0 0
      %5779 = vmatpush1.bf16.msra.mxu0 %v5654
      %5780 = vmatprep.subr.bf16.mxu0 0
      %5781 = vmatpush1.bf16.msra.mxu0 %v5655
      %5782 = vmatprep.subr.bf16.mxu0 0
      %5783 = vmatpush1.bf16.msra.mxu0 %v5656
      %5784 = vmatprep.subr.bf16.mxu0 0
      %5785 = vmatpush1.bf16.msra.mxu0 %v5657
      %5786 = vmatprep.subr.bf16.mxu0 0
      %5787 = vmatpush1.bf16.msra.mxu0 %v5658
      %5788 = vmatprep.subr.bf16.mxu0 0
      %5789 = vmatpush1.bf16.msra.mxu0 %v5659
      %5790 = vmatprep.subr.bf16.mxu0 0
      %5791 = vmatpush1.bf16.msra.mxu0 %v5660
      %5792 = vmatprep.subr.bf16.mxu0 0
      %5793 = vmatpush1.bf16.msra.mxu0 %v5661
      %5794 = vmatprep.subr.bf16.mxu0 0
      %5795 = vmatpush1.bf16.msra.mxu0 %v5662
      %5796 = vmatprep.subr.bf16.mxu0 0
      %5797 = vmatpush1.bf16.msra.mxu0 %v5663
      %5798 = vmatprep.subr.bf16.mxu0 0
      %5799 = vmatpush1.bf16.msra.mxu0 %v5664
      %5800 = vmatprep.subr.bf16.mxu0 0
      %5801 = vmatpush1.bf16.msra.mxu0 %v5665
      %5802 = vmatprep.mubr.bf16.mxu0 %v5348
      %5803 = vmatmul.mubr.bf16.gmra.mrb[0].mxu0 %v5347
      %v5804 = vpop.f32.mrb[0].mxu0
      %v5805 = vadd.f32 %v5504, %v5804
      %v5806 = vpop.f32.mrb[0].mxu0
      %v5807 = vpop.f32.mrb[0].mxu0
      %v5808 = vadd.f32 %v5504, %v5807
      %v5809 = vpop.f32.mrb[0].mxu0
      %5810 = vmatprep.mubr.bf16.mxu0 %v5353
      %5811 = vmatmul.mubr.bf16.gmra.mrb[0].mxu0 %v5352
      %v5812 = vpop.f32.mrb[0].mxu0
      %v5813 = vadd.f32 %v5504, %v5812
      %v5814 = vpop.f32.mrb[0].mxu0
      %v5815 = vpop.f32.mrb[0].mxu0
      %v5816 = vadd.f32 %v5504, %v5815
      %v5817 = vpop.f32.mrb[0].mxu0
      %5818 = vmatprep.mubr.bf16.mxu0 %v5358
      %5819 = vmatmul.mubr.bf16.gmra.mrb[0].mxu0 %v5357
      %v5820 = vpop.f32.mrb[0].mxu0
      %v5821 = vadd.f32 %v5504, %v5820
      %v5822 = vpop.f32.mrb[0].mxu0
      %v5823 = vpop.f32.mrb[0].mxu0
      %v5824 = vadd.f32 %v5504, %v5823
      %v5825 = vpop.f32.mrb[0].mxu0
      %5826 = vmatprep.mubr.bf16.mxu0 %v5363
      %5827 = vmatmul.mubr.bf16.gmra.mrb[0].mxu0 %v5362
      %v5828 = vpop.f32.mrb[0].mxu0
      %v5829 = vadd.f32 %v5504, %v5828
      %v5830 = vpop.f32.mrb[0].mxu0
      %v5831 = vpop.f32.mrb[0].mxu0
      %v5832 = vadd.f32 %v5504, %v5831
      %v5833 = vpop.f32.mrb[0].mxu0
      %5834 = vmatprep.mubr.bf16.mxu0 %v5368
      %5835 = vmatmul.mubr.bf16.gmra.mrb[0].mxu0 %v5367
      %v5836 = vpop.f32.mrb[0].mxu0
      %v5837 = vadd.f32 %v5504, %v5836
      %v5838 = vpop.f32.mrb[0].mxu0
      %v5839 = vpop.f32.mrb[0].mxu0
      %v5840 = vadd.f32 %v5504, %v5839
      %v5841 = vpop.f32.mrb[0].mxu0
      %5842 = vmatprep.mubr.bf16.mxu0 %v5373
      %5843 = vmatmul.mubr.bf16.gmra.mrb[0].mxu0 %v5372
      %v5844 = vpop.f32.mrb[0].mxu0
      %v5845 = vadd.f32 %v5504, %v5844
      %v5846 = vpop.f32.mrb[0].mxu0
      %v5847 = vpop.f32.mrb[0].mxu0
      %v5848 = vadd.f32 %v5504, %v5847
      %v5849 = vpop.f32.mrb[0].mxu0
      %5850 = vmatprep.mubr.bf16.mxu0 %v5378
      %5851 = vmatmul.mubr.bf16.gmra.mrb[0].mxu0 %v5377
      %v5852 = vpop.f32.mrb[0].mxu0
      %v5853 = vadd.f32 %v5504, %v5852
      %v5854 = vpop.f32.mrb[0].mxu0
      %v5855 = vpop.f32.mrb[0].mxu0
      %v5856 = vadd.f32 %v5504, %v5855
      %v5857 = vpop.f32.mrb[0].mxu0
      %5858 = vmatprep.mubr.bf16.mxu0 %v5383
      %5859 = vmatmul.mubr.bf16.gmra.mrb[0].mxu0 %v5382
      %v5860 = vpop.f32.mrb[0].mxu0
      %v5861 = vadd.f32 %v5504, %v5860
      %v5862 = vpop.f32.mrb[0].mxu0
      %v5863 = vpop.f32.mrb[0].mxu0
      %v5864 = vadd.f32 %v5504, %v5863
      %v5865 = vpop.f32.mrb[0].mxu0
      %5866 = vmatprep.mubr.bf16.mxu0 %v5388
      %5867 = vmatmul.mubr.bf16.gmra.mrb[0].mxu0 %v5387
      %v5868 = vpop.f32.mrb[0].mxu0
      %v5869 = vadd.f32 %v5504, %v5868
      %v5870 = vpop.f32.mrb[0].mxu0
      %v5871 = vpop.f32.mrb[0].mxu0
      %v5872 = vadd.f32 %v5504, %v5871
      %v5873 = vpop.f32.mrb[0].mxu0
      %5874 = vmatprep.mubr.bf16.mxu0 %v5393
      %5875 = vmatmul.mubr.bf16.gmra.mrb[0].mxu0 %v5392
      %v5876 = vpop.f32.mrb[0].mxu0
      %v5877 = vadd.f32 %v5504, %v5876
      %v5878 = vpop.f32.mrb[0].mxu0
      %v5879 = vpop.f32.mrb[0].mxu0
      %v5880 = vadd.f32 %v5504, %v5879
      %v5881 = vpop.f32.mrb[0].mxu0
      %5882 = vmatprep.mubr.bf16.mxu0 %v5398
      %5883 = vmatmul.mubr.bf16.gmra.mrb[0].mxu0 %v5397
      %v5884 = vpop.f32.mrb[0].mxu0
      %v5885 = vadd.f32 %v5504, %v5884
      %v5886 = vpop.f32.mrb[0].mxu0
      %v5887 = vpop.f32.mrb[0].mxu0
      %v5888 = vadd.f32 %v5504, %v5887
      %v5889 = vpop.f32.mrb[0].mxu0
      %5890 = vmatprep.mubr.bf16.mxu0 %v5403
      %5891 = vmatmul.mubr.bf16.gmra.mrb[0].mxu0 %v5402
      %v5892 = vpop.f32.mrb[0].mxu0
      %v5893 = vadd.f32 %v5504, %v5892
      %v5894 = vpop.f32.mrb[0].mxu0
      %v5895 = vpop.f32.mrb[0].mxu0
      %v5896 = vadd.f32 %v5504, %v5895
      %v5897 = vpop.f32.mrb[0].mxu0
      %5898 = vmatprep.mubr.bf16.mxu0 %v5408
      %5899 = vmatmul.mubr.bf16.gmra.mrb[0].mxu0 %v5407
      %v5900 = vpop.f32.mrb[0].mxu0
      %v5901 = vadd.f32 %v5504, %v5900
      %v5902 = vpop.f32.mrb[0].mxu0
      %v5903 = vpop.f32.mrb[0].mxu0
      %v5904 = vadd.f32 %v5504, %v5903
      %v5905 = vpop.f32.mrb[0].mxu0
      %5906 = vmatprep.mubr.bf16.mxu0 %v5413
      %5907 = vmatmul.mubr.bf16.gmra.mrb[0].mxu0 %v5412
      %v5908 = vpop.f32.mrb[0].mxu0
      %v5909 = vadd.f32 %v5504, %v5908
      %v5910 = vpop.f32.mrb[0].mxu0
      %v5911 = vpop.f32.mrb[0].mxu0
      %v5912 = vadd.f32 %v5504, %v5911
      %v5913 = vpop.f32.mrb[0].mxu0
      %5914 = vmatprep.mubr.bf16.mxu0 %v5418
      %5915 = vmatmul.mubr.bf16.gmra.mrb[0].mxu0 %v5417
      %v5916 = vpop.f32.mrb[0].mxu0
      %v5917 = vadd.f32 %v5504, %v5916
      %v5918 = vpop.f32.mrb[0].mxu0
      %v5919 = vpop.f32.mrb[0].mxu0
      %v5920 = vadd.f32 %v5504, %v5919
      %v5921 = vpop.f32.mrb[0].mxu0
      %5922 = vmatprep.mubr.bf16.mxu0 %v5423
      %5923 = vmatmul.mubr.bf16.gmra.mrb[0].mxu0 %v5422
      %v5924 = vpop.f32.mrb[0].mxu0
      %v5925 = vadd.f32 %v5504, %v5924
      %v5926 = vpop.f32.mrb[0].mxu0
      %v5927 = vpop.f32.mrb[0].mxu0
      %v5928 = vadd.f32 %v5504, %v5927
      %v5929 = vpop.f32.mrb[0].mxu0
      %5930 = vdwg.mxu0
      %5931 = vmatprep.subr.bf16.mxu0 0
      %5932 = vmatpush1.bf16.msra.mxu0 %v5666
      %5933 = vmatprep.subr.bf16.mxu0 0
      %5934 = vmatpush1.bf16.msra.mxu0 %v5667
      %5935 = vmatprep.subr.bf16.mxu0 0
      %5936 = vmatpush1.bf16.msra.mxu0 %v5668
      %5937 = vmatprep.subr.bf16.mxu0 0
      %5938 = vmatpush1.bf16.msra.mxu0 %v5669
      %5939 = vmatprep.subr.bf16.mxu0 0
      %5940 = vmatpush1.bf16.msra.mxu0 %v5670
      %5941 = vmatprep.subr.bf16.mxu0 0
      %5942 = vmatpush1.bf16.msra.mxu0 %v5671
      %5943 = vmatprep.subr.bf16.mxu0 0
      %5944 = vmatpush1.bf16.msra.mxu0 %v5672
      %5945 = vmatprep.subr.bf16.mxu0 0
      %5946 = vmatpush1.bf16.msra.mxu0 %v5673
      %5947 = vmatprep.subr.bf16.mxu0 0
      %5948 = vmatpush1.bf16.msra.mxu0 %v5674
      %5949 = vmatprep.subr.bf16.mxu0 0
      %5950 = vmatpush1.bf16.msra.mxu0 %v5675
      %5951 = vmatprep.subr.bf16.mxu0 0
      %5952 = vmatpush1.bf16.msra.mxu0 %v5676
      %5953 = vmatprep.subr.bf16.mxu0 0
      %5954 = vmatpush1.bf16.msra.mxu0 %v5677
      %5955 = vmatprep.subr.bf16.mxu0 0
      %5956 = vmatpush1.bf16.msra.mxu0 %v5678
      %5957 = vmatprep.subr.bf16.mxu0 0
      %5958 = vmatpush1.bf16.msra.mxu0 %v5679
      %5959 = vmatprep.subr.bf16.mxu0 0
      %5960 = vmatpush1.bf16.msra.mxu0 %v5680
      %5961 = vmatprep.subr.bf16.mxu0 0
      %5962 = vmatpush1.bf16.msra.mxu0 %v5681
      %5963 = vmatprep.mubr.bf16.mxu0 %v5350
      %5964 = vmatmul.mubr.bf16.gmra.mrb[0].mxu0 %v5349
      %v5965 = vpop.f32.mrb[0].mxu0
      %v5966 = vadd.f32 %v5805, %v5965
      %v5967 = vpop.f32.mrb[0].mxu0
      %v5968 = vpop.f32.mrb[0].mxu0
      %v5969 = vadd.f32 %v5808, %v5968
      %v5970 = vpop.f32.mrb[0].mxu0
      %5971 = vmatprep.mubr.bf16.mxu0 %v5355
      %5972 = vmatmul.mubr.bf16.gmra.mrb[0].mxu0 %v5354
      %v5973 = vpop.f32.mrb[0].mxu0
      %v5974 = vadd.f32 %v5813, %v5973
      %v5975 = vpop.f32.mrb[0].mxu0
      %v5976 = vpop.f32.mrb[0].mxu0
      %v5977 = vadd.f32 %v5816, %v5976
      %v5978 = vpop.f32.mrb[0].mxu0
      %5979 = vmatprep.mubr.bf16.mxu0 %v5360
      %5980 = vmatmul.mubr.bf16.gmra.mrb[0].mxu0 %v5359
      %v5981 = vpop.f32.mrb[0].mxu0
      %v5982 = vadd.f32 %v5821, %v5981
      %v5983 = vpop.f32.mrb[0].mxu0
      %v5984 = vpop.f32.mrb[0].mxu0
      %v5985 = vadd.f32 %v5824, %v5984
      %v5986 = vpop.f32.mrb[0].mxu0
      %5987 = vmatprep.mubr.bf16.mxu0 %v5365
      %5988 = vmatmul.mubr.bf16.gmra.mrb[0].mxu0 %v5364
      %v5989 = vpop.f32.mrb[0].mxu0
      %v5990 = vadd.f32 %v5829, %v5989
      %v5991 = vpop.f32.mrb[0].mxu0
      %v5992 = vpop.f32.mrb[0].mxu0
      %v5993 = vadd.f32 %v5832, %v5992
      %v5994 = vpop.f32.mrb[0].mxu0
      %5995 = vmatprep.mubr.bf16.mxu0 %v5370
      %5996 = vmatmul.mubr.bf16.gmra.mrb[0].mxu0 %v5369
      %v5997 = vpop.f32.mrb[0].mxu0
      %v5998 = vadd.f32 %v5837, %v5997
      %v5999 = vpop.f32.mrb[0].mxu0
      %v6000 = vpop.f32.mrb[0].mxu0
      %v6001 = vadd.f32 %v5840, %v6000
      %v6002 = vpop.f32.mrb[0].mxu0
      %6003 = vmatprep.mubr.bf16.mxu0 %v5375
      %6004 = vmatmul.mubr.bf16.gmra.mrb[0].mxu0 %v5374
      %v6005 = vpop.f32.mrb[0].mxu0
      %v6006 = vadd.f32 %v5845, %v6005
      %v6007 = vpop.f32.mrb[0].mxu0
      %v6008 = vpop.f32.mrb[0].mxu0
      %v6009 = vadd.f32 %v5848, %v6008
      %v6010 = vpop.f32.mrb[0].mxu0
      %6011 = vmatprep.mubr.bf16.mxu0 %v5380
      %6012 = vmatmul.mubr.bf16.gmra.mrb[0].mxu0 %v5379
      %v6013 = vpop.f32.mrb[0].mxu0
      %v6014 = vadd.f32 %v5853, %v6013
      %v6015 = vpop.f32.mrb[0].mxu0
      %v6016 = vpop.f32.mrb[0].mxu0
      %v6017 = vadd.f32 %v5856, %v6016
      %v6018 = vpop.f32.mrb[0].mxu0
      %6019 = vmatprep.mubr.bf16.mxu0 %v5385
      %6020 = vmatmul.mubr.bf16.gmra.mrb[0].mxu0 %v5384
      %v6021 = vpop.f32.mrb[0].mxu0
      %v6022 = vadd.f32 %v5861, %v6021
      %v6023 = vpop.f32.mrb[0].mxu0
      %v6024 = vpop.f32.mrb[0].mxu0
      %v6025 = vadd.f32 %v5864, %v6024
      %v6026 = vpop.f32.mrb[0].mxu0
      %6027 = vmatprep.mubr.bf16.mxu0 %v5390
      %6028 = vmatmul.mubr.bf16.gmra.mrb[0].mxu0 %v5389
      %v6029 = vpop.f32.mrb[0].mxu0
      %v6030 = vadd.f32 %v5869, %v6029
      %v6031 = vpop.f32.mrb[0].mxu0
      %v6032 = vpop.f32.mrb[0].mxu0
      %v6033 = vadd.f32 %v5872, %v6032
      %v6034 = vpop.f32.mrb[0].mxu0
      %6035 = vmatprep.mubr.bf16.mxu0 %v5395
      %6036 = vmatmul.mubr.bf16.gmra.mrb[0].mxu0 %v5394
      %v6037 = vpop.f32.mrb[0].mxu0
      %v6038 = vadd.f32 %v5877, %v6037
      %v6039 = vpop.f32.mrb[0].mxu0
      %v6040 = vpop.f32.mrb[0].mxu0
      %v6041 = vadd.f32 %v5880, %v6040
      %v6042 = vpop.f32.mrb[0].mxu0
      %6043 = vmatprep.mubr.bf16.mxu0 %v5400
      %6044 = vmatmul.mubr.bf16.gmra.mrb[0].mxu0 %v5399
      %v6045 = vpop.f32.mrb[0].mxu0
      %v6046 = vadd.f32 %v5885, %v6045
      %v6047 = vpop.f32.mrb[0].mxu0
      %v6048 = vpop.f32.mrb[0].mxu0
      %v6049 = vadd.f32 %v5888, %v6048
      %v6050 = vpop.f32.mrb[0].mxu0
      %6051 = vmatprep.mubr.bf16.mxu0 %v5405
      %6052 = vmatmul.mubr.bf16.gmra.mrb[0].mxu0 %v5404
      %v6053 = vpop.f32.mrb[0].mxu0
      %v6054 = vadd.f32 %v5893, %v6053
      %v6055 = vpop.f32.mrb[0].mxu0
      %v6056 = vpop.f32.mrb[0].mxu0
      %v6057 = vadd.f32 %v5896, %v6056
      %v6058 = vpop.f32.mrb[0].mxu0
      %6059 = vmatprep.mubr.bf16.mxu0 %v5410
      %6060 = vmatmul.mubr.bf16.gmra.mrb[0].mxu0 %v5409
      %v6061 = vpop.f32.mrb[0].mxu0
      %v6062 = vadd.f32 %v5901, %v6061
      %v6063 = vpop.f32.mrb[0].mxu0
      %v6064 = vpop.f32.mrb[0].mxu0
      %v6065 = vadd.f32 %v5904, %v6064
      %v6066 = vpop.f32.mrb[0].mxu0
      %6067 = vmatprep.mubr.bf16.mxu0 %v5415
      %6068 = vmatmul.mubr.bf16.gmra.mrb[0].mxu0 %v5414
      %v6069 = vpop.f32.mrb[0].mxu0
      %v6070 = vadd.f32 %v5909, %v6069
      %v6071 = vpop.f32.mrb[0].mxu0
      %v6072 = vpop.f32.mrb[0].mxu0
      %v6073 = vadd.f32 %v5912, %v6072
      %v6074 = vpop.f32.mrb[0].mxu0
      %6075 = vmatprep.mubr.bf16.mxu0 %v5420
      %6076 = vmatmul.mubr.bf16.gmra.mrb[0].mxu0 %v5419
      %v6077 = vpop.f32.mrb[0].mxu0
      %v6078 = vadd.f32 %v5917, %v6077
      %v6079 = vpop.f32.mrb[0].mxu0
      %v6080 = vpop.f32.mrb[0].mxu0
      %v6081 = vadd.f32 %v5920, %v6080
      %v6082 = vpop.f32.mrb[0].mxu0
      %6083 = vmatprep.mubr.bf16.mxu0 %v5425
      %6084 = vmatmul.mubr.bf16.gmra.mrb[0].mxu0 %v5424
      %v6085 = vpop.f32.mrb[0].mxu0
      %v6086 = vadd.f32 %v5925, %v6085
      %v6087 = vpop.f32.mrb[0].mxu0
      %v6088 = vpop.f32.mrb[0].mxu0
      %v6089 = vadd.f32 %v5928, %v6088
      %v6090 = vpop.f32.mrb[0].mxu0
      %6091 = vdwg.mxu0
      %6092 = vmatprep.subr.bf16.mxu0 0
      %6093 = vmatpush1.bf16.msra.mxu0 %v5682
      %6094 = vmatprep.subr.bf16.mxu0 0
      %6095 = vmatpush1.bf16.msra.mxu0 %v5683
      %6096 = vmatprep.subr.bf16.mxu0 0
      %6097 = vmatpush1.bf16.msra.mxu0 %v5684
      %6098 = vmatprep.subr.bf16.mxu0 0
      %6099 = vmatpush1.bf16.msra.mxu0 %v5685
      %6100 = vmatprep.subr.bf16.mxu0 0
      %6101 = vmatpush1.bf16.msra.mxu0 0
      %6102 = vmatprep.subr.bf16.mxu0 0
      %6103 = vmatpush1.bf16.msra.mxu0 0
      %6104 = vmatprep.subr.bf16.mxu0 0
      %6105 = vmatpush1.bf16.msra.mxu0 0
      %6106 = vmatprep.subr.bf16.mxu0 0
      %6107 = vmatpush1.bf16.msra.mxu0 0
      %6108 = vmatprep.subr.bf16.mxu0 0
      %6109 = vmatpush1.bf16.msra.mxu0 0
      %6110 = vmatprep.subr.bf16.mxu0 0
      %6111 = vmatpush1.bf16.msra.mxu0 0
      %6112 = vmatprep.subr.bf16.mxu0 0
      %6113 = vmatpush1.bf16.msra.mxu0 0
      %6114 = vmatprep.subr.bf16.mxu0 0
      %6115 = vmatpush1.bf16.msra.mxu0 0
      %6116 = vmatprep.subr.bf16.mxu0 0
      %6117 = vmatpush1.bf16.msra.mxu0 0
      %6118 = vmatprep.subr.bf16.mxu0 0
      %6119 = vmatpush1.bf16.msra.mxu0 0
      %6120 = vmatprep.subr.bf16.mxu0 0
      %6121 = vmatpush1.bf16.msra.mxu0 0
      %6122 = vmatprep.subr.bf16.mxu0 0
      %6123 = vmatpush1.bf16.msra.mxu0 0
      %6124 = vmatprep.mubr.bf16.mxu0 0
      %6125 = vmatmul.mubr.bf16.gmra.mrb[0].mxu0 %v5723
      %v6126 = vpop.f32.mrb[0].mxu0
      %v6127 = vadd.f32 %v5966, %v6126
      %v6128 = vpop.f32.mrb[0].mxu0
      %v6129 = vpop.f32.mrb[0].mxu0
      %v6130 = vadd.f32 %v5969, %v6129
      %v6131 = vpop.f32.mrb[0].mxu0
      %6132 = vmatprep.mubr.bf16.mxu0 0
      %6133 = vmatmul.mubr.bf16.gmra.mrb[0].mxu0 %v5726
      %v6134 = vpop.f32.mrb[0].mxu0
      %v6135 = vadd.f32 %v5974, %v6134
      %v6136 = vpop.f32.mrb[0].mxu0
      %v6137 = vpop.f32.mrb[0].mxu0
      %v6138 = vadd.f32 %v5977, %v6137
      %v6139 = vpop.f32.mrb[0].mxu0
      %6140 = vmatprep.mubr.bf16.mxu0 0
      %6141 = vmatmul.mubr.bf16.gmra.mrb[0].mxu0 %v5729
      %v6142 = vpop.f32.mrb[0].mxu0
      %v6143 = vadd.f32 %v5982, %v6142
      %v6144 = vpop.f32.mrb[0].mxu0
      %v6145 = vpop.f32.mrb[0].mxu0
      %v6146 = vadd.f32 %v5985, %v6145
      %v6147 = vpop.f32.mrb[0].mxu0
      %6148 = vmatprep.mubr.bf16.mxu0 0
      %6149 = vmatmul.mubr.bf16.gmra.mrb[0].mxu0 %v5732
      %v6150 = vpop.f32.mrb[0].mxu0
      %v6151 = vadd.f32 %v5990, %v6150
      %v6152 = vpop.f32.mrb[0].mxu0
      %v6153 = vpop.f32.mrb[0].mxu0
      %v6154 = vadd.f32 %v5993, %v6153
      %v6155 = vpop.f32.mrb[0].mxu0
      %6156 = vmatprep.mubr.bf16.mxu0 0
      %6157 = vmatmul.mubr.bf16.gmra.mrb[0].mxu0 %v5735
      %v6158 = vpop.f32.mrb[0].mxu0
      %v6159 = vadd.f32 %v5998, %v6158
      %v6160 = vpop.f32.mrb[0].mxu0
      %v6161 = vpop.f32.mrb[0].mxu0
      %v6162 = vadd.f32 %v6001, %v6161
      %v6163 = vpop.f32.mrb[0].mxu0
      %6164 = vmatprep.mubr.bf16.mxu0 0
      %6165 = vmatmul.mubr.bf16.gmra.mrb[0].mxu0 %v5738
      %v6166 = vpop.f32.mrb[0].mxu0
      %v6167 = vadd.f32 %v6006, %v6166
      %v6168 = vpop.f32.mrb[0].mxu0
      %v6169 = vpop.f32.mrb[0].mxu0
      %v6170 = vadd.f32 %v6009, %v6169
      %v6171 = vpop.f32.mrb[0].mxu0
      %6172 = vmatprep.mubr.bf16.mxu0 0
      %6173 = vmatmul.mubr.bf16.gmra.mrb[0].mxu0 %v5741
      %v6174 = vpop.f32.mrb[0].mxu0
      %v6175 = vadd.f32 %v6014, %v6174
      %v6176 = vpop.f32.mrb[0].mxu0
      %v6177 = vpop.f32.mrb[0].mxu0
      %v6178 = vadd.f32 %v6017, %v6177
      %v6179 = vpop.f32.mrb[0].mxu0
      %6180 = vmatprep.mubr.bf16.mxu0 0
      %6181 = vmatmul.mubr.bf16.gmra.mrb[0].mxu0 %v5744
      %v6182 = vpop.f32.mrb[0].mxu0
      %v6183 = vadd.f32 %v6022, %v6182
      %v6184 = vpop.f32.mrb[0].mxu0
      %v6185 = vpop.f32.mrb[0].mxu0
      %v6186 = vadd.f32 %v6025, %v6185
      %v6187 = vpop.f32.mrb[0].mxu0
      %6188 = vmatprep.mubr.bf16.mxu0 0
      %6189 = vmatmul.mubr.bf16.gmra.mrb[0].mxu0 %v5747
      %v6190 = vpop.f32.mrb[0].mxu0
      %v6191 = vadd.f32 %v6030, %v6190
      %v6192 = vpop.f32.mrb[0].mxu0
      %v6193 = vpop.f32.mrb[0].mxu0
      %v6194 = vadd.f32 %v6033, %v6193
      %v6195 = vpop.f32.mrb[0].mxu0
      %6196 = vmatprep.mubr.bf16.mxu0 0
      %6197 = vmatmul.mubr.bf16.gmra.mrb[0].mxu0 %v5750
      %v6198 = vpop.f32.mrb[0].mxu0
      %v6199 = vadd.f32 %v6038, %v6198
      %v6200 = vpop.f32.mrb[0].mxu0
      %v6201 = vpop.f32.mrb[0].mxu0
      %v6202 = vadd.f32 %v6041, %v6201
      %v6203 = vpop.f32.mrb[0].mxu0
      %6204 = vmatprep.mubr.bf16.mxu0 0
      %6205 = vmatmul.mubr.bf16.gmra.mrb[0].mxu0 %v5753
      %v6206 = vpop.f32.mrb[0].mxu0
      %v6207 = vadd.f32 %v6046, %v6206
      %v6208 = vpop.f32.mrb[0].mxu0
      %v6209 = vpop.f32.mrb[0].mxu0
      %v6210 = vadd.f32 %v6049, %v6209
      %v6211 = vpop.f32.mrb[0].mxu0
      %6212 = vmatprep.mubr.bf16.mxu0 0
      %6213 = vmatmul.mubr.bf16.gmra.mrb[0].mxu0 %v5756
      %v6214 = vpop.f32.mrb[0].mxu0
      %v6215 = vadd.f32 %v6054, %v6214
      %v6216 = vpop.f32.mrb[0].mxu0
      %v6217 = vpop.f32.mrb[0].mxu0
      %v6218 = vadd.f32 %v6057, %v6217
      %v6219 = vpop.f32.mrb[0].mxu0
      %6220 = vmatprep.mubr.bf16.mxu0 0
      %6221 = vmatmul.mubr.bf16.gmra.mrb[0].mxu0 %v5759
      %v6222 = vpop.f32.mrb[0].mxu0
      %v6223 = vadd.f32 %v6062, %v6222
      %v6224 = vpop.f32.mrb[0].mxu0
      %v6225 = vpop.f32.mrb[0].mxu0
      %v6226 = vadd.f32 %v6065, %v6225
      %v6227 = vpop.f32.mrb[0].mxu0
      %6228 = vmatprep.mubr.bf16.mxu0 0
      %6229 = vmatmul.mubr.bf16.gmra.mrb[0].mxu0 %v5762
      %v6230 = vpop.f32.mrb[0].mxu0
      %v6231 = vadd.f32 %v6070, %v6230
      %v6232 = vpop.f32.mrb[0].mxu0
      %v6233 = vpop.f32.mrb[0].mxu0
      %v6234 = vadd.f32 %v6073, %v6233
      %v6235 = vpop.f32.mrb[0].mxu0
      %6236 = vmatprep.mubr.bf16.mxu0 0
      %6237 = vmatmul.mubr.bf16.gmra.mrb[0].mxu0 %v5765
      %v6238 = vpop.f32.mrb[0].mxu0
      %v6239 = vadd.f32 %v6078, %v6238
      %v6240 = vpop.f32.mrb[0].mxu0
      %v6241 = vpop.f32.mrb[0].mxu0
      %v6242 = vadd.f32 %v6081, %v6241
      %v6243 = vpop.f32.mrb[0].mxu0
      %6244 = vmatprep.mubr.bf16.mxu0 0
      %6245 = vmatmul.mubr.bf16.gmra.mrb[0].mxu0 %v5768
      %v6246 = vpop.f32.mrb[0].mxu0
      %v6247 = vadd.f32 %v6086, %v6246
      %v6248 = vpop.f32.mrb[0].mxu0
      %v6249 = vpop.f32.mrb[0].mxu0
      %v6250 = vadd.f32 %v6089, %v6249
      %v6251 = vpop.f32.mrb[0].mxu0
      %6252 = vdwg.mxu0
      %v6253 = vmax.f32 %v6127, 0.0
      %v6254 = vmax.f32 %v6130, 0.0
      %v6255 = vmax.f32 %v6135, 0.0
      %v6256 = vmax.f32 %v6138, 0.0
      %v6257 = vmax.f32 %v6143, 0.0
      %v6258 = vmax.f32 %v6146, 0.0
      %v6259 = vmax.f32 %v6151, 0.0
      %v6260 = vmax.f32 %v6154, 0.0
      %v6261 = vmax.f32 %v6159, 0.0
      %v6262 = vmax.f32 %v6162, 0.0
      %v6263 = vmax.f32 %v6167, 0.0
      %v6264 = vmax.f32 %v6170, 0.0
      %v6265 = vmax.f32 %v6175, 0.0
      %v6266 = vmax.f32 %v6178, 0.0
      %v6267 = vmax.f32 %v6183, 0.0
      %v6268 = vmax.f32 %v6186, 0.0
      %v6269 = vmax.f32 %v6191, 0.0
      %v6270 = vmax.f32 %v6194, 0.0
      %v6271 = vmax.f32 %v6199, 0.0
      %v6272 = vmax.f32 %v6202, 0.0
      %v6273 = vmax.f32 %v6207, 0.0
      %v6274 = vmax.f32 %v6210, 0.0
      %v6275 = vmax.f32 %v6215, 0.0
      %v6276 = vmax.f32 %v6218, 0.0
      %v6277 = vmax.f32 %v6223, 0.0
      %v6278 = vmax.f32 %v6226, 0.0
      %v6279 = vmax.f32 %v6231, 0.0
      %v6280 = vmax.f32 %v6234, 0.0
      %v6281 = vmax.f32 %v6239, 0.0
      %v6282 = vmax.f32 %v6242, 0.0
      %v6283 = vmax.f32 %v6247, 0.0
      %v6284 = vmax.f32 %v6250, 0.0
      %v6285 = vlaneseq
      %v6286 = vand.u32 %v6285, 127
      %vm6287 = vcmp.eq.s32.totalorder %v6286, 63
      %v6288 = vsel %vm6287, 1, 0
      %v6289 = vcvt.s32.f32 %v6288
      %6291 = vset.pattern.permute.xlu0 24
      %6292 = vperm.xlu0 %6291, %v2398
      %v6293 = vpop.permute.xlu0 %6292
      %6296 = vset.pattern.permute.xlu0 24
      %6297 = vperm.xlu0 %6296, %v2399
      %v6298 = vpop.permute.xlu0 %6297
      %6301 = vset.pattern.permute.xlu0 24
      %6302 = vperm.xlu0 %6301, %v2400
      %v6303 = vpop.permute.xlu0 %6302
      %6306 = vset.pattern.permute.xlu0 24
      %6307 = vperm.xlu0 %6306, %v2401
      %v6308 = vpop.permute.xlu0 %6307
      %6311 = vset.pattern.permute.xlu0 24
      %6312 = vperm.xlu0 %6311, %v2402
      %v6313 = vpop.permute.xlu0 %6312
      %6316 = vset.pattern.permute.xlu0 24
      %6317 = vperm.xlu0 %6316, %v2403
      %v6318 = vpop.permute.xlu0 %6317
      %6321 = vset.pattern.permute.xlu0 24
      %6322 = vperm.xlu0 %6321, %v2404
      %v6323 = vpop.permute.xlu0 %6322
      %6326 = vset.pattern.permute.xlu0 24
      %6327 = vperm.xlu0 %6326, %v2405
      %v6328 = vpop.permute.xlu0 %6327
      %6331 = vset.pattern.permute.xlu0 24
      %6332 = vperm.xlu0 %6331, %v2406
      %v6333 = vpop.permute.xlu0 %6332
      %6336 = vset.pattern.permute.xlu0 24
      %6337 = vperm.xlu0 %6336, %v2407
      %v6338 = vpop.permute.xlu0 %6337
      %6341 = vset.pattern.permute.xlu0 24
      %6342 = vperm.xlu0 %6341, %v2408
      %v6343 = vpop.permute.xlu0 %6342
      %6346 = vset.pattern.permute.xlu0 24
      %6347 = vperm.xlu0 %6346, %v2409
      %v6348 = vpop.permute.xlu0 %6347
      %6351 = vset.pattern.permute.xlu0 24
      %6352 = vperm.xlu0 %6351, %v2410
      %v6353 = vpop.permute.xlu0 %6352
      %6356 = vset.pattern.permute.xlu0 24
      %6357 = vperm.xlu0 %6356, %v2411
      %v6358 = vpop.permute.xlu0 %6357
      %6361 = vset.pattern.permute.xlu0 24
      %6362 = vperm.xlu0 %6361, %v2412
      %v6363 = vpop.permute.xlu0 %6362
      %6366 = vset.pattern.permute.xlu0 24
      %6367 = vperm.xlu0 %6366, %v2413
      %v6368 = vpop.permute.xlu0 %6367
      %6371 = vset.pattern.permute.xlu0 24
      %6372 = vperm.xlu0 %6371, %v2414
      %v6373 = vpop.permute.xlu0 %6372
      %6376 = vset.pattern.permute.xlu0 24
      %6377 = vperm.xlu0 %6376, %v2415
      %v6378 = vpop.permute.xlu0 %6377
      %6381 = vset.pattern.permute.xlu0 24
      %6382 = vperm.xlu0 %6381, %v2416
      %v6383 = vpop.permute.xlu0 %6382
      %6386 = vset.pattern.permute.xlu0 24
      %6387 = vperm.xlu0 %6386, %v2417
      %v6388 = vpop.permute.xlu0 %6387
      %6391 = vset.pattern.permute.xlu0 24
      %6392 = vperm.xlu0 %6391, %v2418
      %v6393 = vpop.permute.xlu0 %6392
      %6396 = vset.pattern.permute.xlu0 24
      %6397 = vperm.xlu0 %6396, %v2419
      %v6398 = vpop.permute.xlu0 %6397
      %6401 = vset.pattern.permute.xlu0 24
      %6402 = vperm.xlu0 %6401, %v2420
      %v6403 = vpop.permute.xlu0 %6402
      %6406 = vset.pattern.permute.xlu0 24
      %6407 = vperm.xlu0 %6406, %v2421
      %v6408 = vpop.permute.xlu0 %6407
      %6411 = vset.pattern.permute.xlu0 24
      %6412 = vperm.xlu0 %6411, %v2422
      %v6413 = vpop.permute.xlu0 %6412
      %6416 = vset.pattern.permute.xlu0 24
      %6417 = vperm.xlu0 %6416, %v2423
      %v6418 = vpop.permute.xlu0 %6417
      %6421 = vset.pattern.permute.xlu0 24
      %6422 = vperm.xlu0 %6421, %v2424
      %v6423 = vpop.permute.xlu0 %6422
      %6426 = vset.pattern.permute.xlu0 24
      %6427 = vperm.xlu0 %6426, %v2425
      %v6428 = vpop.permute.xlu0 %6427
      %6431 = vset.pattern.permute.xlu0 24
      %6432 = vperm.xlu0 %6431, %v2426
      %v6433 = vpop.permute.xlu0 %6432
      %6436 = vset.pattern.permute.xlu0 24
      %6437 = vperm.xlu0 %6436, %v2427
      %v6438 = vpop.permute.xlu0 %6437
      %6441 = vset.pattern.permute.xlu0 24
      %6442 = vperm.xlu0 %6441, %v2428
      %v6443 = vpop.permute.xlu0 %6442
      %6446 = vset.pattern.permute.xlu0 24
      %6447 = vperm.xlu0 %6446, %v2429
      %v6448 = vpop.permute.xlu0 %6447
      %v6450 = vmul.f32 %v6293, %v6289
      %v6451 = vmul.f32 %v6298, %v6289
      %v6452 = vmul.f32 %v6303, %v6289
      %v6453 = vmul.f32 %v6308, %v6289
      %v6454 = vmul.f32 %v6313, %v6289
      %v6455 = vmul.f32 %v6318, %v6289
      %v6456 = vmul.f32 %v6323, %v6289
      %v6457 = vmul.f32 %v6328, %v6289
      %v6458 = vmul.f32 %v6333, %v6289
      %v6459 = vmul.f32 %v6338, %v6289
      %v6460 = vmul.f32 %v6343, %v6289
      %v6461 = vmul.f32 %v6348, %v6289
      %v6462 = vmul.f32 %v6353, %v6289
      %v6463 = vmul.f32 %v6358, %v6289
      %v6464 = vmul.f32 %v6363, %v6289
      %v6465 = vmul.f32 %v6368, %v6289
      %v6466 = vmul.f32 %v6373, %v6289
      %v6467 = vmul.f32 %v6378, %v6289
      %v6468 = vmul.f32 %v6383, %v6289
      %v6469 = vmul.f32 %v6388, %v6289
      %v6470 = vmul.f32 %v6393, %v6289
      %v6471 = vmul.f32 %v6398, %v6289
      %v6472 = vmul.f32 %v6403, %v6289
      %v6473 = vmul.f32 %v6408, %v6289
      %v6474 = vmul.f32 %v6413, %v6289
      %v6475 = vmul.f32 %v6418, %v6289
      %v6476 = vmul.f32 %v6423, %v6289
      %v6477 = vmul.f32 %v6428, %v6289
      %v6478 = vmul.f32 %v6433, %v6289
      %v6479 = vmul.f32 %v6438, %v6289
      %v6480 = vmul.f32 %v6443, %v6289
      %v6481 = vmul.f32 %v6448, %v6289
      %v6482 = vadd.f32 %v6253, %v6450
      %v6483 = vadd.f32 %v6254, %v6451
      %v6484 = vadd.f32 %v6255, %v6452
      %v6485 = vadd.f32 %v6256, %v6453
      %v6486 = vadd.f32 %v6257, %v6454
      %v6487 = vadd.f32 %v6258, %v6455
      %v6488 = vadd.f32 %v6259, %v6456
      %v6489 = vadd.f32 %v6260, %v6457
      %v6490 = vadd.f32 %v6261, %v6458
      %v6491 = vadd.f32 %v6262, %v6459
      %v6492 = vadd.f32 %v6263, %v6460
      %v6493 = vadd.f32 %v6264, %v6461
      %v6494 = vadd.f32 %v6265, %v6462
      %v6495 = vadd.f32 %v6266, %v6463
      %v6496 = vadd.f32 %v6267, %v6464
      %v6497 = vadd.f32 %v6268, %v6465
      %v6498 = vadd.f32 %v6269, %v6466
      %v6499 = vadd.f32 %v6270, %v6467
      %v6500 = vadd.f32 %v6271, %v6468
      %v6501 = vadd.f32 %v6272, %v6469
      %v6502 = vadd.f32 %v6273, %v6470
      %v6503 = vadd.f32 %v6274, %v6471
      %v6504 = vadd.f32 %v6275, %v6472
      %v6505 = vadd.f32 %v6276, %v6473
      %v6506 = vadd.f32 %v6277, %v6474
      %v6507 = vadd.f32 %v6278, %v6475
      %v6508 = vadd.f32 %v6279, %v6476
      %v6509 = vadd.f32 %v6280, %v6477
      %v6510 = vadd.f32 %v6281, %v6478
      %v6511 = vadd.f32 %v6282, %v6479
      %v6512 = vadd.f32 %v6283, %v6480
      %v6513 = vadd.f32 %v6284, %v6481
      %6514 = vst.msk [vmem:[%s433] sm:$0xff] %vm435, %v6482
      %6515 = vst.msk [vmem:[%s433 + $0x8] sm:$0xff] %vm435, %v6483
      %6516 = vst.msk [vmem:[%s433 + $0x10] sm:$0xff] %vm435, %v6484
      %6517 = vst.msk [vmem:[%s433 + $0x18] sm:$0xff] %vm435, %v6485
      %6518 = vst.msk [vmem:[%s433 + $0x20] sm:$0xff] %vm435, %v6486
      %6519 = vst.msk [vmem:[%s433 + $0x28] sm:$0xff] %vm435, %v6487
      %6520 = vst.msk [vmem:[%s433 + $0x30] sm:$0xff] %vm435, %v6488
      %6521 = vst.msk [vmem:[%s433 + $0x38] sm:$0xff] %vm435, %v6489
      %6522 = vst.msk [vmem:[%s433 + $0x40] sm:$0xff] %vm435, %v6490
      %6523 = vst.msk [vmem:[%s433 + $0x48] sm:$0xff] %vm435, %v6491
      %6524 = vst.msk [vmem:[%s433 + $0x50] sm:$0xff] %vm435, %v6492
      %6525 = vst.msk [vmem:[%s433 + $0x58] sm:$0xff] %vm435, %v6493
      %6526 = vst.msk [vmem:[%s433 + $0x60] sm:$0xff] %vm435, %v6494
      %6527 = vst.msk [vmem:[%s433 + $0x68] sm:$0xff] %vm435, %v6495
      %6528 = vst.msk [vmem:[%s433 + $0x70] sm:$0xff] %vm435, %v6496
      %6529 = vst.msk [vmem:[%s433 + $0x78] sm:$0xff] %vm435, %v6497
      %6530 = vst.msk [vmem:[%s433 + $0x80] sm:$0xff] %vm435, %v6498
      %6531 = vst.msk [vmem:[%s433 + $0x88] sm:$0xff] %vm435, %v6499
      %6532 = vst.msk [vmem:[%s433 + $0x90] sm:$0xff] %vm435, %v6500
      %6533 = vst.msk [vmem:[%s433 + $0x98] sm:$0xff] %vm435, %v6501
      %6534 = vst.msk [vmem:[%s433 + $0xa0] sm:$0xff] %vm435, %v6502
      %6535 = vst.msk [vmem:[%s433 + $0xa8] sm:$0xff] %vm435, %v6503
      %6536 = vst.msk [vmem:[%s433 + $0xb0] sm:$0xff] %vm435, %v6504
      %6537 = vst.msk [vmem:[%s433 + $0xb8] sm:$0xff] %vm435, %v6505
      %6538 = vst.msk [vmem:[%s433 + $0xc0] sm:$0xff] %vm435, %v6506
      %6539 = vst.msk [vmem:[%s433 + $0xc8] sm:$0xff] %vm435, %v6507
      %6540 = vst.msk [vmem:[%s433 + $0xd0] sm:$0xff] %vm435, %v6508
      %6541 = vst.msk [vmem:[%s433 + $0xd8] sm:$0xff] %vm435, %v6509
      %6542 = vst.msk [vmem:[%s433 + $0xe0] sm:$0xff] %vm435, %v6510
      %6543 = vst.msk [vmem:[%s433 + $0xe8] sm:$0xff] %vm435, %v6511
      %6544 = vst.msk [vmem:[%s433 + $0xf0] sm:$0xff] %vm435, %v6512
      %6545 = vst.msk [vmem:[%s433 + $0xf8] sm:$0xff] %vm435, %v6513
      %p6546 = scmp.lt.s32.totalorder %s23, 1
      %s6547 = scalar_select %p6546, %s23, 1
      %s6548 = smul.addr %s6547, 32
      %s6549 = smul.addr %s6548, 8
      %s6550 = scalar_lea.vmem %s12, %s6549
      // Predicated region
      $region69: #{tpu_custom_call.1} parent=67 // pred_check
        %p6551 = pneg %p303
      $region70: #{tpu_custom_call.1} parent=67 // pred_check_branch
        %6553 = sbr.rel (%p6551) target = $region72
      $region71: #{tpu_custom_call.1} parent=67 // pred_region
        _
      $region72: #{tpu_custom_call.1} parent=67 // pred_fallthru
        _
    $region68: #{tpu_custom_call.1} parent=5 // pred_fallthru
      _
    %p6554 = scmp.le.s32.totalorder 2, %s18
    // Predicated region
    $region73: #{tpu_custom_call.1} parent=5 // pred_check
      %p6555 = pneg %p6554
    $region74: #{tpu_custom_call.1} parent=5 // pred_check_branch
      %6557 = sbr.rel (%p6555) target = $region76
    $region75: #{tpu_custom_call.1} parent=5 // pred_region
      %s6558 = ssub.s32 %s18, 2
      // Predicated region
      $region77: #{tpu_custom_call.1} parent=75 // pred_check
        %p6559 = pneg %p309
      $region78: #{tpu_custom_call.1} parent=75 // pred_check_branch
        %6561 = sbr.rel (%p6559) target = $region80
      $region79: #{tpu_custom_call.1} parent=75 // pred_region
        %p6562 = scmp.lt.s32.totalorder %s24, 1
        %s6563 = scalar_select %p6562, %s24, 1
        %s6564 = smul.addr %s6563, 32
        %s6565 = smul.addr %s6564, 8
        %s6566 = scalar_lea.vmem %s12, %s6565
      $region80: #{tpu_custom_call.1} parent=75 // pred_fallthru
        _
    $region76: #{tpu_custom_call.1} parent=5 // pred_fallthru
      _
  $region6: #{tpu_custom_call.1} parent=0 // loop_footer
    %s22 = sadd.s32 1, %s18
  $region7: #{tpu_custom_call.1} parent=0 // loop_footer_branch
    %17 = sbr.rel target = $region3
  $region8: #{tpu_custom_call.1} parent=0 // loop_exit
    _

</llo_original>
